<compile_context>
chip_gen: v7x
topology: tpu7x:2x2x1
jax: 0.10.0
libtpu: 0.0.40
codegen_flags: <defaults>
</compile_context>

<pallas_src>
import jax
import jax.numpy as jnp
from jax import lax
from jax.experimental import pallas as pl
from jax.experimental.pallas import tpu as pltpu


# ---------------------------------------------------------------------------
# Kernel 1: fused 3x3 conv (single im2col matmul) + 2x2 maxpool + bias + ReLU
# ---------------------------------------------------------------------------
def conv_relu_pool_kernel(a_ref, w_ref, b_ref, o_ref):
    # a_ref: (1, 4*Np, K)  im2col rows, grouped [pool-tap major, pooled-pixel minor]
    # w_ref: (K, Cout)     flattened conv weights
    # b_ref: (1, Cout)     bias
    # o_ref: (1, Np, Cout) pooled output
    np_ = o_ref.shape[1]
    # One MXU weight-push / drain for all 4 pool taps (4x larger M keeps the
    # systolic array full); the tap-max is a cheap VPU reduce on aligned slabs.
    y = jnp.dot(a_ref[0], w_ref[...], preferred_element_type=jnp.float32)
    m = y[0:np_]
    for t in range(1, 4):
        m = jnp.maximum(m, y[t * np_:(t + 1) * np_])
    # max(relu(a), relu(b)) == relu(max(a, b)); bias is per-channel so it can
    # be added after the max.
    o_ref[0] = jnp.maximum(m + b_ref[...], 0.0).astype(o_ref.dtype)


def conv3x3_relu_pool(x_nhwc, w_mat, bias_row, *, cout):
    B, H, W, cin = x_nhwc.shape
    K = 9 * cin
    Ho, Wo = H // 2, W // 2
    Np = Ho * Wo

    # im2col glue (plain XLA): 9 shifted views of the zero-padded input,
    # regrouped so the 2x2 pool window becomes a leading tap axis.
    xp = jnp.pad(x_nhwc, ((0, 0), (1, 1), (1, 1), (0, 0)))
    taps = [xp[:, dy:dy + H, dx:dx + W, :] for dy in range(3) for dx in range(3)]
    patches = jnp.stack(taps, axis=3).reshape(B, H, W, K)
    a = patches.reshape(B, Ho, 2, Wo, 2, K).transpose(0, 2, 4, 1, 3, 5)
    a = a.reshape(B, 4 * Np, K)          # rows: tap*Np + (i*Wo + j)

    out = pl.pallas_call(
        conv_relu_pool_kernel,
        out_shape=jax.ShapeDtypeStruct((B, Np, cout), jnp.float32),
        grid=(B,),
        in_specs=[
            pl.BlockSpec((1, 4 * Np, K), lambda b: (b, 0, 0)),
            pl.BlockSpec((K, cout), lambda b: (0, 0)),
            pl.BlockSpec((1, cout), lambda b: (0, 0)),
        ],
        out_specs=pl.BlockSpec((1, Np, cout), lambda b: (b, 0, 0)),
        compiler_params=pltpu.CompilerParams(dimension_semantics=("parallel",)),
    )(a, w_mat, bias_row)
    return out.reshape(B, Ho, Wo, cout)


# ---------------------------------------------------------------------------
# Kernel 2: fused fc1 (K-tiled) + bias + ReLU + fc2 + bias
# ---------------------------------------------------------------------------
def fc_fused_kernel(a_ref, w1_ref, b1_ref, w2_ref, b2_ref, o_ref, h_ref):
    k = pl.program_id(0)

    @pl.when(k == 0)
    def _():
        h_ref[...] = jnp.zeros_like(h_ref)

    h_ref[...] += jnp.dot(a_ref[...], w1_ref[...],
                          preferred_element_type=jnp.float32)

    @pl.when(k == pl.num_programs(0) - 1)
    def _():
        h = jnp.maximum(h_ref[...] + b1_ref[...], 0.0)            # fc1 bias + ReLU
        o_ref[...] = (jnp.dot(h, w2_ref[...],
                              preferred_element_type=jnp.float32)
                      + b2_ref[...]).astype(o_ref.dtype)          # fused fc2


def fc1_relu_fc2(feat, w1, b1, w2, b2, *, tk=4096):
    M, K = feat.shape
    _, N1 = w1.shape
    _, N2 = w2.shape
    assert K % tk == 0
    return pl.pallas_call(
        fc_fused_kernel,
        out_shape=jax.ShapeDtypeStruct((M, N2), jnp.float32),
        grid=(K // tk,),
        in_specs=[
            pl.BlockSpec((M, tk), lambda k: (0, k)),
            pl.BlockSpec((tk, N1), lambda k: (k, 0)),
            pl.BlockSpec((1, N1), lambda k: (0, 0)),
            pl.BlockSpec((N1, N2), lambda k: (0, 0)),
            pl.BlockSpec((1, N2), lambda k: (0, 0)),
        ],
        out_specs=pl.BlockSpec((M, N2), lambda k: (0, 0)),
        scratch_shapes=[pltpu.VMEM((M, N1), jnp.float32)],
        compiler_params=pltpu.CompilerParams(dimension_semantics=("arbitrary",)),
    )(feat, w1, b1, w2, b2)


# ---------------------------------------------------------------------------
# Parameters (deterministic, PyTorch-shaped), one-time re-layout, forward pass
# ---------------------------------------------------------------------------
def init_params(key):
    ks = jax.random.split(key, 8)

    def u(k, shape, fan_in):
        bound = 1.0 / jnp.sqrt(jnp.float32(fan_in))
        return jax.random.uniform(k, shape, jnp.float32, -bound, bound)

    return dict(
        conv1_w=u(ks[0], (32, 3, 3, 3), 3 * 9),            # (Cout, Cin, kh, kw)
        conv1_b=u(ks[1], (32,), 3 * 9),
        conv2_w=u(ks[2], (64, 32, 3, 3), 32 * 9),
        conv2_b=u(ks[3], (64,), 32 * 9),
        fc1_w=u(ks[4], (256, 64 * 16 * 16), 64 * 16 * 16),  # (out, in), NCHW in-order
        fc1_b=u(ks[5], (256,), 64 * 16 * 16),
        fc2_w=u(ks[6], (196, 256), 256),
        fc2_b=u(ks[7], (196,), 256),
    )


def prepare_params(params):
    """One-time re-layout of the PyTorch-shaped params for the kernels.

    * conv weights -> (K, Cout) im2col matrices with K ordered (dy, dx, cin).
    * fc1 weight   -> (16384, 256); rows permuted from NCHW-flatten order to
                      NHWC-flatten order so the conv2 output can be flattened
                      directly (no runtime transpose of weights or activations).
    * fc2 weight   -> (256, 196).
    """
    c1 = jnp.transpose(params["conv1_w"], (2, 3, 1, 0)).reshape(27, 32)
    c2 = jnp.transpose(params["conv2_w"], (2, 3, 1, 0)).reshape(288, 64)
    f1 = (params["fc1_w"].reshape(256, 64, 16, 16)
          .transpose(2, 3, 1, 0)                     # (h, w, c, out)
          .reshape(16 * 16 * 64, 256))
    f2 = params["fc2_w"].T                           # (256, 196)
    return dict(
        conv1_w=c1, conv1_b=params["conv1_b"].reshape(1, 32),
        conv2_w=c2, conv2_b=params["conv2_b"].reshape(1, 64),
        fc1_w=f1, fc1_b=params["fc1_b"].reshape(1, 256),
        fc2_w=f2, fc2_b=params["fc2_b"].reshape(1, 196),
    )


@jax.jit
def forward(prep, x_nchw):
    x = jnp.transpose(x_nchw, (0, 2, 3, 1))                    # NCHW -> NHWC
    x = conv3x3_relu_pool(x, prep["conv1_w"], prep["conv1_b"], cout=32)  # (B,32,32,32)
    x = conv3x3_relu_pool(x, prep["conv2_w"], prep["conv2_b"], cout=64)  # (B,16,16,64)
    B = x.shape[0]
    feat = x.reshape(B, -1)            # NHWC flatten; fc1_w rows already permuted
    return fc1_relu_fc2(feat, prep["fc1_w"], prep["fc1_b"],
                        prep["fc2_w"], prep["fc2_b"], tk=4096)


def reference(params, x_nchw):
    """Pure-JAX reference of the PyTorch forward pass (for validation)."""
    x = jnp.transpose(x_nchw, (0, 2, 3, 1))

    def conv_block(x, w, b):
        y = lax.conv_general_dilated(
            x, jnp.transpose(w, (2, 3, 1, 0)), (1, 1), "SAME",
            dimension_numbers=("NHWC", "HWIO", "NHWC"))
        y = jnp.maximum(y + b, 0.0)
        return lax.reduce_window(y, -jnp.inf, lax.max,
                                 (1, 2, 2, 1), (1, 2, 2, 1), "VALID")

    x = conv_block(x, params["conv1_w"], params["conv1_b"])
    x = conv_block(x, params["conv2_w"], params["conv2_b"])
    B = x.shape[0]
    feat = jnp.transpose(x, (0, 3, 1, 2)).reshape(B, -1)
    h = jnp.maximum(feat @ params["fc1_w"].T + params["fc1_b"], 0.0)
    return h @ params["fc2_w"].T + params["fc2_b"]


if __name__ == "__main__":
    key = jax.random.PRNGKey(0)
    k_x, k_p = jax.random.split(key)
    # batch=2; 3 channels, 64x64 spatial (required by fc1 = 64*16*16 after two pools)
    x = jax.random.normal(k_x, (2, 3, 64, 64), jnp.float32)
    params = init_params(k_p)
    prep = prepare_params(params)          # one-time weight re-layout (not per forward)

    out = jax.block_until_ready(forward(prep, x))
    ref = jax.block_until_ready(reference(params, x))

    assert out.shape == (2, 196), out.shape
    assert jnp.allclose(out, ref, rtol=1e-2, atol=1e-2), "mismatch vs reference"
    print("KERNEL_OK")
</pallas_src>

<mosaic_0001>
module attributes {stable_mosaic.version = 11 : i64} {
  func.func @conv_relu_pool_kernel(%arg0: i32, %arg1: memref<1x4096x27xf32, #tpu.memory_space<vmem>>, %arg2: memref<27x32xf32, #tpu.memory_space<vmem>>, %arg3: memref<1x32xf32, #tpu.memory_space<vmem>>, %arg4: memref<1x1024x32xf32, #tpu.memory_space<vmem>>) attributes {dimension_semantics = [#tpu.dimension_semantics<parallel>], iteration_bounds = array<i64: 2>, scalar_prefetch = 0 : i64, scratch_operands = 0 : i64, tpu.core_type = #tpu.core_type<tc>, window_params = [{transform_indices = @transform_0, window_bounds = array<i64: 1, 4096, 27>}, {pipeline_mode = #tpu.pipeline_mode<synchronous>, transform_indices = @transform_1, window_bounds = array<i64: 27, 32>}, {pipeline_mode = #tpu.pipeline_mode<synchronous>, transform_indices = @transform_2, window_bounds = array<i64: 1, 32>}, {transform_indices = @transform_3, window_bounds = array<i64: 1, 1024, 32>}]} {
    %c0 = arith.constant 0 : index
    %c0_0 = arith.constant 0 : index
    %c0_1 = arith.constant 0 : index
    %0 = vector.load %arg1[%c0, %c0_0, %c0_1] : memref<1x4096x27xf32, #tpu.memory_space<vmem>>, vector<1x4096x27xf32>
    %1 = vector.shape_cast %0 : vector<1x4096x27xf32> to vector<4096x27xf32>
    %c0_2 = arith.constant 0 : index
    %c0_3 = arith.constant 0 : index
    %2 = vector.load %arg2[%c0_2, %c0_3] : memref<27x32xf32, #tpu.memory_space<vmem>>, vector<27x32xf32>
    %cst = arith.constant dense<0.000000e+00> : vector<4096x32xf32>
    %3 = tpu.matmul %1, %2, %cst {dimension_numbers = #tpu.dot_dimension_numbers<[1], [0], [0], [1], [0, 0, 1, 1], [], []>} : vector<4096x27xf32>, vector<27x32xf32>, vector<4096x32xf32> -> vector<4096x32xf32>
    %4 = vector.extract_strided_slice %3 {offsets = [0, 0], sizes = [1024, 32], strides = [1, 1]} : vector<4096x32xf32> to vector<1024x32xf32>
    %5 = vector.extract_strided_slice %3 {offsets = [1024, 0], sizes = [1024, 32], strides = [1, 1]} : vector<4096x32xf32> to vector<1024x32xf32>
    %6 = arith.maximumf %4, %5 : vector<1024x32xf32>
    %7 = vector.extract_strided_slice %3 {offsets = [2048, 0], sizes = [1024, 32], strides = [1, 1]} : vector<4096x32xf32> to vector<1024x32xf32>
    %8 = arith.maximumf %6, %7 : vector<1024x32xf32>
    %9 = vector.extract_strided_slice %3 {offsets = [3072, 0], sizes = [1024, 32], strides = [1, 1]} : vector<4096x32xf32> to vector<1024x32xf32>
    %10 = arith.maximumf %8, %9 : vector<1024x32xf32>
    %c0_4 = arith.constant 0 : index
    %c0_5 = arith.constant 0 : index
    %11 = vector.load %arg3[%c0_4, %c0_5] : memref<1x32xf32, #tpu.memory_space<vmem>>, vector<1x32xf32>
    %12 = vector.broadcast %11 : vector<1x32xf32> to vector<1024x32xf32>
    %13 = arith.addf %10, %12 : vector<1024x32xf32>
    %cst_6 = arith.constant 0.000000e+00 : f32
    %14 = vector.broadcast %cst_6 : f32 to vector<1024x32xf32>
    %15 = arith.maximumf %13, %14 : vector<1024x32xf32>
    %c0_7 = arith.constant 0 : index
    %c0_8 = arith.constant 0 : index
    %c0_9 = arith.constant 0 : index
    %16 = vector.load %arg4[%c0_7, %c0_8, %c0_9] : memref<1x1024x32xf32, #tpu.memory_space<vmem>>, vector<1x1024x32xf32>
    %17 = vector.shape_cast %16 : vector<1x1024x32xf32> to vector<1024x32xf32>
    %18 = vector.shape_cast %15 : vector<1024x32xf32> to vector<1x1024x32xf32>
    tpu.vector_store %arg4[%c0_7, %c0_8, %c0_9], %18 {strides = array<i32>} : memref<1x1024x32xf32, #tpu.memory_space<vmem>>, vector<1x1024x32xf32>,
    return
  }
  func.func @transform_0(%arg0: i32) -> (i32, i32, i32) {
    %c0_i32 = arith.constant 0 : i32
    %c0_i32_0 = arith.constant 0 : i32
    %c0_i32_1 = arith.constant 0 : i32
    return %arg0, %c0_i32, %c0_i32_0 : i32, i32, i32
  }
  func.func @transform_1(%arg0: i32) -> (i32, i32) {
    %c0_i32 = arith.constant 0 : i32
    %c0_i32_0 = arith.constant 0 : i32
    %c0_i32_1 = arith.constant 0 : i32
    return %c0_i32, %c0_i32_0 : i32, i32
  }
  func.func @transform_2(%arg0: i32) -> (i32, i32) {
    %c0_i32 = arith.constant 0 : i32
    %c0_i32_0 = arith.constant 0 : i32
    %c0_i32_1 = arith.constant 0 : i32
    return %c0_i32, %c0_i32_0 : i32, i32
  }
  func.func @transform_3(%arg0: i32) -> (i32, i32, i32) {
    %c0_i32 = arith.constant 0 : i32
    %c0_i32_0 = arith.constant 0 : i32
    %c0_i32_1 = arith.constant 0 : i32
    return %arg0, %c0_i32, %c0_i32_0 : i32, i32, i32
  }
}

module attributes {stable_mosaic.version = 11 : i64} {
  func.func @conv_relu_pool_kernel(%arg0: i32, %arg1: memref<1x1024x288xf32, #tpu.memory_space<vmem>>, %arg2: memref<288x64xf32, #tpu.memory_space<vmem>>, %arg3: memref<1x64xf32, #tpu.memory_space<vmem>>, %arg4: memref<1x256x64xf32, #tpu.memory_space<vmem>>) attributes {dimension_semantics = [#tpu.dimension_semantics<parallel>], iteration_bounds = array<i64: 2>, scalar_prefetch = 0 : i64, scratch_operands = 0 : i64, tpu.core_type = #tpu.core_type<tc>, window_params = [{transform_indices = @transform_0, window_bounds = array<i64: 1, 1024, 288>}, {pipeline_mode = #tpu.pipeline_mode<synchronous>, transform_indices = @transform_1, window_bounds = array<i64: 288, 64>}, {pipeline_mode = #tpu.pipeline_mode<synchronous>, transform_indices = @transform_2, window_bounds = array<i64: 1, 64>}, {transform_indices = @transform_3, window_bounds = array<i64: 1, 256, 64>}]} {
    %c0 = arith.constant 0 : index
    %c0_0 = arith.constant 0 : index
    %c0_1 = arith.constant 0 : index
    %0 = vector.load %arg1[%c0, %c0_0, %c0_1] : memref<1x1024x288xf32, #tpu.memory_space<vmem>>, vector<1x1024x288xf32>
    %1 = vector.shape_cast %0 : vector<1x1024x288xf32> to vector<1024x288xf32>
    %c0_2 = arith.constant 0 : index
    %c0_3 = arith.constant 0 : index
    %2 = vector.load %arg2[%c0_2, %c0_3] : memref<288x64xf32, #tpu.memory_space<vmem>>, vector<288x64xf32>
    %cst = arith.constant dense<0.000000e+00> : vector<1024x64xf32>
    %3 = tpu.matmul %1, %2, %cst {dimension_numbers = #tpu.dot_dimension_numbers<[1], [0], [0], [1], [0, 0, 1, 1], [], []>} : vector<1024x288xf32>, vector<288x64xf32>, vector<1024x64xf32> -> vector<1024x64xf32>
    %4 = vector.extract_strided_slice %3 {offsets = [0, 0], sizes = [256, 64], strides = [1, 1]} : vector<1024x64xf32> to vector<256x64xf32>
    %5 = vector.extract_strided_slice %3 {offsets = [256, 0], sizes = [256, 64], strides = [1, 1]} : vector<1024x64xf32> to vector<256x64xf32>
    %6 = arith.maximumf %4, %5 : vector<256x64xf32>
    %7 = vector.extract_strided_slice %3 {offsets = [512, 0], sizes = [256, 64], strides = [1, 1]} : vector<1024x64xf32> to vector<256x64xf32>
    %8 = arith.maximumf %6, %7 : vector<256x64xf32>
    %9 = vector.extract_strided_slice %3 {offsets = [768, 0], sizes = [256, 64], strides = [1, 1]} : vector<1024x64xf32> to vector<256x64xf32>
    %10 = arith.maximumf %8, %9 : vector<256x64xf32>
    %c0_4 = arith.constant 0 : index
    %c0_5 = arith.constant 0 : index
    %11 = vector.load %arg3[%c0_4, %c0_5] : memref<1x64xf32, #tpu.memory_space<vmem>>, vector<1x64xf32>
    %12 = vector.broadcast %11 : vector<1x64xf32> to vector<256x64xf32>
    %13 = arith.addf %10, %12 : vector<256x64xf32>
    %cst_6 = arith.constant 0.000000e+00 : f32
    %14 = vector.broadcast %cst_6 : f32 to vector<256x64xf32>
    %15 = arith.maximumf %13, %14 : vector<256x64xf32>
    %c0_7 = arith.constant 0 : index
    %c0_8 = arith.constant 0 : index
    %c0_9 = arith.constant 0 : index
    %16 = vector.load %arg4[%c0_7, %c0_8, %c0_9] : memref<1x256x64xf32, #tpu.memory_space<vmem>>, vector<1x256x64xf32>
    %17 = vector.shape_cast %16 : vector<1x256x64xf32> to vector<256x64xf32>
    %18 = vector.shape_cast %15 : vector<256x64xf32> to vector<1x256x64xf32>
    tpu.vector_store %arg4[%c0_7, %c0_8, %c0_9], %18 {strides = array<i32>} : memref<1x256x64xf32, #tpu.memory_space<vmem>>, vector<1x256x64xf32>,
    return
  }
  func.func @transform_0(%arg0: i32) -> (i32, i32, i32) {
    %c0_i32 = arith.constant 0 : i32
    %c0_i32_0 = arith.constant 0 : i32
    %c0_i32_1 = arith.constant 0 : i32
    return %arg0, %c0_i32, %c0_i32_0 : i32, i32, i32
  }
  func.func @transform_1(%arg0: i32) -> (i32, i32) {
    %c0_i32 = arith.constant 0 : i32
    %c0_i32_0 = arith.constant 0 : i32
    %c0_i32_1 = arith.constant 0 : i32
    return %c0_i32, %c0_i32_0 : i32, i32
  }
  func.func @transform_2(%arg0: i32) -> (i32, i32) {
    %c0_i32 = arith.constant 0 : i32
    %c0_i32_0 = arith.constant 0 : i32
    %c0_i32_1 = arith.constant 0 : i32
    return %c0_i32, %c0_i32_0 : i32, i32
  }
  func.func @transform_3(%arg0: i32) -> (i32, i32, i32) {
    %c0_i32 = arith.constant 0 : i32
    %c0_i32_0 = arith.constant 0 : i32
    %c0_i32_1 = arith.constant 0 : i32
    return %arg0, %c0_i32, %c0_i32_0 : i32, i32, i32
  }
}

module attributes {stable_mosaic.version = 11 : i64} {
  func.func @fc_fused_kernel(%arg0: i32, %arg1: memref<2x4096xf32, #tpu.memory_space<vmem>>, %arg2: memref<4096x256xf32, #tpu.memory_space<vmem>>, %arg3: memref<1x256xf32, #tpu.memory_space<vmem>>, %arg4: memref<256x196xf32, #tpu.memory_space<vmem>>, %arg5: memref<1x196xf32, #tpu.memory_space<vmem>>, %arg6: memref<2x196xf32, #tpu.memory_space<vmem>>, %arg7: memref<2x256xf32, #tpu.memory_space<vmem>>) attributes {dimension_semantics = [#tpu.dimension_semantics<arbitrary>], iteration_bounds = array<i64: 4>, scalar_prefetch = 0 : i64, scratch_operands = 1 : i64, tpu.core_type = #tpu.core_type<tc>, window_params = [{transform_indices = @transform_0, window_bounds = array<i64: 2, 4096>}, {transform_indices = @transform_1, window_bounds = array<i64: 4096, 256>}, {pipeline_mode = #tpu.pipeline_mode<synchronous>, transform_indices = @transform_2, window_bounds = array<i64: 1, 256>}, {pipeline_mode = #tpu.pipeline_mode<synchronous>, transform_indices = @transform_3, window_bounds = array<i64: 256, 196>}, {pipeline_mode = #tpu.pipeline_mode<synchronous>, transform_indices = @transform_4, window_bounds = array<i64: 1, 196>}, {pipeline_mode = #tpu.pipeline_mode<synchronous>, transform_indices = @transform_5, window_bounds = array<i64: 2, 196>}]} {
    %c0_i32 = arith.constant 0 : i32
    %0 = arith.cmpi eq, %arg0, %c0_i32 : i32
    %1 = arith.extui %0 : i1 to i32
    %c0_i32_0 = arith.constant 0 : i32
    %2 = arith.cmpi ne, %1, %c0_i32_0 : i32
    scf.if %2 {
      %cst_9 = arith.constant 0.000000e+00 : f32
      %12 = vector.broadcast %cst_9 : f32 to vector<2x256xf32>
      %c0_10 = arith.constant 0 : index
      %c0_11 = arith.constant 0 : index
      %13 = vector.load %arg7[%c0_10, %c0_11] : memref<2x256xf32, #tpu.memory_space<vmem>>, vector<2x256xf32>
      tpu.vector_store %arg7[%c0_10, %c0_11], %12 {strides = array<i32>} : memref<2x256xf32, #tpu.memory_space<vmem>>, vector<2x256xf32>,
    } else {
    }
    %c0 = arith.constant 0 : index
    %c0_1 = arith.constant 0 : index
    %3 = vector.load %arg7[%c0, %c0_1] : memref<2x256xf32, #tpu.memory_space<vmem>>, vector<2x256xf32>
    %c0_2 = arith.constant 0 : index
    %c0_3 = arith.constant 0 : index
    %4 = vector.load %arg1[%c0_2, %c0_3] : memref<2x4096xf32, #tpu.memory_space<vmem>>, vector<2x4096xf32>
    %c0_4 = arith.constant 0 : index
    %c0_5 = arith.constant 0 : index
    %5 = vector.load %arg2[%c0_4, %c0_5] : memref<4096x256xf32, #tpu.memory_space<vmem>>, vector<4096x256xf32>
    %cst = arith.constant dense<0.000000e+00> : vector<2x256xf32>
    %6 = tpu.matmul %4, %5, %cst {dimension_numbers = #tpu.dot_dimension_numbers<[1], [0], [0], [1], [0, 0, 1, 1], [], []>} : vector<2x4096xf32>, vector<4096x256xf32>, vector<2x256xf32> -> vector<2x256xf32>
    %7 = arith.addf %3, %6 : vector<2x256xf32>
    %c0_6 = arith.constant 0 : index
    %c0_7 = arith.constant 0 : index
    %8 = vector.load %arg7[%c0_6, %c0_7] : memref<2x256xf32, #tpu.memory_space<vmem>>, vector<2x256xf32>
    tpu.vector_store %arg7[%c0_6, %c0_7], %7 {strides = array<i32>} : memref<2x256xf32, #tpu.memory_space<vmem>>, vector<2x256xf32>,
    %c3_i32 = arith.constant 3 : i32
    %9 = arith.cmpi eq, %arg0, %c3_i32 : i32
    %10 = arith.extui %9 : i1 to i32
    %c0_i32_8 = arith.constant 0 : i32
    %11 = arith.cmpi ne, %10, %c0_i32_8 : i32
    scf.if %11 {
      %c0_9 = arith.constant 0 : index
      %c0_10 = arith.constant 0 : index
      %12 = vector.load %arg7[%c0_9, %c0_10] : memref<2x256xf32, #tpu.memory_space<vmem>>, vector<2x256xf32>
      %c0_11 = arith.constant 0 : index
      %c0_12 = arith.constant 0 : index
      %13 = vector.load %arg3[%c0_11, %c0_12] : memref<1x256xf32, #tpu.memory_space<vmem>>, vector<1x256xf32>
      %14 = vector.broadcast %13 : vector<1x256xf32> to vector<2x256xf32>
      %15 = arith.addf %12, %14 : vector<2x256xf32>
      %cst_13 = arith.constant 0.000000e+00 : f32
      %16 = vector.broadcast %cst_13 : f32 to vector<2x256xf32>
      %17 = arith.maximumf %15, %16 : vector<2x256xf32>
      %c0_14 = arith.constant 0 : index
      %c0_15 = arith.constant 0 : index
      %18 = vector.load %arg4[%c0_14, %c0_15] : memref<256x196xf32, #tpu.memory_space<vmem>>, vector<256x196xf32>
      %cst_16 = arith.constant dense<0.000000e+00> : vector<2x196xf32>
      %19 = tpu.matmul %17, %18, %cst_16 {dimension_numbers = #tpu.dot_dimension_numbers<[1], [0], [0], [1], [0, 0, 1, 1], [], []>} : vector<2x256xf32>, vector<256x196xf32>, vector<2x196xf32> -> vector<2x196xf32>
      %c0_17 = arith.constant 0 : index
      %c0_18 = arith.constant 0 : index
      %20 = vector.load %arg5[%c0_17, %c0_18] : memref<1x196xf32, #tpu.memory_space<vmem>>, vector<1x196xf32>
      %21 = vector.broadcast %20 : vector<1x196xf32> to vector<2x196xf32>
      %22 = arith.addf %19, %21 : vector<2x196xf32>
      %c0_19 = arith.constant 0 : index
      %c0_20 = arith.constant 0 : index
      %23 = vector.load %arg6[%c0_19, %c0_20] : memref<2x196xf32, #tpu.memory_space<vmem>>, vector<2x196xf32>
      tpu.vector_store %arg6[%c0_19, %c0_20], %22 {strides = array<i32>} : memref<2x196xf32, #tpu.memory_space<vmem>>, vector<2x196xf32>,
    } else {
    }
    return
  }
  func.func @transform_0(%arg0: i32) -> (i32, i32) {
    %c0_i32 = arith.constant 0 : i32
    %c0_i32_0 = arith.constant 0 : i32
    return %c0_i32, %arg0 : i32, i32
  }
  func.func @transform_1(%arg0: i32) -> (i32, i32) {
    %c0_i32 = arith.constant 0 : i32
    %c0_i32_0 = arith.constant 0 : i32
    return %arg0, %c0_i32 : i32, i32
  }
  func.func @transform_2(%arg0: i32) -> (i32, i32) {
    %c0_i32 = arith.constant 0 : i32
    %c0_i32_0 = arith.constant 0 : i32
    %c0_i32_1 = arith.constant 0 : i32
    return %c0_i32, %c0_i32_0 : i32, i32
  }
  func.func @transform_3(%arg0: i32) -> (i32, i32) {
    %c0_i32 = arith.constant 0 : i32
    %c0_i32_0 = arith.constant 0 : i32
    %c0_i32_1 = arith.constant 0 : i32
    return %c0_i32, %c0_i32_0 : i32, i32
  }
  func.func @transform_4(%arg0: i32) -> (i32, i32) {
    %c0_i32 = arith.constant 0 : i32
    %c0_i32_0 = arith.constant 0 : i32
    %c0_i32_1 = arith.constant 0 : i32
    return %c0_i32, %c0_i32_0 : i32, i32
  }
  func.func @transform_5(%arg0: i32) -> (i32, i32) {
    %c0_i32 = arith.constant 0 : i32
    %c0_i32_0 = arith.constant 0 : i32
    %c0_i32_1 = arith.constant 0 : i32
    return %c0_i32, %c0_i32_0 : i32, i32
  }
}

</mosaic_0001>

<llo_original>
// kernel: forward.3
$region0: #{forward.3}
  #allocation0 [shape = 'u32[]', space=smem, size = 0x4, offset = 0x4, fixed_abs, tag = 'smem constant byte address 0x4 - core index']
  #allocation1 [shape = 'u32[144,128]{1,0:T(1,128)}', space=vmem, size = 0x12000, scoped, tag = 'internal scratch']
  %s0 = inlined_call_operand.vmem [shape: f32[2,4096,27], index: 0, kind: input, shape index: {}]
  %s1 = inlined_call_operand.vmem [shape: f32[27,32], index: 1, kind: input, shape index: {}]
  %s2 = inlined_call_operand.vmem [shape: f32[1,32], index: 2, kind: input, shape index: {}]
  %s3 = inlined_call_operand.vmem [shape: f32[2,1024,32], index: 3, kind: output, shape index: {}]
  %s4 = sld [smem:[#allocation0]]
  $region45: #{forward.3} parent=0
    _
  %s6 = ssub.s32 1, %s4
  %s7 = scalar_select 0, %s6, %s4
  loop: start=0, step=1, limit=4
  $region2: #{forward.3} parent=0 // loop_pre_header
    _
  $region3: #{forward.3} parent=0 // loop_header
    %s9 = sphi 0, %s13
    %p10 = scmp.ge.s32.totalorder %s9, 4
    %s19 = sphi 0, %s21
    %s22 = sphi 0, %s19
    %s23 = sphi 0, %s22
    %s39 = sphi 0, %s23
    %s43 = sphi 0, %s43
    %s45 = sphi 0, %s43
    %s46 = sphi 0, %s45
    %s60 = sphi 0, %s46
    %s64 = sphi 0, %s64
    %s66 = sphi 0, %s64
    %s67 = sphi 0, %s66
    %s81 = sphi 0, %s67
    %s87 = sphi 0, %s89
    %s90 = sphi 0, %s87
    %s91 = sphi 0, %s90
    %s107 = sphi 0, %s91
  $region4: #{forward.3} parent=0 // loop_header_branch
    %12 = sbr.rel (%p10) target = $region8
  $region5: #{forward.3} parent=0 // loop_body
    %s14 = ssub.s32 %s9, 1
    %s15 = ssub.s32 %s9, 2
    %s16 = sadd.s32 %s9, 1
    %s17 = ssub.s32 %s9, %s16
    %p18 = scmp.eq.s32.totalorder %s17, 0
    %s20 = sadd.s32 %s19, 1
    %s21 = scalar_select %p18, %s19, %s20
    %p24 = pneg %p18
    %p25 = scmp.eq.s32.totalorder %s9, 1
    %p26 = por %p24, %p25
    %p27 = scmp.ne.s32.totalorder %s19, %s22
    %p28 = scmp.eq.s32.totalorder %s9, 0
    %p29 = por %p27, %p28
    %p30 = scmp.ne.s32.totalorder %s19, %s22
    %p31 = scmp.eq.s32.totalorder %s14, 1
    %p32 = por %p30, %p31
    %p33 = scmp.ne.s32.totalorder %s22, %s23
    %p34 = scmp.eq.s32.totalorder %s14, 0
    %p35 = por %p33, %p34
    %p36 = scmp.ne.s32.totalorder %s22, %s23
    %p37 = scmp.eq.s32.totalorder %s15, 1
    %p38 = por %p36, %p37
    %p40 = scmp.ne.s32.totalorder %s23, %s39
    %p41 = scmp.eq.s32.totalorder %s15, 0
    %p42 = por %p40, %p41
    %s44 = sadd.s32 %s43, 1
    %p47 = scmp.eq.s32.totalorder %s9, 1
    %p48 = scmp.ne.s32.totalorder %s43, %s45
    %p49 = scmp.eq.s32.totalorder %s9, 0
    %p50 = por %p48, %p49
    %p51 = scmp.ne.s32.totalorder %s43, %s45
    %p52 = scmp.eq.s32.totalorder %s14, 1
    %p53 = por %p51, %p52
    %p54 = scmp.ne.s32.totalorder %s45, %s46
    %p55 = scmp.eq.s32.totalorder %s14, 0
    %p56 = por %p54, %p55
    %p57 = scmp.ne.s32.totalorder %s45, %s46
    %p58 = scmp.eq.s32.totalorder %s15, 1
    %p59 = por %p57, %p58
    %p61 = scmp.ne.s32.totalorder %s46, %s60
    %p62 = scmp.eq.s32.totalorder %s15, 0
    %p63 = por %p61, %p62
    %s65 = sadd.s32 %s64, 1
    %p68 = scmp.eq.s32.totalorder %s9, 1
    %p69 = scmp.ne.s32.totalorder %s64, %s66
    %p70 = scmp.eq.s32.totalorder %s9, 0
    %p71 = por %p69, %p70
    %p72 = scmp.ne.s32.totalorder %s64, %s66
    %p73 = scmp.eq.s32.totalorder %s14, 1
    %p74 = por %p72, %p73
    %p75 = scmp.ne.s32.totalorder %s66, %s67
    %p76 = scmp.eq.s32.totalorder %s14, 0
    %p77 = por %p75, %p76
    %p78 = scmp.ne.s32.totalorder %s66, %s67
    %p79 = scmp.eq.s32.totalorder %s15, 1
    %p80 = por %p78, %p79
    %p82 = scmp.ne.s32.totalorder %s67, %s81
    %p83 = scmp.eq.s32.totalorder %s15, 0
    %p84 = por %p82, %p83
    %s85 = ssub.s32 %s9, %s16
    %p86 = scmp.eq.s32.totalorder %s85, 0
    %s88 = sadd.s32 %s87, 1
    %s89 = scalar_select %p86, %s87, %s88
    %p92 = pneg %p86
    %p93 = scmp.eq.s32.totalorder %s9, 1
    %p94 = por %p92, %p93
    %p95 = scmp.ne.s32.totalorder %s87, %s90
    %p96 = scmp.eq.s32.totalorder %s9, 0
    %p97 = por %p95, %p96
    %p98 = scmp.ne.s32.totalorder %s87, %s90
    %p99 = scmp.eq.s32.totalorder %s14, 1
    %p100 = por %p98, %p99
    %p101 = scmp.ne.s32.totalorder %s90, %s91
    %p102 = scmp.eq.s32.totalorder %s14, 0
    %p103 = por %p101, %p102
    %p104 = scmp.ne.s32.totalorder %s90, %s91
    %p105 = scmp.eq.s32.totalorder %s15, 1
    %p106 = por %p104, %p105
    %p108 = scmp.ne.s32.totalorder %s91, %s107
    %p109 = scmp.eq.s32.totalorder %s15, 0
    %p110 = por %p108, %p109
    %p111 = scmp.le.s32.totalorder 1, %s9
    %p112 = scmp.lt.s32.totalorder %s9, 3
    %p113 = pnand %p111, %p112
    %p114 = pneg %p113
    // Predicated region
    $region9: #{forward.3} parent=5 // pred_check
      _
    $region10: #{forward.3} parent=5 // pred_check_branch
      %116 = sbr.rel (%p113) target = $region12
    $region11: #{forward.3} parent=5 // pred_region
      %s117 = ssub.s32 %s9, 1
      // Predicated region
      $region13: #{forward.3} parent=11 // pred_check
        %p118 = pneg %p56
      $region14: #{forward.3} parent=11 // pred_check_branch
        %120 = sbr.rel (%p118) target = $region16
      $region15: #{forward.3} parent=11 // pred_region
        _
      $region16: #{forward.3} parent=11 // pred_fallthru
        _
      // Predicated region
      $region17: #{forward.3} parent=11 // pred_check
        %p121 = pneg %p77
      $region18: #{forward.3} parent=11 // pred_check_branch
        %123 = sbr.rel (%p121) target = $region20
      $region19: #{forward.3} parent=11 // pred_region
        _
      $region20: #{forward.3} parent=11 // pred_fallthru
        _
    $region12: #{forward.3} parent=5 // pred_fallthru
      _
    %p124 = scmp.lt.s32.totalorder %s9, 2
    // Predicated region
    $region21: #{forward.3} parent=5 // pred_check
      %p125 = pneg %p124
    $region22: #{forward.3} parent=5 // pred_check_branch
      %127 = sbr.rel (%p125) target = $region24
    $region23: #{forward.3} parent=5 // pred_region
      // Predicated region
      $region25: #{forward.3} parent=23 // pred_check
        %p128 = pneg %p29
      $region26: #{forward.3} parent=23 // pred_check_branch
        %130 = sbr.rel (%p128) target = $region28
      $region27: #{forward.3} parent=23 // pred_region
        %p131 = scmp.lt.s32.totalorder %s9, 1
        %s132 = scalar_select %p131, %s9, 1
        %s133 = smul.addr %s132, 512
        %s134 = smul.addr %s133, 8
        %s135 = scalar_lea.vmem %s0, %s134
      $region28: #{forward.3} parent=23 // pred_fallthru
        _
    $region24: #{forward.3} parent=5 // pred_fallthru
      _
    %p136 = scmp.le.s32.totalorder 1, %s9
    %p137 = scmp.lt.s32.totalorder %s9, 3
    %p138 = pnand %p136, %p137
    %p139 = pneg %p138
    // Predicated region
    $region29: #{forward.3} parent=5 // pred_check
      _
    $region30: #{forward.3} parent=5 // pred_check_branch
      %141 = sbr.rel (%p138) target = $region32
    $region31: #{forward.3} parent=5 // pred_region
      %s142 = ssub.s32 %s9, 1
      %p143 = scmp.lt.s32.totalorder %s14, 1
      %s144 = scalar_select %p143, %s14, 1
      %s145 = smul.addr %s144, 512
      %s146 = smul.addr %s145, 8
      %s147 = scalar_lea.vmem %s0, %s146
      %p148 = pneg %p35
      %p149 = pneg %p32
      %p150 = pneg %p56
      %p151 = pneg %p53
      %p152 = pneg %p77
      %p153 = pneg %p74
      %p154 = pneg %p103
      %p155 = pneg %p100
      %p156 = scmp.lt.s32.totalorder %s14, 1
      %s157 = scalar_select %p156, %s14, 1
      %s158 = smul.addr %s157, 128
      %s159 = smul.addr %s158, 8
      %s160 = scalar_lea.vmem %s3, %s159
      %p161 = scmp.lt.s32.totalorder %s14, 1
      %s162 = scalar_select %p161, %s14, 1
      %s163 = smul.addr %s162, 512
      %s164 = smul.addr %s163, 8
      %s165 = scalar_lea.vmem %s0, %s164
      %p166 = scmp.lt.s32.totalorder %s14, 1
      %s167 = scalar_select %p166, %s14, 1
      %s168 = smul.addr %s167, 128
      %s169 = smul.addr %s168, 8
      %s170 = scalar_lea.vmem %s3, %s169
      %v171 = vld [vmem:[%s165] sm:$0xff]
      %v172 = vld [vmem:[%s165 + $0x8] sm:$0xff]
      %v173 = vld [vmem:[%s165 + $0x10] sm:$0xff]
      %v174 = vld [vmem:[%s165 + $0x18] sm:$0xff]
      %v175 = vld [vmem:[%s165 + $0x20] sm:$0xff]
      %v176 = vld [vmem:[%s165 + $0x28] sm:$0xff]
      %v177 = vld [vmem:[%s165 + $0x30] sm:$0xff]
      %v178 = vld [vmem:[%s165 + $0x38] sm:$0xff]
      %v179 = vld [vmem:[%s165 + $0x40] sm:$0xff]
      %v180 = vld [vmem:[%s165 + $0x48] sm:$0xff]
      %v181 = vld [vmem:[%s165 + $0x50] sm:$0xff]
      %v182 = vld [vmem:[%s165 + $0x58] sm:$0xff]
      %v183 = vld [vmem:[%s165 + $0x60] sm:$0xff]
      %v184 = vld [vmem:[%s165 + $0x68] sm:$0xff]
      %v185 = vld [vmem:[%s165 + $0x70] sm:$0xff]
      %v186 = vld [vmem:[%s165 + $0x78] sm:$0xff]
      %v187 = vld [vmem:[%s165 + $0x80] sm:$0xff]
      %v188 = vld [vmem:[%s165 + $0x88] sm:$0xff]
      %v189 = vld [vmem:[%s165 + $0x90] sm:$0xff]
      %v190 = vld [vmem:[%s165 + $0x98] sm:$0xff]
      %v191 = vld [vmem:[%s165 + $0xa0] sm:$0xff]
      %v192 = vld [vmem:[%s165 + $0xa8] sm:$0xff]
      %v193 = vld [vmem:[%s165 + $0xb0] sm:$0xff]
      %v194 = vld [vmem:[%s165 + $0xb8] sm:$0xff]
      %v195 = vld [vmem:[%s165 + $0xc0] sm:$0xff]
      %v196 = vld [vmem:[%s165 + $0xc8] sm:$0xff]
      %v197 = vld [vmem:[%s165 + $0xd0] sm:$0xff]
      %v198 = vld [vmem:[%s165 + $0xd8] sm:$0xff]
      %v199 = vld [vmem:[%s165 + $0xe0] sm:$0xff]
      %v200 = vld [vmem:[%s165 + $0xe8] sm:$0xff]
      %v201 = vld [vmem:[%s165 + $0xf0] sm:$0xff]
      %v202 = vld [vmem:[%s165 + $0xf8] sm:$0xff]
      %v203 = vld [vmem:[%s165 + $0x100] sm:$0xff]
      %v204 = vld [vmem:[%s165 + $0x108] sm:$0xff]
      %v205 = vld [vmem:[%s165 + $0x110] sm:$0xff]
      %v206 = vld [vmem:[%s165 + $0x118] sm:$0xff]
      %v207 = vld [vmem:[%s165 + $0x120] sm:$0xff]
      %v208 = vld [vmem:[%s165 + $0x128] sm:$0xff]
      %v209 = vld [vmem:[%s165 + $0x130] sm:$0xff]
      %v210 = vld [vmem:[%s165 + $0x138] sm:$0xff]
      %v211 = vld [vmem:[%s165 + $0x140] sm:$0xff]
      %v212 = vld [vmem:[%s165 + $0x148] sm:$0xff]
      %v213 = vld [vmem:[%s165 + $0x150] sm:$0xff]
      %v214 = vld [vmem:[%s165 + $0x158] sm:$0xff]
      %v215 = vld [vmem:[%s165 + $0x160] sm:$0xff]
      %v216 = vld [vmem:[%s165 + $0x168] sm:$0xff]
      %v217 = vld [vmem:[%s165 + $0x170] sm:$0xff]
      %v218 = vld [vmem:[%s165 + $0x178] sm:$0xff]
      %v219 = vld [vmem:[%s165 + $0x180] sm:$0xff]
      %v220 = vld [vmem:[%s165 + $0x188] sm:$0xff]
      %v221 = vld [vmem:[%s165 + $0x190] sm:$0xff]
      %v222 = vld [vmem:[%s165 + $0x198] sm:$0xff]
      %v223 = vld [vmem:[%s165 + $0x1a0] sm:$0xff]
      %v224 = vld [vmem:[%s165 + $0x1a8] sm:$0xff]
      %v225 = vld [vmem:[%s165 + $0x1b0] sm:$0xff]
      %v226 = vld [vmem:[%s165 + $0x1b8] sm:$0xff]
      %v227 = vld [vmem:[%s165 + $0x1c0] sm:$0xff]
      %v228 = vld [vmem:[%s165 + $0x1c8] sm:$0xff]
      %v229 = vld [vmem:[%s165 + $0x1d0] sm:$0xff]
      %v230 = vld [vmem:[%s165 + $0x1d8] sm:$0xff]
      %v231 = vld [vmem:[%s165 + $0x1e0] sm:$0xff]
      %v232 = vld [vmem:[%s165 + $0x1e8] sm:$0xff]
      %v233 = vld [vmem:[%s165 + $0x1f0] sm:$0xff]
      %v234 = vld [vmem:[%s165 + $0x1f8] sm:$0xff]
      %v235 = vld [vmem:[%s165 + $0x200] sm:$0xff]
      %v236 = vld [vmem:[%s165 + $0x208] sm:$0xff]
      %v237 = vld [vmem:[%s165 + $0x210] sm:$0xff]
      %v238 = vld [vmem:[%s165 + $0x218] sm:$0xff]
      %v239 = vld [vmem:[%s165 + $0x220] sm:$0xff]
      %v240 = vld [vmem:[%s165 + $0x228] sm:$0xff]
      %v241 = vld [vmem:[%s165 + $0x230] sm:$0xff]
      %v242 = vld [vmem:[%s165 + $0x238] sm:$0xff]
      %v243 = vld [vmem:[%s165 + $0x240] sm:$0xff]
      %v244 = vld [vmem:[%s165 + $0x248] sm:$0xff]
      %v245 = vld [vmem:[%s165 + $0x250] sm:$0xff]
      %v246 = vld [vmem:[%s165 + $0x258] sm:$0xff]
      %v247 = vld [vmem:[%s165 + $0x260] sm:$0xff]
      %v248 = vld [vmem:[%s165 + $0x268] sm:$0xff]
      %v249 = vld [vmem:[%s165 + $0x270] sm:$0xff]
      %v250 = vld [vmem:[%s165 + $0x278] sm:$0xff]
      %v251 = vld [vmem:[%s165 + $0x280] sm:$0xff]
      %v252 = vld [vmem:[%s165 + $0x288] sm:$0xff]
      %v253 = vld [vmem:[%s165 + $0x290] sm:$0xff]
      %v254 = vld [vmem:[%s165 + $0x298] sm:$0xff]
      %v255 = vld [vmem:[%s165 + $0x2a0] sm:$0xff]
      %v256 = vld [vmem:[%s165 + $0x2a8] sm:$0xff]
      %v257 = vld [vmem:[%s165 + $0x2b0] sm:$0xff]
      %v258 = vld [vmem:[%s165 + $0x2b8] sm:$0xff]
      %v259 = vld [vmem:[%s165 + $0x2c0] sm:$0xff]
      %v260 = vld [vmem:[%s165 + $0x2c8] sm:$0xff]
      %v261 = vld [vmem:[%s165 + $0x2d0] sm:$0xff]
      %v262 = vld [vmem:[%s165 + $0x2d8] sm:$0xff]
      %v263 = vld [vmem:[%s165 + $0x2e0] sm:$0xff]
      %v264 = vld [vmem:[%s165 + $0x2e8] sm:$0xff]
      %v265 = vld [vmem:[%s165 + $0x2f0] sm:$0xff]
      %v266 = vld [vmem:[%s165 + $0x2f8] sm:$0xff]
      %v267 = vld [vmem:[%s165 + $0x300] sm:$0xff]
      %v268 = vld [vmem:[%s165 + $0x308] sm:$0xff]
      %v269 = vld [vmem:[%s165 + $0x310] sm:$0xff]
      %v270 = vld [vmem:[%s165 + $0x318] sm:$0xff]
      %v271 = vld [vmem:[%s165 + $0x320] sm:$0xff]
      %v272 = vld [vmem:[%s165 + $0x328] sm:$0xff]
      %v273 = vld [vmem:[%s165 + $0x330] sm:$0xff]
      %v274 = vld [vmem:[%s165 + $0x338] sm:$0xff]
      %v275 = vld [vmem:[%s165 + $0x340] sm:$0xff]
      %v276 = vld [vmem:[%s165 + $0x348] sm:$0xff]
      %v277 = vld [vmem:[%s165 + $0x350] sm:$0xff]
      %v278 = vld [vmem:[%s165 + $0x358] sm:$0xff]
      %v279 = vld [vmem:[%s165 + $0x360] sm:$0xff]
      %v280 = vld [vmem:[%s165 + $0x368] sm:$0xff]
      %v281 = vld [vmem:[%s165 + $0x370] sm:$0xff]
      %v282 = vld [vmem:[%s165 + $0x378] sm:$0xff]
      %v283 = vld [vmem:[%s165 + $0x380] sm:$0xff]
      %v284 = vld [vmem:[%s165 + $0x388] sm:$0xff]
      %v285 = vld [vmem:[%s165 + $0x390] sm:$0xff]
      %v286 = vld [vmem:[%s165 + $0x398] sm:$0xff]
      %v287 = vld [vmem:[%s165 + $0x3a0] sm:$0xff]
      %v288 = vld [vmem:[%s165 + $0x3a8] sm:$0xff]
      %v289 = vld [vmem:[%s165 + $0x3b0] sm:$0xff]
      %v290 = vld [vmem:[%s165 + $0x3b8] sm:$0xff]
      %v291 = vld [vmem:[%s165 + $0x3c0] sm:$0xff]
      %v292 = vld [vmem:[%s165 + $0x3c8] sm:$0xff]
      %v293 = vld [vmem:[%s165 + $0x3d0] sm:$0xff]
      %v294 = vld [vmem:[%s165 + $0x3d8] sm:$0xff]
      %v295 = vld [vmem:[%s165 + $0x3e0] sm:$0xff]
      %v296 = vld [vmem:[%s165 + $0x3e8] sm:$0xff]
      %v297 = vld [vmem:[%s165 + $0x3f0] sm:$0xff]
      %v298 = vld [vmem:[%s165 + $0x3f8] sm:$0xff]
      %v299 = vld [vmem:[%s165 + $0x400] sm:$0xff]
      %v300 = vld [vmem:[%s165 + $0x408] sm:$0xff]
      %v301 = vld [vmem:[%s165 + $0x410] sm:$0xff]
      %v302 = vld [vmem:[%s165 + $0x418] sm:$0xff]
      %v303 = vld [vmem:[%s165 + $0x420] sm:$0xff]
      %v304 = vld [vmem:[%s165 + $0x428] sm:$0xff]
      %v305 = vld [vmem:[%s165 + $0x430] sm:$0xff]
      %v306 = vld [vmem:[%s165 + $0x438] sm:$0xff]
      %v307 = vld [vmem:[%s165 + $0x440] sm:$0xff]
      %v308 = vld [vmem:[%s165 + $0x448] sm:$0xff]
      %v309 = vld [vmem:[%s165 + $0x450] sm:$0xff]
      %v310 = vld [vmem:[%s165 + $0x458] sm:$0xff]
      %v311 = vld [vmem:[%s165 + $0x460] sm:$0xff]
      %v312 = vld [vmem:[%s165 + $0x468] sm:$0xff]
      %v313 = vld [vmem:[%s165 + $0x470] sm:$0xff]
      %v314 = vld [vmem:[%s165 + $0x478] sm:$0xff]
      %v315 = vld [vmem:[%s165 + $0x480] sm:$0xff]
      %v316 = vld [vmem:[%s165 + $0x488] sm:$0xff]
      %v317 = vld [vmem:[%s165 + $0x490] sm:$0xff]
      %v318 = vld [vmem:[%s165 + $0x498] sm:$0xff]
      %v319 = vld [vmem:[%s165 + $0x4a0] sm:$0xff]
      %v320 = vld [vmem:[%s165 + $0x4a8] sm:$0xff]
      %v321 = vld [vmem:[%s165 + $0x4b0] sm:$0xff]
      %v322 = vld [vmem:[%s165 + $0x4b8] sm:$0xff]
      %v323 = vld [vmem:[%s165 + $0x4c0] sm:$0xff]
      %v324 = vld [vmem:[%s165 + $0x4c8] sm:$0xff]
      %v325 = vld [vmem:[%s165 + $0x4d0] sm:$0xff]
      %v326 = vld [vmem:[%s165 + $0x4d8] sm:$0xff]
      %v327 = vld [vmem:[%s165 + $0x4e0] sm:$0xff]
      %v328 = vld [vmem:[%s165 + $0x4e8] sm:$0xff]
      %v329 = vld [vmem:[%s165 + $0x4f0] sm:$0xff]
      %v330 = vld [vmem:[%s165 + $0x4f8] sm:$0xff]
      %v331 = vld [vmem:[%s165 + $0x500] sm:$0xff]
      %v332 = vld [vmem:[%s165 + $0x508] sm:$0xff]
      %v333 = vld [vmem:[%s165 + $0x510] sm:$0xff]
      %v334 = vld [vmem:[%s165 + $0x518] sm:$0xff]
      %v335 = vld [vmem:[%s165 + $0x520] sm:$0xff]
      %v336 = vld [vmem:[%s165 + $0x528] sm:$0xff]
      %v337 = vld [vmem:[%s165 + $0x530] sm:$0xff]
      %v338 = vld [vmem:[%s165 + $0x538] sm:$0xff]
      %v339 = vld [vmem:[%s165 + $0x540] sm:$0xff]
      %v340 = vld [vmem:[%s165 + $0x548] sm:$0xff]
      %v341 = vld [vmem:[%s165 + $0x550] sm:$0xff]
      %v342 = vld [vmem:[%s165 + $0x558] sm:$0xff]
      %v343 = vld [vmem:[%s165 + $0x560] sm:$0xff]
      %v344 = vld [vmem:[%s165 + $0x568] sm:$0xff]
      %v345 = vld [vmem:[%s165 + $0x570] sm:$0xff]
      %v346 = vld [vmem:[%s165 + $0x578] sm:$0xff]
      %v347 = vld [vmem:[%s165 + $0x580] sm:$0xff]
      %v348 = vld [vmem:[%s165 + $0x588] sm:$0xff]
      %v349 = vld [vmem:[%s165 + $0x590] sm:$0xff]
      %v350 = vld [vmem:[%s165 + $0x598] sm:$0xff]
      %v351 = vld [vmem:[%s165 + $0x5a0] sm:$0xff]
      %v352 = vld [vmem:[%s165 + $0x5a8] sm:$0xff]
      %v353 = vld [vmem:[%s165 + $0x5b0] sm:$0xff]
      %v354 = vld [vmem:[%s165 + $0x5b8] sm:$0xff]
      %v355 = vld [vmem:[%s165 + $0x5c0] sm:$0xff]
      %v356 = vld [vmem:[%s165 + $0x5c8] sm:$0xff]
      %v357 = vld [vmem:[%s165 + $0x5d0] sm:$0xff]
      %v358 = vld [vmem:[%s165 + $0x5d8] sm:$0xff]
      %v359 = vld [vmem:[%s165 + $0x5e0] sm:$0xff]
      %v360 = vld [vmem:[%s165 + $0x5e8] sm:$0xff]
      %v361 = vld [vmem:[%s165 + $0x5f0] sm:$0xff]
      %v362 = vld [vmem:[%s165 + $0x5f8] sm:$0xff]
      %v363 = vld [vmem:[%s165 + $0x600] sm:$0xff]
      %v364 = vld [vmem:[%s165 + $0x608] sm:$0xff]
      %v365 = vld [vmem:[%s165 + $0x610] sm:$0xff]
      %v366 = vld [vmem:[%s165 + $0x618] sm:$0xff]
      %v367 = vld [vmem:[%s165 + $0x620] sm:$0xff]
      %v368 = vld [vmem:[%s165 + $0x628] sm:$0xff]
      %v369 = vld [vmem:[%s165 + $0x630] sm:$0xff]
      %v370 = vld [vmem:[%s165 + $0x638] sm:$0xff]
      %v371 = vld [vmem:[%s165 + $0x640] sm:$0xff]
      %v372 = vld [vmem:[%s165 + $0x648] sm:$0xff]
      %v373 = vld [vmem:[%s165 + $0x650] sm:$0xff]
      %v374 = vld [vmem:[%s165 + $0x658] sm:$0xff]
      %v375 = vld [vmem:[%s165 + $0x660] sm:$0xff]
      %v376 = vld [vmem:[%s165 + $0x668] sm:$0xff]
      %v377 = vld [vmem:[%s165 + $0x670] sm:$0xff]
      %v378 = vld [vmem:[%s165 + $0x678] sm:$0xff]
      %v379 = vld [vmem:[%s165 + $0x680] sm:$0xff]
      %v380 = vld [vmem:[%s165 + $0x688] sm:$0xff]
      %v381 = vld [vmem:[%s165 + $0x690] sm:$0xff]
      %v382 = vld [vmem:[%s165 + $0x698] sm:$0xff]
      %v383 = vld [vmem:[%s165 + $0x6a0] sm:$0xff]
      %v384 = vld [vmem:[%s165 + $0x6a8] sm:$0xff]
      %v385 = vld [vmem:[%s165 + $0x6b0] sm:$0xff]
      %v386 = vld [vmem:[%s165 + $0x6b8] sm:$0xff]
      %v387 = vld [vmem:[%s165 + $0x6c0] sm:$0xff]
      %v388 = vld [vmem:[%s165 + $0x6c8] sm:$0xff]
      %v389 = vld [vmem:[%s165 + $0x6d0] sm:$0xff]
      %v390 = vld [vmem:[%s165 + $0x6d8] sm:$0xff]
      %v391 = vld [vmem:[%s165 + $0x6e0] sm:$0xff]
      %v392 = vld [vmem:[%s165 + $0x6e8] sm:$0xff]
      %v393 = vld [vmem:[%s165 + $0x6f0] sm:$0xff]
      %v394 = vld [vmem:[%s165 + $0x6f8] sm:$0xff]
      %v395 = vld [vmem:[%s165 + $0x700] sm:$0xff]
      %v396 = vld [vmem:[%s165 + $0x708] sm:$0xff]
      %v397 = vld [vmem:[%s165 + $0x710] sm:$0xff]
      %v398 = vld [vmem:[%s165 + $0x718] sm:$0xff]
      %v399 = vld [vmem:[%s165 + $0x720] sm:$0xff]
      %v400 = vld [vmem:[%s165 + $0x728] sm:$0xff]
      %v401 = vld [vmem:[%s165 + $0x730] sm:$0xff]
      %v402 = vld [vmem:[%s165 + $0x738] sm:$0xff]
      %v403 = vld [vmem:[%s165 + $0x740] sm:$0xff]
      %v404 = vld [vmem:[%s165 + $0x748] sm:$0xff]
      %v405 = vld [vmem:[%s165 + $0x750] sm:$0xff]
      %v406 = vld [vmem:[%s165 + $0x758] sm:$0xff]
      %v407 = vld [vmem:[%s165 + $0x760] sm:$0xff]
      %v408 = vld [vmem:[%s165 + $0x768] sm:$0xff]
      %v409 = vld [vmem:[%s165 + $0x770] sm:$0xff]
      %v410 = vld [vmem:[%s165 + $0x778] sm:$0xff]
      %v411 = vld [vmem:[%s165 + $0x780] sm:$0xff]
      %v412 = vld [vmem:[%s165 + $0x788] sm:$0xff]
      %v413 = vld [vmem:[%s165 + $0x790] sm:$0xff]
      %v414 = vld [vmem:[%s165 + $0x798] sm:$0xff]
      %v415 = vld [vmem:[%s165 + $0x7a0] sm:$0xff]
      %v416 = vld [vmem:[%s165 + $0x7a8] sm:$0xff]
      %v417 = vld [vmem:[%s165 + $0x7b0] sm:$0xff]
      %v418 = vld [vmem:[%s165 + $0x7b8] sm:$0xff]
      %v419 = vld [vmem:[%s165 + $0x7c0] sm:$0xff]
      %v420 = vld [vmem:[%s165 + $0x7c8] sm:$0xff]
      %v421 = vld [vmem:[%s165 + $0x7d0] sm:$0xff]
      %v422 = vld [vmem:[%s165 + $0x7d8] sm:$0xff]
      %v423 = vld [vmem:[%s165 + $0x7e0] sm:$0xff]
      %v424 = vld [vmem:[%s165 + $0x7e8] sm:$0xff]
      %v425 = vld [vmem:[%s165 + $0x7f0] sm:$0xff]
      %v426 = vld [vmem:[%s165 + $0x7f8] sm:$0xff]
      %v427 = vld [vmem:[%s165 + $0x800] sm:$0xff]
      %v428 = vld [vmem:[%s165 + $0x808] sm:$0xff]
      %v429 = vld [vmem:[%s165 + $0x810] sm:$0xff]
      %v430 = vld [vmem:[%s165 + $0x818] sm:$0xff]
      %v431 = vld [vmem:[%s165 + $0x820] sm:$0xff]
      %v432 = vld [vmem:[%s165 + $0x828] sm:$0xff]
      %v433 = vld [vmem:[%s165 + $0x830] sm:$0xff]
      %v434 = vld [vmem:[%s165 + $0x838] sm:$0xff]
      %v435 = vld [vmem:[%s165 + $0x840] sm:$0xff]
      %v436 = vld [vmem:[%s165 + $0x848] sm:$0xff]
      %v437 = vld [vmem:[%s165 + $0x850] sm:$0xff]
      %v438 = vld [vmem:[%s165 + $0x858] sm:$0xff]
      %v439 = vld [vmem:[%s165 + $0x860] sm:$0xff]
      %v440 = vld [vmem:[%s165 + $0x868] sm:$0xff]
      %v441 = vld [vmem:[%s165 + $0x870] sm:$0xff]
      %v442 = vld [vmem:[%s165 + $0x878] sm:$0xff]
      %v443 = vld [vmem:[%s165 + $0x880] sm:$0xff]
      %v444 = vld [vmem:[%s165 + $0x888] sm:$0xff]
      %v445 = vld [vmem:[%s165 + $0x890] sm:$0xff]
      %v446 = vld [vmem:[%s165 + $0x898] sm:$0xff]
      %v447 = vld [vmem:[%s165 + $0x8a0] sm:$0xff]
      %v448 = vld [vmem:[%s165 + $0x8a8] sm:$0xff]
      %v449 = vld [vmem:[%s165 + $0x8b0] sm:$0xff]
      %v450 = vld [vmem:[%s165 + $0x8b8] sm:$0xff]
      %v451 = vld [vmem:[%s165 + $0x8c0] sm:$0xff]
      %v452 = vld [vmem:[%s165 + $0x8c8] sm:$0xff]
      %v453 = vld [vmem:[%s165 + $0x8d0] sm:$0xff]
      %v454 = vld [vmem:[%s165 + $0x8d8] sm:$0xff]
      %v455 = vld [vmem:[%s165 + $0x8e0] sm:$0xff]
      %v456 = vld [vmem:[%s165 + $0x8e8] sm:$0xff]
      %v457 = vld [vmem:[%s165 + $0x8f0] sm:$0xff]
      %v458 = vld [vmem:[%s165 + $0x8f8] sm:$0xff]
      %v459 = vld [vmem:[%s165 + $0x900] sm:$0xff]
      %v460 = vld [vmem:[%s165 + $0x908] sm:$0xff]
      %v461 = vld [vmem:[%s165 + $0x910] sm:$0xff]
      %v462 = vld [vmem:[%s165 + $0x918] sm:$0xff]
      %v463 = vld [vmem:[%s165 + $0x920] sm:$0xff]
      %v464 = vld [vmem:[%s165 + $0x928] sm:$0xff]
      %v465 = vld [vmem:[%s165 + $0x930] sm:$0xff]
      %v466 = vld [vmem:[%s165 + $0x938] sm:$0xff]
      %v467 = vld [vmem:[%s165 + $0x940] sm:$0xff]
      %v468 = vld [vmem:[%s165 + $0x948] sm:$0xff]
      %v469 = vld [vmem:[%s165 + $0x950] sm:$0xff]
      %v470 = vld [vmem:[%s165 + $0x958] sm:$0xff]
      %v471 = vld [vmem:[%s165 + $0x960] sm:$0xff]
      %v472 = vld [vmem:[%s165 + $0x968] sm:$0xff]
      %v473 = vld [vmem:[%s165 + $0x970] sm:$0xff]
      %v474 = vld [vmem:[%s165 + $0x978] sm:$0xff]
      %v475 = vld [vmem:[%s165 + $0x980] sm:$0xff]
      %v476 = vld [vmem:[%s165 + $0x988] sm:$0xff]
      %v477 = vld [vmem:[%s165 + $0x990] sm:$0xff]
      %v478 = vld [vmem:[%s165 + $0x998] sm:$0xff]
      %v479 = vld [vmem:[%s165 + $0x9a0] sm:$0xff]
      %v480 = vld [vmem:[%s165 + $0x9a8] sm:$0xff]
      %v481 = vld [vmem:[%s165 + $0x9b0] sm:$0xff]
      %v482 = vld [vmem:[%s165 + $0x9b8] sm:$0xff]
      %v483 = vld [vmem:[%s165 + $0x9c0] sm:$0xff]
      %v484 = vld [vmem:[%s165 + $0x9c8] sm:$0xff]
      %v485 = vld [vmem:[%s165 + $0x9d0] sm:$0xff]
      %v486 = vld [vmem:[%s165 + $0x9d8] sm:$0xff]
      %v487 = vld [vmem:[%s165 + $0x9e0] sm:$0xff]
      %v488 = vld [vmem:[%s165 + $0x9e8] sm:$0xff]
      %v489 = vld [vmem:[%s165 + $0x9f0] sm:$0xff]
      %v490 = vld [vmem:[%s165 + $0x9f8] sm:$0xff]
      %v491 = vld [vmem:[%s165 + $0xa00] sm:$0xff]
      %v492 = vld [vmem:[%s165 + $0xa08] sm:$0xff]
      %v493 = vld [vmem:[%s165 + $0xa10] sm:$0xff]
      %v494 = vld [vmem:[%s165 + $0xa18] sm:$0xff]
      %v495 = vld [vmem:[%s165 + $0xa20] sm:$0xff]
      %v496 = vld [vmem:[%s165 + $0xa28] sm:$0xff]
      %v497 = vld [vmem:[%s165 + $0xa30] sm:$0xff]
      %v498 = vld [vmem:[%s165 + $0xa38] sm:$0xff]
      %v499 = vld [vmem:[%s165 + $0xa40] sm:$0xff]
      %v500 = vld [vmem:[%s165 + $0xa48] sm:$0xff]
      %v501 = vld [vmem:[%s165 + $0xa50] sm:$0xff]
      %v502 = vld [vmem:[%s165 + $0xa58] sm:$0xff]
      %v503 = vld [vmem:[%s165 + $0xa60] sm:$0xff]
      %v504 = vld [vmem:[%s165 + $0xa68] sm:$0xff]
      %v505 = vld [vmem:[%s165 + $0xa70] sm:$0xff]
      %v506 = vld [vmem:[%s165 + $0xa78] sm:$0xff]
      %v507 = vld [vmem:[%s165 + $0xa80] sm:$0xff]
      %v508 = vld [vmem:[%s165 + $0xa88] sm:$0xff]
      %v509 = vld [vmem:[%s165 + $0xa90] sm:$0xff]
      %v510 = vld [vmem:[%s165 + $0xa98] sm:$0xff]
      %v511 = vld [vmem:[%s165 + $0xaa0] sm:$0xff]
      %v512 = vld [vmem:[%s165 + $0xaa8] sm:$0xff]
      %v513 = vld [vmem:[%s165 + $0xab0] sm:$0xff]
      %v514 = vld [vmem:[%s165 + $0xab8] sm:$0xff]
      %v515 = vld [vmem:[%s165 + $0xac0] sm:$0xff]
      %v516 = vld [vmem:[%s165 + $0xac8] sm:$0xff]
      %v517 = vld [vmem:[%s165 + $0xad0] sm:$0xff]
      %v518 = vld [vmem:[%s165 + $0xad8] sm:$0xff]
      %v519 = vld [vmem:[%s165 + $0xae0] sm:$0xff]
      %v520 = vld [vmem:[%s165 + $0xae8] sm:$0xff]
      %v521 = vld [vmem:[%s165 + $0xaf0] sm:$0xff]
      %v522 = vld [vmem:[%s165 + $0xaf8] sm:$0xff]
      %v523 = vld [vmem:[%s165 + $0xb00] sm:$0xff]
      %v524 = vld [vmem:[%s165 + $0xb08] sm:$0xff]
      %v525 = vld [vmem:[%s165 + $0xb10] sm:$0xff]
      %v526 = vld [vmem:[%s165 + $0xb18] sm:$0xff]
      %v527 = vld [vmem:[%s165 + $0xb20] sm:$0xff]
      %v528 = vld [vmem:[%s165 + $0xb28] sm:$0xff]
      %v529 = vld [vmem:[%s165 + $0xb30] sm:$0xff]
      %v530 = vld [vmem:[%s165 + $0xb38] sm:$0xff]
      %v531 = vld [vmem:[%s165 + $0xb40] sm:$0xff]
      %v532 = vld [vmem:[%s165 + $0xb48] sm:$0xff]
      %v533 = vld [vmem:[%s165 + $0xb50] sm:$0xff]
      %v534 = vld [vmem:[%s165 + $0xb58] sm:$0xff]
      %v535 = vld [vmem:[%s165 + $0xb60] sm:$0xff]
      %v536 = vld [vmem:[%s165 + $0xb68] sm:$0xff]
      %v537 = vld [vmem:[%s165 + $0xb70] sm:$0xff]
      %v538 = vld [vmem:[%s165 + $0xb78] sm:$0xff]
      %v539 = vld [vmem:[%s165 + $0xb80] sm:$0xff]
      %v540 = vld [vmem:[%s165 + $0xb88] sm:$0xff]
      %v541 = vld [vmem:[%s165 + $0xb90] sm:$0xff]
      %v542 = vld [vmem:[%s165 + $0xb98] sm:$0xff]
      %v543 = vld [vmem:[%s165 + $0xba0] sm:$0xff]
      %v544 = vld [vmem:[%s165 + $0xba8] sm:$0xff]
      %v545 = vld [vmem:[%s165 + $0xbb0] sm:$0xff]
      %v546 = vld [vmem:[%s165 + $0xbb8] sm:$0xff]
      %v547 = vld [vmem:[%s165 + $0xbc0] sm:$0xff]
      %v548 = vld [vmem:[%s165 + $0xbc8] sm:$0xff]
      %v549 = vld [vmem:[%s165 + $0xbd0] sm:$0xff]
      %v550 = vld [vmem:[%s165 + $0xbd8] sm:$0xff]
      %v551 = vld [vmem:[%s165 + $0xbe0] sm:$0xff]
      %v552 = vld [vmem:[%s165 + $0xbe8] sm:$0xff]
      %v553 = vld [vmem:[%s165 + $0xbf0] sm:$0xff]
      %v554 = vld [vmem:[%s165 + $0xbf8] sm:$0xff]
      %v555 = vld [vmem:[%s165 + $0xc00] sm:$0xff]
      %v556 = vld [vmem:[%s165 + $0xc08] sm:$0xff]
      %v557 = vld [vmem:[%s165 + $0xc10] sm:$0xff]
      %v558 = vld [vmem:[%s165 + $0xc18] sm:$0xff]
      %v559 = vld [vmem:[%s165 + $0xc20] sm:$0xff]
      %v560 = vld [vmem:[%s165 + $0xc28] sm:$0xff]
      %v561 = vld [vmem:[%s165 + $0xc30] sm:$0xff]
      %v562 = vld [vmem:[%s165 + $0xc38] sm:$0xff]
      %v563 = vld [vmem:[%s165 + $0xc40] sm:$0xff]
      %v564 = vld [vmem:[%s165 + $0xc48] sm:$0xff]
      %v565 = vld [vmem:[%s165 + $0xc50] sm:$0xff]
      %v566 = vld [vmem:[%s165 + $0xc58] sm:$0xff]
      %v567 = vld [vmem:[%s165 + $0xc60] sm:$0xff]
      %v568 = vld [vmem:[%s165 + $0xc68] sm:$0xff]
      %v569 = vld [vmem:[%s165 + $0xc70] sm:$0xff]
      %v570 = vld [vmem:[%s165 + $0xc78] sm:$0xff]
      %v571 = vld [vmem:[%s165 + $0xc80] sm:$0xff]
      %v572 = vld [vmem:[%s165 + $0xc88] sm:$0xff]
      %v573 = vld [vmem:[%s165 + $0xc90] sm:$0xff]
      %v574 = vld [vmem:[%s165 + $0xc98] sm:$0xff]
      %v575 = vld [vmem:[%s165 + $0xca0] sm:$0xff]
      %v576 = vld [vmem:[%s165 + $0xca8] sm:$0xff]
      %v577 = vld [vmem:[%s165 + $0xcb0] sm:$0xff]
      %v578 = vld [vmem:[%s165 + $0xcb8] sm:$0xff]
      %v579 = vld [vmem:[%s165 + $0xcc0] sm:$0xff]
      %v580 = vld [vmem:[%s165 + $0xcc8] sm:$0xff]
      %v581 = vld [vmem:[%s165 + $0xcd0] sm:$0xff]
      %v582 = vld [vmem:[%s165 + $0xcd8] sm:$0xff]
      %v583 = vld [vmem:[%s165 + $0xce0] sm:$0xff]
      %v584 = vld [vmem:[%s165 + $0xce8] sm:$0xff]
      %v585 = vld [vmem:[%s165 + $0xcf0] sm:$0xff]
      %v586 = vld [vmem:[%s165 + $0xcf8] sm:$0xff]
      %v587 = vld [vmem:[%s165 + $0xd00] sm:$0xff]
      %v588 = vld [vmem:[%s165 + $0xd08] sm:$0xff]
      %v589 = vld [vmem:[%s165 + $0xd10] sm:$0xff]
      %v590 = vld [vmem:[%s165 + $0xd18] sm:$0xff]
      %v591 = vld [vmem:[%s165 + $0xd20] sm:$0xff]
      %v592 = vld [vmem:[%s165 + $0xd28] sm:$0xff]
      %v593 = vld [vmem:[%s165 + $0xd30] sm:$0xff]
      %v594 = vld [vmem:[%s165 + $0xd38] sm:$0xff]
      %v595 = vld [vmem:[%s165 + $0xd40] sm:$0xff]
      %v596 = vld [vmem:[%s165 + $0xd48] sm:$0xff]
      %v597 = vld [vmem:[%s165 + $0xd50] sm:$0xff]
      %v598 = vld [vmem:[%s165 + $0xd58] sm:$0xff]
      %v599 = vld [vmem:[%s165 + $0xd60] sm:$0xff]
      %v600 = vld [vmem:[%s165 + $0xd68] sm:$0xff]
      %v601 = vld [vmem:[%s165 + $0xd70] sm:$0xff]
      %v602 = vld [vmem:[%s165 + $0xd78] sm:$0xff]
      %v603 = vld [vmem:[%s165 + $0xd80] sm:$0xff]
      %v604 = vld [vmem:[%s165 + $0xd88] sm:$0xff]
      %v605 = vld [vmem:[%s165 + $0xd90] sm:$0xff]
      %v606 = vld [vmem:[%s165 + $0xd98] sm:$0xff]
      %v607 = vld [vmem:[%s165 + $0xda0] sm:$0xff]
      %v608 = vld [vmem:[%s165 + $0xda8] sm:$0xff]
      %v609 = vld [vmem:[%s165 + $0xdb0] sm:$0xff]
      %v610 = vld [vmem:[%s165 + $0xdb8] sm:$0xff]
      %v611 = vld [vmem:[%s165 + $0xdc0] sm:$0xff]
      %v612 = vld [vmem:[%s165 + $0xdc8] sm:$0xff]
      %v613 = vld [vmem:[%s165 + $0xdd0] sm:$0xff]
      %v614 = vld [vmem:[%s165 + $0xdd8] sm:$0xff]
      %v615 = vld [vmem:[%s165 + $0xde0] sm:$0xff]
      %v616 = vld [vmem:[%s165 + $0xde8] sm:$0xff]
      %v617 = vld [vmem:[%s165 + $0xdf0] sm:$0xff]
      %v618 = vld [vmem:[%s165 + $0xdf8] sm:$0xff]
      %v619 = vld [vmem:[%s165 + $0xe00] sm:$0xff]
      %v620 = vld [vmem:[%s165 + $0xe08] sm:$0xff]
      %v621 = vld [vmem:[%s165 + $0xe10] sm:$0xff]
      %v622 = vld [vmem:[%s165 + $0xe18] sm:$0xff]
      %v623 = vld [vmem:[%s165 + $0xe20] sm:$0xff]
      %v624 = vld [vmem:[%s165 + $0xe28] sm:$0xff]
      %v625 = vld [vmem:[%s165 + $0xe30] sm:$0xff]
      %v626 = vld [vmem:[%s165 + $0xe38] sm:$0xff]
      %v627 = vld [vmem:[%s165 + $0xe40] sm:$0xff]
      %v628 = vld [vmem:[%s165 + $0xe48] sm:$0xff]
      %v629 = vld [vmem:[%s165 + $0xe50] sm:$0xff]
      %v630 = vld [vmem:[%s165 + $0xe58] sm:$0xff]
      %v631 = vld [vmem:[%s165 + $0xe60] sm:$0xff]
      %v632 = vld [vmem:[%s165 + $0xe68] sm:$0xff]
      %v633 = vld [vmem:[%s165 + $0xe70] sm:$0xff]
      %v634 = vld [vmem:[%s165 + $0xe78] sm:$0xff]
      %v635 = vld [vmem:[%s165 + $0xe80] sm:$0xff]
      %v636 = vld [vmem:[%s165 + $0xe88] sm:$0xff]
      %v637 = vld [vmem:[%s165 + $0xe90] sm:$0xff]
      %v638 = vld [vmem:[%s165 + $0xe98] sm:$0xff]
      %v639 = vld [vmem:[%s165 + $0xea0] sm:$0xff]
      %v640 = vld [vmem:[%s165 + $0xea8] sm:$0xff]
      %v641 = vld [vmem:[%s165 + $0xeb0] sm:$0xff]
      %v642 = vld [vmem:[%s165 + $0xeb8] sm:$0xff]
      %v643 = vld [vmem:[%s165 + $0xec0] sm:$0xff]
      %v644 = vld [vmem:[%s165 + $0xec8] sm:$0xff]
      %v645 = vld [vmem:[%s165 + $0xed0] sm:$0xff]
      %v646 = vld [vmem:[%s165 + $0xed8] sm:$0xff]
      %v647 = vld [vmem:[%s165 + $0xee0] sm:$0xff]
      %v648 = vld [vmem:[%s165 + $0xee8] sm:$0xff]
      %v649 = vld [vmem:[%s165 + $0xef0] sm:$0xff]
      %v650 = vld [vmem:[%s165 + $0xef8] sm:$0xff]
      %v651 = vld [vmem:[%s165 + $0xf00] sm:$0xff]
      %v652 = vld [vmem:[%s165 + $0xf08] sm:$0xff]
      %v653 = vld [vmem:[%s165 + $0xf10] sm:$0xff]
      %v654 = vld [vmem:[%s165 + $0xf18] sm:$0xff]
      %v655 = vld [vmem:[%s165 + $0xf20] sm:$0xff]
      %v656 = vld [vmem:[%s165 + $0xf28] sm:$0xff]
      %v657 = vld [vmem:[%s165 + $0xf30] sm:$0xff]
      %v658 = vld [vmem:[%s165 + $0xf38] sm:$0xff]
      %v659 = vld [vmem:[%s165 + $0xf40] sm:$0xff]
      %v660 = vld [vmem:[%s165 + $0xf48] sm:$0xff]
      %v661 = vld [vmem:[%s165 + $0xf50] sm:$0xff]
      %v662 = vld [vmem:[%s165 + $0xf58] sm:$0xff]
      %v663 = vld [vmem:[%s165 + $0xf60] sm:$0xff]
      %v664 = vld [vmem:[%s165 + $0xf68] sm:$0xff]
      %v665 = vld [vmem:[%s165 + $0xf70] sm:$0xff]
      %v666 = vld [vmem:[%s165 + $0xf78] sm:$0xff]
      %v667 = vld [vmem:[%s165 + $0xf80] sm:$0xff]
      %v668 = vld [vmem:[%s165 + $0xf88] sm:$0xff]
      %v669 = vld [vmem:[%s165 + $0xf90] sm:$0xff]
      %v670 = vld [vmem:[%s165 + $0xf98] sm:$0xff]
      %v671 = vld [vmem:[%s165 + $0xfa0] sm:$0xff]
      %v672 = vld [vmem:[%s165 + $0xfa8] sm:$0xff]
      %v673 = vld [vmem:[%s165 + $0xfb0] sm:$0xff]
      %v674 = vld [vmem:[%s165 + $0xfb8] sm:$0xff]
      %v675 = vld [vmem:[%s165 + $0xfc0] sm:$0xff]
      %v676 = vld [vmem:[%s165 + $0xfc8] sm:$0xff]
      %v677 = vld [vmem:[%s165 + $0xfd0] sm:$0xff]
      %v678 = vld [vmem:[%s165 + $0xfd8] sm:$0xff]
      %v679 = vld [vmem:[%s165 + $0xfe0] sm:$0xff]
      %v680 = vld [vmem:[%s165 + $0xfe8] sm:$0xff]
      %v681 = vld [vmem:[%s165 + $0xff0] sm:$0xff]
      %v682 = vld [vmem:[%s165 + $0xff8] sm:$0xff]
      %v683 = vld [vmem:[%s1] sm:$0xff]
      %v684 = vld [vmem:[%s1 + $0x8] sm:$0xff]
      %v685 = vld [vmem:[%s1 + $0x10] sm:$0xff]
      %v686 = vld [vmem:[%s1 + $0x18] sm:$0x7]
      %vm687 = vcmask 220160
      %v689 = vsel %vm687, %v171, 0
      %v692 = vsel %vm687, %v172, 0
      %v695 = vsel %vm687, %v173, 0
      %v698 = vsel %vm687, %v174, 0
      %v701 = vsel %vm687, %v175, 0
      %v704 = vsel %vm687, %v176, 0
      %v707 = vsel %vm687, %v177, 0
      %v710 = vsel %vm687, %v178, 0
      %v713 = vsel %vm687, %v179, 0
      %v716 = vsel %vm687, %v180, 0
      %v719 = vsel %vm687, %v181, 0
      %v722 = vsel %vm687, %v182, 0
      %v725 = vsel %vm687, %v183, 0
      %v728 = vsel %vm687, %v184, 0
      %v731 = vsel %vm687, %v185, 0
      %v734 = vsel %vm687, %v186, 0
      %v737 = vsel %vm687, %v187, 0
      %v740 = vsel %vm687, %v188, 0
      %v743 = vsel %vm687, %v189, 0
      %v746 = vsel %vm687, %v190, 0
      %v749 = vsel %vm687, %v191, 0
      %v752 = vsel %vm687, %v192, 0
      %v755 = vsel %vm687, %v193, 0
      %v758 = vsel %vm687, %v194, 0
      %v761 = vsel %vm687, %v195, 0
      %v764 = vsel %vm687, %v196, 0
      %v767 = vsel %vm687, %v197, 0
      %v770 = vsel %vm687, %v198, 0
      %v773 = vsel %vm687, %v199, 0
      %v776 = vsel %vm687, %v200, 0
      %v779 = vsel %vm687, %v201, 0
      %v782 = vsel %vm687, %v202, 0
      %v785 = vsel %vm687, %v203, 0
      %v788 = vsel %vm687, %v204, 0
      %v791 = vsel %vm687, %v205, 0
      %v794 = vsel %vm687, %v206, 0
      %v797 = vsel %vm687, %v207, 0
      %v800 = vsel %vm687, %v208, 0
      %v803 = vsel %vm687, %v209, 0
      %v806 = vsel %vm687, %v210, 0
      %v809 = vsel %vm687, %v211, 0
      %v812 = vsel %vm687, %v212, 0
      %v815 = vsel %vm687, %v213, 0
      %v818 = vsel %vm687, %v214, 0
      %v821 = vsel %vm687, %v215, 0
      %v824 = vsel %vm687, %v216, 0
      %v827 = vsel %vm687, %v217, 0
      %v830 = vsel %vm687, %v218, 0
      %v833 = vsel %vm687, %v219, 0
      %v836 = vsel %vm687, %v220, 0
      %v839 = vsel %vm687, %v221, 0
      %v842 = vsel %vm687, %v222, 0
      %v845 = vsel %vm687, %v223, 0
      %v848 = vsel %vm687, %v224, 0
      %v851 = vsel %vm687, %v225, 0
      %v854 = vsel %vm687, %v226, 0
      %v857 = vsel %vm687, %v227, 0
      %v860 = vsel %vm687, %v228, 0
      %v863 = vsel %vm687, %v229, 0
      %v866 = vsel %vm687, %v230, 0
      %v869 = vsel %vm687, %v231, 0
      %v872 = vsel %vm687, %v232, 0
      %v875 = vsel %vm687, %v233, 0
      %v878 = vsel %vm687, %v234, 0
      %v881 = vsel %vm687, %v235, 0
      %v884 = vsel %vm687, %v236, 0
      %v887 = vsel %vm687, %v237, 0
      %v890 = vsel %vm687, %v238, 0
      %v893 = vsel %vm687, %v239, 0
      %v896 = vsel %vm687, %v240, 0
      %v899 = vsel %vm687, %v241, 0
      %v902 = vsel %vm687, %v242, 0
      %v905 = vsel %vm687, %v243, 0
      %v908 = vsel %vm687, %v244, 0
      %v911 = vsel %vm687, %v245, 0
      %v914 = vsel %vm687, %v246, 0
      %v917 = vsel %vm687, %v247, 0
      %v920 = vsel %vm687, %v248, 0
      %v923 = vsel %vm687, %v249, 0
      %v926 = vsel %vm687, %v250, 0
      %v929 = vsel %vm687, %v251, 0
      %v932 = vsel %vm687, %v252, 0
      %v935 = vsel %vm687, %v253, 0
      %v938 = vsel %vm687, %v254, 0
      %v941 = vsel %vm687, %v255, 0
      %v944 = vsel %vm687, %v256, 0
      %v947 = vsel %vm687, %v257, 0
      %v950 = vsel %vm687, %v258, 0
      %v953 = vsel %vm687, %v259, 0
      %v956 = vsel %vm687, %v260, 0
      %v959 = vsel %vm687, %v261, 0
      %v962 = vsel %vm687, %v262, 0
      %v965 = vsel %vm687, %v263, 0
      %v968 = vsel %vm687, %v264, 0
      %v971 = vsel %vm687, %v265, 0
      %v974 = vsel %vm687, %v266, 0
      %v977 = vsel %vm687, %v267, 0
      %v980 = vsel %vm687, %v268, 0
      %v983 = vsel %vm687, %v269, 0
      %v986 = vsel %vm687, %v270, 0
      %v989 = vsel %vm687, %v271, 0
      %v992 = vsel %vm687, %v272, 0
      %v995 = vsel %vm687, %v273, 0
      %v998 = vsel %vm687, %v274, 0
      %v1001 = vsel %vm687, %v275, 0
      %v1004 = vsel %vm687, %v276, 0
      %v1007 = vsel %vm687, %v277, 0
      %v1010 = vsel %vm687, %v278, 0
      %v1013 = vsel %vm687, %v279, 0
      %v1016 = vsel %vm687, %v280, 0
      %v1019 = vsel %vm687, %v281, 0
      %v1022 = vsel %vm687, %v282, 0
      %v1025 = vsel %vm687, %v283, 0
      %v1028 = vsel %vm687, %v284, 0
      %v1031 = vsel %vm687, %v285, 0
      %v1034 = vsel %vm687, %v286, 0
      %v1037 = vsel %vm687, %v287, 0
      %v1040 = vsel %vm687, %v288, 0
      %v1043 = vsel %vm687, %v289, 0
      %v1046 = vsel %vm687, %v290, 0
      %v1049 = vsel %vm687, %v291, 0
      %v1052 = vsel %vm687, %v292, 0
      %v1055 = vsel %vm687, %v293, 0
      %v1058 = vsel %vm687, %v294, 0
      %v1061 = vsel %vm687, %v295, 0
      %v1064 = vsel %vm687, %v296, 0
      %v1067 = vsel %vm687, %v297, 0
      %v1070 = vsel %vm687, %v298, 0
      %v1073 = vsel %vm687, %v299, 0
      %v1076 = vsel %vm687, %v300, 0
      %v1079 = vsel %vm687, %v301, 0
      %v1082 = vsel %vm687, %v302, 0
      %v1085 = vsel %vm687, %v303, 0
      %v1088 = vsel %vm687, %v304, 0
      %v1091 = vsel %vm687, %v305, 0
      %v1094 = vsel %vm687, %v306, 0
      %v1097 = vsel %vm687, %v307, 0
      %v1100 = vsel %vm687, %v308, 0
      %v1103 = vsel %vm687, %v309, 0
      %v1106 = vsel %vm687, %v310, 0
      %v1109 = vsel %vm687, %v311, 0
      %v1112 = vsel %vm687, %v312, 0
      %v1115 = vsel %vm687, %v313, 0
      %v1118 = vsel %vm687, %v314, 0
      %v1121 = vsel %vm687, %v315, 0
      %v1124 = vsel %vm687, %v316, 0
      %v1127 = vsel %vm687, %v317, 0
      %v1130 = vsel %vm687, %v318, 0
      %v1133 = vsel %vm687, %v319, 0
      %v1136 = vsel %vm687, %v320, 0
      %v1139 = vsel %vm687, %v321, 0
      %v1142 = vsel %vm687, %v322, 0
      %v1145 = vsel %vm687, %v323, 0
      %v1148 = vsel %vm687, %v324, 0
      %v1151 = vsel %vm687, %v325, 0
      %v1154 = vsel %vm687, %v326, 0
      %v1157 = vsel %vm687, %v327, 0
      %v1160 = vsel %vm687, %v328, 0
      %v1163 = vsel %vm687, %v329, 0
      %v1166 = vsel %vm687, %v330, 0
      %v1169 = vsel %vm687, %v331, 0
      %v1172 = vsel %vm687, %v332, 0
      %v1175 = vsel %vm687, %v333, 0
      %v1178 = vsel %vm687, %v334, 0
      %v1181 = vsel %vm687, %v335, 0
      %v1184 = vsel %vm687, %v336, 0
      %v1187 = vsel %vm687, %v337, 0
      %v1190 = vsel %vm687, %v338, 0
      %v1193 = vsel %vm687, %v339, 0
      %v1196 = vsel %vm687, %v340, 0
      %v1199 = vsel %vm687, %v341, 0
      %v1202 = vsel %vm687, %v342, 0
      %v1205 = vsel %vm687, %v343, 0
      %v1208 = vsel %vm687, %v344, 0
      %v1211 = vsel %vm687, %v345, 0
      %v1214 = vsel %vm687, %v346, 0
      %v1217 = vsel %vm687, %v347, 0
      %v1220 = vsel %vm687, %v348, 0
      %v1223 = vsel %vm687, %v349, 0
      %v1226 = vsel %vm687, %v350, 0
      %v1229 = vsel %vm687, %v351, 0
      %v1232 = vsel %vm687, %v352, 0
      %v1235 = vsel %vm687, %v353, 0
      %v1238 = vsel %vm687, %v354, 0
      %v1241 = vsel %vm687, %v355, 0
      %v1244 = vsel %vm687, %v356, 0
      %v1247 = vsel %vm687, %v357, 0
      %v1250 = vsel %vm687, %v358, 0
      %v1253 = vsel %vm687, %v359, 0
      %v1256 = vsel %vm687, %v360, 0
      %v1259 = vsel %vm687, %v361, 0
      %v1262 = vsel %vm687, %v362, 0
      %v1265 = vsel %vm687, %v363, 0
      %v1268 = vsel %vm687, %v364, 0
      %v1271 = vsel %vm687, %v365, 0
      %v1274 = vsel %vm687, %v366, 0
      %v1277 = vsel %vm687, %v367, 0
      %v1280 = vsel %vm687, %v368, 0
      %v1283 = vsel %vm687, %v369, 0
      %v1286 = vsel %vm687, %v370, 0
      %v1289 = vsel %vm687, %v371, 0
      %v1292 = vsel %vm687, %v372, 0
      %v1295 = vsel %vm687, %v373, 0
      %v1298 = vsel %vm687, %v374, 0
      %v1301 = vsel %vm687, %v375, 0
      %v1304 = vsel %vm687, %v376, 0
      %v1307 = vsel %vm687, %v377, 0
      %v1310 = vsel %vm687, %v378, 0
      %v1313 = vsel %vm687, %v379, 0
      %v1316 = vsel %vm687, %v380, 0
      %v1319 = vsel %vm687, %v381, 0
      %v1322 = vsel %vm687, %v382, 0
      %v1325 = vsel %vm687, %v383, 0
      %v1328 = vsel %vm687, %v384, 0
      %v1331 = vsel %vm687, %v385, 0
      %v1334 = vsel %vm687, %v386, 0
      %v1337 = vsel %vm687, %v387, 0
      %v1340 = vsel %vm687, %v388, 0
      %v1343 = vsel %vm687, %v389, 0
      %v1346 = vsel %vm687, %v390, 0
      %v1349 = vsel %vm687, %v391, 0
      %v1352 = vsel %vm687, %v392, 0
      %v1355 = vsel %vm687, %v393, 0
      %v1358 = vsel %vm687, %v394, 0
      %v1361 = vsel %vm687, %v395, 0
      %v1364 = vsel %vm687, %v396, 0
      %v1367 = vsel %vm687, %v397, 0
      %v1370 = vsel %vm687, %v398, 0
      %v1373 = vsel %vm687, %v399, 0
      %v1376 = vsel %vm687, %v400, 0
      %v1379 = vsel %vm687, %v401, 0
      %v1382 = vsel %vm687, %v402, 0
      %v1385 = vsel %vm687, %v403, 0
      %v1388 = vsel %vm687, %v404, 0
      %v1391 = vsel %vm687, %v405, 0
      %v1394 = vsel %vm687, %v406, 0
      %v1397 = vsel %vm687, %v407, 0
      %v1400 = vsel %vm687, %v408, 0
      %v1403 = vsel %vm687, %v409, 0
      %v1406 = vsel %vm687, %v410, 0
      %v1409 = vsel %vm687, %v411, 0
      %v1412 = vsel %vm687, %v412, 0
      %v1415 = vsel %vm687, %v413, 0
      %v1418 = vsel %vm687, %v414, 0
      %v1421 = vsel %vm687, %v415, 0
      %v1424 = vsel %vm687, %v416, 0
      %v1427 = vsel %vm687, %v417, 0
      %v1430 = vsel %vm687, %v418, 0
      %v1433 = vsel %vm687, %v419, 0
      %v1436 = vsel %vm687, %v420, 0
      %v1439 = vsel %vm687, %v421, 0
      %v1442 = vsel %vm687, %v422, 0
      %v1445 = vsel %vm687, %v423, 0
      %v1448 = vsel %vm687, %v424, 0
      %v1451 = vsel %vm687, %v425, 0
      %v1454 = vsel %vm687, %v426, 0
      %v1457 = vsel %vm687, %v427, 0
      %v1460 = vsel %vm687, %v428, 0
      %v1463 = vsel %vm687, %v429, 0
      %v1466 = vsel %vm687, %v430, 0
      %v1469 = vsel %vm687, %v431, 0
      %v1472 = vsel %vm687, %v432, 0
      %v1475 = vsel %vm687, %v433, 0
      %v1478 = vsel %vm687, %v434, 0
      %v1481 = vsel %vm687, %v435, 0
      %v1484 = vsel %vm687, %v436, 0
      %v1487 = vsel %vm687, %v437, 0
      %v1490 = vsel %vm687, %v438, 0
      %v1493 = vsel %vm687, %v439, 0
      %v1496 = vsel %vm687, %v440, 0
      %v1499 = vsel %vm687, %v441, 0
      %v1502 = vsel %vm687, %v442, 0
      %v1505 = vsel %vm687, %v443, 0
      %v1508 = vsel %vm687, %v444, 0
      %v1511 = vsel %vm687, %v445, 0
      %v1514 = vsel %vm687, %v446, 0
      %v1517 = vsel %vm687, %v447, 0
      %v1520 = vsel %vm687, %v448, 0
      %v1523 = vsel %vm687, %v449, 0
      %v1526 = vsel %vm687, %v450, 0
      %v1529 = vsel %vm687, %v451, 0
      %v1532 = vsel %vm687, %v452, 0
      %v1535 = vsel %vm687, %v453, 0
      %v1538 = vsel %vm687, %v454, 0
      %v1541 = vsel %vm687, %v455, 0
      %v1544 = vsel %vm687, %v456, 0
      %v1547 = vsel %vm687, %v457, 0
      %v1550 = vsel %vm687, %v458, 0
      %v1553 = vsel %vm687, %v459, 0
      %v1556 = vsel %vm687, %v460, 0
      %v1559 = vsel %vm687, %v461, 0
      %v1562 = vsel %vm687, %v462, 0
      %v1565 = vsel %vm687, %v463, 0
      %v1568 = vsel %vm687, %v464, 0
      %v1571 = vsel %vm687, %v465, 0
      %v1574 = vsel %vm687, %v466, 0
      %v1577 = vsel %vm687, %v467, 0
      %v1580 = vsel %vm687, %v468, 0
      %v1583 = vsel %vm687, %v469, 0
      %v1586 = vsel %vm687, %v470, 0
      %v1589 = vsel %vm687, %v471, 0
      %v1592 = vsel %vm687, %v472, 0
      %v1595 = vsel %vm687, %v473, 0
      %v1598 = vsel %vm687, %v474, 0
      %v1601 = vsel %vm687, %v475, 0
      %v1604 = vsel %vm687, %v476, 0
      %v1607 = vsel %vm687, %v477, 0
      %v1610 = vsel %vm687, %v478, 0
      %v1613 = vsel %vm687, %v479, 0
      %v1616 = vsel %vm687, %v480, 0
      %v1619 = vsel %vm687, %v481, 0
      %v1622 = vsel %vm687, %v482, 0
      %v1625 = vsel %vm687, %v483, 0
      %v1628 = vsel %vm687, %v484, 0
      %v1631 = vsel %vm687, %v485, 0
      %v1634 = vsel %vm687, %v486, 0
      %v1637 = vsel %vm687, %v487, 0
      %v1640 = vsel %vm687, %v488, 0
      %v1643 = vsel %vm687, %v489, 0
      %v1646 = vsel %vm687, %v490, 0
      %v1649 = vsel %vm687, %v491, 0
      %v1652 = vsel %vm687, %v492, 0
      %v1655 = vsel %vm687, %v493, 0
      %v1658 = vsel %vm687, %v494, 0
      %v1661 = vsel %vm687, %v495, 0
      %v1664 = vsel %vm687, %v496, 0
      %v1667 = vsel %vm687, %v497, 0
      %v1670 = vsel %vm687, %v498, 0
      %v1673 = vsel %vm687, %v499, 0
      %v1676 = vsel %vm687, %v500, 0
      %v1679 = vsel %vm687, %v501, 0
      %v1682 = vsel %vm687, %v502, 0
      %v1685 = vsel %vm687, %v503, 0
      %v1688 = vsel %vm687, %v504, 0
      %v1691 = vsel %vm687, %v505, 0
      %v1694 = vsel %vm687, %v506, 0
      %v1697 = vsel %vm687, %v507, 0
      %v1700 = vsel %vm687, %v508, 0
      %v1703 = vsel %vm687, %v509, 0
      %v1706 = vsel %vm687, %v510, 0
      %v1709 = vsel %vm687, %v511, 0
      %v1712 = vsel %vm687, %v512, 0
      %v1715 = vsel %vm687, %v513, 0
      %v1718 = vsel %vm687, %v514, 0
      %v1721 = vsel %vm687, %v515, 0
      %v1724 = vsel %vm687, %v516, 0
      %v1727 = vsel %vm687, %v517, 0
      %v1730 = vsel %vm687, %v518, 0
      %v1733 = vsel %vm687, %v519, 0
      %v1736 = vsel %vm687, %v520, 0
      %v1739 = vsel %vm687, %v521, 0
      %v1742 = vsel %vm687, %v522, 0
      %v1745 = vsel %vm687, %v523, 0
      %v1748 = vsel %vm687, %v524, 0
      %v1751 = vsel %vm687, %v525, 0
      %v1754 = vsel %vm687, %v526, 0
      %v1757 = vsel %vm687, %v527, 0
      %v1760 = vsel %vm687, %v528, 0
      %v1763 = vsel %vm687, %v529, 0
      %v1766 = vsel %vm687, %v530, 0
      %v1769 = vsel %vm687, %v531, 0
      %v1772 = vsel %vm687, %v532, 0
      %v1775 = vsel %vm687, %v533, 0
      %v1778 = vsel %vm687, %v534, 0
      %v1781 = vsel %vm687, %v535, 0
      %v1784 = vsel %vm687, %v536, 0
      %v1787 = vsel %vm687, %v537, 0
      %v1790 = vsel %vm687, %v538, 0
      %v1793 = vsel %vm687, %v539, 0
      %v1796 = vsel %vm687, %v540, 0
      %v1799 = vsel %vm687, %v541, 0
      %v1802 = vsel %vm687, %v542, 0
      %v1805 = vsel %vm687, %v543, 0
      %v1808 = vsel %vm687, %v544, 0
      %v1811 = vsel %vm687, %v545, 0
      %v1814 = vsel %vm687, %v546, 0
      %v1817 = vsel %vm687, %v547, 0
      %v1820 = vsel %vm687, %v548, 0
      %v1823 = vsel %vm687, %v549, 0
      %v1826 = vsel %vm687, %v550, 0
      %v1829 = vsel %vm687, %v551, 0
      %v1832 = vsel %vm687, %v552, 0
      %v1835 = vsel %vm687, %v553, 0
      %v1838 = vsel %vm687, %v554, 0
      %v1841 = vsel %vm687, %v555, 0
      %v1844 = vsel %vm687, %v556, 0
      %v1847 = vsel %vm687, %v557, 0
      %v1850 = vsel %vm687, %v558, 0
      %v1853 = vsel %vm687, %v559, 0
      %v1856 = vsel %vm687, %v560, 0
      %v1859 = vsel %vm687, %v561, 0
      %v1862 = vsel %vm687, %v562, 0
      %v1865 = vsel %vm687, %v563, 0
      %v1868 = vsel %vm687, %v564, 0
      %v1871 = vsel %vm687, %v565, 0
      %v1874 = vsel %vm687, %v566, 0
      %v1877 = vsel %vm687, %v567, 0
      %v1880 = vsel %vm687, %v568, 0
      %v1883 = vsel %vm687, %v569, 0
      %v1886 = vsel %vm687, %v570, 0
      %v1889 = vsel %vm687, %v571, 0
      %v1892 = vsel %vm687, %v572, 0
      %v1895 = vsel %vm687, %v573, 0
      %v1898 = vsel %vm687, %v574, 0
      %v1901 = vsel %vm687, %v575, 0
      %v1904 = vsel %vm687, %v576, 0
      %v1907 = vsel %vm687, %v577, 0
      %v1910 = vsel %vm687, %v578, 0
      %v1913 = vsel %vm687, %v579, 0
      %v1916 = vsel %vm687, %v580, 0
      %v1919 = vsel %vm687, %v581, 0
      %v1922 = vsel %vm687, %v582, 0
      %v1925 = vsel %vm687, %v583, 0
      %v1928 = vsel %vm687, %v584, 0
      %v1931 = vsel %vm687, %v585, 0
      %v1934 = vsel %vm687, %v586, 0
      %v1937 = vsel %vm687, %v587, 0
      %v1940 = vsel %vm687, %v588, 0
      %v1943 = vsel %vm687, %v589, 0
      %v1946 = vsel %vm687, %v590, 0
      %v1949 = vsel %vm687, %v591, 0
      %v1952 = vsel %vm687, %v592, 0
      %v1955 = vsel %vm687, %v593, 0
      %v1958 = vsel %vm687, %v594, 0
      %v1961 = vsel %vm687, %v595, 0
      %v1964 = vsel %vm687, %v596, 0
      %v1967 = vsel %vm687, %v597, 0
      %v1970 = vsel %vm687, %v598, 0
      %v1973 = vsel %vm687, %v599, 0
      %v1976 = vsel %vm687, %v600, 0
      %v1979 = vsel %vm687, %v601, 0
      %v1982 = vsel %vm687, %v602, 0
      %v1985 = vsel %vm687, %v603, 0
      %v1988 = vsel %vm687, %v604, 0
      %v1991 = vsel %vm687, %v605, 0
      %v1994 = vsel %vm687, %v606, 0
      %v1997 = vsel %vm687, %v607, 0
      %v2000 = vsel %vm687, %v608, 0
      %v2003 = vsel %vm687, %v609, 0
      %v2006 = vsel %vm687, %v610, 0
      %v2009 = vsel %vm687, %v611, 0
      %v2012 = vsel %vm687, %v612, 0
      %v2015 = vsel %vm687, %v613, 0
      %v2018 = vsel %vm687, %v614, 0
      %v2021 = vsel %vm687, %v615, 0
      %v2024 = vsel %vm687, %v616, 0
      %v2027 = vsel %vm687, %v617, 0
      %v2030 = vsel %vm687, %v618, 0
      %v2033 = vsel %vm687, %v619, 0
      %v2036 = vsel %vm687, %v620, 0
      %v2039 = vsel %vm687, %v621, 0
      %v2042 = vsel %vm687, %v622, 0
      %v2045 = vsel %vm687, %v623, 0
      %v2048 = vsel %vm687, %v624, 0
      %v2051 = vsel %vm687, %v625, 0
      %v2054 = vsel %vm687, %v626, 0
      %v2057 = vsel %vm687, %v627, 0
      %v2060 = vsel %vm687, %v628, 0
      %v2063 = vsel %vm687, %v629, 0
      %v2066 = vsel %vm687, %v630, 0
      %v2069 = vsel %vm687, %v631, 0
      %v2072 = vsel %vm687, %v632, 0
      %v2075 = vsel %vm687, %v633, 0
      %v2078 = vsel %vm687, %v634, 0
      %v2081 = vsel %vm687, %v635, 0
      %v2084 = vsel %vm687, %v636, 0
      %v2087 = vsel %vm687, %v637, 0
      %v2090 = vsel %vm687, %v638, 0
      %v2093 = vsel %vm687, %v639, 0
      %v2096 = vsel %vm687, %v640, 0
      %v2099 = vsel %vm687, %v641, 0
      %v2102 = vsel %vm687, %v642, 0
      %v2105 = vsel %vm687, %v643, 0
      %v2108 = vsel %vm687, %v644, 0
      %v2111 = vsel %vm687, %v645, 0
      %v2114 = vsel %vm687, %v646, 0
      %v2117 = vsel %vm687, %v647, 0
      %v2120 = vsel %vm687, %v648, 0
      %v2123 = vsel %vm687, %v649, 0
      %v2126 = vsel %vm687, %v650, 0
      %v2129 = vsel %vm687, %v651, 0
      %v2132 = vsel %vm687, %v652, 0
      %v2135 = vsel %vm687, %v653, 0
      %v2138 = vsel %vm687, %v654, 0
      %v2141 = vsel %vm687, %v655, 0
      %v2144 = vsel %vm687, %v656, 0
      %v2147 = vsel %vm687, %v657, 0
      %v2150 = vsel %vm687, %v658, 0
      %v2153 = vsel %vm687, %v659, 0
      %v2156 = vsel %vm687, %v660, 0
      %v2159 = vsel %vm687, %v661, 0
      %v2162 = vsel %vm687, %v662, 0
      %v2165 = vsel %vm687, %v663, 0
      %v2168 = vsel %vm687, %v664, 0
      %v2171 = vsel %vm687, %v665, 0
      %v2174 = vsel %vm687, %v666, 0
      %v2177 = vsel %vm687, %v667, 0
      %v2180 = vsel %vm687, %v668, 0
      %v2183 = vsel %vm687, %v669, 0
      %v2186 = vsel %vm687, %v670, 0
      %v2189 = vsel %vm687, %v671, 0
      %v2192 = vsel %vm687, %v672, 0
      %v2195 = vsel %vm687, %v673, 0
      %v2198 = vsel %vm687, %v674, 0
      %v2201 = vsel %vm687, %v675, 0
      %v2204 = vsel %vm687, %v676, 0
      %v2207 = vsel %vm687, %v677, 0
      %v2210 = vsel %vm687, %v678, 0
      %v2213 = vsel %vm687, %v679, 0
      %v2216 = vsel %vm687, %v680, 0
      %v2219 = vsel %vm687, %v681, 0
      %v2222 = vsel %vm687, %v682, 0
      %vm2224 = vcmask 1042432
      %v2226 = vsel %vm2224, %v686, 0
      %2228 = vmatprep.subr.mxu0 0.0
      %2229 = vmatpush1.msra.mxu0 %v683
      %2230 = vmatprep.subr.mxu0 0.0
      %2231 = vmatpush1.msra.mxu0 %v684
      %2232 = vmatprep.subr.mxu0 0.0
      %2233 = vmatpush1.msra.mxu0 %v685
      %2234 = vmatprep.subr.mxu0 0.0
      %2235 = vmatpush1.msra.mxu0 %v2226
      %2236 = vmatprep.subr.mxu0 0.0
      %2237 = vmatpush1.msra.mxu0 0.0
      %2238 = vmatprep.subr.mxu0 0.0
      %2239 = vmatpush1.msra.mxu0 0.0
      %2240 = vmatprep.subr.mxu0 0.0
      %2241 = vmatpush1.msra.mxu0 0.0
      %2242 = vmatprep.subr.mxu0 0.0
      %2243 = vmatpush1.msra.mxu0 0.0
      %2244 = vmatprep.subr.mxu0 0.0
      %2245 = vmatpush1.msra.mxu0 0.0
      %2246 = vmatprep.subr.mxu0 0.0
      %2247 = vmatpush1.msra.mxu0 0.0
      %2248 = vmatprep.subr.mxu0 0.0
      %2249 = vmatpush1.msra.mxu0 0.0
      %2250 = vmatprep.subr.mxu0 0.0
      %2251 = vmatpush1.msra.mxu0 0.0
      %2252 = vmatprep.subr.mxu0 0.0
      %2253 = vmatpush1.msra.mxu0 0.0
      %2254 = vmatprep.subr.mxu0 0.0
      %2255 = vmatpush1.msra.mxu0 0.0
      %2256 = vmatprep.subr.mxu0 0.0
      %2257 = vmatpush1.msra.mxu0 0.0
      %2258 = vmatprep.subr.mxu0 0.0
      %2259 = vmatpush1.msra.mxu0 0.0
      %2260 = vmatprep.subr.mxu0 0.0
      %2261 = vmatpush1.msra.mxu0 0.0
      %2262 = vmatprep.subr.mxu0 0.0
      %2263 = vmatpush1.msra.mxu0 0.0
      %2264 = vmatprep.subr.mxu0 0.0
      %2265 = vmatpush1.msra.mxu0 0.0
      %2266 = vmatprep.subr.mxu0 0.0
      %2267 = vmatpush1.msra.mxu0 0.0
      %2268 = vmatprep.subr.mxu0 0.0
      %2269 = vmatpush1.msra.mxu0 0.0
      %2270 = vmatprep.subr.mxu0 0.0
      %2271 = vmatpush1.msra.mxu0 0.0
      %2272 = vmatprep.subr.mxu0 0.0
      %2273 = vmatpush1.msra.mxu0 0.0
      %2274 = vmatprep.subr.mxu0 0.0
      %2275 = vmatpush1.msra.mxu0 0.0
      %2276 = vmatprep.subr.mxu0 0.0
      %2277 = vmatpush1.msra.mxu0 0.0
      %2278 = vmatprep.subr.mxu0 0.0
      %2279 = vmatpush1.msra.mxu0 0.0
      %2280 = vmatprep.subr.mxu0 0.0
      %2281 = vmatpush1.msra.mxu0 0.0
      %2282 = vmatprep.subr.mxu0 0.0
      %2283 = vmatpush1.msra.mxu0 0.0
      %2284 = vmatprep.subr.mxu0 0.0
      %2285 = vmatpush1.msra.mxu0 0.0
      %2286 = vmatprep.subr.mxu0 0.0
      %2287 = vmatpush1.msra.mxu0 0.0
      %2288 = vmatprep.subr.mxu0 0.0
      %2289 = vmatpush1.msra.mxu0 0.0
      %2290 = vmatprep.subr.mxu0 0.0
      %2291 = vmatpush1.msra.mxu0 0.0
      %2292 = vmatprep.mubr.f32.mxu0 0.0
      %2293 = vmatmul.mubr.f32.gmra.mrb[0].mxu0 %v689
      %v2294 = vpop.f32.mrb[0].mxu0
      %v2295 = vadd.f32 0.0, %v2294
      %v2296 = vpop.f32.mrb[0].mxu0
      %2297 = vmatprep.mubr.f32.mxu0 0.0
      %2298 = vmatmul.mubr.f32.gmra.mrb[0].mxu0 %v692
      %v2299 = vpop.f32.mrb[0].mxu0
      %v2300 = vadd.f32 0.0, %v2299
      %v2301 = vpop.f32.mrb[0].mxu0
      %2302 = vmatprep.mubr.f32.mxu0 0.0
      %2303 = vmatmul.mubr.f32.gmra.mrb[0].mxu0 %v695
      %v2304 = vpop.f32.mrb[0].mxu0
      %v2305 = vadd.f32 0.0, %v2304
      %v2306 = vpop.f32.mrb[0].mxu0
      %2307 = vmatprep.mubr.f32.mxu0 0.0
      %2308 = vmatmul.mubr.f32.gmra.mrb[0].mxu0 %v698
      %v2309 = vpop.f32.mrb[0].mxu0
      %v2310 = vadd.f32 0.0, %v2309
      %v2311 = vpop.f32.mrb[0].mxu0
      %2312 = vmatprep.mubr.f32.mxu0 0.0
      %2313 = vmatmul.mubr.f32.gmra.mrb[0].mxu0 %v701
      %v2314 = vpop.f32.mrb[0].mxu0
      %v2315 = vadd.f32 0.0, %v2314
      %v2316 = vpop.f32.mrb[0].mxu0
      %2317 = vmatprep.mubr.f32.mxu0 0.0
      %2318 = vmatmul.mubr.f32.gmra.mrb[0].mxu0 %v704
      %v2319 = vpop.f32.mrb[0].mxu0
      %v2320 = vadd.f32 0.0, %v2319
      %v2321 = vpop.f32.mrb[0].mxu0
      %2322 = vmatprep.mubr.f32.mxu0 0.0
      %2323 = vmatmul.mubr.f32.gmra.mrb[0].mxu0 %v707
      %v2324 = vpop.f32.mrb[0].mxu0
      %v2325 = vadd.f32 0.0, %v2324
      %v2326 = vpop.f32.mrb[0].mxu0
      %2327 = vmatprep.mubr.f32.mxu0 0.0
      %2328 = vmatmul.mubr.f32.gmra.mrb[0].mxu0 %v710
      %v2329 = vpop.f32.mrb[0].mxu0
      %v2330 = vadd.f32 0.0, %v2329
      %v2331 = vpop.f32.mrb[0].mxu0
      %2332 = vmatprep.mubr.f32.mxu0 0.0
      %2333 = vmatmul.mubr.f32.gmra.mrb[0].mxu0 %v713
      %v2334 = vpop.f32.mrb[0].mxu0
      %v2335 = vadd.f32 0.0, %v2334
      %v2336 = vpop.f32.mrb[0].mxu0
      %2337 = vmatprep.mubr.f32.mxu0 0.0
      %2338 = vmatmul.mubr.f32.gmra.mrb[0].mxu0 %v716
      %v2339 = vpop.f32.mrb[0].mxu0
      %v2340 = vadd.f32 0.0, %v2339
      %v2341 = vpop.f32.mrb[0].mxu0
      %2342 = vmatprep.mubr.f32.mxu0 0.0
      %2343 = vmatmul.mubr.f32.gmra.mrb[0].mxu0 %v719
      %v2344 = vpop.f32.mrb[0].mxu0
      %v2345 = vadd.f32 0.0, %v2344
      %v2346 = vpop.f32.mrb[0].mxu0
      %2347 = vmatprep.mubr.f32.mxu0 0.0
      %2348 = vmatmul.mubr.f32.gmra.mrb[0].mxu0 %v722
      %v2349 = vpop.f32.mrb[0].mxu0
      %v2350 = vadd.f32 0.0, %v2349
      %v2351 = vpop.f32.mrb[0].mxu0
      %2352 = vmatprep.mubr.f32.mxu0 0.0
      %2353 = vmatmul.mubr.f32.gmra.mrb[0].mxu0 %v725
      %v2354 = vpop.f32.mrb[0].mxu0
      %v2355 = vadd.f32 0.0, %v2354
      %v2356 = vpop.f32.mrb[0].mxu0
      %2357 = vmatprep.mubr.f32.mxu0 0.0
      %2358 = vmatmul.mubr.f32.gmra.mrb[0].mxu0 %v728
      %v2359 = vpop.f32.mrb[0].mxu0
      %v2360 = vadd.f32 0.0, %v2359
      %v2361 = vpop.f32.mrb[0].mxu0
      %2362 = vmatprep.mubr.f32.mxu0 0.0
      %2363 = vmatmul.mubr.f32.gmra.mrb[0].mxu0 %v731
      %v2364 = vpop.f32.mrb[0].mxu0
      %v2365 = vadd.f32 0.0, %v2364
      %v2366 = vpop.f32.mrb[0].mxu0
      %2367 = vmatprep.mubr.f32.mxu0 0.0
      %2368 = vmatmul.mubr.f32.gmra.mrb[0].mxu0 %v734
      %v2369 = vpop.f32.mrb[0].mxu0
      %v2370 = vadd.f32 0.0, %v2369
      %v2371 = vpop.f32.mrb[0].mxu0
      %2372 = vmatprep.mubr.f32.mxu0 0.0
      %2373 = vmatmul.mubr.f32.gmra.mrb[0].mxu0 %v737
      %v2374 = vpop.f32.mrb[0].mxu0
      %v2375 = vadd.f32 0.0, %v2374
      %v2376 = vpop.f32.mrb[0].mxu0
      %2377 = vmatprep.mubr.f32.mxu0 0.0
      %2378 = vmatmul.mubr.f32.gmra.mrb[0].mxu0 %v740
      %v2379 = vpop.f32.mrb[0].mxu0
      %v2380 = vadd.f32 0.0, %v2379
      %v2381 = vpop.f32.mrb[0].mxu0
      %2382 = vmatprep.mubr.f32.mxu0 0.0
      %2383 = vmatmul.mubr.f32.gmra.mrb[0].mxu0 %v743
      %v2384 = vpop.f32.mrb[0].mxu0
      %v2385 = vadd.f32 0.0, %v2384
      %v2386 = vpop.f32.mrb[0].mxu0
      %2387 = vmatprep.mubr.f32.mxu0 0.0
      %2388 = vmatmul.mubr.f32.gmra.mrb[0].mxu0 %v746
      %v2389 = vpop.f32.mrb[0].mxu0
      %v2390 = vadd.f32 0.0, %v2389
      %v2391 = vpop.f32.mrb[0].mxu0
      %2392 = vmatprep.mubr.f32.mxu0 0.0
      %2393 = vmatmul.mubr.f32.gmra.mrb[0].mxu0 %v749
      %v2394 = vpop.f32.mrb[0].mxu0
      %v2395 = vadd.f32 0.0, %v2394
      %v2396 = vpop.f32.mrb[0].mxu0
      %2397 = vmatprep.mubr.f32.mxu0 0.0
      %2398 = vmatmul.mubr.f32.gmra.mrb[0].mxu0 %v752
      %v2399 = vpop.f32.mrb[0].mxu0
      %v2400 = vadd.f32 0.0, %v2399
      %v2401 = vpop.f32.mrb[0].mxu0
      %2402 = vmatprep.mubr.f32.mxu0 0.0
      %2403 = vmatmul.mubr.f32.gmra.mrb[0].mxu0 %v755
      %v2404 = vpop.f32.mrb[0].mxu0
      %v2405 = vadd.f32 0.0, %v2404
      %v2406 = vpop.f32.mrb[0].mxu0
      %2407 = vmatprep.mubr.f32.mxu0 0.0
      %2408 = vmatmul.mubr.f32.gmra.mrb[0].mxu0 %v758
      %v2409 = vpop.f32.mrb[0].mxu0
      %v2410 = vadd.f32 0.0, %v2409
      %v2411 = vpop.f32.mrb[0].mxu0
      %2412 = vmatprep.mubr.f32.mxu0 0.0
      %2413 = vmatmul.mubr.f32.gmra.mrb[0].mxu0 %v761
      %v2414 = vpop.f32.mrb[0].mxu0
      %v2415 = vadd.f32 0.0, %v2414
      %v2416 = vpop.f32.mrb[0].mxu0
      %2417 = vmatprep.mubr.f32.mxu0 0.0
      %2418 = vmatmul.mubr.f32.gmra.mrb[0].mxu0 %v764
      %v2419 = vpop.f32.mrb[0].mxu0
      %v2420 = vadd.f32 0.0, %v2419
      %v2421 = vpop.f32.mrb[0].mxu0
      %2422 = vmatprep.mubr.f32.mxu0 0.0
      %2423 = vmatmul.mubr.f32.gmra.mrb[0].mxu0 %v767
      %v2424 = vpop.f32.mrb[0].mxu0
      %v2425 = vadd.f32 0.0, %v2424
      %v2426 = vpop.f32.mrb[0].mxu0
      %2427 = vmatprep.mubr.f32.mxu0 0.0
      %2428 = vmatmul.mubr.f32.gmra.mrb[0].mxu0 %v770
      %v2429 = vpop.f32.mrb[0].mxu0
      %v2430 = vadd.f32 0.0, %v2429
      %v2431 = vpop.f32.mrb[0].mxu0
      %2432 = vmatprep.mubr.f32.mxu0 0.0
      %2433 = vmatmul.mubr.f32.gmra.mrb[0].mxu0 %v773
      %v2434 = vpop.f32.mrb[0].mxu0
      %v2435 = vadd.f32 0.0, %v2434
      %v2436 = vpop.f32.mrb[0].mxu0
      %2437 = vmatprep.mubr.f32.mxu0 0.0
      %2438 = vmatmul.mubr.f32.gmra.mrb[0].mxu0 %v776
      %v2439 = vpop.f32.mrb[0].mxu0
      %v2440 = vadd.f32 0.0, %v2439
      %v2441 = vpop.f32.mrb[0].mxu0
      %2442 = vmatprep.mubr.f32.mxu0 0.0
      %2443 = vmatmul.mubr.f32.gmra.mrb[0].mxu0 %v779
      %v2444 = vpop.f32.mrb[0].mxu0
      %v2445 = vadd.f32 0.0, %v2444
      %v2446 = vpop.f32.mrb[0].mxu0
      %2447 = vmatprep.mubr.f32.mxu0 0.0
      %2448 = vmatmul.mubr.f32.gmra.mrb[0].mxu0 %v782
      %v2449 = vpop.f32.mrb[0].mxu0
      %v2450 = vadd.f32 0.0, %v2449
      %v2451 = vpop.f32.mrb[0].mxu0
      %2452 = vmatprep.mubr.f32.mxu0 0.0
      %2453 = vmatmul.mubr.f32.gmra.mrb[0].mxu0 %v785
      %v2454 = vpop.f32.mrb[0].mxu0
      %v2455 = vadd.f32 0.0, %v2454
      %v2456 = vpop.f32.mrb[0].mxu0
      %2457 = vmatprep.mubr.f32.mxu0 0.0
      %2458 = vmatmul.mubr.f32.gmra.mrb[0].mxu0 %v788
      %v2459 = vpop.f32.mrb[0].mxu0
      %v2460 = vadd.f32 0.0, %v2459
      %v2461 = vpop.f32.mrb[0].mxu0
      %2462 = vmatprep.mubr.f32.mxu0 0.0
      %2463 = vmatmul.mubr.f32.gmra.mrb[0].mxu0 %v791
      %v2464 = vpop.f32.mrb[0].mxu0
      %v2465 = vadd.f32 0.0, %v2464
      %v2466 = vpop.f32.mrb[0].mxu0
      %2467 = vmatprep.mubr.f32.mxu0 0.0
      %2468 = vmatmul.mubr.f32.gmra.mrb[0].mxu0 %v794
      %v2469 = vpop.f32.mrb[0].mxu0
      %v2470 = vadd.f32 0.0, %v2469
      %v2471 = vpop.f32.mrb[0].mxu0
      %2472 = vmatprep.mubr.f32.mxu0 0.0
      %2473 = vmatmul.mubr.f32.gmra.mrb[0].mxu0 %v797
      %v2474 = vpop.f32.mrb[0].mxu0
      %v2475 = vadd.f32 0.0, %v2474
      %v2476 = vpop.f32.mrb[0].mxu0
      %2477 = vmatprep.mubr.f32.mxu0 0.0
      %2478 = vmatmul.mubr.f32.gmra.mrb[0].mxu0 %v800
      %v2479 = vpop.f32.mrb[0].mxu0
      %v2480 = vadd.f32 0.0, %v2479
      %v2481 = vpop.f32.mrb[0].mxu0
      %2482 = vmatprep.mubr.f32.mxu0 0.0
      %2483 = vmatmul.mubr.f32.gmra.mrb[0].mxu0 %v803
      %v2484 = vpop.f32.mrb[0].mxu0
      %v2485 = vadd.f32 0.0, %v2484
      %v2486 = vpop.f32.mrb[0].mxu0
      %2487 = vmatprep.mubr.f32.mxu0 0.0
      %2488 = vmatmul.mubr.f32.gmra.mrb[0].mxu0 %v806
      %v2489 = vpop.f32.mrb[0].mxu0
      %v2490 = vadd.f32 0.0, %v2489
      %v2491 = vpop.f32.mrb[0].mxu0
      %2492 = vmatprep.mubr.f32.mxu0 0.0
      %2493 = vmatmul.mubr.f32.gmra.mrb[0].mxu0 %v809
      %v2494 = vpop.f32.mrb[0].mxu0
      %v2495 = vadd.f32 0.0, %v2494
      %v2496 = vpop.f32.mrb[0].mxu0
      %2497 = vmatprep.mubr.f32.mxu0 0.0
      %2498 = vmatmul.mubr.f32.gmra.mrb[0].mxu0 %v812
      %v2499 = vpop.f32.mrb[0].mxu0
      %v2500 = vadd.f32 0.0, %v2499
      %v2501 = vpop.f32.mrb[0].mxu0
      %2502 = vmatprep.mubr.f32.mxu0 0.0
      %2503 = vmatmul.mubr.f32.gmra.mrb[0].mxu0 %v815
      %v2504 = vpop.f32.mrb[0].mxu0
      %v2505 = vadd.f32 0.0, %v2504
      %v2506 = vpop.f32.mrb[0].mxu0
      %2507 = vmatprep.mubr.f32.mxu0 0.0
      %2508 = vmatmul.mubr.f32.gmra.mrb[0].mxu0 %v818
      %v2509 = vpop.f32.mrb[0].mxu0
      %v2510 = vadd.f32 0.0, %v2509
      %v2511 = vpop.f32.mrb[0].mxu0
      %2512 = vmatprep.mubr.f32.mxu0 0.0
      %2513 = vmatmul.mubr.f32.gmra.mrb[0].mxu0 %v821
      %v2514 = vpop.f32.mrb[0].mxu0
      %v2515 = vadd.f32 0.0, %v2514
      %v2516 = vpop.f32.mrb[0].mxu0
      %2517 = vmatprep.mubr.f32.mxu0 0.0
      %2518 = vmatmul.mubr.f32.gmra.mrb[0].mxu0 %v824
      %v2519 = vpop.f32.mrb[0].mxu0
      %v2520 = vadd.f32 0.0, %v2519
      %v2521 = vpop.f32.mrb[0].mxu0
      %2522 = vmatprep.mubr.f32.mxu0 0.0
      %2523 = vmatmul.mubr.f32.gmra.mrb[0].mxu0 %v827
      %v2524 = vpop.f32.mrb[0].mxu0
      %v2525 = vadd.f32 0.0, %v2524
      %v2526 = vpop.f32.mrb[0].mxu0
      %2527 = vmatprep.mubr.f32.mxu0 0.0
      %2528 = vmatmul.mubr.f32.gmra.mrb[0].mxu0 %v830
      %v2529 = vpop.f32.mrb[0].mxu0
      %v2530 = vadd.f32 0.0, %v2529
      %v2531 = vpop.f32.mrb[0].mxu0
      %2532 = vmatprep.mubr.f32.mxu0 0.0
      %2533 = vmatmul.mubr.f32.gmra.mrb[0].mxu0 %v833
      %v2534 = vpop.f32.mrb[0].mxu0
      %v2535 = vadd.f32 0.0, %v2534
      %v2536 = vpop.f32.mrb[0].mxu0
      %2537 = vmatprep.mubr.f32.mxu0 0.0
      %2538 = vmatmul.mubr.f32.gmra.mrb[0].mxu0 %v836
      %v2539 = vpop.f32.mrb[0].mxu0
      %v2540 = vadd.f32 0.0, %v2539
      %v2541 = vpop.f32.mrb[0].mxu0
      %2542 = vmatprep.mubr.f32.mxu0 0.0
      %2543 = vmatmul.mubr.f32.gmra.mrb[0].mxu0 %v839
      %v2544 = vpop.f32.mrb[0].mxu0
      %v2545 = vadd.f32 0.0, %v2544
      %v2546 = vpop.f32.mrb[0].mxu0
      %2547 = vmatprep.mubr.f32.mxu0 0.0
      %2548 = vmatmul.mubr.f32.gmra.mrb[0].mxu0 %v842
      %v2549 = vpop.f32.mrb[0].mxu0
      %v2550 = vadd.f32 0.0, %v2549
      %v2551 = vpop.f32.mrb[0].mxu0
      %2552 = vmatprep.mubr.f32.mxu0 0.0
      %2553 = vmatmul.mubr.f32.gmra.mrb[0].mxu0 %v845
      %v2554 = vpop.f32.mrb[0].mxu0
      %v2555 = vadd.f32 0.0, %v2554
      %v2556 = vpop.f32.mrb[0].mxu0
      %2557 = vmatprep.mubr.f32.mxu0 0.0
      %2558 = vmatmul.mubr.f32.gmra.mrb[0].mxu0 %v848
      %v2559 = vpop.f32.mrb[0].mxu0
      %v2560 = vadd.f32 0.0, %v2559
      %v2561 = vpop.f32.mrb[0].mxu0
      %2562 = vmatprep.mubr.f32.mxu0 0.0
      %2563 = vmatmul.mubr.f32.gmra.mrb[0].mxu0 %v851
      %v2564 = vpop.f32.mrb[0].mxu0
      %v2565 = vadd.f32 0.0, %v2564
      %v2566 = vpop.f32.mrb[0].mxu0
      %2567 = vmatprep.mubr.f32.mxu0 0.0
      %2568 = vmatmul.mubr.f32.gmra.mrb[0].mxu0 %v854
      %v2569 = vpop.f32.mrb[0].mxu0
      %v2570 = vadd.f32 0.0, %v2569
      %v2571 = vpop.f32.mrb[0].mxu0
      %2572 = vmatprep.mubr.f32.mxu0 0.0
      %2573 = vmatmul.mubr.f32.gmra.mrb[0].mxu0 %v857
      %v2574 = vpop.f32.mrb[0].mxu0
      %v2575 = vadd.f32 0.0, %v2574
      %v2576 = vpop.f32.mrb[0].mxu0
      %2577 = vmatprep.mubr.f32.mxu0 0.0
      %2578 = vmatmul.mubr.f32.gmra.mrb[0].mxu0 %v860
      %v2579 = vpop.f32.mrb[0].mxu0
      %v2580 = vadd.f32 0.0, %v2579
      %v2581 = vpop.f32.mrb[0].mxu0
      %2582 = vmatprep.mubr.f32.mxu0 0.0
      %2583 = vmatmul.mubr.f32.gmra.mrb[0].mxu0 %v863
      %v2584 = vpop.f32.mrb[0].mxu0
      %v2585 = vadd.f32 0.0, %v2584
      %v2586 = vpop.f32.mrb[0].mxu0
      %2587 = vmatprep.mubr.f32.mxu0 0.0
      %2588 = vmatmul.mubr.f32.gmra.mrb[0].mxu0 %v866
      %v2589 = vpop.f32.mrb[0].mxu0
      %v2590 = vadd.f32 0.0, %v2589
      %v2591 = vpop.f32.mrb[0].mxu0
      %2592 = vmatprep.mubr.f32.mxu0 0.0
      %2593 = vmatmul.mubr.f32.gmra.mrb[0].mxu0 %v869
      %v2594 = vpop.f32.mrb[0].mxu0
      %v2595 = vadd.f32 0.0, %v2594
      %v2596 = vpop.f32.mrb[0].mxu0
      %2597 = vmatprep.mubr.f32.mxu0 0.0
      %2598 = vmatmul.mubr.f32.gmra.mrb[0].mxu0 %v872
      %v2599 = vpop.f32.mrb[0].mxu0
      %v2600 = vadd.f32 0.0, %v2599
      %v2601 = vpop.f32.mrb[0].mxu0
      %2602 = vmatprep.mubr.f32.mxu0 0.0
      %2603 = vmatmul.mubr.f32.gmra.mrb[0].mxu0 %v875
      %v2604 = vpop.f32.mrb[0].mxu0
      %v2605 = vadd.f32 0.0, %v2604
      %v2606 = vpop.f32.mrb[0].mxu0
      %2607 = vmatprep.mubr.f32.mxu0 0.0
      %2608 = vmatmul.mubr.f32.gmra.mrb[0].mxu0 %v878
      %v2609 = vpop.f32.mrb[0].mxu0
      %v2610 = vadd.f32 0.0, %v2609
      %v2611 = vpop.f32.mrb[0].mxu0
      %2612 = vmatprep.mubr.f32.mxu0 0.0
      %2613 = vmatmul.mubr.f32.gmra.mrb[0].mxu0 %v881
      %v2614 = vpop.f32.mrb[0].mxu0
      %v2615 = vadd.f32 0.0, %v2614
      %v2616 = vpop.f32.mrb[0].mxu0
      %2617 = vmatprep.mubr.f32.mxu0 0.0
      %2618 = vmatmul.mubr.f32.gmra.mrb[0].mxu0 %v884
      %v2619 = vpop.f32.mrb[0].mxu0
      %v2620 = vadd.f32 0.0, %v2619
      %v2621 = vpop.f32.mrb[0].mxu0
      %2622 = vmatprep.mubr.f32.mxu0 0.0
      %2623 = vmatmul.mubr.f32.gmra.mrb[0].mxu0 %v887
      %v2624 = vpop.f32.mrb[0].mxu0
      %v2625 = vadd.f32 0.0, %v2624
      %v2626 = vpop.f32.mrb[0].mxu0
      %2627 = vmatprep.mubr.f32.mxu0 0.0
      %2628 = vmatmul.mubr.f32.gmra.mrb[0].mxu0 %v890
      %v2629 = vpop.f32.mrb[0].mxu0
      %v2630 = vadd.f32 0.0, %v2629
      %v2631 = vpop.f32.mrb[0].mxu0
      %2632 = vmatprep.mubr.f32.mxu0 0.0
      %2633 = vmatmul.mubr.f32.gmra.mrb[0].mxu0 %v893
      %v2634 = vpop.f32.mrb[0].mxu0
      %v2635 = vadd.f32 0.0, %v2634
      %v2636 = vpop.f32.mrb[0].mxu0
      %2637 = vmatprep.mubr.f32.mxu0 0.0
      %2638 = vmatmul.mubr.f32.gmra.mrb[0].mxu0 %v896
      %v2639 = vpop.f32.mrb[0].mxu0
      %v2640 = vadd.f32 0.0, %v2639
      %v2641 = vpop.f32.mrb[0].mxu0
      %2642 = vmatprep.mubr.f32.mxu0 0.0
      %2643 = vmatmul.mubr.f32.gmra.mrb[0].mxu0 %v899
      %v2644 = vpop.f32.mrb[0].mxu0
      %v2645 = vadd.f32 0.0, %v2644
      %v2646 = vpop.f32.mrb[0].mxu0
      %2647 = vmatprep.mubr.f32.mxu0 0.0
      %2648 = vmatmul.mubr.f32.gmra.mrb[0].mxu0 %v902
      %v2649 = vpop.f32.mrb[0].mxu0
      %v2650 = vadd.f32 0.0, %v2649
      %v2651 = vpop.f32.mrb[0].mxu0
      %2652 = vmatprep.mubr.f32.mxu0 0.0
      %2653 = vmatmul.mubr.f32.gmra.mrb[0].mxu0 %v905
      %v2654 = vpop.f32.mrb[0].mxu0
      %v2655 = vadd.f32 0.0, %v2654
      %v2656 = vpop.f32.mrb[0].mxu0
      %2657 = vmatprep.mubr.f32.mxu0 0.0
      %2658 = vmatmul.mubr.f32.gmra.mrb[0].mxu0 %v908
      %v2659 = vpop.f32.mrb[0].mxu0
      %v2660 = vadd.f32 0.0, %v2659
      %v2661 = vpop.f32.mrb[0].mxu0
      %2662 = vmatprep.mubr.f32.mxu0 0.0
      %2663 = vmatmul.mubr.f32.gmra.mrb[0].mxu0 %v911
      %v2664 = vpop.f32.mrb[0].mxu0
      %v2665 = vadd.f32 0.0, %v2664
      %v2666 = vpop.f32.mrb[0].mxu0
      %2667 = vmatprep.mubr.f32.mxu0 0.0
      %2668 = vmatmul.mubr.f32.gmra.mrb[0].mxu0 %v914
      %v2669 = vpop.f32.mrb[0].mxu0
      %v2670 = vadd.f32 0.0, %v2669
      %v2671 = vpop.f32.mrb[0].mxu0
      %2672 = vmatprep.mubr.f32.mxu0 0.0
      %2673 = vmatmul.mubr.f32.gmra.mrb[0].mxu0 %v917
      %v2674 = vpop.f32.mrb[0].mxu0
      %v2675 = vadd.f32 0.0, %v2674
      %v2676 = vpop.f32.mrb[0].mxu0
      %2677 = vmatprep.mubr.f32.mxu0 0.0
      %2678 = vmatmul.mubr.f32.gmra.mrb[0].mxu0 %v920
      %v2679 = vpop.f32.mrb[0].mxu0
      %v2680 = vadd.f32 0.0, %v2679
      %v2681 = vpop.f32.mrb[0].mxu0
      %2682 = vmatprep.mubr.f32.mxu0 0.0
      %2683 = vmatmul.mubr.f32.gmra.mrb[0].mxu0 %v923
      %v2684 = vpop.f32.mrb[0].mxu0
      %v2685 = vadd.f32 0.0, %v2684
      %v2686 = vpop.f32.mrb[0].mxu0
      %2687 = vmatprep.mubr.f32.mxu0 0.0
      %2688 = vmatmul.mubr.f32.gmra.mrb[0].mxu0 %v926
      %v2689 = vpop.f32.mrb[0].mxu0
      %v2690 = vadd.f32 0.0, %v2689
      %v2691 = vpop.f32.mrb[0].mxu0
      %2692 = vmatprep.mubr.f32.mxu0 0.0
      %2693 = vmatmul.mubr.f32.gmra.mrb[0].mxu0 %v929
      %v2694 = vpop.f32.mrb[0].mxu0
      %v2695 = vadd.f32 0.0, %v2694
      %v2696 = vpop.f32.mrb[0].mxu0
      %2697 = vmatprep.mubr.f32.mxu0 0.0
      %2698 = vmatmul.mubr.f32.gmra.mrb[0].mxu0 %v932
      %v2699 = vpop.f32.mrb[0].mxu0
      %v2700 = vadd.f32 0.0, %v2699
      %v2701 = vpop.f32.mrb[0].mxu0
      %2702 = vmatprep.mubr.f32.mxu0 0.0
      %2703 = vmatmul.mubr.f32.gmra.mrb[0].mxu0 %v935
      %v2704 = vpop.f32.mrb[0].mxu0
      %v2705 = vadd.f32 0.0, %v2704
      %v2706 = vpop.f32.mrb[0].mxu0
      %2707 = vmatprep.mubr.f32.mxu0 0.0
      %2708 = vmatmul.mubr.f32.gmra.mrb[0].mxu0 %v938
      %v2709 = vpop.f32.mrb[0].mxu0
      %v2710 = vadd.f32 0.0, %v2709
      %v2711 = vpop.f32.mrb[0].mxu0
      %2712 = vmatprep.mubr.f32.mxu0 0.0
      %2713 = vmatmul.mubr.f32.gmra.mrb[0].mxu0 %v941
      %v2714 = vpop.f32.mrb[0].mxu0
      %v2715 = vadd.f32 0.0, %v2714
      %v2716 = vpop.f32.mrb[0].mxu0
      %2717 = vmatprep.mubr.f32.mxu0 0.0
      %2718 = vmatmul.mubr.f32.gmra.mrb[0].mxu0 %v944
      %v2719 = vpop.f32.mrb[0].mxu0
      %v2720 = vadd.f32 0.0, %v2719
      %v2721 = vpop.f32.mrb[0].mxu0
      %2722 = vmatprep.mubr.f32.mxu0 0.0
      %2723 = vmatmul.mubr.f32.gmra.mrb[0].mxu0 %v947
      %v2724 = vpop.f32.mrb[0].mxu0
      %v2725 = vadd.f32 0.0, %v2724
      %v2726 = vpop.f32.mrb[0].mxu0
      %2727 = vmatprep.mubr.f32.mxu0 0.0
      %2728 = vmatmul.mubr.f32.gmra.mrb[0].mxu0 %v950
      %v2729 = vpop.f32.mrb[0].mxu0
      %v2730 = vadd.f32 0.0, %v2729
      %v2731 = vpop.f32.mrb[0].mxu0
      %2732 = vmatprep.mubr.f32.mxu0 0.0
      %2733 = vmatmul.mubr.f32.gmra.mrb[0].mxu0 %v953
      %v2734 = vpop.f32.mrb[0].mxu0
      %v2735 = vadd.f32 0.0, %v2734
      %v2736 = vpop.f32.mrb[0].mxu0
      %2737 = vmatprep.mubr.f32.mxu0 0.0
      %2738 = vmatmul.mubr.f32.gmra.mrb[0].mxu0 %v956
      %v2739 = vpop.f32.mrb[0].mxu0
      %v2740 = vadd.f32 0.0, %v2739
      %v2741 = vpop.f32.mrb[0].mxu0
      %2742 = vmatprep.mubr.f32.mxu0 0.0
      %2743 = vmatmul.mubr.f32.gmra.mrb[0].mxu0 %v959
      %v2744 = vpop.f32.mrb[0].mxu0
      %v2745 = vadd.f32 0.0, %v2744
      %v2746 = vpop.f32.mrb[0].mxu0
      %2747 = vmatprep.mubr.f32.mxu0 0.0
      %2748 = vmatmul.mubr.f32.gmra.mrb[0].mxu0 %v962
      %v2749 = vpop.f32.mrb[0].mxu0
      %v2750 = vadd.f32 0.0, %v2749
      %v2751 = vpop.f32.mrb[0].mxu0
      %2752 = vmatprep.mubr.f32.mxu0 0.0
      %2753 = vmatmul.mubr.f32.gmra.mrb[0].mxu0 %v965
      %v2754 = vpop.f32.mrb[0].mxu0
      %v2755 = vadd.f32 0.0, %v2754
      %v2756 = vpop.f32.mrb[0].mxu0
      %2757 = vmatprep.mubr.f32.mxu0 0.0
      %2758 = vmatmul.mubr.f32.gmra.mrb[0].mxu0 %v968
      %v2759 = vpop.f32.mrb[0].mxu0
      %v2760 = vadd.f32 0.0, %v2759
      %v2761 = vpop.f32.mrb[0].mxu0
      %2762 = vmatprep.mubr.f32.mxu0 0.0
      %2763 = vmatmul.mubr.f32.gmra.mrb[0].mxu0 %v971
      %v2764 = vpop.f32.mrb[0].mxu0
      %v2765 = vadd.f32 0.0, %v2764
      %v2766 = vpop.f32.mrb[0].mxu0
      %2767 = vmatprep.mubr.f32.mxu0 0.0
      %2768 = vmatmul.mubr.f32.gmra.mrb[0].mxu0 %v974
      %v2769 = vpop.f32.mrb[0].mxu0
      %v2770 = vadd.f32 0.0, %v2769
      %v2771 = vpop.f32.mrb[0].mxu0
      %2772 = vmatprep.mubr.f32.mxu0 0.0
      %2773 = vmatmul.mubr.f32.gmra.mrb[0].mxu0 %v977
      %v2774 = vpop.f32.mrb[0].mxu0
      %v2775 = vadd.f32 0.0, %v2774
      %v2776 = vpop.f32.mrb[0].mxu0
      %2777 = vmatprep.mubr.f32.mxu0 0.0
      %2778 = vmatmul.mubr.f32.gmra.mrb[0].mxu0 %v980
      %v2779 = vpop.f32.mrb[0].mxu0
      %v2780 = vadd.f32 0.0, %v2779
      %v2781 = vpop.f32.mrb[0].mxu0
      %2782 = vmatprep.mubr.f32.mxu0 0.0
      %2783 = vmatmul.mubr.f32.gmra.mrb[0].mxu0 %v983
      %v2784 = vpop.f32.mrb[0].mxu0
      %v2785 = vadd.f32 0.0, %v2784
      %v2786 = vpop.f32.mrb[0].mxu0
      %2787 = vmatprep.mubr.f32.mxu0 0.0
      %2788 = vmatmul.mubr.f32.gmra.mrb[0].mxu0 %v986
      %v2789 = vpop.f32.mrb[0].mxu0
      %v2790 = vadd.f32 0.0, %v2789
      %v2791 = vpop.f32.mrb[0].mxu0
      %2792 = vmatprep.mubr.f32.mxu0 0.0
      %2793 = vmatmul.mubr.f32.gmra.mrb[0].mxu0 %v989
      %v2794 = vpop.f32.mrb[0].mxu0
      %v2795 = vadd.f32 0.0, %v2794
      %v2796 = vpop.f32.mrb[0].mxu0
      %2797 = vmatprep.mubr.f32.mxu0 0.0
      %2798 = vmatmul.mubr.f32.gmra.mrb[0].mxu0 %v992
      %v2799 = vpop.f32.mrb[0].mxu0
      %v2800 = vadd.f32 0.0, %v2799
      %v2801 = vpop.f32.mrb[0].mxu0
      %2802 = vmatprep.mubr.f32.mxu0 0.0
      %2803 = vmatmul.mubr.f32.gmra.mrb[0].mxu0 %v995
      %v2804 = vpop.f32.mrb[0].mxu0
      %v2805 = vadd.f32 0.0, %v2804
      %v2806 = vpop.f32.mrb[0].mxu0
      %2807 = vmatprep.mubr.f32.mxu0 0.0
      %2808 = vmatmul.mubr.f32.gmra.mrb[0].mxu0 %v998
      %v2809 = vpop.f32.mrb[0].mxu0
      %v2810 = vadd.f32 0.0, %v2809
      %v2811 = vpop.f32.mrb[0].mxu0
      %2812 = vmatprep.mubr.f32.mxu0 0.0
      %2813 = vmatmul.mubr.f32.gmra.mrb[0].mxu0 %v1001
      %v2814 = vpop.f32.mrb[0].mxu0
      %v2815 = vadd.f32 0.0, %v2814
      %v2816 = vpop.f32.mrb[0].mxu0
      %2817 = vmatprep.mubr.f32.mxu0 0.0
      %2818 = vmatmul.mubr.f32.gmra.mrb[0].mxu0 %v1004
      %v2819 = vpop.f32.mrb[0].mxu0
      %v2820 = vadd.f32 0.0, %v2819
      %v2821 = vpop.f32.mrb[0].mxu0
      %2822 = vmatprep.mubr.f32.mxu0 0.0
      %2823 = vmatmul.mubr.f32.gmra.mrb[0].mxu0 %v1007
      %v2824 = vpop.f32.mrb[0].mxu0
      %v2825 = vadd.f32 0.0, %v2824
      %v2826 = vpop.f32.mrb[0].mxu0
      %2827 = vmatprep.mubr.f32.mxu0 0.0
      %2828 = vmatmul.mubr.f32.gmra.mrb[0].mxu0 %v1010
      %v2829 = vpop.f32.mrb[0].mxu0
      %v2830 = vadd.f32 0.0, %v2829
      %v2831 = vpop.f32.mrb[0].mxu0
      %2832 = vmatprep.mubr.f32.mxu0 0.0
      %2833 = vmatmul.mubr.f32.gmra.mrb[0].mxu0 %v1013
      %v2834 = vpop.f32.mrb[0].mxu0
      %v2835 = vadd.f32 0.0, %v2834
      %v2836 = vpop.f32.mrb[0].mxu0
      %2837 = vmatprep.mubr.f32.mxu0 0.0
      %2838 = vmatmul.mubr.f32.gmra.mrb[0].mxu0 %v1016
      %v2839 = vpop.f32.mrb[0].mxu0
      %v2840 = vadd.f32 0.0, %v2839
      %v2841 = vpop.f32.mrb[0].mxu0
      %2842 = vmatprep.mubr.f32.mxu0 0.0
      %2843 = vmatmul.mubr.f32.gmra.mrb[0].mxu0 %v1019
      %v2844 = vpop.f32.mrb[0].mxu0
      %v2845 = vadd.f32 0.0, %v2844
      %v2846 = vpop.f32.mrb[0].mxu0
      %2847 = vmatprep.mubr.f32.mxu0 0.0
      %2848 = vmatmul.mubr.f32.gmra.mrb[0].mxu0 %v1022
      %v2849 = vpop.f32.mrb[0].mxu0
      %v2850 = vadd.f32 0.0, %v2849
      %v2851 = vpop.f32.mrb[0].mxu0
      %2852 = vmatprep.mubr.f32.mxu0 0.0
      %2853 = vmatmul.mubr.f32.gmra.mrb[0].mxu0 %v1025
      %v2854 = vpop.f32.mrb[0].mxu0
      %v2855 = vadd.f32 0.0, %v2854
      %v2856 = vpop.f32.mrb[0].mxu0
      %2857 = vmatprep.mubr.f32.mxu0 0.0
      %2858 = vmatmul.mubr.f32.gmra.mrb[0].mxu0 %v1028
      %v2859 = vpop.f32.mrb[0].mxu0
      %v2860 = vadd.f32 0.0, %v2859
      %v2861 = vpop.f32.mrb[0].mxu0
      %2862 = vmatprep.mubr.f32.mxu0 0.0
      %2863 = vmatmul.mubr.f32.gmra.mrb[0].mxu0 %v1031
      %v2864 = vpop.f32.mrb[0].mxu0
      %v2865 = vadd.f32 0.0, %v2864
      %v2866 = vpop.f32.mrb[0].mxu0
      %2867 = vmatprep.mubr.f32.mxu0 0.0
      %2868 = vmatmul.mubr.f32.gmra.mrb[0].mxu0 %v1034
      %v2869 = vpop.f32.mrb[0].mxu0
      %v2870 = vadd.f32 0.0, %v2869
      %v2871 = vpop.f32.mrb[0].mxu0
      %2872 = vmatprep.mubr.f32.mxu0 0.0
      %2873 = vmatmul.mubr.f32.gmra.mrb[0].mxu0 %v1037
      %v2874 = vpop.f32.mrb[0].mxu0
      %v2875 = vadd.f32 0.0, %v2874
      %v2876 = vpop.f32.mrb[0].mxu0
      %2877 = vmatprep.mubr.f32.mxu0 0.0
      %2878 = vmatmul.mubr.f32.gmra.mrb[0].mxu0 %v1040
      %v2879 = vpop.f32.mrb[0].mxu0
      %v2880 = vadd.f32 0.0, %v2879
      %v2881 = vpop.f32.mrb[0].mxu0
      %2882 = vmatprep.mubr.f32.mxu0 0.0
      %2883 = vmatmul.mubr.f32.gmra.mrb[0].mxu0 %v1043
      %v2884 = vpop.f32.mrb[0].mxu0
      %v2885 = vadd.f32 0.0, %v2884
      %v2886 = vpop.f32.mrb[0].mxu0
      %2887 = vmatprep.mubr.f32.mxu0 0.0
      %2888 = vmatmul.mubr.f32.gmra.mrb[0].mxu0 %v1046
      %v2889 = vpop.f32.mrb[0].mxu0
      %v2890 = vadd.f32 0.0, %v2889
      %v2891 = vpop.f32.mrb[0].mxu0
      %2892 = vmatprep.mubr.f32.mxu0 0.0
      %2893 = vmatmul.mubr.f32.gmra.mrb[0].mxu0 %v1049
      %v2894 = vpop.f32.mrb[0].mxu0
      %v2895 = vadd.f32 0.0, %v2894
      %v2896 = vpop.f32.mrb[0].mxu0
      %2897 = vmatprep.mubr.f32.mxu0 0.0
      %2898 = vmatmul.mubr.f32.gmra.mrb[0].mxu0 %v1052
      %v2899 = vpop.f32.mrb[0].mxu0
      %v2900 = vadd.f32 0.0, %v2899
      %v2901 = vpop.f32.mrb[0].mxu0
      %2902 = vmatprep.mubr.f32.mxu0 0.0
      %2903 = vmatmul.mubr.f32.gmra.mrb[0].mxu0 %v1055
      %v2904 = vpop.f32.mrb[0].mxu0
      %v2905 = vadd.f32 0.0, %v2904
      %v2906 = vpop.f32.mrb[0].mxu0
      %2907 = vmatprep.mubr.f32.mxu0 0.0
      %2908 = vmatmul.mubr.f32.gmra.mrb[0].mxu0 %v1058
      %v2909 = vpop.f32.mrb[0].mxu0
      %v2910 = vadd.f32 0.0, %v2909
      %v2911 = vpop.f32.mrb[0].mxu0
      %2912 = vmatprep.mubr.f32.mxu0 0.0
      %2913 = vmatmul.mubr.f32.gmra.mrb[0].mxu0 %v1061
      %v2914 = vpop.f32.mrb[0].mxu0
      %v2915 = vadd.f32 0.0, %v2914
      %v2916 = vpop.f32.mrb[0].mxu0
      %2917 = vmatprep.mubr.f32.mxu0 0.0
      %2918 = vmatmul.mubr.f32.gmra.mrb[0].mxu0 %v1064
      %v2919 = vpop.f32.mrb[0].mxu0
      %v2920 = vadd.f32 0.0, %v2919
      %v2921 = vpop.f32.mrb[0].mxu0
      %2922 = vmatprep.mubr.f32.mxu0 0.0
      %2923 = vmatmul.mubr.f32.gmra.mrb[0].mxu0 %v1067
      %v2924 = vpop.f32.mrb[0].mxu0
      %v2925 = vadd.f32 0.0, %v2924
      %v2926 = vpop.f32.mrb[0].mxu0
      %2927 = vmatprep.mubr.f32.mxu0 0.0
      %2928 = vmatmul.mubr.f32.gmra.mrb[0].mxu0 %v1070
      %v2929 = vpop.f32.mrb[0].mxu0
      %v2930 = vadd.f32 0.0, %v2929
      %v2931 = vpop.f32.mrb[0].mxu0
      %2932 = vmatprep.mubr.f32.mxu0 0.0
      %2933 = vmatmul.mubr.f32.gmra.mrb[0].mxu0 %v1073
      %v2934 = vpop.f32.mrb[0].mxu0
      %v2935 = vadd.f32 0.0, %v2934
      %v2936 = vpop.f32.mrb[0].mxu0
      %2937 = vmatprep.mubr.f32.mxu0 0.0
      %2938 = vmatmul.mubr.f32.gmra.mrb[0].mxu0 %v1076
      %v2939 = vpop.f32.mrb[0].mxu0
      %v2940 = vadd.f32 0.0, %v2939
      %v2941 = vpop.f32.mrb[0].mxu0
      %2942 = vmatprep.mubr.f32.mxu0 0.0
      %2943 = vmatmul.mubr.f32.gmra.mrb[0].mxu0 %v1079
      %v2944 = vpop.f32.mrb[0].mxu0
      %v2945 = vadd.f32 0.0, %v2944
      %v2946 = vpop.f32.mrb[0].mxu0
      %2947 = vmatprep.mubr.f32.mxu0 0.0
      %2948 = vmatmul.mubr.f32.gmra.mrb[0].mxu0 %v1082
      %v2949 = vpop.f32.mrb[0].mxu0
      %v2950 = vadd.f32 0.0, %v2949
      %v2951 = vpop.f32.mrb[0].mxu0
      %2952 = vmatprep.mubr.f32.mxu0 0.0
      %2953 = vmatmul.mubr.f32.gmra.mrb[0].mxu0 %v1085
      %v2954 = vpop.f32.mrb[0].mxu0
      %v2955 = vadd.f32 0.0, %v2954
      %v2956 = vpop.f32.mrb[0].mxu0
      %2957 = vmatprep.mubr.f32.mxu0 0.0
      %2958 = vmatmul.mubr.f32.gmra.mrb[0].mxu0 %v1088
      %v2959 = vpop.f32.mrb[0].mxu0
      %v2960 = vadd.f32 0.0, %v2959
      %v2961 = vpop.f32.mrb[0].mxu0
      %2962 = vmatprep.mubr.f32.mxu0 0.0
      %2963 = vmatmul.mubr.f32.gmra.mrb[0].mxu0 %v1091
      %v2964 = vpop.f32.mrb[0].mxu0
      %v2965 = vadd.f32 0.0, %v2964
      %v2966 = vpop.f32.mrb[0].mxu0
      %2967 = vmatprep.mubr.f32.mxu0 0.0
      %2968 = vmatmul.mubr.f32.gmra.mrb[0].mxu0 %v1094
      %v2969 = vpop.f32.mrb[0].mxu0
      %v2970 = vadd.f32 0.0, %v2969
      %v2971 = vpop.f32.mrb[0].mxu0
      %2972 = vmatprep.mubr.f32.mxu0 0.0
      %2973 = vmatmul.mubr.f32.gmra.mrb[0].mxu0 %v1097
      %v2974 = vpop.f32.mrb[0].mxu0
      %v2975 = vadd.f32 0.0, %v2974
      %v2976 = vpop.f32.mrb[0].mxu0
      %2977 = vmatprep.mubr.f32.mxu0 0.0
      %2978 = vmatmul.mubr.f32.gmra.mrb[0].mxu0 %v1100
      %v2979 = vpop.f32.mrb[0].mxu0
      %v2980 = vadd.f32 0.0, %v2979
      %v2981 = vpop.f32.mrb[0].mxu0
      %2982 = vmatprep.mubr.f32.mxu0 0.0
      %2983 = vmatmul.mubr.f32.gmra.mrb[0].mxu0 %v1103
      %v2984 = vpop.f32.mrb[0].mxu0
      %v2985 = vadd.f32 0.0, %v2984
      %v2986 = vpop.f32.mrb[0].mxu0
      %2987 = vmatprep.mubr.f32.mxu0 0.0
      %2988 = vmatmul.mubr.f32.gmra.mrb[0].mxu0 %v1106
      %v2989 = vpop.f32.mrb[0].mxu0
      %v2990 = vadd.f32 0.0, %v2989
      %v2991 = vpop.f32.mrb[0].mxu0
      %2992 = vmatprep.mubr.f32.mxu0 0.0
      %2993 = vmatmul.mubr.f32.gmra.mrb[0].mxu0 %v1109
      %v2994 = vpop.f32.mrb[0].mxu0
      %v2995 = vadd.f32 0.0, %v2994
      %v2996 = vpop.f32.mrb[0].mxu0
      %2997 = vmatprep.mubr.f32.mxu0 0.0
      %2998 = vmatmul.mubr.f32.gmra.mrb[0].mxu0 %v1112
      %v2999 = vpop.f32.mrb[0].mxu0
      %v3000 = vadd.f32 0.0, %v2999
      %v3001 = vpop.f32.mrb[0].mxu0
      %3002 = vmatprep.mubr.f32.mxu0 0.0
      %3003 = vmatmul.mubr.f32.gmra.mrb[0].mxu0 %v1115
      %v3004 = vpop.f32.mrb[0].mxu0
      %v3005 = vadd.f32 0.0, %v3004
      %v3006 = vpop.f32.mrb[0].mxu0
      %3007 = vmatprep.mubr.f32.mxu0 0.0
      %3008 = vmatmul.mubr.f32.gmra.mrb[0].mxu0 %v1118
      %v3009 = vpop.f32.mrb[0].mxu0
      %v3010 = vadd.f32 0.0, %v3009
      %v3011 = vpop.f32.mrb[0].mxu0
      %3012 = vmatprep.mubr.f32.mxu0 0.0
      %3013 = vmatmul.mubr.f32.gmra.mrb[0].mxu0 %v1121
      %v3014 = vpop.f32.mrb[0].mxu0
      %v3015 = vadd.f32 0.0, %v3014
      %v3016 = vpop.f32.mrb[0].mxu0
      %3017 = vmatprep.mubr.f32.mxu0 0.0
      %3018 = vmatmul.mubr.f32.gmra.mrb[0].mxu0 %v1124
      %v3019 = vpop.f32.mrb[0].mxu0
      %v3020 = vadd.f32 0.0, %v3019
      %v3021 = vpop.f32.mrb[0].mxu0
      %3022 = vmatprep.mubr.f32.mxu0 0.0
      %3023 = vmatmul.mubr.f32.gmra.mrb[0].mxu0 %v1127
      %v3024 = vpop.f32.mrb[0].mxu0
      %v3025 = vadd.f32 0.0, %v3024
      %v3026 = vpop.f32.mrb[0].mxu0
      %3027 = vmatprep.mubr.f32.mxu0 0.0
      %3028 = vmatmul.mubr.f32.gmra.mrb[0].mxu0 %v1130
      %v3029 = vpop.f32.mrb[0].mxu0
      %v3030 = vadd.f32 0.0, %v3029
      %v3031 = vpop.f32.mrb[0].mxu0
      %3032 = vmatprep.mubr.f32.mxu0 0.0
      %3033 = vmatmul.mubr.f32.gmra.mrb[0].mxu0 %v1133
      %v3034 = vpop.f32.mrb[0].mxu0
      %v3035 = vadd.f32 0.0, %v3034
      %v3036 = vpop.f32.mrb[0].mxu0
      %3037 = vmatprep.mubr.f32.mxu0 0.0
      %3038 = vmatmul.mubr.f32.gmra.mrb[0].mxu0 %v1136
      %v3039 = vpop.f32.mrb[0].mxu0
      %v3040 = vadd.f32 0.0, %v3039
      %v3041 = vpop.f32.mrb[0].mxu0
      %3042 = vmatprep.mubr.f32.mxu0 0.0
      %3043 = vmatmul.mubr.f32.gmra.mrb[0].mxu0 %v1139
      %v3044 = vpop.f32.mrb[0].mxu0
      %v3045 = vadd.f32 0.0, %v3044
      %v3046 = vpop.f32.mrb[0].mxu0
      %3047 = vmatprep.mubr.f32.mxu0 0.0
      %3048 = vmatmul.mubr.f32.gmra.mrb[0].mxu0 %v1142
      %v3049 = vpop.f32.mrb[0].mxu0
      %v3050 = vadd.f32 0.0, %v3049
      %v3051 = vpop.f32.mrb[0].mxu0
      %3052 = vmatprep.mubr.f32.mxu0 0.0
      %3053 = vmatmul.mubr.f32.gmra.mrb[0].mxu0 %v1145
      %v3054 = vpop.f32.mrb[0].mxu0
      %v3055 = vadd.f32 0.0, %v3054
      %v3056 = vpop.f32.mrb[0].mxu0
      %3057 = vmatprep.mubr.f32.mxu0 0.0
      %3058 = vmatmul.mubr.f32.gmra.mrb[0].mxu0 %v1148
      %v3059 = vpop.f32.mrb[0].mxu0
      %v3060 = vadd.f32 0.0, %v3059
      %v3061 = vpop.f32.mrb[0].mxu0
      %3062 = vmatprep.mubr.f32.mxu0 0.0
      %3063 = vmatmul.mubr.f32.gmra.mrb[0].mxu0 %v1151
      %v3064 = vpop.f32.mrb[0].mxu0
      %v3065 = vadd.f32 0.0, %v3064
      %v3066 = vpop.f32.mrb[0].mxu0
      %3067 = vmatprep.mubr.f32.mxu0 0.0
      %3068 = vmatmul.mubr.f32.gmra.mrb[0].mxu0 %v1154
      %v3069 = vpop.f32.mrb[0].mxu0
      %v3070 = vadd.f32 0.0, %v3069
      %v3071 = vpop.f32.mrb[0].mxu0
      %3072 = vmatprep.mubr.f32.mxu0 0.0
      %3073 = vmatmul.mubr.f32.gmra.mrb[0].mxu0 %v1157
      %v3074 = vpop.f32.mrb[0].mxu0
      %v3075 = vadd.f32 0.0, %v3074
      %v3076 = vpop.f32.mrb[0].mxu0
      %3077 = vmatprep.mubr.f32.mxu0 0.0
      %3078 = vmatmul.mubr.f32.gmra.mrb[0].mxu0 %v1160
      %v3079 = vpop.f32.mrb[0].mxu0
      %v3080 = vadd.f32 0.0, %v3079
      %v3081 = vpop.f32.mrb[0].mxu0
      %3082 = vmatprep.mubr.f32.mxu0 0.0
      %3083 = vmatmul.mubr.f32.gmra.mrb[0].mxu0 %v1163
      %v3084 = vpop.f32.mrb[0].mxu0
      %v3085 = vadd.f32 0.0, %v3084
      %v3086 = vpop.f32.mrb[0].mxu0
      %3087 = vmatprep.mubr.f32.mxu0 0.0
      %3088 = vmatmul.mubr.f32.gmra.mrb[0].mxu0 %v1166
      %v3089 = vpop.f32.mrb[0].mxu0
      %v3090 = vadd.f32 0.0, %v3089
      %v3091 = vpop.f32.mrb[0].mxu0
      %3092 = vmatprep.mubr.f32.mxu0 0.0
      %3093 = vmatmul.mubr.f32.gmra.mrb[0].mxu0 %v1169
      %v3094 = vpop.f32.mrb[0].mxu0
      %v3095 = vadd.f32 0.0, %v3094
      %v3096 = vpop.f32.mrb[0].mxu0
      %3097 = vmatprep.mubr.f32.mxu0 0.0
      %3098 = vmatmul.mubr.f32.gmra.mrb[0].mxu0 %v1172
      %v3099 = vpop.f32.mrb[0].mxu0
      %v3100 = vadd.f32 0.0, %v3099
      %v3101 = vpop.f32.mrb[0].mxu0
      %3102 = vmatprep.mubr.f32.mxu0 0.0
      %3103 = vmatmul.mubr.f32.gmra.mrb[0].mxu0 %v1175
      %v3104 = vpop.f32.mrb[0].mxu0
      %v3105 = vadd.f32 0.0, %v3104
      %v3106 = vpop.f32.mrb[0].mxu0
      %3107 = vmatprep.mubr.f32.mxu0 0.0
      %3108 = vmatmul.mubr.f32.gmra.mrb[0].mxu0 %v1178
      %v3109 = vpop.f32.mrb[0].mxu0
      %v3110 = vadd.f32 0.0, %v3109
      %v3111 = vpop.f32.mrb[0].mxu0
      %3112 = vmatprep.mubr.f32.mxu0 0.0
      %3113 = vmatmul.mubr.f32.gmra.mrb[0].mxu0 %v1181
      %v3114 = vpop.f32.mrb[0].mxu0
      %v3115 = vadd.f32 0.0, %v3114
      %v3116 = vpop.f32.mrb[0].mxu0
      %3117 = vmatprep.mubr.f32.mxu0 0.0
      %3118 = vmatmul.mubr.f32.gmra.mrb[0].mxu0 %v1184
      %v3119 = vpop.f32.mrb[0].mxu0
      %v3120 = vadd.f32 0.0, %v3119
      %v3121 = vpop.f32.mrb[0].mxu0
      %3122 = vmatprep.mubr.f32.mxu0 0.0
      %3123 = vmatmul.mubr.f32.gmra.mrb[0].mxu0 %v1187
      %v3124 = vpop.f32.mrb[0].mxu0
      %v3125 = vadd.f32 0.0, %v3124
      %v3126 = vpop.f32.mrb[0].mxu0
      %3127 = vmatprep.mubr.f32.mxu0 0.0
      %3128 = vmatmul.mubr.f32.gmra.mrb[0].mxu0 %v1190
      %v3129 = vpop.f32.mrb[0].mxu0
      %v3130 = vadd.f32 0.0, %v3129
      %v3131 = vpop.f32.mrb[0].mxu0
      %3132 = vmatprep.mubr.f32.mxu0 0.0
      %3133 = vmatmul.mubr.f32.gmra.mrb[0].mxu0 %v1193
      %v3134 = vpop.f32.mrb[0].mxu0
      %v3135 = vadd.f32 0.0, %v3134
      %v3136 = vpop.f32.mrb[0].mxu0
      %3137 = vmatprep.mubr.f32.mxu0 0.0
      %3138 = vmatmul.mubr.f32.gmra.mrb[0].mxu0 %v1196
      %v3139 = vpop.f32.mrb[0].mxu0
      %v3140 = vadd.f32 0.0, %v3139
      %v3141 = vpop.f32.mrb[0].mxu0
      %3142 = vmatprep.mubr.f32.mxu0 0.0
      %3143 = vmatmul.mubr.f32.gmra.mrb[0].mxu0 %v1199
      %v3144 = vpop.f32.mrb[0].mxu0
      %v3145 = vadd.f32 0.0, %v3144
      %v3146 = vpop.f32.mrb[0].mxu0
      %3147 = vmatprep.mubr.f32.mxu0 0.0
      %3148 = vmatmul.mubr.f32.gmra.mrb[0].mxu0 %v1202
      %v3149 = vpop.f32.mrb[0].mxu0
      %v3150 = vadd.f32 0.0, %v3149
      %v3151 = vpop.f32.mrb[0].mxu0
      %3152 = vmatprep.mubr.f32.mxu0 0.0
      %3153 = vmatmul.mubr.f32.gmra.mrb[0].mxu0 %v1205
      %v3154 = vpop.f32.mrb[0].mxu0
      %v3155 = vadd.f32 0.0, %v3154
      %v3156 = vpop.f32.mrb[0].mxu0
      %3157 = vmatprep.mubr.f32.mxu0 0.0
      %3158 = vmatmul.mubr.f32.gmra.mrb[0].mxu0 %v1208
      %v3159 = vpop.f32.mrb[0].mxu0
      %v3160 = vadd.f32 0.0, %v3159
      %v3161 = vpop.f32.mrb[0].mxu0
      %3162 = vmatprep.mubr.f32.mxu0 0.0
      %3163 = vmatmul.mubr.f32.gmra.mrb[0].mxu0 %v1211
      %v3164 = vpop.f32.mrb[0].mxu0
      %v3165 = vadd.f32 0.0, %v3164
      %v3166 = vpop.f32.mrb[0].mxu0
      %3167 = vmatprep.mubr.f32.mxu0 0.0
      %3168 = vmatmul.mubr.f32.gmra.mrb[0].mxu0 %v1214
      %v3169 = vpop.f32.mrb[0].mxu0
      %v3170 = vadd.f32 0.0, %v3169
      %v3171 = vpop.f32.mrb[0].mxu0
      %3172 = vmatprep.mubr.f32.mxu0 0.0
      %3173 = vmatmul.mubr.f32.gmra.mrb[0].mxu0 %v1217
      %v3174 = vpop.f32.mrb[0].mxu0
      %v3175 = vadd.f32 0.0, %v3174
      %v3176 = vpop.f32.mrb[0].mxu0
      %3177 = vmatprep.mubr.f32.mxu0 0.0
      %3178 = vmatmul.mubr.f32.gmra.mrb[0].mxu0 %v1220
      %v3179 = vpop.f32.mrb[0].mxu0
      %v3180 = vadd.f32 0.0, %v3179
      %v3181 = vpop.f32.mrb[0].mxu0
      %3182 = vmatprep.mubr.f32.mxu0 0.0
      %3183 = vmatmul.mubr.f32.gmra.mrb[0].mxu0 %v1223
      %v3184 = vpop.f32.mrb[0].mxu0
      %v3185 = vadd.f32 0.0, %v3184
      %v3186 = vpop.f32.mrb[0].mxu0
      %3187 = vmatprep.mubr.f32.mxu0 0.0
      %3188 = vmatmul.mubr.f32.gmra.mrb[0].mxu0 %v1226
      %v3189 = vpop.f32.mrb[0].mxu0
      %v3190 = vadd.f32 0.0, %v3189
      %v3191 = vpop.f32.mrb[0].mxu0
      %3192 = vmatprep.mubr.f32.mxu0 0.0
      %3193 = vmatmul.mubr.f32.gmra.mrb[0].mxu0 %v1229
      %v3194 = vpop.f32.mrb[0].mxu0
      %v3195 = vadd.f32 0.0, %v3194
      %v3196 = vpop.f32.mrb[0].mxu0
      %3197 = vmatprep.mubr.f32.mxu0 0.0
      %3198 = vmatmul.mubr.f32.gmra.mrb[0].mxu0 %v1232
      %v3199 = vpop.f32.mrb[0].mxu0
      %v3200 = vadd.f32 0.0, %v3199
      %v3201 = vpop.f32.mrb[0].mxu0
      %3202 = vmatprep.mubr.f32.mxu0 0.0
      %3203 = vmatmul.mubr.f32.gmra.mrb[0].mxu0 %v1235
      %v3204 = vpop.f32.mrb[0].mxu0
      %v3205 = vadd.f32 0.0, %v3204
      %v3206 = vpop.f32.mrb[0].mxu0
      %3207 = vmatprep.mubr.f32.mxu0 0.0
      %3208 = vmatmul.mubr.f32.gmra.mrb[0].mxu0 %v1238
      %v3209 = vpop.f32.mrb[0].mxu0
      %v3210 = vadd.f32 0.0, %v3209
      %v3211 = vpop.f32.mrb[0].mxu0
      %3212 = vmatprep.mubr.f32.mxu0 0.0
      %3213 = vmatmul.mubr.f32.gmra.mrb[0].mxu0 %v1241
      %v3214 = vpop.f32.mrb[0].mxu0
      %v3215 = vadd.f32 0.0, %v3214
      %v3216 = vpop.f32.mrb[0].mxu0
      %3217 = vmatprep.mubr.f32.mxu0 0.0
      %3218 = vmatmul.mubr.f32.gmra.mrb[0].mxu0 %v1244
      %v3219 = vpop.f32.mrb[0].mxu0
      %v3220 = vadd.f32 0.0, %v3219
      %v3221 = vpop.f32.mrb[0].mxu0
      %3222 = vmatprep.mubr.f32.mxu0 0.0
      %3223 = vmatmul.mubr.f32.gmra.mrb[0].mxu0 %v1247
      %v3224 = vpop.f32.mrb[0].mxu0
      %v3225 = vadd.f32 0.0, %v3224
      %v3226 = vpop.f32.mrb[0].mxu0
      %3227 = vmatprep.mubr.f32.mxu0 0.0
      %3228 = vmatmul.mubr.f32.gmra.mrb[0].mxu0 %v1250
      %v3229 = vpop.f32.mrb[0].mxu0
      %v3230 = vadd.f32 0.0, %v3229
      %v3231 = vpop.f32.mrb[0].mxu0
      %3232 = vmatprep.mubr.f32.mxu0 0.0
      %3233 = vmatmul.mubr.f32.gmra.mrb[0].mxu0 %v1253
      %v3234 = vpop.f32.mrb[0].mxu0
      %v3235 = vadd.f32 0.0, %v3234
      %v3236 = vpop.f32.mrb[0].mxu0
      %3237 = vmatprep.mubr.f32.mxu0 0.0
      %3238 = vmatmul.mubr.f32.gmra.mrb[0].mxu0 %v1256
      %v3239 = vpop.f32.mrb[0].mxu0
      %v3240 = vadd.f32 0.0, %v3239
      %v3241 = vpop.f32.mrb[0].mxu0
      %3242 = vmatprep.mubr.f32.mxu0 0.0
      %3243 = vmatmul.mubr.f32.gmra.mrb[0].mxu0 %v1259
      %v3244 = vpop.f32.mrb[0].mxu0
      %v3245 = vadd.f32 0.0, %v3244
      %v3246 = vpop.f32.mrb[0].mxu0
      %3247 = vmatprep.mubr.f32.mxu0 0.0
      %3248 = vmatmul.mubr.f32.gmra.mrb[0].mxu0 %v1262
      %v3249 = vpop.f32.mrb[0].mxu0
      %v3250 = vadd.f32 0.0, %v3249
      %v3251 = vpop.f32.mrb[0].mxu0
      %3252 = vmatprep.mubr.f32.mxu0 0.0
      %3253 = vmatmul.mubr.f32.gmra.mrb[0].mxu0 %v1265
      %v3254 = vpop.f32.mrb[0].mxu0
      %v3255 = vadd.f32 0.0, %v3254
      %v3256 = vpop.f32.mrb[0].mxu0
      %3257 = vmatprep.mubr.f32.mxu0 0.0
      %3258 = vmatmul.mubr.f32.gmra.mrb[0].mxu0 %v1268
      %v3259 = vpop.f32.mrb[0].mxu0
      %v3260 = vadd.f32 0.0, %v3259
      %v3261 = vpop.f32.mrb[0].mxu0
      %3262 = vmatprep.mubr.f32.mxu0 0.0
      %3263 = vmatmul.mubr.f32.gmra.mrb[0].mxu0 %v1271
      %v3264 = vpop.f32.mrb[0].mxu0
      %v3265 = vadd.f32 0.0, %v3264
      %v3266 = vpop.f32.mrb[0].mxu0
      %3267 = vmatprep.mubr.f32.mxu0 0.0
      %3268 = vmatmul.mubr.f32.gmra.mrb[0].mxu0 %v1274
      %v3269 = vpop.f32.mrb[0].mxu0
      %v3270 = vadd.f32 0.0, %v3269
      %v3271 = vpop.f32.mrb[0].mxu0
      %3272 = vmatprep.mubr.f32.mxu0 0.0
      %3273 = vmatmul.mubr.f32.gmra.mrb[0].mxu0 %v1277
      %v3274 = vpop.f32.mrb[0].mxu0
      %v3275 = vadd.f32 0.0, %v3274
      %v3276 = vpop.f32.mrb[0].mxu0
      %3277 = vmatprep.mubr.f32.mxu0 0.0
      %3278 = vmatmul.mubr.f32.gmra.mrb[0].mxu0 %v1280
      %v3279 = vpop.f32.mrb[0].mxu0
      %v3280 = vadd.f32 0.0, %v3279
      %v3281 = vpop.f32.mrb[0].mxu0
      %3282 = vmatprep.mubr.f32.mxu0 0.0
      %3283 = vmatmul.mubr.f32.gmra.mrb[0].mxu0 %v1283
      %v3284 = vpop.f32.mrb[0].mxu0
      %v3285 = vadd.f32 0.0, %v3284
      %v3286 = vpop.f32.mrb[0].mxu0
      %3287 = vmatprep.mubr.f32.mxu0 0.0
      %3288 = vmatmul.mubr.f32.gmra.mrb[0].mxu0 %v1286
      %v3289 = vpop.f32.mrb[0].mxu0
      %v3290 = vadd.f32 0.0, %v3289
      %v3291 = vpop.f32.mrb[0].mxu0
      %3292 = vmatprep.mubr.f32.mxu0 0.0
      %3293 = vmatmul.mubr.f32.gmra.mrb[0].mxu0 %v1289
      %v3294 = vpop.f32.mrb[0].mxu0
      %v3295 = vadd.f32 0.0, %v3294
      %v3296 = vpop.f32.mrb[0].mxu0
      %3297 = vmatprep.mubr.f32.mxu0 0.0
      %3298 = vmatmul.mubr.f32.gmra.mrb[0].mxu0 %v1292
      %v3299 = vpop.f32.mrb[0].mxu0
      %v3300 = vadd.f32 0.0, %v3299
      %v3301 = vpop.f32.mrb[0].mxu0
      %3302 = vmatprep.mubr.f32.mxu0 0.0
      %3303 = vmatmul.mubr.f32.gmra.mrb[0].mxu0 %v1295
      %v3304 = vpop.f32.mrb[0].mxu0
      %v3305 = vadd.f32 0.0, %v3304
      %v3306 = vpop.f32.mrb[0].mxu0
      %3307 = vmatprep.mubr.f32.mxu0 0.0
      %3308 = vmatmul.mubr.f32.gmra.mrb[0].mxu0 %v1298
      %v3309 = vpop.f32.mrb[0].mxu0
      %v3310 = vadd.f32 0.0, %v3309
      %v3311 = vpop.f32.mrb[0].mxu0
      %3312 = vmatprep.mubr.f32.mxu0 0.0
      %3313 = vmatmul.mubr.f32.gmra.mrb[0].mxu0 %v1301
      %v3314 = vpop.f32.mrb[0].mxu0
      %v3315 = vadd.f32 0.0, %v3314
      %v3316 = vpop.f32.mrb[0].mxu0
      %3317 = vmatprep.mubr.f32.mxu0 0.0
      %3318 = vmatmul.mubr.f32.gmra.mrb[0].mxu0 %v1304
      %v3319 = vpop.f32.mrb[0].mxu0
      %v3320 = vadd.f32 0.0, %v3319
      %v3321 = vpop.f32.mrb[0].mxu0
      %3322 = vmatprep.mubr.f32.mxu0 0.0
      %3323 = vmatmul.mubr.f32.gmra.mrb[0].mxu0 %v1307
      %v3324 = vpop.f32.mrb[0].mxu0
      %v3325 = vadd.f32 0.0, %v3324
      %v3326 = vpop.f32.mrb[0].mxu0
      %3327 = vmatprep.mubr.f32.mxu0 0.0
      %3328 = vmatmul.mubr.f32.gmra.mrb[0].mxu0 %v1310
      %v3329 = vpop.f32.mrb[0].mxu0
      %v3330 = vadd.f32 0.0, %v3329
      %v3331 = vpop.f32.mrb[0].mxu0
      %3332 = vmatprep.mubr.f32.mxu0 0.0
      %3333 = vmatmul.mubr.f32.gmra.mrb[0].mxu0 %v1313
      %v3334 = vpop.f32.mrb[0].mxu0
      %v3335 = vadd.f32 0.0, %v3334
      %v3336 = vpop.f32.mrb[0].mxu0
      %3337 = vmatprep.mubr.f32.mxu0 0.0
      %3338 = vmatmul.mubr.f32.gmra.mrb[0].mxu0 %v1316
      %v3339 = vpop.f32.mrb[0].mxu0
      %v3340 = vadd.f32 0.0, %v3339
      %v3341 = vpop.f32.mrb[0].mxu0
      %3342 = vmatprep.mubr.f32.mxu0 0.0
      %3343 = vmatmul.mubr.f32.gmra.mrb[0].mxu0 %v1319
      %v3344 = vpop.f32.mrb[0].mxu0
      %v3345 = vadd.f32 0.0, %v3344
      %v3346 = vpop.f32.mrb[0].mxu0
      %3347 = vmatprep.mubr.f32.mxu0 0.0
      %3348 = vmatmul.mubr.f32.gmra.mrb[0].mxu0 %v1322
      %v3349 = vpop.f32.mrb[0].mxu0
      %v3350 = vadd.f32 0.0, %v3349
      %v3351 = vpop.f32.mrb[0].mxu0
      %3352 = vmatprep.mubr.f32.mxu0 0.0
      %3353 = vmatmul.mubr.f32.gmra.mrb[0].mxu0 %v1325
      %v3354 = vpop.f32.mrb[0].mxu0
      %v3355 = vadd.f32 0.0, %v3354
      %v3356 = vpop.f32.mrb[0].mxu0
      %3357 = vmatprep.mubr.f32.mxu0 0.0
      %3358 = vmatmul.mubr.f32.gmra.mrb[0].mxu0 %v1328
      %v3359 = vpop.f32.mrb[0].mxu0
      %v3360 = vadd.f32 0.0, %v3359
      %v3361 = vpop.f32.mrb[0].mxu0
      %3362 = vmatprep.mubr.f32.mxu0 0.0
      %3363 = vmatmul.mubr.f32.gmra.mrb[0].mxu0 %v1331
      %v3364 = vpop.f32.mrb[0].mxu0
      %v3365 = vadd.f32 0.0, %v3364
      %v3366 = vpop.f32.mrb[0].mxu0
      %3367 = vmatprep.mubr.f32.mxu0 0.0
      %3368 = vmatmul.mubr.f32.gmra.mrb[0].mxu0 %v1334
      %v3369 = vpop.f32.mrb[0].mxu0
      %v3370 = vadd.f32 0.0, %v3369
      %v3371 = vpop.f32.mrb[0].mxu0
      %3372 = vmatprep.mubr.f32.mxu0 0.0
      %3373 = vmatmul.mubr.f32.gmra.mrb[0].mxu0 %v1337
      %v3374 = vpop.f32.mrb[0].mxu0
      %v3375 = vadd.f32 0.0, %v3374
      %v3376 = vpop.f32.mrb[0].mxu0
      %3377 = vmatprep.mubr.f32.mxu0 0.0
      %3378 = vmatmul.mubr.f32.gmra.mrb[0].mxu0 %v1340
      %v3379 = vpop.f32.mrb[0].mxu0
      %v3380 = vadd.f32 0.0, %v3379
      %v3381 = vpop.f32.mrb[0].mxu0
      %3382 = vmatprep.mubr.f32.mxu0 0.0
      %3383 = vmatmul.mubr.f32.gmra.mrb[0].mxu0 %v1343
      %v3384 = vpop.f32.mrb[0].mxu0
      %v3385 = vadd.f32 0.0, %v3384
      %v3386 = vpop.f32.mrb[0].mxu0
      %3387 = vmatprep.mubr.f32.mxu0 0.0
      %3388 = vmatmul.mubr.f32.gmra.mrb[0].mxu0 %v1346
      %v3389 = vpop.f32.mrb[0].mxu0
      %v3390 = vadd.f32 0.0, %v3389
      %v3391 = vpop.f32.mrb[0].mxu0
      %3392 = vmatprep.mubr.f32.mxu0 0.0
      %3393 = vmatmul.mubr.f32.gmra.mrb[0].mxu0 %v1349
      %v3394 = vpop.f32.mrb[0].mxu0
      %v3395 = vadd.f32 0.0, %v3394
      %v3396 = vpop.f32.mrb[0].mxu0
      %3397 = vmatprep.mubr.f32.mxu0 0.0
      %3398 = vmatmul.mubr.f32.gmra.mrb[0].mxu0 %v1352
      %v3399 = vpop.f32.mrb[0].mxu0
      %v3400 = vadd.f32 0.0, %v3399
      %v3401 = vpop.f32.mrb[0].mxu0
      %3402 = vmatprep.mubr.f32.mxu0 0.0
      %3403 = vmatmul.mubr.f32.gmra.mrb[0].mxu0 %v1355
      %v3404 = vpop.f32.mrb[0].mxu0
      %v3405 = vadd.f32 0.0, %v3404
      %v3406 = vpop.f32.mrb[0].mxu0
      %3407 = vmatprep.mubr.f32.mxu0 0.0
      %3408 = vmatmul.mubr.f32.gmra.mrb[0].mxu0 %v1358
      %v3409 = vpop.f32.mrb[0].mxu0
      %v3410 = vadd.f32 0.0, %v3409
      %v3411 = vpop.f32.mrb[0].mxu0
      %3412 = vmatprep.mubr.f32.mxu0 0.0
      %3413 = vmatmul.mubr.f32.gmra.mrb[0].mxu0 %v1361
      %v3414 = vpop.f32.mrb[0].mxu0
      %v3415 = vadd.f32 0.0, %v3414
      %v3416 = vpop.f32.mrb[0].mxu0
      %3417 = vmatprep.mubr.f32.mxu0 0.0
      %3418 = vmatmul.mubr.f32.gmra.mrb[0].mxu0 %v1364
      %v3419 = vpop.f32.mrb[0].mxu0
      %v3420 = vadd.f32 0.0, %v3419
      %v3421 = vpop.f32.mrb[0].mxu0
      %3422 = vmatprep.mubr.f32.mxu0 0.0
      %3423 = vmatmul.mubr.f32.gmra.mrb[0].mxu0 %v1367
      %v3424 = vpop.f32.mrb[0].mxu0
      %v3425 = vadd.f32 0.0, %v3424
      %v3426 = vpop.f32.mrb[0].mxu0
      %3427 = vmatprep.mubr.f32.mxu0 0.0
      %3428 = vmatmul.mubr.f32.gmra.mrb[0].mxu0 %v1370
      %v3429 = vpop.f32.mrb[0].mxu0
      %v3430 = vadd.f32 0.0, %v3429
      %v3431 = vpop.f32.mrb[0].mxu0
      %3432 = vmatprep.mubr.f32.mxu0 0.0
      %3433 = vmatmul.mubr.f32.gmra.mrb[0].mxu0 %v1373
      %v3434 = vpop.f32.mrb[0].mxu0
      %v3435 = vadd.f32 0.0, %v3434
      %v3436 = vpop.f32.mrb[0].mxu0
      %3437 = vmatprep.mubr.f32.mxu0 0.0
      %3438 = vmatmul.mubr.f32.gmra.mrb[0].mxu0 %v1376
      %v3439 = vpop.f32.mrb[0].mxu0
      %v3440 = vadd.f32 0.0, %v3439
      %v3441 = vpop.f32.mrb[0].mxu0
      %3442 = vmatprep.mubr.f32.mxu0 0.0
      %3443 = vmatmul.mubr.f32.gmra.mrb[0].mxu0 %v1379
      %v3444 = vpop.f32.mrb[0].mxu0
      %v3445 = vadd.f32 0.0, %v3444
      %v3446 = vpop.f32.mrb[0].mxu0
      %3447 = vmatprep.mubr.f32.mxu0 0.0
      %3448 = vmatmul.mubr.f32.gmra.mrb[0].mxu0 %v1382
      %v3449 = vpop.f32.mrb[0].mxu0
      %v3450 = vadd.f32 0.0, %v3449
      %v3451 = vpop.f32.mrb[0].mxu0
      %3452 = vmatprep.mubr.f32.mxu0 0.0
      %3453 = vmatmul.mubr.f32.gmra.mrb[0].mxu0 %v1385
      %v3454 = vpop.f32.mrb[0].mxu0
      %v3455 = vadd.f32 0.0, %v3454
      %v3456 = vpop.f32.mrb[0].mxu0
      %3457 = vmatprep.mubr.f32.mxu0 0.0
      %3458 = vmatmul.mubr.f32.gmra.mrb[0].mxu0 %v1388
      %v3459 = vpop.f32.mrb[0].mxu0
      %v3460 = vadd.f32 0.0, %v3459
      %v3461 = vpop.f32.mrb[0].mxu0
      %3462 = vmatprep.mubr.f32.mxu0 0.0
      %3463 = vmatmul.mubr.f32.gmra.mrb[0].mxu0 %v1391
      %v3464 = vpop.f32.mrb[0].mxu0
      %v3465 = vadd.f32 0.0, %v3464
      %v3466 = vpop.f32.mrb[0].mxu0
      %3467 = vmatprep.mubr.f32.mxu0 0.0
      %3468 = vmatmul.mubr.f32.gmra.mrb[0].mxu0 %v1394
      %v3469 = vpop.f32.mrb[0].mxu0
      %v3470 = vadd.f32 0.0, %v3469
      %v3471 = vpop.f32.mrb[0].mxu0
      %3472 = vmatprep.mubr.f32.mxu0 0.0
      %3473 = vmatmul.mubr.f32.gmra.mrb[0].mxu0 %v1397
      %v3474 = vpop.f32.mrb[0].mxu0
      %v3475 = vadd.f32 0.0, %v3474
      %v3476 = vpop.f32.mrb[0].mxu0
      %3477 = vmatprep.mubr.f32.mxu0 0.0
      %3478 = vmatmul.mubr.f32.gmra.mrb[0].mxu0 %v1400
      %v3479 = vpop.f32.mrb[0].mxu0
      %v3480 = vadd.f32 0.0, %v3479
      %v3481 = vpop.f32.mrb[0].mxu0
      %3482 = vmatprep.mubr.f32.mxu0 0.0
      %3483 = vmatmul.mubr.f32.gmra.mrb[0].mxu0 %v1403
      %v3484 = vpop.f32.mrb[0].mxu0
      %v3485 = vadd.f32 0.0, %v3484
      %v3486 = vpop.f32.mrb[0].mxu0
      %3487 = vmatprep.mubr.f32.mxu0 0.0
      %3488 = vmatmul.mubr.f32.gmra.mrb[0].mxu0 %v1406
      %v3489 = vpop.f32.mrb[0].mxu0
      %v3490 = vadd.f32 0.0, %v3489
      %v3491 = vpop.f32.mrb[0].mxu0
      %3492 = vmatprep.mubr.f32.mxu0 0.0
      %3493 = vmatmul.mubr.f32.gmra.mrb[0].mxu0 %v1409
      %v3494 = vpop.f32.mrb[0].mxu0
      %v3495 = vadd.f32 0.0, %v3494
      %v3496 = vpop.f32.mrb[0].mxu0
      %3497 = vmatprep.mubr.f32.mxu0 0.0
      %3498 = vmatmul.mubr.f32.gmra.mrb[0].mxu0 %v1412
      %v3499 = vpop.f32.mrb[0].mxu0
      %v3500 = vadd.f32 0.0, %v3499
      %v3501 = vpop.f32.mrb[0].mxu0
      %3502 = vmatprep.mubr.f32.mxu0 0.0
      %3503 = vmatmul.mubr.f32.gmra.mrb[0].mxu0 %v1415
      %v3504 = vpop.f32.mrb[0].mxu0
      %v3505 = vadd.f32 0.0, %v3504
      %v3506 = vpop.f32.mrb[0].mxu0
      %3507 = vmatprep.mubr.f32.mxu0 0.0
      %3508 = vmatmul.mubr.f32.gmra.mrb[0].mxu0 %v1418
      %v3509 = vpop.f32.mrb[0].mxu0
      %v3510 = vadd.f32 0.0, %v3509
      %v3511 = vpop.f32.mrb[0].mxu0
      %3512 = vmatprep.mubr.f32.mxu0 0.0
      %3513 = vmatmul.mubr.f32.gmra.mrb[0].mxu0 %v1421
      %v3514 = vpop.f32.mrb[0].mxu0
      %v3515 = vadd.f32 0.0, %v3514
      %v3516 = vpop.f32.mrb[0].mxu0
      %3517 = vmatprep.mubr.f32.mxu0 0.0
      %3518 = vmatmul.mubr.f32.gmra.mrb[0].mxu0 %v1424
      %v3519 = vpop.f32.mrb[0].mxu0
      %v3520 = vadd.f32 0.0, %v3519
      %v3521 = vpop.f32.mrb[0].mxu0
      %3522 = vmatprep.mubr.f32.mxu0 0.0
      %3523 = vmatmul.mubr.f32.gmra.mrb[0].mxu0 %v1427
      %v3524 = vpop.f32.mrb[0].mxu0
      %v3525 = vadd.f32 0.0, %v3524
      %v3526 = vpop.f32.mrb[0].mxu0
      %3527 = vmatprep.mubr.f32.mxu0 0.0
      %3528 = vmatmul.mubr.f32.gmra.mrb[0].mxu0 %v1430
      %v3529 = vpop.f32.mrb[0].mxu0
      %v3530 = vadd.f32 0.0, %v3529
      %v3531 = vpop.f32.mrb[0].mxu0
      %3532 = vmatprep.mubr.f32.mxu0 0.0
      %3533 = vmatmul.mubr.f32.gmra.mrb[0].mxu0 %v1433
      %v3534 = vpop.f32.mrb[0].mxu0
      %v3535 = vadd.f32 0.0, %v3534
      %v3536 = vpop.f32.mrb[0].mxu0
      %3537 = vmatprep.mubr.f32.mxu0 0.0
      %3538 = vmatmul.mubr.f32.gmra.mrb[0].mxu0 %v1436
      %v3539 = vpop.f32.mrb[0].mxu0
      %v3540 = vadd.f32 0.0, %v3539
      %v3541 = vpop.f32.mrb[0].mxu0
      %3542 = vmatprep.mubr.f32.mxu0 0.0
      %3543 = vmatmul.mubr.f32.gmra.mrb[0].mxu0 %v1439
      %v3544 = vpop.f32.mrb[0].mxu0
      %v3545 = vadd.f32 0.0, %v3544
      %v3546 = vpop.f32.mrb[0].mxu0
      %3547 = vmatprep.mubr.f32.mxu0 0.0
      %3548 = vmatmul.mubr.f32.gmra.mrb[0].mxu0 %v1442
      %v3549 = vpop.f32.mrb[0].mxu0
      %v3550 = vadd.f32 0.0, %v3549
      %v3551 = vpop.f32.mrb[0].mxu0
      %3552 = vmatprep.mubr.f32.mxu0 0.0
      %3553 = vmatmul.mubr.f32.gmra.mrb[0].mxu0 %v1445
      %v3554 = vpop.f32.mrb[0].mxu0
      %v3555 = vadd.f32 0.0, %v3554
      %v3556 = vpop.f32.mrb[0].mxu0
      %3557 = vmatprep.mubr.f32.mxu0 0.0
      %3558 = vmatmul.mubr.f32.gmra.mrb[0].mxu0 %v1448
      %v3559 = vpop.f32.mrb[0].mxu0
      %v3560 = vadd.f32 0.0, %v3559
      %v3561 = vpop.f32.mrb[0].mxu0
      %3562 = vmatprep.mubr.f32.mxu0 0.0
      %3563 = vmatmul.mubr.f32.gmra.mrb[0].mxu0 %v1451
      %v3564 = vpop.f32.mrb[0].mxu0
      %v3565 = vadd.f32 0.0, %v3564
      %v3566 = vpop.f32.mrb[0].mxu0
      %3567 = vmatprep.mubr.f32.mxu0 0.0
      %3568 = vmatmul.mubr.f32.gmra.mrb[0].mxu0 %v1454
      %v3569 = vpop.f32.mrb[0].mxu0
      %v3570 = vadd.f32 0.0, %v3569
      %v3571 = vpop.f32.mrb[0].mxu0
      %3572 = vmatprep.mubr.f32.mxu0 0.0
      %3573 = vmatmul.mubr.f32.gmra.mrb[0].mxu0 %v1457
      %v3574 = vpop.f32.mrb[0].mxu0
      %v3575 = vadd.f32 0.0, %v3574
      %v3576 = vpop.f32.mrb[0].mxu0
      %3577 = vmatprep.mubr.f32.mxu0 0.0
      %3578 = vmatmul.mubr.f32.gmra.mrb[0].mxu0 %v1460
      %v3579 = vpop.f32.mrb[0].mxu0
      %v3580 = vadd.f32 0.0, %v3579
      %v3581 = vpop.f32.mrb[0].mxu0
      %3582 = vmatprep.mubr.f32.mxu0 0.0
      %3583 = vmatmul.mubr.f32.gmra.mrb[0].mxu0 %v1463
      %v3584 = vpop.f32.mrb[0].mxu0
      %v3585 = vadd.f32 0.0, %v3584
      %v3586 = vpop.f32.mrb[0].mxu0
      %3587 = vmatprep.mubr.f32.mxu0 0.0
      %3588 = vmatmul.mubr.f32.gmra.mrb[0].mxu0 %v1466
      %v3589 = vpop.f32.mrb[0].mxu0
      %v3590 = vadd.f32 0.0, %v3589
      %v3591 = vpop.f32.mrb[0].mxu0
      %3592 = vmatprep.mubr.f32.mxu0 0.0
      %3593 = vmatmul.mubr.f32.gmra.mrb[0].mxu0 %v1469
      %v3594 = vpop.f32.mrb[0].mxu0
      %v3595 = vadd.f32 0.0, %v3594
      %v3596 = vpop.f32.mrb[0].mxu0
      %3597 = vmatprep.mubr.f32.mxu0 0.0
      %3598 = vmatmul.mubr.f32.gmra.mrb[0].mxu0 %v1472
      %v3599 = vpop.f32.mrb[0].mxu0
      %v3600 = vadd.f32 0.0, %v3599
      %v3601 = vpop.f32.mrb[0].mxu0
      %3602 = vmatprep.mubr.f32.mxu0 0.0
      %3603 = vmatmul.mubr.f32.gmra.mrb[0].mxu0 %v1475
      %v3604 = vpop.f32.mrb[0].mxu0
      %v3605 = vadd.f32 0.0, %v3604
      %v3606 = vpop.f32.mrb[0].mxu0
      %3607 = vmatprep.mubr.f32.mxu0 0.0
      %3608 = vmatmul.mubr.f32.gmra.mrb[0].mxu0 %v1478
      %v3609 = vpop.f32.mrb[0].mxu0
      %v3610 = vadd.f32 0.0, %v3609
      %v3611 = vpop.f32.mrb[0].mxu0
      %3612 = vmatprep.mubr.f32.mxu0 0.0
      %3613 = vmatmul.mubr.f32.gmra.mrb[0].mxu0 %v1481
      %v3614 = vpop.f32.mrb[0].mxu0
      %v3615 = vadd.f32 0.0, %v3614
      %v3616 = vpop.f32.mrb[0].mxu0
      %3617 = vmatprep.mubr.f32.mxu0 0.0
      %3618 = vmatmul.mubr.f32.gmra.mrb[0].mxu0 %v1484
      %v3619 = vpop.f32.mrb[0].mxu0
      %v3620 = vadd.f32 0.0, %v3619
      %v3621 = vpop.f32.mrb[0].mxu0
      %3622 = vmatprep.mubr.f32.mxu0 0.0
      %3623 = vmatmul.mubr.f32.gmra.mrb[0].mxu0 %v1487
      %v3624 = vpop.f32.mrb[0].mxu0
      %v3625 = vadd.f32 0.0, %v3624
      %v3626 = vpop.f32.mrb[0].mxu0
      %3627 = vmatprep.mubr.f32.mxu0 0.0
      %3628 = vmatmul.mubr.f32.gmra.mrb[0].mxu0 %v1490
      %v3629 = vpop.f32.mrb[0].mxu0
      %v3630 = vadd.f32 0.0, %v3629
      %v3631 = vpop.f32.mrb[0].mxu0
      %3632 = vmatprep.mubr.f32.mxu0 0.0
      %3633 = vmatmul.mubr.f32.gmra.mrb[0].mxu0 %v1493
      %v3634 = vpop.f32.mrb[0].mxu0
      %v3635 = vadd.f32 0.0, %v3634
      %v3636 = vpop.f32.mrb[0].mxu0
      %3637 = vmatprep.mubr.f32.mxu0 0.0
      %3638 = vmatmul.mubr.f32.gmra.mrb[0].mxu0 %v1496
      %v3639 = vpop.f32.mrb[0].mxu0
      %v3640 = vadd.f32 0.0, %v3639
      %v3641 = vpop.f32.mrb[0].mxu0
      %3642 = vmatprep.mubr.f32.mxu0 0.0
      %3643 = vmatmul.mubr.f32.gmra.mrb[0].mxu0 %v1499
      %v3644 = vpop.f32.mrb[0].mxu0
      %v3645 = vadd.f32 0.0, %v3644
      %v3646 = vpop.f32.mrb[0].mxu0
      %3647 = vmatprep.mubr.f32.mxu0 0.0
      %3648 = vmatmul.mubr.f32.gmra.mrb[0].mxu0 %v1502
      %v3649 = vpop.f32.mrb[0].mxu0
      %v3650 = vadd.f32 0.0, %v3649
      %v3651 = vpop.f32.mrb[0].mxu0
      %3652 = vmatprep.mubr.f32.mxu0 0.0
      %3653 = vmatmul.mubr.f32.gmra.mrb[0].mxu0 %v1505
      %v3654 = vpop.f32.mrb[0].mxu0
      %v3655 = vadd.f32 0.0, %v3654
      %v3656 = vpop.f32.mrb[0].mxu0
      %3657 = vmatprep.mubr.f32.mxu0 0.0
      %3658 = vmatmul.mubr.f32.gmra.mrb[0].mxu0 %v1508
      %v3659 = vpop.f32.mrb[0].mxu0
      %v3660 = vadd.f32 0.0, %v3659
      %v3661 = vpop.f32.mrb[0].mxu0
      %3662 = vmatprep.mubr.f32.mxu0 0.0
      %3663 = vmatmul.mubr.f32.gmra.mrb[0].mxu0 %v1511
      %v3664 = vpop.f32.mrb[0].mxu0
      %v3665 = vadd.f32 0.0, %v3664
      %v3666 = vpop.f32.mrb[0].mxu0
      %3667 = vmatprep.mubr.f32.mxu0 0.0
      %3668 = vmatmul.mubr.f32.gmra.mrb[0].mxu0 %v1514
      %v3669 = vpop.f32.mrb[0].mxu0
      %v3670 = vadd.f32 0.0, %v3669
      %v3671 = vpop.f32.mrb[0].mxu0
      %3672 = vmatprep.mubr.f32.mxu0 0.0
      %3673 = vmatmul.mubr.f32.gmra.mrb[0].mxu0 %v1517
      %v3674 = vpop.f32.mrb[0].mxu0
      %v3675 = vadd.f32 0.0, %v3674
      %v3676 = vpop.f32.mrb[0].mxu0
      %3677 = vmatprep.mubr.f32.mxu0 0.0
      %3678 = vmatmul.mubr.f32.gmra.mrb[0].mxu0 %v1520
      %v3679 = vpop.f32.mrb[0].mxu0
      %v3680 = vadd.f32 0.0, %v3679
      %v3681 = vpop.f32.mrb[0].mxu0
      %3682 = vmatprep.mubr.f32.mxu0 0.0
      %3683 = vmatmul.mubr.f32.gmra.mrb[0].mxu0 %v1523
      %v3684 = vpop.f32.mrb[0].mxu0
      %v3685 = vadd.f32 0.0, %v3684
      %v3686 = vpop.f32.mrb[0].mxu0
      %3687 = vmatprep.mubr.f32.mxu0 0.0
      %3688 = vmatmul.mubr.f32.gmra.mrb[0].mxu0 %v1526
      %v3689 = vpop.f32.mrb[0].mxu0
      %v3690 = vadd.f32 0.0, %v3689
      %v3691 = vpop.f32.mrb[0].mxu0
      %3692 = vmatprep.mubr.f32.mxu0 0.0
      %3693 = vmatmul.mubr.f32.gmra.mrb[0].mxu0 %v1529
      %v3694 = vpop.f32.mrb[0].mxu0
      %v3695 = vadd.f32 0.0, %v3694
      %v3696 = vpop.f32.mrb[0].mxu0
      %3697 = vmatprep.mubr.f32.mxu0 0.0
      %3698 = vmatmul.mubr.f32.gmra.mrb[0].mxu0 %v1532
      %v3699 = vpop.f32.mrb[0].mxu0
      %v3700 = vadd.f32 0.0, %v3699
      %v3701 = vpop.f32.mrb[0].mxu0
      %3702 = vmatprep.mubr.f32.mxu0 0.0
      %3703 = vmatmul.mubr.f32.gmra.mrb[0].mxu0 %v1535
      %v3704 = vpop.f32.mrb[0].mxu0
      %v3705 = vadd.f32 0.0, %v3704
      %v3706 = vpop.f32.mrb[0].mxu0
      %3707 = vmatprep.mubr.f32.mxu0 0.0
      %3708 = vmatmul.mubr.f32.gmra.mrb[0].mxu0 %v1538
      %v3709 = vpop.f32.mrb[0].mxu0
      %v3710 = vadd.f32 0.0, %v3709
      %v3711 = vpop.f32.mrb[0].mxu0
      %3712 = vmatprep.mubr.f32.mxu0 0.0
      %3713 = vmatmul.mubr.f32.gmra.mrb[0].mxu0 %v1541
      %v3714 = vpop.f32.mrb[0].mxu0
      %v3715 = vadd.f32 0.0, %v3714
      %v3716 = vpop.f32.mrb[0].mxu0
      %3717 = vmatprep.mubr.f32.mxu0 0.0
      %3718 = vmatmul.mubr.f32.gmra.mrb[0].mxu0 %v1544
      %v3719 = vpop.f32.mrb[0].mxu0
      %v3720 = vadd.f32 0.0, %v3719
      %v3721 = vpop.f32.mrb[0].mxu0
      %3722 = vmatprep.mubr.f32.mxu0 0.0
      %3723 = vmatmul.mubr.f32.gmra.mrb[0].mxu0 %v1547
      %v3724 = vpop.f32.mrb[0].mxu0
      %v3725 = vadd.f32 0.0, %v3724
      %v3726 = vpop.f32.mrb[0].mxu0
      %3727 = vmatprep.mubr.f32.mxu0 0.0
      %3728 = vmatmul.mubr.f32.gmra.mrb[0].mxu0 %v1550
      %v3729 = vpop.f32.mrb[0].mxu0
      %v3730 = vadd.f32 0.0, %v3729
      %v3731 = vpop.f32.mrb[0].mxu0
      %3732 = vmatprep.mubr.f32.mxu0 0.0
      %3733 = vmatmul.mubr.f32.gmra.mrb[0].mxu0 %v1553
      %v3734 = vpop.f32.mrb[0].mxu0
      %v3735 = vadd.f32 0.0, %v3734
      %v3736 = vpop.f32.mrb[0].mxu0
      %3737 = vmatprep.mubr.f32.mxu0 0.0
      %3738 = vmatmul.mubr.f32.gmra.mrb[0].mxu0 %v1556
      %v3739 = vpop.f32.mrb[0].mxu0
      %v3740 = vadd.f32 0.0, %v3739
      %v3741 = vpop.f32.mrb[0].mxu0
      %3742 = vmatprep.mubr.f32.mxu0 0.0
      %3743 = vmatmul.mubr.f32.gmra.mrb[0].mxu0 %v1559
      %v3744 = vpop.f32.mrb[0].mxu0
      %v3745 = vadd.f32 0.0, %v3744
      %v3746 = vpop.f32.mrb[0].mxu0
      %3747 = vmatprep.mubr.f32.mxu0 0.0
      %3748 = vmatmul.mubr.f32.gmra.mrb[0].mxu0 %v1562
      %v3749 = vpop.f32.mrb[0].mxu0
      %v3750 = vadd.f32 0.0, %v3749
      %v3751 = vpop.f32.mrb[0].mxu0
      %3752 = vmatprep.mubr.f32.mxu0 0.0
      %3753 = vmatmul.mubr.f32.gmra.mrb[0].mxu0 %v1565
      %v3754 = vpop.f32.mrb[0].mxu0
      %v3755 = vadd.f32 0.0, %v3754
      %v3756 = vpop.f32.mrb[0].mxu0
      %3757 = vmatprep.mubr.f32.mxu0 0.0
      %3758 = vmatmul.mubr.f32.gmra.mrb[0].mxu0 %v1568
      %v3759 = vpop.f32.mrb[0].mxu0
      %v3760 = vadd.f32 0.0, %v3759
      %v3761 = vpop.f32.mrb[0].mxu0
      %3762 = vmatprep.mubr.f32.mxu0 0.0
      %3763 = vmatmul.mubr.f32.gmra.mrb[0].mxu0 %v1571
      %v3764 = vpop.f32.mrb[0].mxu0
      %v3765 = vadd.f32 0.0, %v3764
      %v3766 = vpop.f32.mrb[0].mxu0
      %3767 = vmatprep.mubr.f32.mxu0 0.0
      %3768 = vmatmul.mubr.f32.gmra.mrb[0].mxu0 %v1574
      %v3769 = vpop.f32.mrb[0].mxu0
      %v3770 = vadd.f32 0.0, %v3769
      %v3771 = vpop.f32.mrb[0].mxu0
      %3772 = vmatprep.mubr.f32.mxu0 0.0
      %3773 = vmatmul.mubr.f32.gmra.mrb[0].mxu0 %v1577
      %v3774 = vpop.f32.mrb[0].mxu0
      %v3775 = vadd.f32 0.0, %v3774
      %v3776 = vpop.f32.mrb[0].mxu0
      %3777 = vmatprep.mubr.f32.mxu0 0.0
      %3778 = vmatmul.mubr.f32.gmra.mrb[0].mxu0 %v1580
      %v3779 = vpop.f32.mrb[0].mxu0
      %v3780 = vadd.f32 0.0, %v3779
      %v3781 = vpop.f32.mrb[0].mxu0
      %3782 = vmatprep.mubr.f32.mxu0 0.0
      %3783 = vmatmul.mubr.f32.gmra.mrb[0].mxu0 %v1583
      %v3784 = vpop.f32.mrb[0].mxu0
      %v3785 = vadd.f32 0.0, %v3784
      %v3786 = vpop.f32.mrb[0].mxu0
      %3787 = vmatprep.mubr.f32.mxu0 0.0
      %3788 = vmatmul.mubr.f32.gmra.mrb[0].mxu0 %v1586
      %v3789 = vpop.f32.mrb[0].mxu0
      %v3790 = vadd.f32 0.0, %v3789
      %v3791 = vpop.f32.mrb[0].mxu0
      %3792 = vmatprep.mubr.f32.mxu0 0.0
      %3793 = vmatmul.mubr.f32.gmra.mrb[0].mxu0 %v1589
      %v3794 = vpop.f32.mrb[0].mxu0
      %v3795 = vadd.f32 0.0, %v3794
      %v3796 = vpop.f32.mrb[0].mxu0
      %3797 = vmatprep.mubr.f32.mxu0 0.0
      %3798 = vmatmul.mubr.f32.gmra.mrb[0].mxu0 %v1592
      %v3799 = vpop.f32.mrb[0].mxu0
      %v3800 = vadd.f32 0.0, %v3799
      %v3801 = vpop.f32.mrb[0].mxu0
      %3802 = vmatprep.mubr.f32.mxu0 0.0
      %3803 = vmatmul.mubr.f32.gmra.mrb[0].mxu0 %v1595
      %v3804 = vpop.f32.mrb[0].mxu0
      %v3805 = vadd.f32 0.0, %v3804
      %v3806 = vpop.f32.mrb[0].mxu0
      %3807 = vmatprep.mubr.f32.mxu0 0.0
      %3808 = vmatmul.mubr.f32.gmra.mrb[0].mxu0 %v1598
      %v3809 = vpop.f32.mrb[0].mxu0
      %v3810 = vadd.f32 0.0, %v3809
      %v3811 = vpop.f32.mrb[0].mxu0
      %3812 = vmatprep.mubr.f32.mxu0 0.0
      %3813 = vmatmul.mubr.f32.gmra.mrb[0].mxu0 %v1601
      %v3814 = vpop.f32.mrb[0].mxu0
      %v3815 = vadd.f32 0.0, %v3814
      %v3816 = vpop.f32.mrb[0].mxu0
      %3817 = vmatprep.mubr.f32.mxu0 0.0
      %3818 = vmatmul.mubr.f32.gmra.mrb[0].mxu0 %v1604
      %v3819 = vpop.f32.mrb[0].mxu0
      %v3820 = vadd.f32 0.0, %v3819
      %v3821 = vpop.f32.mrb[0].mxu0
      %3822 = vmatprep.mubr.f32.mxu0 0.0
      %3823 = vmatmul.mubr.f32.gmra.mrb[0].mxu0 %v1607
      %v3824 = vpop.f32.mrb[0].mxu0
      %v3825 = vadd.f32 0.0, %v3824
      %v3826 = vpop.f32.mrb[0].mxu0
      %3827 = vmatprep.mubr.f32.mxu0 0.0
      %3828 = vmatmul.mubr.f32.gmra.mrb[0].mxu0 %v1610
      %v3829 = vpop.f32.mrb[0].mxu0
      %v3830 = vadd.f32 0.0, %v3829
      %v3831 = vpop.f32.mrb[0].mxu0
      %3832 = vmatprep.mubr.f32.mxu0 0.0
      %3833 = vmatmul.mubr.f32.gmra.mrb[0].mxu0 %v1613
      %v3834 = vpop.f32.mrb[0].mxu0
      %v3835 = vadd.f32 0.0, %v3834
      %v3836 = vpop.f32.mrb[0].mxu0
      %3837 = vmatprep.mubr.f32.mxu0 0.0
      %3838 = vmatmul.mubr.f32.gmra.mrb[0].mxu0 %v1616
      %v3839 = vpop.f32.mrb[0].mxu0
      %v3840 = vadd.f32 0.0, %v3839
      %v3841 = vpop.f32.mrb[0].mxu0
      %3842 = vmatprep.mubr.f32.mxu0 0.0
      %3843 = vmatmul.mubr.f32.gmra.mrb[0].mxu0 %v1619
      %v3844 = vpop.f32.mrb[0].mxu0
      %v3845 = vadd.f32 0.0, %v3844
      %v3846 = vpop.f32.mrb[0].mxu0
      %3847 = vmatprep.mubr.f32.mxu0 0.0
      %3848 = vmatmul.mubr.f32.gmra.mrb[0].mxu0 %v1622
      %v3849 = vpop.f32.mrb[0].mxu0
      %v3850 = vadd.f32 0.0, %v3849
      %v3851 = vpop.f32.mrb[0].mxu0
      %3852 = vmatprep.mubr.f32.mxu0 0.0
      %3853 = vmatmul.mubr.f32.gmra.mrb[0].mxu0 %v1625
      %v3854 = vpop.f32.mrb[0].mxu0
      %v3855 = vadd.f32 0.0, %v3854
      %v3856 = vpop.f32.mrb[0].mxu0
      %3857 = vmatprep.mubr.f32.mxu0 0.0
      %3858 = vmatmul.mubr.f32.gmra.mrb[0].mxu0 %v1628
      %v3859 = vpop.f32.mrb[0].mxu0
      %v3860 = vadd.f32 0.0, %v3859
      %v3861 = vpop.f32.mrb[0].mxu0
      %3862 = vmatprep.mubr.f32.mxu0 0.0
      %3863 = vmatmul.mubr.f32.gmra.mrb[0].mxu0 %v1631
      %v3864 = vpop.f32.mrb[0].mxu0
      %v3865 = vadd.f32 0.0, %v3864
      %v3866 = vpop.f32.mrb[0].mxu0
      %3867 = vmatprep.mubr.f32.mxu0 0.0
      %3868 = vmatmul.mubr.f32.gmra.mrb[0].mxu0 %v1634
      %v3869 = vpop.f32.mrb[0].mxu0
      %v3870 = vadd.f32 0.0, %v3869
      %v3871 = vpop.f32.mrb[0].mxu0
      %3872 = vmatprep.mubr.f32.mxu0 0.0
      %3873 = vmatmul.mubr.f32.gmra.mrb[0].mxu0 %v1637
      %v3874 = vpop.f32.mrb[0].mxu0
      %v3875 = vadd.f32 0.0, %v3874
      %v3876 = vpop.f32.mrb[0].mxu0
      %3877 = vmatprep.mubr.f32.mxu0 0.0
      %3878 = vmatmul.mubr.f32.gmra.mrb[0].mxu0 %v1640
      %v3879 = vpop.f32.mrb[0].mxu0
      %v3880 = vadd.f32 0.0, %v3879
      %v3881 = vpop.f32.mrb[0].mxu0
      %3882 = vmatprep.mubr.f32.mxu0 0.0
      %3883 = vmatmul.mubr.f32.gmra.mrb[0].mxu0 %v1643
      %v3884 = vpop.f32.mrb[0].mxu0
      %v3885 = vadd.f32 0.0, %v3884
      %v3886 = vpop.f32.mrb[0].mxu0
      %3887 = vmatprep.mubr.f32.mxu0 0.0
      %3888 = vmatmul.mubr.f32.gmra.mrb[0].mxu0 %v1646
      %v3889 = vpop.f32.mrb[0].mxu0
      %v3890 = vadd.f32 0.0, %v3889
      %v3891 = vpop.f32.mrb[0].mxu0
      %3892 = vmatprep.mubr.f32.mxu0 0.0
      %3893 = vmatmul.mubr.f32.gmra.mrb[0].mxu0 %v1649
      %v3894 = vpop.f32.mrb[0].mxu0
      %v3895 = vadd.f32 0.0, %v3894
      %v3896 = vpop.f32.mrb[0].mxu0
      %3897 = vmatprep.mubr.f32.mxu0 0.0
      %3898 = vmatmul.mubr.f32.gmra.mrb[0].mxu0 %v1652
      %v3899 = vpop.f32.mrb[0].mxu0
      %v3900 = vadd.f32 0.0, %v3899
      %v3901 = vpop.f32.mrb[0].mxu0
      %3902 = vmatprep.mubr.f32.mxu0 0.0
      %3903 = vmatmul.mubr.f32.gmra.mrb[0].mxu0 %v1655
      %v3904 = vpop.f32.mrb[0].mxu0
      %v3905 = vadd.f32 0.0, %v3904
      %v3906 = vpop.f32.mrb[0].mxu0
      %3907 = vmatprep.mubr.f32.mxu0 0.0
      %3908 = vmatmul.mubr.f32.gmra.mrb[0].mxu0 %v1658
      %v3909 = vpop.f32.mrb[0].mxu0
      %v3910 = vadd.f32 0.0, %v3909
      %v3911 = vpop.f32.mrb[0].mxu0
      %3912 = vmatprep.mubr.f32.mxu0 0.0
      %3913 = vmatmul.mubr.f32.gmra.mrb[0].mxu0 %v1661
      %v3914 = vpop.f32.mrb[0].mxu0
      %v3915 = vadd.f32 0.0, %v3914
      %v3916 = vpop.f32.mrb[0].mxu0
      %3917 = vmatprep.mubr.f32.mxu0 0.0
      %3918 = vmatmul.mubr.f32.gmra.mrb[0].mxu0 %v1664
      %v3919 = vpop.f32.mrb[0].mxu0
      %v3920 = vadd.f32 0.0, %v3919
      %v3921 = vpop.f32.mrb[0].mxu0
      %3922 = vmatprep.mubr.f32.mxu0 0.0
      %3923 = vmatmul.mubr.f32.gmra.mrb[0].mxu0 %v1667
      %v3924 = vpop.f32.mrb[0].mxu0
      %v3925 = vadd.f32 0.0, %v3924
      %v3926 = vpop.f32.mrb[0].mxu0
      %3927 = vmatprep.mubr.f32.mxu0 0.0
      %3928 = vmatmul.mubr.f32.gmra.mrb[0].mxu0 %v1670
      %v3929 = vpop.f32.mrb[0].mxu0
      %v3930 = vadd.f32 0.0, %v3929
      %v3931 = vpop.f32.mrb[0].mxu0
      %3932 = vmatprep.mubr.f32.mxu0 0.0
      %3933 = vmatmul.mubr.f32.gmra.mrb[0].mxu0 %v1673
      %v3934 = vpop.f32.mrb[0].mxu0
      %v3935 = vadd.f32 0.0, %v3934
      %v3936 = vpop.f32.mrb[0].mxu0
      %3937 = vmatprep.mubr.f32.mxu0 0.0
      %3938 = vmatmul.mubr.f32.gmra.mrb[0].mxu0 %v1676
      %v3939 = vpop.f32.mrb[0].mxu0
      %v3940 = vadd.f32 0.0, %v3939
      %v3941 = vpop.f32.mrb[0].mxu0
      %3942 = vmatprep.mubr.f32.mxu0 0.0
      %3943 = vmatmul.mubr.f32.gmra.mrb[0].mxu0 %v1679
      %v3944 = vpop.f32.mrb[0].mxu0
      %v3945 = vadd.f32 0.0, %v3944
      %v3946 = vpop.f32.mrb[0].mxu0
      %3947 = vmatprep.mubr.f32.mxu0 0.0
      %3948 = vmatmul.mubr.f32.gmra.mrb[0].mxu0 %v1682
      %v3949 = vpop.f32.mrb[0].mxu0
      %v3950 = vadd.f32 0.0, %v3949
      %v3951 = vpop.f32.mrb[0].mxu0
      %3952 = vmatprep.mubr.f32.mxu0 0.0
      %3953 = vmatmul.mubr.f32.gmra.mrb[0].mxu0 %v1685
      %v3954 = vpop.f32.mrb[0].mxu0
      %v3955 = vadd.f32 0.0, %v3954
      %v3956 = vpop.f32.mrb[0].mxu0
      %3957 = vmatprep.mubr.f32.mxu0 0.0
      %3958 = vmatmul.mubr.f32.gmra.mrb[0].mxu0 %v1688
      %v3959 = vpop.f32.mrb[0].mxu0
      %v3960 = vadd.f32 0.0, %v3959
      %v3961 = vpop.f32.mrb[0].mxu0
      %3962 = vmatprep.mubr.f32.mxu0 0.0
      %3963 = vmatmul.mubr.f32.gmra.mrb[0].mxu0 %v1691
      %v3964 = vpop.f32.mrb[0].mxu0
      %v3965 = vadd.f32 0.0, %v3964
      %v3966 = vpop.f32.mrb[0].mxu0
      %3967 = vmatprep.mubr.f32.mxu0 0.0
      %3968 = vmatmul.mubr.f32.gmra.mrb[0].mxu0 %v1694
      %v3969 = vpop.f32.mrb[0].mxu0
      %v3970 = vadd.f32 0.0, %v3969
      %v3971 = vpop.f32.mrb[0].mxu0
      %3972 = vmatprep.mubr.f32.mxu0 0.0
      %3973 = vmatmul.mubr.f32.gmra.mrb[0].mxu0 %v1697
      %v3974 = vpop.f32.mrb[0].mxu0
      %v3975 = vadd.f32 0.0, %v3974
      %v3976 = vpop.f32.mrb[0].mxu0
      %3977 = vmatprep.mubr.f32.mxu0 0.0
      %3978 = vmatmul.mubr.f32.gmra.mrb[0].mxu0 %v1700
      %v3979 = vpop.f32.mrb[0].mxu0
      %v3980 = vadd.f32 0.0, %v3979
      %v3981 = vpop.f32.mrb[0].mxu0
      %3982 = vmatprep.mubr.f32.mxu0 0.0
      %3983 = vmatmul.mubr.f32.gmra.mrb[0].mxu0 %v1703
      %v3984 = vpop.f32.mrb[0].mxu0
      %v3985 = vadd.f32 0.0, %v3984
      %v3986 = vpop.f32.mrb[0].mxu0
      %3987 = vmatprep.mubr.f32.mxu0 0.0
      %3988 = vmatmul.mubr.f32.gmra.mrb[0].mxu0 %v1706
      %v3989 = vpop.f32.mrb[0].mxu0
      %v3990 = vadd.f32 0.0, %v3989
      %v3991 = vpop.f32.mrb[0].mxu0
      %3992 = vmatprep.mubr.f32.mxu0 0.0
      %3993 = vmatmul.mubr.f32.gmra.mrb[0].mxu0 %v1709
      %v3994 = vpop.f32.mrb[0].mxu0
      %v3995 = vadd.f32 0.0, %v3994
      %v3996 = vpop.f32.mrb[0].mxu0
      %3997 = vmatprep.mubr.f32.mxu0 0.0
      %3998 = vmatmul.mubr.f32.gmra.mrb[0].mxu0 %v1712
      %v3999 = vpop.f32.mrb[0].mxu0
      %v4000 = vadd.f32 0.0, %v3999
      %v4001 = vpop.f32.mrb[0].mxu0
      %4002 = vmatprep.mubr.f32.mxu0 0.0
      %4003 = vmatmul.mubr.f32.gmra.mrb[0].mxu0 %v1715
      %v4004 = vpop.f32.mrb[0].mxu0
      %v4005 = vadd.f32 0.0, %v4004
      %v4006 = vpop.f32.mrb[0].mxu0
      %4007 = vmatprep.mubr.f32.mxu0 0.0
      %4008 = vmatmul.mubr.f32.gmra.mrb[0].mxu0 %v1718
      %v4009 = vpop.f32.mrb[0].mxu0
      %v4010 = vadd.f32 0.0, %v4009
      %v4011 = vpop.f32.mrb[0].mxu0
      %4012 = vmatprep.mubr.f32.mxu0 0.0
      %4013 = vmatmul.mubr.f32.gmra.mrb[0].mxu0 %v1721
      %v4014 = vpop.f32.mrb[0].mxu0
      %v4015 = vadd.f32 0.0, %v4014
      %v4016 = vpop.f32.mrb[0].mxu0
      %4017 = vmatprep.mubr.f32.mxu0 0.0
      %4018 = vmatmul.mubr.f32.gmra.mrb[0].mxu0 %v1724
      %v4019 = vpop.f32.mrb[0].mxu0
      %v4020 = vadd.f32 0.0, %v4019
      %v4021 = vpop.f32.mrb[0].mxu0
      %4022 = vmatprep.mubr.f32.mxu0 0.0
      %4023 = vmatmul.mubr.f32.gmra.mrb[0].mxu0 %v1727
      %v4024 = vpop.f32.mrb[0].mxu0
      %v4025 = vadd.f32 0.0, %v4024
      %v4026 = vpop.f32.mrb[0].mxu0
      %4027 = vmatprep.mubr.f32.mxu0 0.0
      %4028 = vmatmul.mubr.f32.gmra.mrb[0].mxu0 %v1730
      %v4029 = vpop.f32.mrb[0].mxu0
      %v4030 = vadd.f32 0.0, %v4029
      %v4031 = vpop.f32.mrb[0].mxu0
      %4032 = vmatprep.mubr.f32.mxu0 0.0
      %4033 = vmatmul.mubr.f32.gmra.mrb[0].mxu0 %v1733
      %v4034 = vpop.f32.mrb[0].mxu0
      %v4035 = vadd.f32 0.0, %v4034
      %v4036 = vpop.f32.mrb[0].mxu0
      %4037 = vmatprep.mubr.f32.mxu0 0.0
      %4038 = vmatmul.mubr.f32.gmra.mrb[0].mxu0 %v1736
      %v4039 = vpop.f32.mrb[0].mxu0
      %v4040 = vadd.f32 0.0, %v4039
      %v4041 = vpop.f32.mrb[0].mxu0
      %4042 = vmatprep.mubr.f32.mxu0 0.0
      %4043 = vmatmul.mubr.f32.gmra.mrb[0].mxu0 %v1739
      %v4044 = vpop.f32.mrb[0].mxu0
      %v4045 = vadd.f32 0.0, %v4044
      %v4046 = vpop.f32.mrb[0].mxu0
      %4047 = vmatprep.mubr.f32.mxu0 0.0
      %4048 = vmatmul.mubr.f32.gmra.mrb[0].mxu0 %v1742
      %v4049 = vpop.f32.mrb[0].mxu0
      %v4050 = vadd.f32 0.0, %v4049
      %v4051 = vpop.f32.mrb[0].mxu0
      %4052 = vmatprep.mubr.f32.mxu0 0.0
      %4053 = vmatmul.mubr.f32.gmra.mrb[0].mxu0 %v1745
      %v4054 = vpop.f32.mrb[0].mxu0
      %v4055 = vadd.f32 0.0, %v4054
      %v4056 = vpop.f32.mrb[0].mxu0
      %4057 = vmatprep.mubr.f32.mxu0 0.0
      %4058 = vmatmul.mubr.f32.gmra.mrb[0].mxu0 %v1748
      %v4059 = vpop.f32.mrb[0].mxu0
      %v4060 = vadd.f32 0.0, %v4059
      %v4061 = vpop.f32.mrb[0].mxu0
      %4062 = vmatprep.mubr.f32.mxu0 0.0
      %4063 = vmatmul.mubr.f32.gmra.mrb[0].mxu0 %v1751
      %v4064 = vpop.f32.mrb[0].mxu0
      %v4065 = vadd.f32 0.0, %v4064
      %v4066 = vpop.f32.mrb[0].mxu0
      %4067 = vmatprep.mubr.f32.mxu0 0.0
      %4068 = vmatmul.mubr.f32.gmra.mrb[0].mxu0 %v1754
      %v4069 = vpop.f32.mrb[0].mxu0
      %v4070 = vadd.f32 0.0, %v4069
      %v4071 = vpop.f32.mrb[0].mxu0
      %4072 = vmatprep.mubr.f32.mxu0 0.0
      %4073 = vmatmul.mubr.f32.gmra.mrb[0].mxu0 %v1757
      %v4074 = vpop.f32.mrb[0].mxu0
      %v4075 = vadd.f32 0.0, %v4074
      %v4076 = vpop.f32.mrb[0].mxu0
      %4077 = vmatprep.mubr.f32.mxu0 0.0
      %4078 = vmatmul.mubr.f32.gmra.mrb[0].mxu0 %v1760
      %v4079 = vpop.f32.mrb[0].mxu0
      %v4080 = vadd.f32 0.0, %v4079
      %v4081 = vpop.f32.mrb[0].mxu0
      %4082 = vmatprep.mubr.f32.mxu0 0.0
      %4083 = vmatmul.mubr.f32.gmra.mrb[0].mxu0 %v1763
      %v4084 = vpop.f32.mrb[0].mxu0
      %v4085 = vadd.f32 0.0, %v4084
      %v4086 = vpop.f32.mrb[0].mxu0
      %4087 = vmatprep.mubr.f32.mxu0 0.0
      %4088 = vmatmul.mubr.f32.gmra.mrb[0].mxu0 %v1766
      %v4089 = vpop.f32.mrb[0].mxu0
      %v4090 = vadd.f32 0.0, %v4089
      %v4091 = vpop.f32.mrb[0].mxu0
      %4092 = vmatprep.mubr.f32.mxu0 0.0
      %4093 = vmatmul.mubr.f32.gmra.mrb[0].mxu0 %v1769
      %v4094 = vpop.f32.mrb[0].mxu0
      %v4095 = vadd.f32 0.0, %v4094
      %v4096 = vpop.f32.mrb[0].mxu0
      %4097 = vmatprep.mubr.f32.mxu0 0.0
      %4098 = vmatmul.mubr.f32.gmra.mrb[0].mxu0 %v1772
      %v4099 = vpop.f32.mrb[0].mxu0
      %v4100 = vadd.f32 0.0, %v4099
      %v4101 = vpop.f32.mrb[0].mxu0
      %4102 = vmatprep.mubr.f32.mxu0 0.0
      %4103 = vmatmul.mubr.f32.gmra.mrb[0].mxu0 %v1775
      %v4104 = vpop.f32.mrb[0].mxu0
      %v4105 = vadd.f32 0.0, %v4104
      %v4106 = vpop.f32.mrb[0].mxu0
      %4107 = vmatprep.mubr.f32.mxu0 0.0
      %4108 = vmatmul.mubr.f32.gmra.mrb[0].mxu0 %v1778
      %v4109 = vpop.f32.mrb[0].mxu0
      %v4110 = vadd.f32 0.0, %v4109
      %v4111 = vpop.f32.mrb[0].mxu0
      %4112 = vmatprep.mubr.f32.mxu0 0.0
      %4113 = vmatmul.mubr.f32.gmra.mrb[0].mxu0 %v1781
      %v4114 = vpop.f32.mrb[0].mxu0
      %v4115 = vadd.f32 0.0, %v4114
      %v4116 = vpop.f32.mrb[0].mxu0
      %4117 = vmatprep.mubr.f32.mxu0 0.0
      %4118 = vmatmul.mubr.f32.gmra.mrb[0].mxu0 %v1784
      %v4119 = vpop.f32.mrb[0].mxu0
      %v4120 = vadd.f32 0.0, %v4119
      %v4121 = vpop.f32.mrb[0].mxu0
      %4122 = vmatprep.mubr.f32.mxu0 0.0
      %4123 = vmatmul.mubr.f32.gmra.mrb[0].mxu0 %v1787
      %v4124 = vpop.f32.mrb[0].mxu0
      %v4125 = vadd.f32 0.0, %v4124
      %v4126 = vpop.f32.mrb[0].mxu0
      %4127 = vmatprep.mubr.f32.mxu0 0.0
      %4128 = vmatmul.mubr.f32.gmra.mrb[0].mxu0 %v1790
      %v4129 = vpop.f32.mrb[0].mxu0
      %v4130 = vadd.f32 0.0, %v4129
      %v4131 = vpop.f32.mrb[0].mxu0
      %4132 = vmatprep.mubr.f32.mxu0 0.0
      %4133 = vmatmul.mubr.f32.gmra.mrb[0].mxu0 %v1793
      %v4134 = vpop.f32.mrb[0].mxu0
      %v4135 = vadd.f32 0.0, %v4134
      %v4136 = vpop.f32.mrb[0].mxu0
      %4137 = vmatprep.mubr.f32.mxu0 0.0
      %4138 = vmatmul.mubr.f32.gmra.mrb[0].mxu0 %v1796
      %v4139 = vpop.f32.mrb[0].mxu0
      %v4140 = vadd.f32 0.0, %v4139
      %v4141 = vpop.f32.mrb[0].mxu0
      %4142 = vmatprep.mubr.f32.mxu0 0.0
      %4143 = vmatmul.mubr.f32.gmra.mrb[0].mxu0 %v1799
      %v4144 = vpop.f32.mrb[0].mxu0
      %v4145 = vadd.f32 0.0, %v4144
      %v4146 = vpop.f32.mrb[0].mxu0
      %4147 = vmatprep.mubr.f32.mxu0 0.0
      %4148 = vmatmul.mubr.f32.gmra.mrb[0].mxu0 %v1802
      %v4149 = vpop.f32.mrb[0].mxu0
      %v4150 = vadd.f32 0.0, %v4149
      %v4151 = vpop.f32.mrb[0].mxu0
      %4152 = vmatprep.mubr.f32.mxu0 0.0
      %4153 = vmatmul.mubr.f32.gmra.mrb[0].mxu0 %v1805
      %v4154 = vpop.f32.mrb[0].mxu0
      %v4155 = vadd.f32 0.0, %v4154
      %v4156 = vpop.f32.mrb[0].mxu0
      %4157 = vmatprep.mubr.f32.mxu0 0.0
      %4158 = vmatmul.mubr.f32.gmra.mrb[0].mxu0 %v1808
      %v4159 = vpop.f32.mrb[0].mxu0
      %v4160 = vadd.f32 0.0, %v4159
      %v4161 = vpop.f32.mrb[0].mxu0
      %4162 = vmatprep.mubr.f32.mxu0 0.0
      %4163 = vmatmul.mubr.f32.gmra.mrb[0].mxu0 %v1811
      %v4164 = vpop.f32.mrb[0].mxu0
      %v4165 = vadd.f32 0.0, %v4164
      %v4166 = vpop.f32.mrb[0].mxu0
      %4167 = vmatprep.mubr.f32.mxu0 0.0
      %4168 = vmatmul.mubr.f32.gmra.mrb[0].mxu0 %v1814
      %v4169 = vpop.f32.mrb[0].mxu0
      %v4170 = vadd.f32 0.0, %v4169
      %v4171 = vpop.f32.mrb[0].mxu0
      %4172 = vmatprep.mubr.f32.mxu0 0.0
      %4173 = vmatmul.mubr.f32.gmra.mrb[0].mxu0 %v1817
      %v4174 = vpop.f32.mrb[0].mxu0
      %v4175 = vadd.f32 0.0, %v4174
      %v4176 = vpop.f32.mrb[0].mxu0
      %4177 = vmatprep.mubr.f32.mxu0 0.0
      %4178 = vmatmul.mubr.f32.gmra.mrb[0].mxu0 %v1820
      %v4179 = vpop.f32.mrb[0].mxu0
      %v4180 = vadd.f32 0.0, %v4179
      %v4181 = vpop.f32.mrb[0].mxu0
      %4182 = vmatprep.mubr.f32.mxu0 0.0
      %4183 = vmatmul.mubr.f32.gmra.mrb[0].mxu0 %v1823
      %v4184 = vpop.f32.mrb[0].mxu0
      %v4185 = vadd.f32 0.0, %v4184
      %v4186 = vpop.f32.mrb[0].mxu0
      %4187 = vmatprep.mubr.f32.mxu0 0.0
      %4188 = vmatmul.mubr.f32.gmra.mrb[0].mxu0 %v1826
      %v4189 = vpop.f32.mrb[0].mxu0
      %v4190 = vadd.f32 0.0, %v4189
      %v4191 = vpop.f32.mrb[0].mxu0
      %4192 = vmatprep.mubr.f32.mxu0 0.0
      %4193 = vmatmul.mubr.f32.gmra.mrb[0].mxu0 %v1829
      %v4194 = vpop.f32.mrb[0].mxu0
      %v4195 = vadd.f32 0.0, %v4194
      %v4196 = vpop.f32.mrb[0].mxu0
      %4197 = vmatprep.mubr.f32.mxu0 0.0
      %4198 = vmatmul.mubr.f32.gmra.mrb[0].mxu0 %v1832
      %v4199 = vpop.f32.mrb[0].mxu0
      %v4200 = vadd.f32 0.0, %v4199
      %v4201 = vpop.f32.mrb[0].mxu0
      %4202 = vmatprep.mubr.f32.mxu0 0.0
      %4203 = vmatmul.mubr.f32.gmra.mrb[0].mxu0 %v1835
      %v4204 = vpop.f32.mrb[0].mxu0
      %v4205 = vadd.f32 0.0, %v4204
      %v4206 = vpop.f32.mrb[0].mxu0
      %4207 = vmatprep.mubr.f32.mxu0 0.0
      %4208 = vmatmul.mubr.f32.gmra.mrb[0].mxu0 %v1838
      %v4209 = vpop.f32.mrb[0].mxu0
      %v4210 = vadd.f32 0.0, %v4209
      %v4211 = vpop.f32.mrb[0].mxu0
      %4212 = vmatprep.mubr.f32.mxu0 0.0
      %4213 = vmatmul.mubr.f32.gmra.mrb[0].mxu0 %v1841
      %v4214 = vpop.f32.mrb[0].mxu0
      %v4215 = vadd.f32 0.0, %v4214
      %v4216 = vpop.f32.mrb[0].mxu0
      %4217 = vmatprep.mubr.f32.mxu0 0.0
      %4218 = vmatmul.mubr.f32.gmra.mrb[0].mxu0 %v1844
      %v4219 = vpop.f32.mrb[0].mxu0
      %v4220 = vadd.f32 0.0, %v4219
      %v4221 = vpop.f32.mrb[0].mxu0
      %4222 = vmatprep.mubr.f32.mxu0 0.0
      %4223 = vmatmul.mubr.f32.gmra.mrb[0].mxu0 %v1847
      %v4224 = vpop.f32.mrb[0].mxu0
      %v4225 = vadd.f32 0.0, %v4224
      %v4226 = vpop.f32.mrb[0].mxu0
      %4227 = vmatprep.mubr.f32.mxu0 0.0
      %4228 = vmatmul.mubr.f32.gmra.mrb[0].mxu0 %v1850
      %v4229 = vpop.f32.mrb[0].mxu0
      %v4230 = vadd.f32 0.0, %v4229
      %v4231 = vpop.f32.mrb[0].mxu0
      %4232 = vmatprep.mubr.f32.mxu0 0.0
      %4233 = vmatmul.mubr.f32.gmra.mrb[0].mxu0 %v1853
      %v4234 = vpop.f32.mrb[0].mxu0
      %v4235 = vadd.f32 0.0, %v4234
      %v4236 = vpop.f32.mrb[0].mxu0
      %4237 = vmatprep.mubr.f32.mxu0 0.0
      %4238 = vmatmul.mubr.f32.gmra.mrb[0].mxu0 %v1856
      %v4239 = vpop.f32.mrb[0].mxu0
      %v4240 = vadd.f32 0.0, %v4239
      %v4241 = vpop.f32.mrb[0].mxu0
      %4242 = vmatprep.mubr.f32.mxu0 0.0
      %4243 = vmatmul.mubr.f32.gmra.mrb[0].mxu0 %v1859
      %v4244 = vpop.f32.mrb[0].mxu0
      %v4245 = vadd.f32 0.0, %v4244
      %v4246 = vpop.f32.mrb[0].mxu0
      %4247 = vmatprep.mubr.f32.mxu0 0.0
      %4248 = vmatmul.mubr.f32.gmra.mrb[0].mxu0 %v1862
      %v4249 = vpop.f32.mrb[0].mxu0
      %v4250 = vadd.f32 0.0, %v4249
      %v4251 = vpop.f32.mrb[0].mxu0
      %4252 = vmatprep.mubr.f32.mxu0 0.0
      %4253 = vmatmul.mubr.f32.gmra.mrb[0].mxu0 %v1865
      %v4254 = vpop.f32.mrb[0].mxu0
      %v4255 = vadd.f32 0.0, %v4254
      %v4256 = vpop.f32.mrb[0].mxu0
      %4257 = vmatprep.mubr.f32.mxu0 0.0
      %4258 = vmatmul.mubr.f32.gmra.mrb[0].mxu0 %v1868
      %v4259 = vpop.f32.mrb[0].mxu0
      %v4260 = vadd.f32 0.0, %v4259
      %v4261 = vpop.f32.mrb[0].mxu0
      %4262 = vmatprep.mubr.f32.mxu0 0.0
      %4263 = vmatmul.mubr.f32.gmra.mrb[0].mxu0 %v1871
      %v4264 = vpop.f32.mrb[0].mxu0
      %v4265 = vadd.f32 0.0, %v4264
      %v4266 = vpop.f32.mrb[0].mxu0
      %4267 = vmatprep.mubr.f32.mxu0 0.0
      %4268 = vmatmul.mubr.f32.gmra.mrb[0].mxu0 %v1874
      %v4269 = vpop.f32.mrb[0].mxu0
      %v4270 = vadd.f32 0.0, %v4269
      %v4271 = vpop.f32.mrb[0].mxu0
      %4272 = vmatprep.mubr.f32.mxu0 0.0
      %4273 = vmatmul.mubr.f32.gmra.mrb[0].mxu0 %v1877
      %v4274 = vpop.f32.mrb[0].mxu0
      %v4275 = vadd.f32 0.0, %v4274
      %v4276 = vpop.f32.mrb[0].mxu0
      %4277 = vmatprep.mubr.f32.mxu0 0.0
      %4278 = vmatmul.mubr.f32.gmra.mrb[0].mxu0 %v1880
      %v4279 = vpop.f32.mrb[0].mxu0
      %v4280 = vadd.f32 0.0, %v4279
      %v4281 = vpop.f32.mrb[0].mxu0
      %4282 = vmatprep.mubr.f32.mxu0 0.0
      %4283 = vmatmul.mubr.f32.gmra.mrb[0].mxu0 %v1883
      %v4284 = vpop.f32.mrb[0].mxu0
      %v4285 = vadd.f32 0.0, %v4284
      %v4286 = vpop.f32.mrb[0].mxu0
      %4287 = vmatprep.mubr.f32.mxu0 0.0
      %4288 = vmatmul.mubr.f32.gmra.mrb[0].mxu0 %v1886
      %v4289 = vpop.f32.mrb[0].mxu0
      %v4290 = vadd.f32 0.0, %v4289
      %v4291 = vpop.f32.mrb[0].mxu0
      %4292 = vmatprep.mubr.f32.mxu0 0.0
      %4293 = vmatmul.mubr.f32.gmra.mrb[0].mxu0 %v1889
      %v4294 = vpop.f32.mrb[0].mxu0
      %v4295 = vadd.f32 0.0, %v4294
      %v4296 = vpop.f32.mrb[0].mxu0
      %4297 = vmatprep.mubr.f32.mxu0 0.0
      %4298 = vmatmul.mubr.f32.gmra.mrb[0].mxu0 %v1892
      %v4299 = vpop.f32.mrb[0].mxu0
      %v4300 = vadd.f32 0.0, %v4299
      %v4301 = vpop.f32.mrb[0].mxu0
      %4302 = vmatprep.mubr.f32.mxu0 0.0
      %4303 = vmatmul.mubr.f32.gmra.mrb[0].mxu0 %v1895
      %v4304 = vpop.f32.mrb[0].mxu0
      %v4305 = vadd.f32 0.0, %v4304
      %v4306 = vpop.f32.mrb[0].mxu0
      %4307 = vmatprep.mubr.f32.mxu0 0.0
      %4308 = vmatmul.mubr.f32.gmra.mrb[0].mxu0 %v1898
      %v4309 = vpop.f32.mrb[0].mxu0
      %v4310 = vadd.f32 0.0, %v4309
      %v4311 = vpop.f32.mrb[0].mxu0
      %4312 = vmatprep.mubr.f32.mxu0 0.0
      %4313 = vmatmul.mubr.f32.gmra.mrb[0].mxu0 %v1901
      %v4314 = vpop.f32.mrb[0].mxu0
      %v4315 = vadd.f32 0.0, %v4314
      %v4316 = vpop.f32.mrb[0].mxu0
      %4317 = vmatprep.mubr.f32.mxu0 0.0
      %4318 = vmatmul.mubr.f32.gmra.mrb[0].mxu0 %v1904
      %v4319 = vpop.f32.mrb[0].mxu0
      %v4320 = vadd.f32 0.0, %v4319
      %v4321 = vpop.f32.mrb[0].mxu0
      %4322 = vmatprep.mubr.f32.mxu0 0.0
      %4323 = vmatmul.mubr.f32.gmra.mrb[0].mxu0 %v1907
      %v4324 = vpop.f32.mrb[0].mxu0
      %v4325 = vadd.f32 0.0, %v4324
      %v4326 = vpop.f32.mrb[0].mxu0
      %4327 = vmatprep.mubr.f32.mxu0 0.0
      %4328 = vmatmul.mubr.f32.gmra.mrb[0].mxu0 %v1910
      %v4329 = vpop.f32.mrb[0].mxu0
      %v4330 = vadd.f32 0.0, %v4329
      %v4331 = vpop.f32.mrb[0].mxu0
      %4332 = vmatprep.mubr.f32.mxu0 0.0
      %4333 = vmatmul.mubr.f32.gmra.mrb[0].mxu0 %v1913
      %v4334 = vpop.f32.mrb[0].mxu0
      %v4335 = vadd.f32 0.0, %v4334
      %v4336 = vpop.f32.mrb[0].mxu0
      %4337 = vmatprep.mubr.f32.mxu0 0.0
      %4338 = vmatmul.mubr.f32.gmra.mrb[0].mxu0 %v1916
      %v4339 = vpop.f32.mrb[0].mxu0
      %v4340 = vadd.f32 0.0, %v4339
      %v4341 = vpop.f32.mrb[0].mxu0
      %4342 = vmatprep.mubr.f32.mxu0 0.0
      %4343 = vmatmul.mubr.f32.gmra.mrb[0].mxu0 %v1919
      %v4344 = vpop.f32.mrb[0].mxu0
      %v4345 = vadd.f32 0.0, %v4344
      %v4346 = vpop.f32.mrb[0].mxu0
      %4347 = vmatprep.mubr.f32.mxu0 0.0
      %4348 = vmatmul.mubr.f32.gmra.mrb[0].mxu0 %v1922
      %v4349 = vpop.f32.mrb[0].mxu0
      %v4350 = vadd.f32 0.0, %v4349
      %v4351 = vpop.f32.mrb[0].mxu0
      %4352 = vmatprep.mubr.f32.mxu0 0.0
      %4353 = vmatmul.mubr.f32.gmra.mrb[0].mxu0 %v1925
      %v4354 = vpop.f32.mrb[0].mxu0
      %v4355 = vadd.f32 0.0, %v4354
      %v4356 = vpop.f32.mrb[0].mxu0
      %4357 = vmatprep.mubr.f32.mxu0 0.0
      %4358 = vmatmul.mubr.f32.gmra.mrb[0].mxu0 %v1928
      %v4359 = vpop.f32.mrb[0].mxu0
      %v4360 = vadd.f32 0.0, %v4359
      %v4361 = vpop.f32.mrb[0].mxu0
      %4362 = vmatprep.mubr.f32.mxu0 0.0
      %4363 = vmatmul.mubr.f32.gmra.mrb[0].mxu0 %v1931
      %v4364 = vpop.f32.mrb[0].mxu0
      %v4365 = vadd.f32 0.0, %v4364
      %v4366 = vpop.f32.mrb[0].mxu0
      %4367 = vmatprep.mubr.f32.mxu0 0.0
      %4368 = vmatmul.mubr.f32.gmra.mrb[0].mxu0 %v1934
      %v4369 = vpop.f32.mrb[0].mxu0
      %v4370 = vadd.f32 0.0, %v4369
      %v4371 = vpop.f32.mrb[0].mxu0
      %4372 = vmatprep.mubr.f32.mxu0 0.0
      %4373 = vmatmul.mubr.f32.gmra.mrb[0].mxu0 %v1937
      %v4374 = vpop.f32.mrb[0].mxu0
      %v4375 = vadd.f32 0.0, %v4374
      %v4376 = vpop.f32.mrb[0].mxu0
      %4377 = vmatprep.mubr.f32.mxu0 0.0
      %4378 = vmatmul.mubr.f32.gmra.mrb[0].mxu0 %v1940
      %v4379 = vpop.f32.mrb[0].mxu0
      %v4380 = vadd.f32 0.0, %v4379
      %v4381 = vpop.f32.mrb[0].mxu0
      %4382 = vmatprep.mubr.f32.mxu0 0.0
      %4383 = vmatmul.mubr.f32.gmra.mrb[0].mxu0 %v1943
      %v4384 = vpop.f32.mrb[0].mxu0
      %v4385 = vadd.f32 0.0, %v4384
      %v4386 = vpop.f32.mrb[0].mxu0
      %4387 = vmatprep.mubr.f32.mxu0 0.0
      %4388 = vmatmul.mubr.f32.gmra.mrb[0].mxu0 %v1946
      %v4389 = vpop.f32.mrb[0].mxu0
      %v4390 = vadd.f32 0.0, %v4389
      %v4391 = vpop.f32.mrb[0].mxu0
      %4392 = vmatprep.mubr.f32.mxu0 0.0
      %4393 = vmatmul.mubr.f32.gmra.mrb[0].mxu0 %v1949
      %v4394 = vpop.f32.mrb[0].mxu0
      %v4395 = vadd.f32 0.0, %v4394
      %v4396 = vpop.f32.mrb[0].mxu0
      %4397 = vmatprep.mubr.f32.mxu0 0.0
      %4398 = vmatmul.mubr.f32.gmra.mrb[0].mxu0 %v1952
      %v4399 = vpop.f32.mrb[0].mxu0
      %v4400 = vadd.f32 0.0, %v4399
      %v4401 = vpop.f32.mrb[0].mxu0
      %4402 = vmatprep.mubr.f32.mxu0 0.0
      %4403 = vmatmul.mubr.f32.gmra.mrb[0].mxu0 %v1955
      %v4404 = vpop.f32.mrb[0].mxu0
      %v4405 = vadd.f32 0.0, %v4404
      %v4406 = vpop.f32.mrb[0].mxu0
      %4407 = vmatprep.mubr.f32.mxu0 0.0
      %4408 = vmatmul.mubr.f32.gmra.mrb[0].mxu0 %v1958
      %v4409 = vpop.f32.mrb[0].mxu0
      %v4410 = vadd.f32 0.0, %v4409
      %v4411 = vpop.f32.mrb[0].mxu0
      %4412 = vmatprep.mubr.f32.mxu0 0.0
      %4413 = vmatmul.mubr.f32.gmra.mrb[0].mxu0 %v1961
      %v4414 = vpop.f32.mrb[0].mxu0
      %v4415 = vadd.f32 0.0, %v4414
      %v4416 = vpop.f32.mrb[0].mxu0
      %4417 = vmatprep.mubr.f32.mxu0 0.0
      %4418 = vmatmul.mubr.f32.gmra.mrb[0].mxu0 %v1964
      %v4419 = vpop.f32.mrb[0].mxu0
      %v4420 = vadd.f32 0.0, %v4419
      %v4421 = vpop.f32.mrb[0].mxu0
      %4422 = vmatprep.mubr.f32.mxu0 0.0
      %4423 = vmatmul.mubr.f32.gmra.mrb[0].mxu0 %v1967
      %v4424 = vpop.f32.mrb[0].mxu0
      %v4425 = vadd.f32 0.0, %v4424
      %v4426 = vpop.f32.mrb[0].mxu0
      %4427 = vmatprep.mubr.f32.mxu0 0.0
      %4428 = vmatmul.mubr.f32.gmra.mrb[0].mxu0 %v1970
      %v4429 = vpop.f32.mrb[0].mxu0
      %v4430 = vadd.f32 0.0, %v4429
      %v4431 = vpop.f32.mrb[0].mxu0
      %4432 = vmatprep.mubr.f32.mxu0 0.0
      %4433 = vmatmul.mubr.f32.gmra.mrb[0].mxu0 %v1973
      %v4434 = vpop.f32.mrb[0].mxu0
      %v4435 = vadd.f32 0.0, %v4434
      %v4436 = vpop.f32.mrb[0].mxu0
      %4437 = vmatprep.mubr.f32.mxu0 0.0
      %4438 = vmatmul.mubr.f32.gmra.mrb[0].mxu0 %v1976
      %v4439 = vpop.f32.mrb[0].mxu0
      %v4440 = vadd.f32 0.0, %v4439
      %v4441 = vpop.f32.mrb[0].mxu0
      %4442 = vmatprep.mubr.f32.mxu0 0.0
      %4443 = vmatmul.mubr.f32.gmra.mrb[0].mxu0 %v1979
      %v4444 = vpop.f32.mrb[0].mxu0
      %v4445 = vadd.f32 0.0, %v4444
      %v4446 = vpop.f32.mrb[0].mxu0
      %4447 = vmatprep.mubr.f32.mxu0 0.0
      %4448 = vmatmul.mubr.f32.gmra.mrb[0].mxu0 %v1982
      %v4449 = vpop.f32.mrb[0].mxu0
      %v4450 = vadd.f32 0.0, %v4449
      %v4451 = vpop.f32.mrb[0].mxu0
      %4452 = vmatprep.mubr.f32.mxu0 0.0
      %4453 = vmatmul.mubr.f32.gmra.mrb[0].mxu0 %v1985
      %v4454 = vpop.f32.mrb[0].mxu0
      %v4455 = vadd.f32 0.0, %v4454
      %v4456 = vpop.f32.mrb[0].mxu0
      %4457 = vmatprep.mubr.f32.mxu0 0.0
      %4458 = vmatmul.mubr.f32.gmra.mrb[0].mxu0 %v1988
      %v4459 = vpop.f32.mrb[0].mxu0
      %v4460 = vadd.f32 0.0, %v4459
      %v4461 = vpop.f32.mrb[0].mxu0
      %4462 = vmatprep.mubr.f32.mxu0 0.0
      %4463 = vmatmul.mubr.f32.gmra.mrb[0].mxu0 %v1991
      %v4464 = vpop.f32.mrb[0].mxu0
      %v4465 = vadd.f32 0.0, %v4464
      %v4466 = vpop.f32.mrb[0].mxu0
      %4467 = vmatprep.mubr.f32.mxu0 0.0
      %4468 = vmatmul.mubr.f32.gmra.mrb[0].mxu0 %v1994
      %v4469 = vpop.f32.mrb[0].mxu0
      %v4470 = vadd.f32 0.0, %v4469
      %v4471 = vpop.f32.mrb[0].mxu0
      %4472 = vmatprep.mubr.f32.mxu0 0.0
      %4473 = vmatmul.mubr.f32.gmra.mrb[0].mxu0 %v1997
      %v4474 = vpop.f32.mrb[0].mxu0
      %v4475 = vadd.f32 0.0, %v4474
      %v4476 = vpop.f32.mrb[0].mxu0
      %4477 = vmatprep.mubr.f32.mxu0 0.0
      %4478 = vmatmul.mubr.f32.gmra.mrb[0].mxu0 %v2000
      %v4479 = vpop.f32.mrb[0].mxu0
      %v4480 = vadd.f32 0.0, %v4479
      %v4481 = vpop.f32.mrb[0].mxu0
      %4482 = vmatprep.mubr.f32.mxu0 0.0
      %4483 = vmatmul.mubr.f32.gmra.mrb[0].mxu0 %v2003
      %v4484 = vpop.f32.mrb[0].mxu0
      %v4485 = vadd.f32 0.0, %v4484
      %v4486 = vpop.f32.mrb[0].mxu0
      %4487 = vmatprep.mubr.f32.mxu0 0.0
      %4488 = vmatmul.mubr.f32.gmra.mrb[0].mxu0 %v2006
      %v4489 = vpop.f32.mrb[0].mxu0
      %v4490 = vadd.f32 0.0, %v4489
      %v4491 = vpop.f32.mrb[0].mxu0
      %4492 = vmatprep.mubr.f32.mxu0 0.0
      %4493 = vmatmul.mubr.f32.gmra.mrb[0].mxu0 %v2009
      %v4494 = vpop.f32.mrb[0].mxu0
      %v4495 = vadd.f32 0.0, %v4494
      %v4496 = vpop.f32.mrb[0].mxu0
      %4497 = vmatprep.mubr.f32.mxu0 0.0
      %4498 = vmatmul.mubr.f32.gmra.mrb[0].mxu0 %v2012
      %v4499 = vpop.f32.mrb[0].mxu0
      %v4500 = vadd.f32 0.0, %v4499
      %v4501 = vpop.f32.mrb[0].mxu0
      %4502 = vmatprep.mubr.f32.mxu0 0.0
      %4503 = vmatmul.mubr.f32.gmra.mrb[0].mxu0 %v2015
      %v4504 = vpop.f32.mrb[0].mxu0
      %v4505 = vadd.f32 0.0, %v4504
      %v4506 = vpop.f32.mrb[0].mxu0
      %4507 = vmatprep.mubr.f32.mxu0 0.0
      %4508 = vmatmul.mubr.f32.gmra.mrb[0].mxu0 %v2018
      %v4509 = vpop.f32.mrb[0].mxu0
      %v4510 = vadd.f32 0.0, %v4509
      %v4511 = vpop.f32.mrb[0].mxu0
      %4512 = vmatprep.mubr.f32.mxu0 0.0
      %4513 = vmatmul.mubr.f32.gmra.mrb[0].mxu0 %v2021
      %v4514 = vpop.f32.mrb[0].mxu0
      %v4515 = vadd.f32 0.0, %v4514
      %v4516 = vpop.f32.mrb[0].mxu0
      %4517 = vmatprep.mubr.f32.mxu0 0.0
      %4518 = vmatmul.mubr.f32.gmra.mrb[0].mxu0 %v2024
      %v4519 = vpop.f32.mrb[0].mxu0
      %v4520 = vadd.f32 0.0, %v4519
      %v4521 = vpop.f32.mrb[0].mxu0
      %4522 = vmatprep.mubr.f32.mxu0 0.0
      %4523 = vmatmul.mubr.f32.gmra.mrb[0].mxu0 %v2027
      %v4524 = vpop.f32.mrb[0].mxu0
      %v4525 = vadd.f32 0.0, %v4524
      %v4526 = vpop.f32.mrb[0].mxu0
      %4527 = vmatprep.mubr.f32.mxu0 0.0
      %4528 = vmatmul.mubr.f32.gmra.mrb[0].mxu0 %v2030
      %v4529 = vpop.f32.mrb[0].mxu0
      %v4530 = vadd.f32 0.0, %v4529
      %v4531 = vpop.f32.mrb[0].mxu0
      %4532 = vmatprep.mubr.f32.mxu0 0.0
      %4533 = vmatmul.mubr.f32.gmra.mrb[0].mxu0 %v2033
      %v4534 = vpop.f32.mrb[0].mxu0
      %v4535 = vadd.f32 0.0, %v4534
      %v4536 = vpop.f32.mrb[0].mxu0
      %4537 = vmatprep.mubr.f32.mxu0 0.0
      %4538 = vmatmul.mubr.f32.gmra.mrb[0].mxu0 %v2036
      %v4539 = vpop.f32.mrb[0].mxu0
      %v4540 = vadd.f32 0.0, %v4539
      %v4541 = vpop.f32.mrb[0].mxu0
      %4542 = vmatprep.mubr.f32.mxu0 0.0
      %4543 = vmatmul.mubr.f32.gmra.mrb[0].mxu0 %v2039
      %v4544 = vpop.f32.mrb[0].mxu0
      %v4545 = vadd.f32 0.0, %v4544
      %v4546 = vpop.f32.mrb[0].mxu0
      %4547 = vmatprep.mubr.f32.mxu0 0.0
      %4548 = vmatmul.mubr.f32.gmra.mrb[0].mxu0 %v2042
      %v4549 = vpop.f32.mrb[0].mxu0
      %v4550 = vadd.f32 0.0, %v4549
      %v4551 = vpop.f32.mrb[0].mxu0
      %4552 = vmatprep.mubr.f32.mxu0 0.0
      %4553 = vmatmul.mubr.f32.gmra.mrb[0].mxu0 %v2045
      %v4554 = vpop.f32.mrb[0].mxu0
      %v4555 = vadd.f32 0.0, %v4554
      %v4556 = vpop.f32.mrb[0].mxu0
      %4557 = vmatprep.mubr.f32.mxu0 0.0
      %4558 = vmatmul.mubr.f32.gmra.mrb[0].mxu0 %v2048
      %v4559 = vpop.f32.mrb[0].mxu0
      %v4560 = vadd.f32 0.0, %v4559
      %v4561 = vpop.f32.mrb[0].mxu0
      %4562 = vmatprep.mubr.f32.mxu0 0.0
      %4563 = vmatmul.mubr.f32.gmra.mrb[0].mxu0 %v2051
      %v4564 = vpop.f32.mrb[0].mxu0
      %v4565 = vadd.f32 0.0, %v4564
      %v4566 = vpop.f32.mrb[0].mxu0
      %4567 = vmatprep.mubr.f32.mxu0 0.0
      %4568 = vmatmul.mubr.f32.gmra.mrb[0].mxu0 %v2054
      %v4569 = vpop.f32.mrb[0].mxu0
      %v4570 = vadd.f32 0.0, %v4569
      %v4571 = vpop.f32.mrb[0].mxu0
      %4572 = vmatprep.mubr.f32.mxu0 0.0
      %4573 = vmatmul.mubr.f32.gmra.mrb[0].mxu0 %v2057
      %v4574 = vpop.f32.mrb[0].mxu0
      %v4575 = vadd.f32 0.0, %v4574
      %v4576 = vpop.f32.mrb[0].mxu0
      %4577 = vmatprep.mubr.f32.mxu0 0.0
      %4578 = vmatmul.mubr.f32.gmra.mrb[0].mxu0 %v2060
      %v4579 = vpop.f32.mrb[0].mxu0
      %v4580 = vadd.f32 0.0, %v4579
      %v4581 = vpop.f32.mrb[0].mxu0
      %4582 = vmatprep.mubr.f32.mxu0 0.0
      %4583 = vmatmul.mubr.f32.gmra.mrb[0].mxu0 %v2063
      %v4584 = vpop.f32.mrb[0].mxu0
      %v4585 = vadd.f32 0.0, %v4584
      %v4586 = vpop.f32.mrb[0].mxu0
      %4587 = vmatprep.mubr.f32.mxu0 0.0
      %4588 = vmatmul.mubr.f32.gmra.mrb[0].mxu0 %v2066
      %v4589 = vpop.f32.mrb[0].mxu0
      %v4590 = vadd.f32 0.0, %v4589
      %v4591 = vpop.f32.mrb[0].mxu0
      %4592 = vmatprep.mubr.f32.mxu0 0.0
      %4593 = vmatmul.mubr.f32.gmra.mrb[0].mxu0 %v2069
      %v4594 = vpop.f32.mrb[0].mxu0
      %v4595 = vadd.f32 0.0, %v4594
      %v4596 = vpop.f32.mrb[0].mxu0
      %4597 = vmatprep.mubr.f32.mxu0 0.0
      %4598 = vmatmul.mubr.f32.gmra.mrb[0].mxu0 %v2072
      %v4599 = vpop.f32.mrb[0].mxu0
      %v4600 = vadd.f32 0.0, %v4599
      %v4601 = vpop.f32.mrb[0].mxu0
      %4602 = vmatprep.mubr.f32.mxu0 0.0
      %4603 = vmatmul.mubr.f32.gmra.mrb[0].mxu0 %v2075
      %v4604 = vpop.f32.mrb[0].mxu0
      %v4605 = vadd.f32 0.0, %v4604
      %v4606 = vpop.f32.mrb[0].mxu0
      %4607 = vmatprep.mubr.f32.mxu0 0.0
      %4608 = vmatmul.mubr.f32.gmra.mrb[0].mxu0 %v2078
      %v4609 = vpop.f32.mrb[0].mxu0
      %v4610 = vadd.f32 0.0, %v4609
      %v4611 = vpop.f32.mrb[0].mxu0
      %4612 = vmatprep.mubr.f32.mxu0 0.0
      %4613 = vmatmul.mubr.f32.gmra.mrb[0].mxu0 %v2081
      %v4614 = vpop.f32.mrb[0].mxu0
      %v4615 = vadd.f32 0.0, %v4614
      %v4616 = vpop.f32.mrb[0].mxu0
      %4617 = vmatprep.mubr.f32.mxu0 0.0
      %4618 = vmatmul.mubr.f32.gmra.mrb[0].mxu0 %v2084
      %v4619 = vpop.f32.mrb[0].mxu0
      %v4620 = vadd.f32 0.0, %v4619
      %v4621 = vpop.f32.mrb[0].mxu0
      %4622 = vmatprep.mubr.f32.mxu0 0.0
      %4623 = vmatmul.mubr.f32.gmra.mrb[0].mxu0 %v2087
      %v4624 = vpop.f32.mrb[0].mxu0
      %v4625 = vadd.f32 0.0, %v4624
      %v4626 = vpop.f32.mrb[0].mxu0
      %4627 = vmatprep.mubr.f32.mxu0 0.0
      %4628 = vmatmul.mubr.f32.gmra.mrb[0].mxu0 %v2090
      %v4629 = vpop.f32.mrb[0].mxu0
      %v4630 = vadd.f32 0.0, %v4629
      %v4631 = vpop.f32.mrb[0].mxu0
      %4632 = vmatprep.mubr.f32.mxu0 0.0
      %4633 = vmatmul.mubr.f32.gmra.mrb[0].mxu0 %v2093
      %v4634 = vpop.f32.mrb[0].mxu0
      %v4635 = vadd.f32 0.0, %v4634
      %v4636 = vpop.f32.mrb[0].mxu0
      %4637 = vmatprep.mubr.f32.mxu0 0.0
      %4638 = vmatmul.mubr.f32.gmra.mrb[0].mxu0 %v2096
      %v4639 = vpop.f32.mrb[0].mxu0
      %v4640 = vadd.f32 0.0, %v4639
      %v4641 = vpop.f32.mrb[0].mxu0
      %4642 = vmatprep.mubr.f32.mxu0 0.0
      %4643 = vmatmul.mubr.f32.gmra.mrb[0].mxu0 %v2099
      %v4644 = vpop.f32.mrb[0].mxu0
      %v4645 = vadd.f32 0.0, %v4644
      %v4646 = vpop.f32.mrb[0].mxu0
      %4647 = vmatprep.mubr.f32.mxu0 0.0
      %4648 = vmatmul.mubr.f32.gmra.mrb[0].mxu0 %v2102
      %v4649 = vpop.f32.mrb[0].mxu0
      %v4650 = vadd.f32 0.0, %v4649
      %v4651 = vpop.f32.mrb[0].mxu0
      %4652 = vmatprep.mubr.f32.mxu0 0.0
      %4653 = vmatmul.mubr.f32.gmra.mrb[0].mxu0 %v2105
      %v4654 = vpop.f32.mrb[0].mxu0
      %v4655 = vadd.f32 0.0, %v4654
      %v4656 = vpop.f32.mrb[0].mxu0
      %4657 = vmatprep.mubr.f32.mxu0 0.0
      %4658 = vmatmul.mubr.f32.gmra.mrb[0].mxu0 %v2108
      %v4659 = vpop.f32.mrb[0].mxu0
      %v4660 = vadd.f32 0.0, %v4659
      %v4661 = vpop.f32.mrb[0].mxu0
      %4662 = vmatprep.mubr.f32.mxu0 0.0
      %4663 = vmatmul.mubr.f32.gmra.mrb[0].mxu0 %v2111
      %v4664 = vpop.f32.mrb[0].mxu0
      %v4665 = vadd.f32 0.0, %v4664
      %v4666 = vpop.f32.mrb[0].mxu0
      %4667 = vmatprep.mubr.f32.mxu0 0.0
      %4668 = vmatmul.mubr.f32.gmra.mrb[0].mxu0 %v2114
      %v4669 = vpop.f32.mrb[0].mxu0
      %v4670 = vadd.f32 0.0, %v4669
      %v4671 = vpop.f32.mrb[0].mxu0
      %4672 = vmatprep.mubr.f32.mxu0 0.0
      %4673 = vmatmul.mubr.f32.gmra.mrb[0].mxu0 %v2117
      %v4674 = vpop.f32.mrb[0].mxu0
      %v4675 = vadd.f32 0.0, %v4674
      %v4676 = vpop.f32.mrb[0].mxu0
      %4677 = vmatprep.mubr.f32.mxu0 0.0
      %4678 = vmatmul.mubr.f32.gmra.mrb[0].mxu0 %v2120
      %v4679 = vpop.f32.mrb[0].mxu0
      %v4680 = vadd.f32 0.0, %v4679
      %v4681 = vpop.f32.mrb[0].mxu0
      %4682 = vmatprep.mubr.f32.mxu0 0.0
      %4683 = vmatmul.mubr.f32.gmra.mrb[0].mxu0 %v2123
      %v4684 = vpop.f32.mrb[0].mxu0
      %v4685 = vadd.f32 0.0, %v4684
      %v4686 = vpop.f32.mrb[0].mxu0
      %4687 = vmatprep.mubr.f32.mxu0 0.0
      %4688 = vmatmul.mubr.f32.gmra.mrb[0].mxu0 %v2126
      %v4689 = vpop.f32.mrb[0].mxu0
      %v4690 = vadd.f32 0.0, %v4689
      %v4691 = vpop.f32.mrb[0].mxu0
      %4692 = vmatprep.mubr.f32.mxu0 0.0
      %4693 = vmatmul.mubr.f32.gmra.mrb[0].mxu0 %v2129
      %v4694 = vpop.f32.mrb[0].mxu0
      %v4695 = vadd.f32 0.0, %v4694
      %v4696 = vpop.f32.mrb[0].mxu0
      %4697 = vmatprep.mubr.f32.mxu0 0.0
      %4698 = vmatmul.mubr.f32.gmra.mrb[0].mxu0 %v2132
      %v4699 = vpop.f32.mrb[0].mxu0
      %v4700 = vadd.f32 0.0, %v4699
      %v4701 = vpop.f32.mrb[0].mxu0
      %4702 = vmatprep.mubr.f32.mxu0 0.0
      %4703 = vmatmul.mubr.f32.gmra.mrb[0].mxu0 %v2135
      %v4704 = vpop.f32.mrb[0].mxu0
      %v4705 = vadd.f32 0.0, %v4704
      %v4706 = vpop.f32.mrb[0].mxu0
      %4707 = vmatprep.mubr.f32.mxu0 0.0
      %4708 = vmatmul.mubr.f32.gmra.mrb[0].mxu0 %v2138
      %v4709 = vpop.f32.mrb[0].mxu0
      %v4710 = vadd.f32 0.0, %v4709
      %v4711 = vpop.f32.mrb[0].mxu0
      %4712 = vmatprep.mubr.f32.mxu0 0.0
      %4713 = vmatmul.mubr.f32.gmra.mrb[0].mxu0 %v2141
      %v4714 = vpop.f32.mrb[0].mxu0
      %v4715 = vadd.f32 0.0, %v4714
      %v4716 = vpop.f32.mrb[0].mxu0
      %4717 = vmatprep.mubr.f32.mxu0 0.0
      %4718 = vmatmul.mubr.f32.gmra.mrb[0].mxu0 %v2144
      %v4719 = vpop.f32.mrb[0].mxu0
      %v4720 = vadd.f32 0.0, %v4719
      %v4721 = vpop.f32.mrb[0].mxu0
      %4722 = vmatprep.mubr.f32.mxu0 0.0
      %4723 = vmatmul.mubr.f32.gmra.mrb[0].mxu0 %v2147
      %v4724 = vpop.f32.mrb[0].mxu0
      %v4725 = vadd.f32 0.0, %v4724
      %v4726 = vpop.f32.mrb[0].mxu0
      %4727 = vmatprep.mubr.f32.mxu0 0.0
      %4728 = vmatmul.mubr.f32.gmra.mrb[0].mxu0 %v2150
      %v4729 = vpop.f32.mrb[0].mxu0
      %v4730 = vadd.f32 0.0, %v4729
      %v4731 = vpop.f32.mrb[0].mxu0
      %4732 = vmatprep.mubr.f32.mxu0 0.0
      %4733 = vmatmul.mubr.f32.gmra.mrb[0].mxu0 %v2153
      %v4734 = vpop.f32.mrb[0].mxu0
      %v4735 = vadd.f32 0.0, %v4734
      %v4736 = vpop.f32.mrb[0].mxu0
      %4737 = vmatprep.mubr.f32.mxu0 0.0
      %4738 = vmatmul.mubr.f32.gmra.mrb[0].mxu0 %v2156
      %v4739 = vpop.f32.mrb[0].mxu0
      %v4740 = vadd.f32 0.0, %v4739
      %v4741 = vpop.f32.mrb[0].mxu0
      %4742 = vmatprep.mubr.f32.mxu0 0.0
      %4743 = vmatmul.mubr.f32.gmra.mrb[0].mxu0 %v2159
      %v4744 = vpop.f32.mrb[0].mxu0
      %v4745 = vadd.f32 0.0, %v4744
      %v4746 = vpop.f32.mrb[0].mxu0
      %4747 = vmatprep.mubr.f32.mxu0 0.0
      %4748 = vmatmul.mubr.f32.gmra.mrb[0].mxu0 %v2162
      %v4749 = vpop.f32.mrb[0].mxu0
      %v4750 = vadd.f32 0.0, %v4749
      %v4751 = vpop.f32.mrb[0].mxu0
      %4752 = vmatprep.mubr.f32.mxu0 0.0
      %4753 = vmatmul.mubr.f32.gmra.mrb[0].mxu0 %v2165
      %v4754 = vpop.f32.mrb[0].mxu0
      %v4755 = vadd.f32 0.0, %v4754
      %v4756 = vpop.f32.mrb[0].mxu0
      %4757 = vmatprep.mubr.f32.mxu0 0.0
      %4758 = vmatmul.mubr.f32.gmra.mrb[0].mxu0 %v2168
      %v4759 = vpop.f32.mrb[0].mxu0
      %v4760 = vadd.f32 0.0, %v4759
      %v4761 = vpop.f32.mrb[0].mxu0
      %4762 = vmatprep.mubr.f32.mxu0 0.0
      %4763 = vmatmul.mubr.f32.gmra.mrb[0].mxu0 %v2171
      %v4764 = vpop.f32.mrb[0].mxu0
      %v4765 = vadd.f32 0.0, %v4764
      %v4766 = vpop.f32.mrb[0].mxu0
      %4767 = vmatprep.mubr.f32.mxu0 0.0
      %4768 = vmatmul.mubr.f32.gmra.mrb[0].mxu0 %v2174
      %v4769 = vpop.f32.mrb[0].mxu0
      %v4770 = vadd.f32 0.0, %v4769
      %v4771 = vpop.f32.mrb[0].mxu0
      %4772 = vmatprep.mubr.f32.mxu0 0.0
      %4773 = vmatmul.mubr.f32.gmra.mrb[0].mxu0 %v2177
      %v4774 = vpop.f32.mrb[0].mxu0
      %v4775 = vadd.f32 0.0, %v4774
      %v4776 = vpop.f32.mrb[0].mxu0
      %4777 = vmatprep.mubr.f32.mxu0 0.0
      %4778 = vmatmul.mubr.f32.gmra.mrb[0].mxu0 %v2180
      %v4779 = vpop.f32.mrb[0].mxu0
      %v4780 = vadd.f32 0.0, %v4779
      %v4781 = vpop.f32.mrb[0].mxu0
      %4782 = vmatprep.mubr.f32.mxu0 0.0
      %4783 = vmatmul.mubr.f32.gmra.mrb[0].mxu0 %v2183
      %v4784 = vpop.f32.mrb[0].mxu0
      %v4785 = vadd.f32 0.0, %v4784
      %v4786 = vpop.f32.mrb[0].mxu0
      %4787 = vmatprep.mubr.f32.mxu0 0.0
      %4788 = vmatmul.mubr.f32.gmra.mrb[0].mxu0 %v2186
      %v4789 = vpop.f32.mrb[0].mxu0
      %v4790 = vadd.f32 0.0, %v4789
      %v4791 = vpop.f32.mrb[0].mxu0
      %4792 = vmatprep.mubr.f32.mxu0 0.0
      %4793 = vmatmul.mubr.f32.gmra.mrb[0].mxu0 %v2189
      %v4794 = vpop.f32.mrb[0].mxu0
      %v4795 = vadd.f32 0.0, %v4794
      %v4796 = vpop.f32.mrb[0].mxu0
      %4797 = vmatprep.mubr.f32.mxu0 0.0
      %4798 = vmatmul.mubr.f32.gmra.mrb[0].mxu0 %v2192
      %v4799 = vpop.f32.mrb[0].mxu0
      %v4800 = vadd.f32 0.0, %v4799
      %v4801 = vpop.f32.mrb[0].mxu0
      %4802 = vmatprep.mubr.f32.mxu0 0.0
      %4803 = vmatmul.mubr.f32.gmra.mrb[0].mxu0 %v2195
      %v4804 = vpop.f32.mrb[0].mxu0
      %v4805 = vadd.f32 0.0, %v4804
      %v4806 = vpop.f32.mrb[0].mxu0
      %4807 = vmatprep.mubr.f32.mxu0 0.0
      %4808 = vmatmul.mubr.f32.gmra.mrb[0].mxu0 %v2198
      %v4809 = vpop.f32.mrb[0].mxu0
      %v4810 = vadd.f32 0.0, %v4809
      %v4811 = vpop.f32.mrb[0].mxu0
      %4812 = vmatprep.mubr.f32.mxu0 0.0
      %4813 = vmatmul.mubr.f32.gmra.mrb[0].mxu0 %v2201
      %v4814 = vpop.f32.mrb[0].mxu0
      %v4815 = vadd.f32 0.0, %v4814
      %v4816 = vpop.f32.mrb[0].mxu0
      %4817 = vmatprep.mubr.f32.mxu0 0.0
      %4818 = vmatmul.mubr.f32.gmra.mrb[0].mxu0 %v2204
      %v4819 = vpop.f32.mrb[0].mxu0
      %v4820 = vadd.f32 0.0, %v4819
      %v4821 = vpop.f32.mrb[0].mxu0
      %4822 = vmatprep.mubr.f32.mxu0 0.0
      %4823 = vmatmul.mubr.f32.gmra.mrb[0].mxu0 %v2207
      %v4824 = vpop.f32.mrb[0].mxu0
      %v4825 = vadd.f32 0.0, %v4824
      %v4826 = vpop.f32.mrb[0].mxu0
      %4827 = vmatprep.mubr.f32.mxu0 0.0
      %4828 = vmatmul.mubr.f32.gmra.mrb[0].mxu0 %v2210
      %v4829 = vpop.f32.mrb[0].mxu0
      %v4830 = vadd.f32 0.0, %v4829
      %v4831 = vpop.f32.mrb[0].mxu0
      %4832 = vmatprep.mubr.f32.mxu0 0.0
      %4833 = vmatmul.mubr.f32.gmra.mrb[0].mxu0 %v2213
      %v4834 = vpop.f32.mrb[0].mxu0
      %v4835 = vadd.f32 0.0, %v4834
      %v4836 = vpop.f32.mrb[0].mxu0
      %4837 = vmatprep.mubr.f32.mxu0 0.0
      %4838 = vmatmul.mubr.f32.gmra.mrb[0].mxu0 %v2216
      %v4839 = vpop.f32.mrb[0].mxu0
      %v4840 = vadd.f32 0.0, %v4839
      %v4841 = vpop.f32.mrb[0].mxu0
      %4842 = vmatprep.mubr.f32.mxu0 0.0
      %4843 = vmatmul.mubr.f32.gmra.mrb[0].mxu0 %v2219
      %v4844 = vpop.f32.mrb[0].mxu0
      %v4845 = vadd.f32 0.0, %v4844
      %v4846 = vpop.f32.mrb[0].mxu0
      %4847 = vmatprep.mubr.f32.mxu0 0.0
      %4848 = vmatmul.mubr.f32.gmra.mrb[0].mxu0 %v2222
      %v4849 = vpop.f32.mrb[0].mxu0
      %v4850 = vadd.f32 0.0, %v4849
      %v4851 = vpop.f32.mrb[0].mxu0
      %4852 = vdwg.mxu0
      %v4853 = vmax.f32 %v2295, %v2935
      %v4854 = vmax.f32 %v2300, %v2940
      %v4855 = vmax.f32 %v2305, %v2945
      %v4856 = vmax.f32 %v2310, %v2950
      %v4857 = vmax.f32 %v2315, %v2955
      %v4858 = vmax.f32 %v2320, %v2960
      %v4859 = vmax.f32 %v2325, %v2965
      %v4860 = vmax.f32 %v2330, %v2970
      %v4861 = vmax.f32 %v2335, %v2975
      %v4862 = vmax.f32 %v2340, %v2980
      %v4863 = vmax.f32 %v2345, %v2985
      %v4864 = vmax.f32 %v2350, %v2990
      %v4865 = vmax.f32 %v2355, %v2995
      %v4866 = vmax.f32 %v2360, %v3000
      %v4867 = vmax.f32 %v2365, %v3005
      %v4868 = vmax.f32 %v2370, %v3010
      %v4869 = vmax.f32 %v2375, %v3015
      %v4870 = vmax.f32 %v2380, %v3020
      %v4871 = vmax.f32 %v2385, %v3025
      %v4872 = vmax.f32 %v2390, %v3030
      %v4873 = vmax.f32 %v2395, %v3035
      %v4874 = vmax.f32 %v2400, %v3040
      %v4875 = vmax.f32 %v2405, %v3045
      %v4876 = vmax.f32 %v2410, %v3050
      %v4877 = vmax.f32 %v2415, %v3055
      %v4878 = vmax.f32 %v2420, %v3060
      %v4879 = vmax.f32 %v2425, %v3065
      %v4880 = vmax.f32 %v2430, %v3070
      %v4881 = vmax.f32 %v2435, %v3075
      %v4882 = vmax.f32 %v2440, %v3080
      %v4883 = vmax.f32 %v2445, %v3085
      %v4884 = vmax.f32 %v2450, %v3090
      %v4885 = vmax.f32 %v2455, %v3095
      %v4886 = vmax.f32 %v2460, %v3100
      %v4887 = vmax.f32 %v2465, %v3105
      %v4888 = vmax.f32 %v2470, %v3110
      %v4889 = vmax.f32 %v2475, %v3115
      %v4890 = vmax.f32 %v2480, %v3120
      %v4891 = vmax.f32 %v2485, %v3125
      %v4892 = vmax.f32 %v2490, %v3130
      %v4893 = vmax.f32 %v2495, %v3135
      %v4894 = vmax.f32 %v2500, %v3140
      %v4895 = vmax.f32 %v2505, %v3145
      %v4896 = vmax.f32 %v2510, %v3150
      %v4897 = vmax.f32 %v2515, %v3155
      %v4898 = vmax.f32 %v2520, %v3160
      %v4899 = vmax.f32 %v2525, %v3165
      %v4900 = vmax.f32 %v2530, %v3170
      %v4901 = vmax.f32 %v2535, %v3175
      %v4902 = vmax.f32 %v2540, %v3180
      %v4903 = vmax.f32 %v2545, %v3185
      %v4904 = vmax.f32 %v2550, %v3190
      %v4905 = vmax.f32 %v2555, %v3195
      %v4906 = vmax.f32 %v2560, %v3200
      %v4907 = vmax.f32 %v2565, %v3205
      %v4908 = vmax.f32 %v2570, %v3210
      %v4909 = vmax.f32 %v2575, %v3215
      %v4910 = vmax.f32 %v2580, %v3220
      %v4911 = vmax.f32 %v2585, %v3225
      %v4912 = vmax.f32 %v2590, %v3230
      %v4913 = vmax.f32 %v2595, %v3235
      %v4914 = vmax.f32 %v2600, %v3240
      %v4915 = vmax.f32 %v2605, %v3245
      %v4916 = vmax.f32 %v2610, %v3250
      %v4917 = vmax.f32 %v2615, %v3255
      %v4918 = vmax.f32 %v2620, %v3260
      %v4919 = vmax.f32 %v2625, %v3265
      %v4920 = vmax.f32 %v2630, %v3270
      %v4921 = vmax.f32 %v2635, %v3275
      %v4922 = vmax.f32 %v2640, %v3280
      %v4923 = vmax.f32 %v2645, %v3285
      %v4924 = vmax.f32 %v2650, %v3290
      %v4925 = vmax.f32 %v2655, %v3295
      %v4926 = vmax.f32 %v2660, %v3300
      %v4927 = vmax.f32 %v2665, %v3305
      %v4928 = vmax.f32 %v2670, %v3310
      %v4929 = vmax.f32 %v2675, %v3315
      %v4930 = vmax.f32 %v2680, %v3320
      %v4931 = vmax.f32 %v2685, %v3325
      %v4932 = vmax.f32 %v2690, %v3330
      %v4933 = vmax.f32 %v2695, %v3335
      %v4934 = vmax.f32 %v2700, %v3340
      %v4935 = vmax.f32 %v2705, %v3345
      %v4936 = vmax.f32 %v2710, %v3350
      %v4937 = vmax.f32 %v2715, %v3355
      %v4938 = vmax.f32 %v2720, %v3360
      %v4939 = vmax.f32 %v2725, %v3365
      %v4940 = vmax.f32 %v2730, %v3370
      %v4941 = vmax.f32 %v2735, %v3375
      %v4942 = vmax.f32 %v2740, %v3380
      %v4943 = vmax.f32 %v2745, %v3385
      %v4944 = vmax.f32 %v2750, %v3390
      %v4945 = vmax.f32 %v2755, %v3395
      %v4946 = vmax.f32 %v2760, %v3400
      %v4947 = vmax.f32 %v2765, %v3405
      %v4948 = vmax.f32 %v2770, %v3410
      %v4949 = vmax.f32 %v2775, %v3415
      %v4950 = vmax.f32 %v2780, %v3420
      %v4951 = vmax.f32 %v2785, %v3425
      %v4952 = vmax.f32 %v2790, %v3430
      %v4953 = vmax.f32 %v2795, %v3435
      %v4954 = vmax.f32 %v2800, %v3440
      %v4955 = vmax.f32 %v2805, %v3445
      %v4956 = vmax.f32 %v2810, %v3450
      %v4957 = vmax.f32 %v2815, %v3455
      %v4958 = vmax.f32 %v2820, %v3460
      %v4959 = vmax.f32 %v2825, %v3465
      %v4960 = vmax.f32 %v2830, %v3470
      %v4961 = vmax.f32 %v2835, %v3475
      %v4962 = vmax.f32 %v2840, %v3480
      %v4963 = vmax.f32 %v2845, %v3485
      %v4964 = vmax.f32 %v2850, %v3490
      %v4965 = vmax.f32 %v2855, %v3495
      %v4966 = vmax.f32 %v2860, %v3500
      %v4967 = vmax.f32 %v2865, %v3505
      %v4968 = vmax.f32 %v2870, %v3510
      %v4969 = vmax.f32 %v2875, %v3515
      %v4970 = vmax.f32 %v2880, %v3520
      %v4971 = vmax.f32 %v2885, %v3525
      %v4972 = vmax.f32 %v2890, %v3530
      %v4973 = vmax.f32 %v2895, %v3535
      %v4974 = vmax.f32 %v2900, %v3540
      %v4975 = vmax.f32 %v2905, %v3545
      %v4976 = vmax.f32 %v2910, %v3550
      %v4977 = vmax.f32 %v2915, %v3555
      %v4978 = vmax.f32 %v2920, %v3560
      %v4979 = vmax.f32 %v2925, %v3565
      %v4980 = vmax.f32 %v2930, %v3570
      %v4981 = vmax.f32 %v4853, %v3575
      %v4982 = vmax.f32 %v4854, %v3580
      %v4983 = vmax.f32 %v4855, %v3585
      %v4984 = vmax.f32 %v4856, %v3590
      %v4985 = vmax.f32 %v4857, %v3595
      %v4986 = vmax.f32 %v4858, %v3600
      %v4987 = vmax.f32 %v4859, %v3605
      %v4988 = vmax.f32 %v4860, %v3610
      %v4989 = vmax.f32 %v4861, %v3615
      %v4990 = vmax.f32 %v4862, %v3620
      %v4991 = vmax.f32 %v4863, %v3625
      %v4992 = vmax.f32 %v4864, %v3630
      %v4993 = vmax.f32 %v4865, %v3635
      %v4994 = vmax.f32 %v4866, %v3640
      %v4995 = vmax.f32 %v4867, %v3645
      %v4996 = vmax.f32 %v4868, %v3650
      %v4997 = vmax.f32 %v4869, %v3655
      %v4998 = vmax.f32 %v4870, %v3660
      %v4999 = vmax.f32 %v4871, %v3665
      %v5000 = vmax.f32 %v4872, %v3670
      %v5001 = vmax.f32 %v4873, %v3675
      %v5002 = vmax.f32 %v4874, %v3680
      %v5003 = vmax.f32 %v4875, %v3685
      %v5004 = vmax.f32 %v4876, %v3690
      %v5005 = vmax.f32 %v4877, %v3695
      %v5006 = vmax.f32 %v4878, %v3700
      %v5007 = vmax.f32 %v4879, %v3705
      %v5008 = vmax.f32 %v4880, %v3710
      %v5009 = vmax.f32 %v4881, %v3715
      %v5010 = vmax.f32 %v4882, %v3720
      %v5011 = vmax.f32 %v4883, %v3725
      %v5012 = vmax.f32 %v4884, %v3730
      %v5013 = vmax.f32 %v4885, %v3735
      %v5014 = vmax.f32 %v4886, %v3740
      %v5015 = vmax.f32 %v4887, %v3745
      %v5016 = vmax.f32 %v4888, %v3750
      %v5017 = vmax.f32 %v4889, %v3755
      %v5018 = vmax.f32 %v4890, %v3760
      %v5019 = vmax.f32 %v4891, %v3765
      %v5020 = vmax.f32 %v4892, %v3770
      %v5021 = vmax.f32 %v4893, %v3775
      %v5022 = vmax.f32 %v4894, %v3780
      %v5023 = vmax.f32 %v4895, %v3785
      %v5024 = vmax.f32 %v4896, %v3790
      %v5025 = vmax.f32 %v4897, %v3795
      %v5026 = vmax.f32 %v4898, %v3800
      %v5027 = vmax.f32 %v4899, %v3805
      %v5028 = vmax.f32 %v4900, %v3810
      %v5029 = vmax.f32 %v4901, %v3815
      %v5030 = vmax.f32 %v4902, %v3820
      %v5031 = vmax.f32 %v4903, %v3825
      %v5032 = vmax.f32 %v4904, %v3830
      %v5033 = vmax.f32 %v4905, %v3835
      %v5034 = vmax.f32 %v4906, %v3840
      %v5035 = vmax.f32 %v4907, %v3845
      %v5036 = vmax.f32 %v4908, %v3850
      %v5037 = vmax.f32 %v4909, %v3855
      %v5038 = vmax.f32 %v4910, %v3860
      %v5039 = vmax.f32 %v4911, %v3865
      %v5040 = vmax.f32 %v4912, %v3870
      %v5041 = vmax.f32 %v4913, %v3875
      %v5042 = vmax.f32 %v4914, %v3880
      %v5043 = vmax.f32 %v4915, %v3885
      %v5044 = vmax.f32 %v4916, %v3890
      %v5045 = vmax.f32 %v4917, %v3895
      %v5046 = vmax.f32 %v4918, %v3900
      %v5047 = vmax.f32 %v4919, %v3905
      %v5048 = vmax.f32 %v4920, %v3910
      %v5049 = vmax.f32 %v4921, %v3915
      %v5050 = vmax.f32 %v4922, %v3920
      %v5051 = vmax.f32 %v4923, %v3925
      %v5052 = vmax.f32 %v4924, %v3930
      %v5053 = vmax.f32 %v4925, %v3935
      %v5054 = vmax.f32 %v4926, %v3940
      %v5055 = vmax.f32 %v4927, %v3945
      %v5056 = vmax.f32 %v4928, %v3950
      %v5057 = vmax.f32 %v4929, %v3955
      %v5058 = vmax.f32 %v4930, %v3960
      %v5059 = vmax.f32 %v4931, %v3965
      %v5060 = vmax.f32 %v4932, %v3970
      %v5061 = vmax.f32 %v4933, %v3975
      %v5062 = vmax.f32 %v4934, %v3980
      %v5063 = vmax.f32 %v4935, %v3985
      %v5064 = vmax.f32 %v4936, %v3990
      %v5065 = vmax.f32 %v4937, %v3995
      %v5066 = vmax.f32 %v4938, %v4000
      %v5067 = vmax.f32 %v4939, %v4005
      %v5068 = vmax.f32 %v4940, %v4010
      %v5069 = vmax.f32 %v4941, %v4015
      %v5070 = vmax.f32 %v4942, %v4020
      %v5071 = vmax.f32 %v4943, %v4025
      %v5072 = vmax.f32 %v4944, %v4030
      %v5073 = vmax.f32 %v4945, %v4035
      %v5074 = vmax.f32 %v4946, %v4040
      %v5075 = vmax.f32 %v4947, %v4045
      %v5076 = vmax.f32 %v4948, %v4050
      %v5077 = vmax.f32 %v4949, %v4055
      %v5078 = vmax.f32 %v4950, %v4060
      %v5079 = vmax.f32 %v4951, %v4065
      %v5080 = vmax.f32 %v4952, %v4070
      %v5081 = vmax.f32 %v4953, %v4075
      %v5082 = vmax.f32 %v4954, %v4080
      %v5083 = vmax.f32 %v4955, %v4085
      %v5084 = vmax.f32 %v4956, %v4090
      %v5085 = vmax.f32 %v4957, %v4095
      %v5086 = vmax.f32 %v4958, %v4100
      %v5087 = vmax.f32 %v4959, %v4105
      %v5088 = vmax.f32 %v4960, %v4110
      %v5089 = vmax.f32 %v4961, %v4115
      %v5090 = vmax.f32 %v4962, %v4120
      %v5091 = vmax.f32 %v4963, %v4125
      %v5092 = vmax.f32 %v4964, %v4130
      %v5093 = vmax.f32 %v4965, %v4135
      %v5094 = vmax.f32 %v4966, %v4140
      %v5095 = vmax.f32 %v4967, %v4145
      %v5096 = vmax.f32 %v4968, %v4150
      %v5097 = vmax.f32 %v4969, %v4155
      %v5098 = vmax.f32 %v4970, %v4160
      %v5099 = vmax.f32 %v4971, %v4165
      %v5100 = vmax.f32 %v4972, %v4170
      %v5101 = vmax.f32 %v4973, %v4175
      %v5102 = vmax.f32 %v4974, %v4180
      %v5103 = vmax.f32 %v4975, %v4185
      %v5104 = vmax.f32 %v4976, %v4190
      %v5105 = vmax.f32 %v4977, %v4195
      %v5106 = vmax.f32 %v4978, %v4200
      %v5107 = vmax.f32 %v4979, %v4205
      %v5108 = vmax.f32 %v4980, %v4210
      %v5109 = vmax.f32 %v4981, %v4215
      %v5110 = vmax.f32 %v4982, %v4220
      %v5111 = vmax.f32 %v4983, %v4225
      %v5112 = vmax.f32 %v4984, %v4230
      %v5113 = vmax.f32 %v4985, %v4235
      %v5114 = vmax.f32 %v4986, %v4240
      %v5115 = vmax.f32 %v4987, %v4245
      %v5116 = vmax.f32 %v4988, %v4250
      %v5117 = vmax.f32 %v4989, %v4255
      %v5118 = vmax.f32 %v4990, %v4260
      %v5119 = vmax.f32 %v4991, %v4265
      %v5120 = vmax.f32 %v4992, %v4270
      %v5121 = vmax.f32 %v4993, %v4275
      %v5122 = vmax.f32 %v4994, %v4280
      %v5123 = vmax.f32 %v4995, %v4285
      %v5124 = vmax.f32 %v4996, %v4290
      %v5125 = vmax.f32 %v4997, %v4295
      %v5126 = vmax.f32 %v4998, %v4300
      %v5127 = vmax.f32 %v4999, %v4305
      %v5128 = vmax.f32 %v5000, %v4310
      %v5129 = vmax.f32 %v5001, %v4315
      %v5130 = vmax.f32 %v5002, %v4320
      %v5131 = vmax.f32 %v5003, %v4325
      %v5132 = vmax.f32 %v5004, %v4330
      %v5133 = vmax.f32 %v5005, %v4335
      %v5134 = vmax.f32 %v5006, %v4340
      %v5135 = vmax.f32 %v5007, %v4345
      %v5136 = vmax.f32 %v5008, %v4350
      %v5137 = vmax.f32 %v5009, %v4355
      %v5138 = vmax.f32 %v5010, %v4360
      %v5139 = vmax.f32 %v5011, %v4365
      %v5140 = vmax.f32 %v5012, %v4370
      %v5141 = vmax.f32 %v5013, %v4375
      %v5142 = vmax.f32 %v5014, %v4380
      %v5143 = vmax.f32 %v5015, %v4385
      %v5144 = vmax.f32 %v5016, %v4390
      %v5145 = vmax.f32 %v5017, %v4395
      %v5146 = vmax.f32 %v5018, %v4400
      %v5147 = vmax.f32 %v5019, %v4405
      %v5148 = vmax.f32 %v5020, %v4410
      %v5149 = vmax.f32 %v5021, %v4415
      %v5150 = vmax.f32 %v5022, %v4420
      %v5151 = vmax.f32 %v5023, %v4425
      %v5152 = vmax.f32 %v5024, %v4430
      %v5153 = vmax.f32 %v5025, %v4435
      %v5154 = vmax.f32 %v5026, %v4440
      %v5155 = vmax.f32 %v5027, %v4445
      %v5156 = vmax.f32 %v5028, %v4450
      %v5157 = vmax.f32 %v5029, %v4455
      %v5158 = vmax.f32 %v5030, %v4460
      %v5159 = vmax.f32 %v5031, %v4465
      %v5160 = vmax.f32 %v5032, %v4470
      %v5161 = vmax.f32 %v5033, %v4475
      %v5162 = vmax.f32 %v5034, %v4480
      %v5163 = vmax.f32 %v5035, %v4485
      %v5164 = vmax.f32 %v5036, %v4490
      %v5165 = vmax.f32 %v5037, %v4495
      %v5166 = vmax.f32 %v5038, %v4500
      %v5167 = vmax.f32 %v5039, %v4505
      %v5168 = vmax.f32 %v5040, %v4510
      %v5169 = vmax.f32 %v5041, %v4515
      %v5170 = vmax.f32 %v5042, %v4520
      %v5171 = vmax.f32 %v5043, %v4525
      %v5172 = vmax.f32 %v5044, %v4530
      %v5173 = vmax.f32 %v5045, %v4535
      %v5174 = vmax.f32 %v5046, %v4540
      %v5175 = vmax.f32 %v5047, %v4545
      %v5176 = vmax.f32 %v5048, %v4550
      %v5177 = vmax.f32 %v5049, %v4555
      %v5178 = vmax.f32 %v5050, %v4560
      %v5179 = vmax.f32 %v5051, %v4565
      %v5180 = vmax.f32 %v5052, %v4570
      %v5181 = vmax.f32 %v5053, %v4575
      %v5182 = vmax.f32 %v5054, %v4580
      %v5183 = vmax.f32 %v5055, %v4585
      %v5184 = vmax.f32 %v5056, %v4590
      %v5185 = vmax.f32 %v5057, %v4595
      %v5186 = vmax.f32 %v5058, %v4600
      %v5187 = vmax.f32 %v5059, %v4605
      %v5188 = vmax.f32 %v5060, %v4610
      %v5189 = vmax.f32 %v5061, %v4615
      %v5190 = vmax.f32 %v5062, %v4620
      %v5191 = vmax.f32 %v5063, %v4625
      %v5192 = vmax.f32 %v5064, %v4630
      %v5193 = vmax.f32 %v5065, %v4635
      %v5194 = vmax.f32 %v5066, %v4640
      %v5195 = vmax.f32 %v5067, %v4645
      %v5196 = vmax.f32 %v5068, %v4650
      %v5197 = vmax.f32 %v5069, %v4655
      %v5198 = vmax.f32 %v5070, %v4660
      %v5199 = vmax.f32 %v5071, %v4665
      %v5200 = vmax.f32 %v5072, %v4670
      %v5201 = vmax.f32 %v5073, %v4675
      %v5202 = vmax.f32 %v5074, %v4680
      %v5203 = vmax.f32 %v5075, %v4685
      %v5204 = vmax.f32 %v5076, %v4690
      %v5205 = vmax.f32 %v5077, %v4695
      %v5206 = vmax.f32 %v5078, %v4700
      %v5207 = vmax.f32 %v5079, %v4705
      %v5208 = vmax.f32 %v5080, %v4710
      %v5209 = vmax.f32 %v5081, %v4715
      %v5210 = vmax.f32 %v5082, %v4720
      %v5211 = vmax.f32 %v5083, %v4725
      %v5212 = vmax.f32 %v5084, %v4730
      %v5213 = vmax.f32 %v5085, %v4735
      %v5214 = vmax.f32 %v5086, %v4740
      %v5215 = vmax.f32 %v5087, %v4745
      %v5216 = vmax.f32 %v5088, %v4750
      %v5217 = vmax.f32 %v5089, %v4755
      %v5218 = vmax.f32 %v5090, %v4760
      %v5219 = vmax.f32 %v5091, %v4765
      %v5220 = vmax.f32 %v5092, %v4770
      %v5221 = vmax.f32 %v5093, %v4775
      %v5222 = vmax.f32 %v5094, %v4780
      %v5223 = vmax.f32 %v5095, %v4785
      %v5224 = vmax.f32 %v5096, %v4790
      %v5225 = vmax.f32 %v5097, %v4795
      %v5226 = vmax.f32 %v5098, %v4800
      %v5227 = vmax.f32 %v5099, %v4805
      %v5228 = vmax.f32 %v5100, %v4810
      %v5229 = vmax.f32 %v5101, %v4815
      %v5230 = vmax.f32 %v5102, %v4820
      %v5231 = vmax.f32 %v5103, %v4825
      %v5232 = vmax.f32 %v5104, %v4830
      %v5233 = vmax.f32 %v5105, %v4835
      %v5234 = vmax.f32 %v5106, %v4840
      %v5235 = vmax.f32 %v5107, %v4845
      %v5236 = vmax.f32 %v5108, %v4850
      %v5237 = vld [vmem:[%s2] sm:$0x1]
      %v5239 = vlaneseq
      %v5240 = vshrl.u32 %v5239, 7
      %v5241 = vsub.s32 0, %v5240
      %v5242 = vrot.slane %v5237, %v5241
      %v5244 = vadd.f32 %v5109, %v5242
      %v5245 = vadd.f32 %v5110, %v5242
      %v5246 = vadd.f32 %v5111, %v5242
      %v5247 = vadd.f32 %v5112, %v5242
      %v5248 = vadd.f32 %v5113, %v5242
      %v5249 = vadd.f32 %v5114, %v5242
      %v5250 = vadd.f32 %v5115, %v5242
      %v5251 = vadd.f32 %v5116, %v5242
      %v5252 = vadd.f32 %v5117, %v5242
      %v5253 = vadd.f32 %v5118, %v5242
      %v5254 = vadd.f32 %v5119, %v5242
      %v5255 = vadd.f32 %v5120, %v5242
      %v5256 = vadd.f32 %v5121, %v5242
      %v5257 = vadd.f32 %v5122, %v5242
      %v5258 = vadd.f32 %v5123, %v5242
      %v5259 = vadd.f32 %v5124, %v5242
      %v5260 = vadd.f32 %v5125, %v5242
      %v5261 = vadd.f32 %v5126, %v5242
      %v5262 = vadd.f32 %v5127, %v5242
      %v5263 = vadd.f32 %v5128, %v5242
      %v5264 = vadd.f32 %v5129, %v5242
      %v5265 = vadd.f32 %v5130, %v5242
      %v5266 = vadd.f32 %v5131, %v5242
      %v5267 = vadd.f32 %v5132, %v5242
      %v5268 = vadd.f32 %v5133, %v5242
      %v5269 = vadd.f32 %v5134, %v5242
      %v5270 = vadd.f32 %v5135, %v5242
      %v5271 = vadd.f32 %v5136, %v5242
      %v5272 = vadd.f32 %v5137, %v5242
      %v5273 = vadd.f32 %v5138, %v5242
      %v5274 = vadd.f32 %v5139, %v5242
      %v5275 = vadd.f32 %v5140, %v5242
      %v5276 = vadd.f32 %v5141, %v5242
      %v5277 = vadd.f32 %v5142, %v5242
      %v5278 = vadd.f32 %v5143, %v5242
      %v5279 = vadd.f32 %v5144, %v5242
      %v5280 = vadd.f32 %v5145, %v5242
      %v5281 = vadd.f32 %v5146, %v5242
      %v5282 = vadd.f32 %v5147, %v5242
      %v5283 = vadd.f32 %v5148, %v5242
      %v5284 = vadd.f32 %v5149, %v5242
      %v5285 = vadd.f32 %v5150, %v5242
      %v5286 = vadd.f32 %v5151, %v5242
      %v5287 = vadd.f32 %v5152, %v5242
      %v5288 = vadd.f32 %v5153, %v5242
      %v5289 = vadd.f32 %v5154, %v5242
      %v5290 = vadd.f32 %v5155, %v5242
      %v5291 = vadd.f32 %v5156, %v5242
      %v5292 = vadd.f32 %v5157, %v5242
      %v5293 = vadd.f32 %v5158, %v5242
      %v5294 = vadd.f32 %v5159, %v5242
      %v5295 = vadd.f32 %v5160, %v5242
      %v5296 = vadd.f32 %v5161, %v5242
      %v5297 = vadd.f32 %v5162, %v5242
      %v5298 = vadd.f32 %v5163, %v5242
      %v5299 = vadd.f32 %v5164, %v5242
      %v5300 = vadd.f32 %v5165, %v5242
      %v5301 = vadd.f32 %v5166, %v5242
      %v5302 = vadd.f32 %v5167, %v5242
      %v5303 = vadd.f32 %v5168, %v5242
      %v5304 = vadd.f32 %v5169, %v5242
      %v5305 = vadd.f32 %v5170, %v5242
      %v5306 = vadd.f32 %v5171, %v5242
      %v5307 = vadd.f32 %v5172, %v5242
      %v5308 = vadd.f32 %v5173, %v5242
      %v5309 = vadd.f32 %v5174, %v5242
      %v5310 = vadd.f32 %v5175, %v5242
      %v5311 = vadd.f32 %v5176, %v5242
      %v5312 = vadd.f32 %v5177, %v5242
      %v5313 = vadd.f32 %v5178, %v5242
      %v5314 = vadd.f32 %v5179, %v5242
      %v5315 = vadd.f32 %v5180, %v5242
      %v5316 = vadd.f32 %v5181, %v5242
      %v5317 = vadd.f32 %v5182, %v5242
      %v5318 = vadd.f32 %v5183, %v5242
      %v5319 = vadd.f32 %v5184, %v5242
      %v5320 = vadd.f32 %v5185, %v5242
      %v5321 = vadd.f32 %v5186, %v5242
      %v5322 = vadd.f32 %v5187, %v5242
      %v5323 = vadd.f32 %v5188, %v5242
      %v5324 = vadd.f32 %v5189, %v5242
      %v5325 = vadd.f32 %v5190, %v5242
      %v5326 = vadd.f32 %v5191, %v5242
      %v5327 = vadd.f32 %v5192, %v5242
      %v5328 = vadd.f32 %v5193, %v5242
      %v5329 = vadd.f32 %v5194, %v5242
      %v5330 = vadd.f32 %v5195, %v5242
      %v5331 = vadd.f32 %v5196, %v5242
      %v5332 = vadd.f32 %v5197, %v5242
      %v5333 = vadd.f32 %v5198, %v5242
      %v5334 = vadd.f32 %v5199, %v5242
      %v5335 = vadd.f32 %v5200, %v5242
      %v5336 = vadd.f32 %v5201, %v5242
      %v5337 = vadd.f32 %v5202, %v5242
      %v5338 = vadd.f32 %v5203, %v5242
      %v5339 = vadd.f32 %v5204, %v5242
      %v5340 = vadd.f32 %v5205, %v5242
      %v5341 = vadd.f32 %v5206, %v5242
      %v5342 = vadd.f32 %v5207, %v5242
      %v5343 = vadd.f32 %v5208, %v5242
      %v5344 = vadd.f32 %v5209, %v5242
      %v5345 = vadd.f32 %v5210, %v5242
      %v5346 = vadd.f32 %v5211, %v5242
      %v5347 = vadd.f32 %v5212, %v5242
      %v5348 = vadd.f32 %v5213, %v5242
      %v5349 = vadd.f32 %v5214, %v5242
      %v5350 = vadd.f32 %v5215, %v5242
      %v5351 = vadd.f32 %v5216, %v5242
      %v5352 = vadd.f32 %v5217, %v5242
      %v5353 = vadd.f32 %v5218, %v5242
      %v5354 = vadd.f32 %v5219, %v5242
      %v5355 = vadd.f32 %v5220, %v5242
      %v5356 = vadd.f32 %v5221, %v5242
      %v5357 = vadd.f32 %v5222, %v5242
      %v5358 = vadd.f32 %v5223, %v5242
      %v5359 = vadd.f32 %v5224, %v5242
      %v5360 = vadd.f32 %v5225, %v5242
      %v5361 = vadd.f32 %v5226, %v5242
      %v5362 = vadd.f32 %v5227, %v5242
      %v5363 = vadd.f32 %v5228, %v5242
      %v5364 = vadd.f32 %v5229, %v5242
      %v5365 = vadd.f32 %v5230, %v5242
      %v5366 = vadd.f32 %v5231, %v5242
      %v5367 = vadd.f32 %v5232, %v5242
      %v5368 = vadd.f32 %v5233, %v5242
      %v5369 = vadd.f32 %v5234, %v5242
      %v5370 = vadd.f32 %v5235, %v5242
      %v5371 = vadd.f32 %v5236, %v5242
      %v5372 = vmax.f32 %v5244, 0.0
      %v5373 = vmax.f32 %v5245, 0.0
      %v5374 = vmax.f32 %v5246, 0.0
      %v5375 = vmax.f32 %v5247, 0.0
      %v5376 = vmax.f32 %v5248, 0.0
      %v5377 = vmax.f32 %v5249, 0.0
      %v5378 = vmax.f32 %v5250, 0.0
      %v5379 = vmax.f32 %v5251, 0.0
      %v5380 = vmax.f32 %v5252, 0.0
      %v5381 = vmax.f32 %v5253, 0.0
      %v5382 = vmax.f32 %v5254, 0.0
      %v5383 = vmax.f32 %v5255, 0.0
      %v5384 = vmax.f32 %v5256, 0.0
      %v5385 = vmax.f32 %v5257, 0.0
      %v5386 = vmax.f32 %v5258, 0.0
      %v5387 = vmax.f32 %v5259, 0.0
      %v5388 = vmax.f32 %v5260, 0.0
      %v5389 = vmax.f32 %v5261, 0.0
      %v5390 = vmax.f32 %v5262, 0.0
      %v5391 = vmax.f32 %v5263, 0.0
      %v5392 = vmax.f32 %v5264, 0.0
      %v5393 = vmax.f32 %v5265, 0.0
      %v5394 = vmax.f32 %v5266, 0.0
      %v5395 = vmax.f32 %v5267, 0.0
      %v5396 = vmax.f32 %v5268, 0.0
      %v5397 = vmax.f32 %v5269, 0.0
      %v5398 = vmax.f32 %v5270, 0.0
      %v5399 = vmax.f32 %v5271, 0.0
      %v5400 = vmax.f32 %v5272, 0.0
      %v5401 = vmax.f32 %v5273, 0.0
      %v5402 = vmax.f32 %v5274, 0.0
      %v5403 = vmax.f32 %v5275, 0.0
      %v5404 = vmax.f32 %v5276, 0.0
      %v5405 = vmax.f32 %v5277, 0.0
      %v5406 = vmax.f32 %v5278, 0.0
      %v5407 = vmax.f32 %v5279, 0.0
      %v5408 = vmax.f32 %v5280, 0.0
      %v5409 = vmax.f32 %v5281, 0.0
      %v5410 = vmax.f32 %v5282, 0.0
      %v5411 = vmax.f32 %v5283, 0.0
      %v5412 = vmax.f32 %v5284, 0.0
      %v5413 = vmax.f32 %v5285, 0.0
      %v5414 = vmax.f32 %v5286, 0.0
      %v5415 = vmax.f32 %v5287, 0.0
      %v5416 = vmax.f32 %v5288, 0.0
      %v5417 = vmax.f32 %v5289, 0.0
      %v5418 = vmax.f32 %v5290, 0.0
      %v5419 = vmax.f32 %v5291, 0.0
      %v5420 = vmax.f32 %v5292, 0.0
      %v5421 = vmax.f32 %v5293, 0.0
      %v5422 = vmax.f32 %v5294, 0.0
      %v5423 = vmax.f32 %v5295, 0.0
      %v5424 = vmax.f32 %v5296, 0.0
      %v5425 = vmax.f32 %v5297, 0.0
      %v5426 = vmax.f32 %v5298, 0.0
      %v5427 = vmax.f32 %v5299, 0.0
      %v5428 = vmax.f32 %v5300, 0.0
      %v5429 = vmax.f32 %v5301, 0.0
      %v5430 = vmax.f32 %v5302, 0.0
      %v5431 = vmax.f32 %v5303, 0.0
      %v5432 = vmax.f32 %v5304, 0.0
      %v5433 = vmax.f32 %v5305, 0.0
      %v5434 = vmax.f32 %v5306, 0.0
      %v5435 = vmax.f32 %v5307, 0.0
      %v5436 = vmax.f32 %v5308, 0.0
      %v5437 = vmax.f32 %v5309, 0.0
      %v5438 = vmax.f32 %v5310, 0.0
      %v5439 = vmax.f32 %v5311, 0.0
      %v5440 = vmax.f32 %v5312, 0.0
      %v5441 = vmax.f32 %v5313, 0.0
      %v5442 = vmax.f32 %v5314, 0.0
      %v5443 = vmax.f32 %v5315, 0.0
      %v5444 = vmax.f32 %v5316, 0.0
      %v5445 = vmax.f32 %v5317, 0.0
      %v5446 = vmax.f32 %v5318, 0.0
      %v5447 = vmax.f32 %v5319, 0.0
      %v5448 = vmax.f32 %v5320, 0.0
      %v5449 = vmax.f32 %v5321, 0.0
      %v5450 = vmax.f32 %v5322, 0.0
      %v5451 = vmax.f32 %v5323, 0.0
      %v5452 = vmax.f32 %v5324, 0.0
      %v5453 = vmax.f32 %v5325, 0.0
      %v5454 = vmax.f32 %v5326, 0.0
      %v5455 = vmax.f32 %v5327, 0.0
      %v5456 = vmax.f32 %v5328, 0.0
      %v5457 = vmax.f32 %v5329, 0.0
      %v5458 = vmax.f32 %v5330, 0.0
      %v5459 = vmax.f32 %v5331, 0.0
      %v5460 = vmax.f32 %v5332, 0.0
      %v5461 = vmax.f32 %v5333, 0.0
      %v5462 = vmax.f32 %v5334, 0.0
      %v5463 = vmax.f32 %v5335, 0.0
      %v5464 = vmax.f32 %v5336, 0.0
      %v5465 = vmax.f32 %v5337, 0.0
      %v5466 = vmax.f32 %v5338, 0.0
      %v5467 = vmax.f32 %v5339, 0.0
      %v5468 = vmax.f32 %v5340, 0.0
      %v5469 = vmax.f32 %v5341, 0.0
      %v5470 = vmax.f32 %v5342, 0.0
      %v5471 = vmax.f32 %v5343, 0.0
      %v5472 = vmax.f32 %v5344, 0.0
      %v5473 = vmax.f32 %v5345, 0.0
      %v5474 = vmax.f32 %v5346, 0.0
      %v5475 = vmax.f32 %v5347, 0.0
      %v5476 = vmax.f32 %v5348, 0.0
      %v5477 = vmax.f32 %v5349, 0.0
      %v5478 = vmax.f32 %v5350, 0.0
      %v5479 = vmax.f32 %v5351, 0.0
      %v5480 = vmax.f32 %v5352, 0.0
      %v5481 = vmax.f32 %v5353, 0.0
      %v5482 = vmax.f32 %v5354, 0.0
      %v5483 = vmax.f32 %v5355, 0.0
      %v5484 = vmax.f32 %v5356, 0.0
      %v5485 = vmax.f32 %v5357, 0.0
      %v5486 = vmax.f32 %v5358, 0.0
      %v5487 = vmax.f32 %v5359, 0.0
      %v5488 = vmax.f32 %v5360, 0.0
      %v5489 = vmax.f32 %v5361, 0.0
      %v5490 = vmax.f32 %v5362, 0.0
      %v5491 = vmax.f32 %v5363, 0.0
      %v5492 = vmax.f32 %v5364, 0.0
      %v5493 = vmax.f32 %v5365, 0.0
      %v5494 = vmax.f32 %v5366, 0.0
      %v5495 = vmax.f32 %v5367, 0.0
      %v5496 = vmax.f32 %v5368, 0.0
      %v5497 = vmax.f32 %v5369, 0.0
      %v5498 = vmax.f32 %v5370, 0.0
      %v5499 = vmax.f32 %v5371, 0.0
      %vm5500 = vcmask 261120
      %5501 = vst.msk [vmem:[%s170] sm:$0xff] %vm5500, %v5372
      %5502 = vst.msk [vmem:[%s170 + $0x8] sm:$0xff] %vm5500, %v5373
      %5503 = vst.msk [vmem:[%s170 + $0x10] sm:$0xff] %vm5500, %v5374
      %5504 = vst.msk [vmem:[%s170 + $0x18] sm:$0xff] %vm5500, %v5375
      %5505 = vst.msk [vmem:[%s170 + $0x20] sm:$0xff] %vm5500, %v5376
      %5506 = vst.msk [vmem:[%s170 + $0x28] sm:$0xff] %vm5500, %v5377
      %5507 = vst.msk [vmem:[%s170 + $0x30] sm:$0xff] %vm5500, %v5378
      %5508 = vst.msk [vmem:[%s170 + $0x38] sm:$0xff] %vm5500, %v5379
      %5509 = vst.msk [vmem:[%s170 + $0x40] sm:$0xff] %vm5500, %v5380
      %5510 = vst.msk [vmem:[%s170 + $0x48] sm:$0xff] %vm5500, %v5381
      %5511 = vst.msk [vmem:[%s170 + $0x50] sm:$0xff] %vm5500, %v5382
      %5512 = vst.msk [vmem:[%s170 + $0x58] sm:$0xff] %vm5500, %v5383
      %5513 = vst.msk [vmem:[%s170 + $0x60] sm:$0xff] %vm5500, %v5384
      %5514 = vst.msk [vmem:[%s170 + $0x68] sm:$0xff] %vm5500, %v5385
      %5515 = vst.msk [vmem:[%s170 + $0x70] sm:$0xff] %vm5500, %v5386
      %5516 = vst.msk [vmem:[%s170 + $0x78] sm:$0xff] %vm5500, %v5387
      %5517 = vst.msk [vmem:[%s170 + $0x80] sm:$0xff] %vm5500, %v5388
      %5518 = vst.msk [vmem:[%s170 + $0x88] sm:$0xff] %vm5500, %v5389
      %5519 = vst.msk [vmem:[%s170 + $0x90] sm:$0xff] %vm5500, %v5390
      %5520 = vst.msk [vmem:[%s170 + $0x98] sm:$0xff] %vm5500, %v5391
      %5521 = vst.msk [vmem:[%s170 + $0xa0] sm:$0xff] %vm5500, %v5392
      %5522 = vst.msk [vmem:[%s170 + $0xa8] sm:$0xff] %vm5500, %v5393
      %5523 = vst.msk [vmem:[%s170 + $0xb0] sm:$0xff] %vm5500, %v5394
      %5524 = vst.msk [vmem:[%s170 + $0xb8] sm:$0xff] %vm5500, %v5395
      %5525 = vst.msk [vmem:[%s170 + $0xc0] sm:$0xff] %vm5500, %v5396
      %5526 = vst.msk [vmem:[%s170 + $0xc8] sm:$0xff] %vm5500, %v5397
      %5527 = vst.msk [vmem:[%s170 + $0xd0] sm:$0xff] %vm5500, %v5398
      %5528 = vst.msk [vmem:[%s170 + $0xd8] sm:$0xff] %vm5500, %v5399
      %5529 = vst.msk [vmem:[%s170 + $0xe0] sm:$0xff] %vm5500, %v5400
      %5530 = vst.msk [vmem:[%s170 + $0xe8] sm:$0xff] %vm5500, %v5401
      %5531 = vst.msk [vmem:[%s170 + $0xf0] sm:$0xff] %vm5500, %v5402
      %5532 = vst.msk [vmem:[%s170 + $0xf8] sm:$0xff] %vm5500, %v5403
      %5533 = vst.msk [vmem:[%s170 + $0x100] sm:$0xff] %vm5500, %v5404
      %5534 = vst.msk [vmem:[%s170 + $0x108] sm:$0xff] %vm5500, %v5405
      %5535 = vst.msk [vmem:[%s170 + $0x110] sm:$0xff] %vm5500, %v5406
      %5536 = vst.msk [vmem:[%s170 + $0x118] sm:$0xff] %vm5500, %v5407
      %5537 = vst.msk [vmem:[%s170 + $0x120] sm:$0xff] %vm5500, %v5408
      %5538 = vst.msk [vmem:[%s170 + $0x128] sm:$0xff] %vm5500, %v5409
      %5539 = vst.msk [vmem:[%s170 + $0x130] sm:$0xff] %vm5500, %v5410
      %5540 = vst.msk [vmem:[%s170 + $0x138] sm:$0xff] %vm5500, %v5411
      %5541 = vst.msk [vmem:[%s170 + $0x140] sm:$0xff] %vm5500, %v5412
      %5542 = vst.msk [vmem:[%s170 + $0x148] sm:$0xff] %vm5500, %v5413
      %5543 = vst.msk [vmem:[%s170 + $0x150] sm:$0xff] %vm5500, %v5414
      %5544 = vst.msk [vmem:[%s170 + $0x158] sm:$0xff] %vm5500, %v5415
      %5545 = vst.msk [vmem:[%s170 + $0x160] sm:$0xff] %vm5500, %v5416
      %5546 = vst.msk [vmem:[%s170 + $0x168] sm:$0xff] %vm5500, %v5417
      %5547 = vst.msk [vmem:[%s170 + $0x170] sm:$0xff] %vm5500, %v5418
      %5548 = vst.msk [vmem:[%s170 + $0x178] sm:$0xff] %vm5500, %v5419
      %5549 = vst.msk [vmem:[%s170 + $0x180] sm:$0xff] %vm5500, %v5420
      %5550 = vst.msk [vmem:[%s170 + $0x188] sm:$0xff] %vm5500, %v5421
      %5551 = vst.msk [vmem:[%s170 + $0x190] sm:$0xff] %vm5500, %v5422
      %5552 = vst.msk [vmem:[%s170 + $0x198] sm:$0xff] %vm5500, %v5423
      %5553 = vst.msk [vmem:[%s170 + $0x1a0] sm:$0xff] %vm5500, %v5424
      %5554 = vst.msk [vmem:[%s170 + $0x1a8] sm:$0xff] %vm5500, %v5425
      %5555 = vst.msk [vmem:[%s170 + $0x1b0] sm:$0xff] %vm5500, %v5426
      %5556 = vst.msk [vmem:[%s170 + $0x1b8] sm:$0xff] %vm5500, %v5427
      %5557 = vst.msk [vmem:[%s170 + $0x1c0] sm:$0xff] %vm5500, %v5428
      %5558 = vst.msk [vmem:[%s170 + $0x1c8] sm:$0xff] %vm5500, %v5429
      %5559 = vst.msk [vmem:[%s170 + $0x1d0] sm:$0xff] %vm5500, %v5430
      %5560 = vst.msk [vmem:[%s170 + $0x1d8] sm:$0xff] %vm5500, %v5431
      %5561 = vst.msk [vmem:[%s170 + $0x1e0] sm:$0xff] %vm5500, %v5432
      %5562 = vst.msk [vmem:[%s170 + $0x1e8] sm:$0xff] %vm5500, %v5433
      %5563 = vst.msk [vmem:[%s170 + $0x1f0] sm:$0xff] %vm5500, %v5434
      %5564 = vst.msk [vmem:[%s170 + $0x1f8] sm:$0xff] %vm5500, %v5435
      %5565 = vst.msk [vmem:[%s170 + $0x200] sm:$0xff] %vm5500, %v5436
      %5566 = vst.msk [vmem:[%s170 + $0x208] sm:$0xff] %vm5500, %v5437
      %5567 = vst.msk [vmem:[%s170 + $0x210] sm:$0xff] %vm5500, %v5438
      %5568 = vst.msk [vmem:[%s170 + $0x218] sm:$0xff] %vm5500, %v5439
      %5569 = vst.msk [vmem:[%s170 + $0x220] sm:$0xff] %vm5500, %v5440
      %5570 = vst.msk [vmem:[%s170 + $0x228] sm:$0xff] %vm5500, %v5441
      %5571 = vst.msk [vmem:[%s170 + $0x230] sm:$0xff] %vm5500, %v5442
      %5572 = vst.msk [vmem:[%s170 + $0x238] sm:$0xff] %vm5500, %v5443
      %5573 = vst.msk [vmem:[%s170 + $0x240] sm:$0xff] %vm5500, %v5444
      %5574 = vst.msk [vmem:[%s170 + $0x248] sm:$0xff] %vm5500, %v5445
      %5575 = vst.msk [vmem:[%s170 + $0x250] sm:$0xff] %vm5500, %v5446
      %5576 = vst.msk [vmem:[%s170 + $0x258] sm:$0xff] %vm5500, %v5447
      %5577 = vst.msk [vmem:[%s170 + $0x260] sm:$0xff] %vm5500, %v5448
      %5578 = vst.msk [vmem:[%s170 + $0x268] sm:$0xff] %vm5500, %v5449
      %5579 = vst.msk [vmem:[%s170 + $0x270] sm:$0xff] %vm5500, %v5450
      %5580 = vst.msk [vmem:[%s170 + $0x278] sm:$0xff] %vm5500, %v5451
      %5581 = vst.msk [vmem:[%s170 + $0x280] sm:$0xff] %vm5500, %v5452
      %5582 = vst.msk [vmem:[%s170 + $0x288] sm:$0xff] %vm5500, %v5453
      %5583 = vst.msk [vmem:[%s170 + $0x290] sm:$0xff] %vm5500, %v5454
      %5584 = vst.msk [vmem:[%s170 + $0x298] sm:$0xff] %vm5500, %v5455
      %5585 = vst.msk [vmem:[%s170 + $0x2a0] sm:$0xff] %vm5500, %v5456
      %5586 = vst.msk [vmem:[%s170 + $0x2a8] sm:$0xff] %vm5500, %v5457
      %5587 = vst.msk [vmem:[%s170 + $0x2b0] sm:$0xff] %vm5500, %v5458
      %5588 = vst.msk [vmem:[%s170 + $0x2b8] sm:$0xff] %vm5500, %v5459
      %5589 = vst.msk [vmem:[%s170 + $0x2c0] sm:$0xff] %vm5500, %v5460
      %5590 = vst.msk [vmem:[%s170 + $0x2c8] sm:$0xff] %vm5500, %v5461
      %5591 = vst.msk [vmem:[%s170 + $0x2d0] sm:$0xff] %vm5500, %v5462
      %5592 = vst.msk [vmem:[%s170 + $0x2d8] sm:$0xff] %vm5500, %v5463
      %5593 = vst.msk [vmem:[%s170 + $0x2e0] sm:$0xff] %vm5500, %v5464
      %5594 = vst.msk [vmem:[%s170 + $0x2e8] sm:$0xff] %vm5500, %v5465
      %5595 = vst.msk [vmem:[%s170 + $0x2f0] sm:$0xff] %vm5500, %v5466
      %5596 = vst.msk [vmem:[%s170 + $0x2f8] sm:$0xff] %vm5500, %v5467
      %5597 = vst.msk [vmem:[%s170 + $0x300] sm:$0xff] %vm5500, %v5468
      %5598 = vst.msk [vmem:[%s170 + $0x308] sm:$0xff] %vm5500, %v5469
      %5599 = vst.msk [vmem:[%s170 + $0x310] sm:$0xff] %vm5500, %v5470
      %5600 = vst.msk [vmem:[%s170 + $0x318] sm:$0xff] %vm5500, %v5471
      %5601 = vst.msk [vmem:[%s170 + $0x320] sm:$0xff] %vm5500, %v5472
      %5602 = vst.msk [vmem:[%s170 + $0x328] sm:$0xff] %vm5500, %v5473
      %5603 = vst.msk [vmem:[%s170 + $0x330] sm:$0xff] %vm5500, %v5474
      %5604 = vst.msk [vmem:[%s170 + $0x338] sm:$0xff] %vm5500, %v5475
      %5605 = vst.msk [vmem:[%s170 + $0x340] sm:$0xff] %vm5500, %v5476
      %5606 = vst.msk [vmem:[%s170 + $0x348] sm:$0xff] %vm5500, %v5477
      %5607 = vst.msk [vmem:[%s170 + $0x350] sm:$0xff] %vm5500, %v5478
      %5608 = vst.msk [vmem:[%s170 + $0x358] sm:$0xff] %vm5500, %v5479
      %5609 = vst.msk [vmem:[%s170 + $0x360] sm:$0xff] %vm5500, %v5480
      %5610 = vst.msk [vmem:[%s170 + $0x368] sm:$0xff] %vm5500, %v5481
      %5611 = vst.msk [vmem:[%s170 + $0x370] sm:$0xff] %vm5500, %v5482
      %5612 = vst.msk [vmem:[%s170 + $0x378] sm:$0xff] %vm5500, %v5483
      %5613 = vst.msk [vmem:[%s170 + $0x380] sm:$0xff] %vm5500, %v5484
      %5614 = vst.msk [vmem:[%s170 + $0x388] sm:$0xff] %vm5500, %v5485
      %5615 = vst.msk [vmem:[%s170 + $0x390] sm:$0xff] %vm5500, %v5486
      %5616 = vst.msk [vmem:[%s170 + $0x398] sm:$0xff] %vm5500, %v5487
      %5617 = vst.msk [vmem:[%s170 + $0x3a0] sm:$0xff] %vm5500, %v5488
      %5618 = vst.msk [vmem:[%s170 + $0x3a8] sm:$0xff] %vm5500, %v5489
      %5619 = vst.msk [vmem:[%s170 + $0x3b0] sm:$0xff] %vm5500, %v5490
      %5620 = vst.msk [vmem:[%s170 + $0x3b8] sm:$0xff] %vm5500, %v5491
      %5621 = vst.msk [vmem:[%s170 + $0x3c0] sm:$0xff] %vm5500, %v5492
      %5622 = vst.msk [vmem:[%s170 + $0x3c8] sm:$0xff] %vm5500, %v5493
      %5623 = vst.msk [vmem:[%s170 + $0x3d0] sm:$0xff] %vm5500, %v5494
      %5624 = vst.msk [vmem:[%s170 + $0x3d8] sm:$0xff] %vm5500, %v5495
      %5625 = vst.msk [vmem:[%s170 + $0x3e0] sm:$0xff] %vm5500, %v5496
      %5626 = vst.msk [vmem:[%s170 + $0x3e8] sm:$0xff] %vm5500, %v5497
      %5627 = vst.msk [vmem:[%s170 + $0x3f0] sm:$0xff] %vm5500, %v5498
      %5628 = vst.msk [vmem:[%s170 + $0x3f8] sm:$0xff] %vm5500, %v5499
      %p5629 = scmp.lt.s32.totalorder %s14, 1
      %s5630 = scalar_select %p5629, %s14, 1
      %s5631 = smul.addr %s5630, 128
      %s5632 = smul.addr %s5631, 8
      %s5633 = scalar_lea.vmem %s3, %s5632
      // Predicated region
      $region33: #{forward.3} parent=31 // pred_check
        %p5634 = pneg %p100
      $region34: #{forward.3} parent=31 // pred_check_branch
        %5636 = sbr.rel (%p5634) target = $region36
      $region35: #{forward.3} parent=31 // pred_region
        _
      $region36: #{forward.3} parent=31 // pred_fallthru
        _
    $region32: #{forward.3} parent=5 // pred_fallthru
      _
    %p5637 = scmp.le.s32.totalorder 2, %s9
    // Predicated region
    $region37: #{forward.3} parent=5 // pred_check
      %p5638 = pneg %p5637
    $region38: #{forward.3} parent=5 // pred_check_branch
      %5640 = sbr.rel (%p5638) target = $region40
    $region39: #{forward.3} parent=5 // pred_region
      %s5641 = ssub.s32 %s9, 2
      // Predicated region
      $region41: #{forward.3} parent=39 // pred_check
        %p5642 = pneg %p106
      $region42: #{forward.3} parent=39 // pred_check_branch
        %5644 = sbr.rel (%p5642) target = $region44
      $region43: #{forward.3} parent=39 // pred_region
        %p5645 = scmp.lt.s32.totalorder %s15, 1
        %s5646 = scalar_select %p5645, %s15, 1
        %s5647 = smul.addr %s5646, 128
        %s5648 = smul.addr %s5647, 8
        %s5649 = scalar_lea.vmem %s3, %s5648
      $region44: #{forward.3} parent=39 // pred_fallthru
        _
    $region40: #{forward.3} parent=5 // pred_fallthru
      _
  $region6: #{forward.3} parent=0 // loop_footer
    %s13 = sadd.s32 1, %s9
  $region7: #{forward.3} parent=0 // loop_footer_branch
    %8 = sbr.rel target = $region3
  $region8: #{forward.3} parent=0 // loop_exit
    _

// kernel: forward.4
$region0: #{forward.4}
  #allocation0 [shape = 'u32[]', space=smem, size = 0x4, offset = 0x4, fixed_abs, tag = 'smem constant byte address 0x4 - core index']
  #allocation1 [shape = 'u32[144,128]{1,0:T(1,128)}', space=vmem, size = 0x12000, scoped, tag = 'internal scratch']
  %s0 = inlined_call_operand.vmem [shape: f32[2,1024,288], index: 0, kind: input, shape index: {}]
  %s1 = inlined_call_operand.vmem [shape: f32[288,64], index: 1, kind: input, shape index: {}]
  %s2 = inlined_call_operand.vmem [shape: f32[1,64], index: 2, kind: input, shape index: {}]
  %s3 = inlined_call_operand.vmem [shape: f32[2,256,64], index: 3, kind: output, shape index: {}]
  %s4 = sld [smem:[#allocation0]]
  $region45: #{forward.4} parent=0
    _
  %s6 = ssub.s32 1, %s4
  %s7 = scalar_select 0, %s6, %s4
  loop: start=0, step=1, limit=4
  $region2: #{forward.4} parent=0 // loop_pre_header
    _
  $region3: #{forward.4} parent=0 // loop_header
    %s9 = sphi 0, %s13
    %p10 = scmp.ge.s32.totalorder %s9, 4
    %s19 = sphi 0, %s21
    %s22 = sphi 0, %s19
    %s23 = sphi 0, %s22
    %s39 = sphi 0, %s23
    %s43 = sphi 0, %s43
    %s45 = sphi 0, %s43
    %s46 = sphi 0, %s45
    %s60 = sphi 0, %s46
    %s64 = sphi 0, %s64
    %s66 = sphi 0, %s64
    %s67 = sphi 0, %s66
    %s81 = sphi 0, %s67
    %s87 = sphi 0, %s89
    %s90 = sphi 0, %s87
    %s91 = sphi 0, %s90
    %s107 = sphi 0, %s91
  $region4: #{forward.4} parent=0 // loop_header_branch
    %12 = sbr.rel (%p10) target = $region8
  $region5: #{forward.4} parent=0 // loop_body
    %s14 = ssub.s32 %s9, 1
    %s15 = ssub.s32 %s9, 2
    %s16 = sadd.s32 %s9, 1
    %s17 = ssub.s32 %s9, %s16
    %p18 = scmp.eq.s32.totalorder %s17, 0
    %s20 = sadd.s32 %s19, 1
    %s21 = scalar_select %p18, %s19, %s20
    %p24 = pneg %p18
    %p25 = scmp.eq.s32.totalorder %s9, 1
    %p26 = por %p24, %p25
    %p27 = scmp.ne.s32.totalorder %s19, %s22
    %p28 = scmp.eq.s32.totalorder %s9, 0
    %p29 = por %p27, %p28
    %p30 = scmp.ne.s32.totalorder %s19, %s22
    %p31 = scmp.eq.s32.totalorder %s14, 1
    %p32 = por %p30, %p31
    %p33 = scmp.ne.s32.totalorder %s22, %s23
    %p34 = scmp.eq.s32.totalorder %s14, 0
    %p35 = por %p33, %p34
    %p36 = scmp.ne.s32.totalorder %s22, %s23
    %p37 = scmp.eq.s32.totalorder %s15, 1
    %p38 = por %p36, %p37
    %p40 = scmp.ne.s32.totalorder %s23, %s39
    %p41 = scmp.eq.s32.totalorder %s15, 0
    %p42 = por %p40, %p41
    %s44 = sadd.s32 %s43, 1
    %p47 = scmp.eq.s32.totalorder %s9, 1
    %p48 = scmp.ne.s32.totalorder %s43, %s45
    %p49 = scmp.eq.s32.totalorder %s9, 0
    %p50 = por %p48, %p49
    %p51 = scmp.ne.s32.totalorder %s43, %s45
    %p52 = scmp.eq.s32.totalorder %s14, 1
    %p53 = por %p51, %p52
    %p54 = scmp.ne.s32.totalorder %s45, %s46
    %p55 = scmp.eq.s32.totalorder %s14, 0
    %p56 = por %p54, %p55
    %p57 = scmp.ne.s32.totalorder %s45, %s46
    %p58 = scmp.eq.s32.totalorder %s15, 1
    %p59 = por %p57, %p58
    %p61 = scmp.ne.s32.totalorder %s46, %s60
    %p62 = scmp.eq.s32.totalorder %s15, 0
    %p63 = por %p61, %p62
    %s65 = sadd.s32 %s64, 1
    %p68 = scmp.eq.s32.totalorder %s9, 1
    %p69 = scmp.ne.s32.totalorder %s64, %s66
    %p70 = scmp.eq.s32.totalorder %s9, 0
    %p71 = por %p69, %p70
    %p72 = scmp.ne.s32.totalorder %s64, %s66
    %p73 = scmp.eq.s32.totalorder %s14, 1
    %p74 = por %p72, %p73
    %p75 = scmp.ne.s32.totalorder %s66, %s67
    %p76 = scmp.eq.s32.totalorder %s14, 0
    %p77 = por %p75, %p76
    %p78 = scmp.ne.s32.totalorder %s66, %s67
    %p79 = scmp.eq.s32.totalorder %s15, 1
    %p80 = por %p78, %p79
    %p82 = scmp.ne.s32.totalorder %s67, %s81
    %p83 = scmp.eq.s32.totalorder %s15, 0
    %p84 = por %p82, %p83
    %s85 = ssub.s32 %s9, %s16
    %p86 = scmp.eq.s32.totalorder %s85, 0
    %s88 = sadd.s32 %s87, 1
    %s89 = scalar_select %p86, %s87, %s88
    %p92 = pneg %p86
    %p93 = scmp.eq.s32.totalorder %s9, 1
    %p94 = por %p92, %p93
    %p95 = scmp.ne.s32.totalorder %s87, %s90
    %p96 = scmp.eq.s32.totalorder %s9, 0
    %p97 = por %p95, %p96
    %p98 = scmp.ne.s32.totalorder %s87, %s90
    %p99 = scmp.eq.s32.totalorder %s14, 1
    %p100 = por %p98, %p99
    %p101 = scmp.ne.s32.totalorder %s90, %s91
    %p102 = scmp.eq.s32.totalorder %s14, 0
    %p103 = por %p101, %p102
    %p104 = scmp.ne.s32.totalorder %s90, %s91
    %p105 = scmp.eq.s32.totalorder %s15, 1
    %p106 = por %p104, %p105
    %p108 = scmp.ne.s32.totalorder %s91, %s107
    %p109 = scmp.eq.s32.totalorder %s15, 0
    %p110 = por %p108, %p109
    %p111 = scmp.le.s32.totalorder 1, %s9
    %p112 = scmp.lt.s32.totalorder %s9, 3
    %p113 = pnand %p111, %p112
    %p114 = pneg %p113
    // Predicated region
    $region9: #{forward.4} parent=5 // pred_check
      _
    $region10: #{forward.4} parent=5 // pred_check_branch
      %116 = sbr.rel (%p113) target = $region12
    $region11: #{forward.4} parent=5 // pred_region
      %s117 = ssub.s32 %s9, 1
      // Predicated region
      $region13: #{forward.4} parent=11 // pred_check
        %p118 = pneg %p56
      $region14: #{forward.4} parent=11 // pred_check_branch
        %120 = sbr.rel (%p118) target = $region16
      $region15: #{forward.4} parent=11 // pred_region
        _
      $region16: #{forward.4} parent=11 // pred_fallthru
        _
      // Predicated region
      $region17: #{forward.4} parent=11 // pred_check
        %p121 = pneg %p77
      $region18: #{forward.4} parent=11 // pred_check_branch
        %123 = sbr.rel (%p121) target = $region20
      $region19: #{forward.4} parent=11 // pred_region
        _
      $region20: #{forward.4} parent=11 // pred_fallthru
        _
    $region12: #{forward.4} parent=5 // pred_fallthru
      _
    %p124 = scmp.lt.s32.totalorder %s9, 2
    // Predicated region
    $region21: #{forward.4} parent=5 // pred_check
      %p125 = pneg %p124
    $region22: #{forward.4} parent=5 // pred_check_branch
      %127 = sbr.rel (%p125) target = $region24
    $region23: #{forward.4} parent=5 // pred_region
      // Predicated region
      $region25: #{forward.4} parent=23 // pred_check
        %p128 = pneg %p29
      $region26: #{forward.4} parent=23 // pred_check_branch
        %130 = sbr.rel (%p128) target = $region28
      $region27: #{forward.4} parent=23 // pred_region
        %p131 = scmp.lt.s32.totalorder %s9, 1
        %s132 = scalar_select %p131, %s9, 1
        %s133 = smul.addr %s132, 384
        %s134 = smul.addr %s133, 8
        %s135 = scalar_lea.vmem %s0, %s134
      $region28: #{forward.4} parent=23 // pred_fallthru
        _
    $region24: #{forward.4} parent=5 // pred_fallthru
      _
    %p136 = scmp.le.s32.totalorder 1, %s9
    %p137 = scmp.lt.s32.totalorder %s9, 3
    %p138 = pnand %p136, %p137
    %p139 = pneg %p138
    // Predicated region
    $region29: #{forward.4} parent=5 // pred_check
      _
    $region30: #{forward.4} parent=5 // pred_check_branch
      %141 = sbr.rel (%p138) target = $region32
    $region31: #{forward.4} parent=5 // pred_region
      %s142 = ssub.s32 %s9, 1
      %p143 = scmp.lt.s32.totalorder %s14, 1
      %s144 = scalar_select %p143, %s14, 1
      %s145 = smul.addr %s144, 384
      %s146 = smul.addr %s145, 8
      %s147 = scalar_lea.vmem %s0, %s146
      %p148 = pneg %p35
      %p149 = pneg %p32
      %p150 = pneg %p56
      %p151 = pneg %p53
      %p152 = pneg %p77
      %p153 = pneg %p74
      %p154 = pneg %p103
      %p155 = pneg %p100
      %p156 = scmp.lt.s32.totalorder %s14, 1
      %s157 = scalar_select %p156, %s14, 1
      %s158 = smul.addr %s157, 32
      %s159 = smul.addr %s158, 8
      %s160 = scalar_lea.vmem %s3, %s159
      %p161 = scmp.lt.s32.totalorder %s14, 1
      %s162 = scalar_select %p161, %s14, 1
      %s163 = smul.addr %s162, 384
      %s164 = smul.addr %s163, 8
      %s165 = scalar_lea.vmem %s0, %s164
      %p166 = scmp.lt.s32.totalorder %s14, 1
      %s167 = scalar_select %p166, %s14, 1
      %s168 = smul.addr %s167, 32
      %s169 = smul.addr %s168, 8
      %s170 = scalar_lea.vmem %s3, %s169
      %v171 = vld [vmem:[%s165] sm:$0xff]
      %v172 = vld [vmem:[%s165 + $0x8] sm:$0xff]
      %v173 = vld [vmem:[%s165 + $0x10] sm:$0xff]
      %v174 = vld [vmem:[%s165 + $0x18] sm:$0xff]
      %v175 = vld [vmem:[%s165 + $0x20] sm:$0xff]
      %v176 = vld [vmem:[%s165 + $0x28] sm:$0xff]
      %v177 = vld [vmem:[%s165 + $0x30] sm:$0xff]
      %v178 = vld [vmem:[%s165 + $0x38] sm:$0xff]
      %v179 = vld [vmem:[%s165 + $0x40] sm:$0xff]
      %v180 = vld [vmem:[%s165 + $0x48] sm:$0xff]
      %v181 = vld [vmem:[%s165 + $0x50] sm:$0xff]
      %v182 = vld [vmem:[%s165 + $0x58] sm:$0xff]
      %v183 = vld [vmem:[%s165 + $0x60] sm:$0xff]
      %v184 = vld [vmem:[%s165 + $0x68] sm:$0xff]
      %v185 = vld [vmem:[%s165 + $0x70] sm:$0xff]
      %v186 = vld [vmem:[%s165 + $0x78] sm:$0xff]
      %v187 = vld [vmem:[%s165 + $0x80] sm:$0xff]
      %v188 = vld [vmem:[%s165 + $0x88] sm:$0xff]
      %v189 = vld [vmem:[%s165 + $0x90] sm:$0xff]
      %v190 = vld [vmem:[%s165 + $0x98] sm:$0xff]
      %v191 = vld [vmem:[%s165 + $0xa0] sm:$0xff]
      %v192 = vld [vmem:[%s165 + $0xa8] sm:$0xff]
      %v193 = vld [vmem:[%s165 + $0xb0] sm:$0xff]
      %v194 = vld [vmem:[%s165 + $0xb8] sm:$0xff]
      %v195 = vld [vmem:[%s165 + $0xc0] sm:$0xff]
      %v196 = vld [vmem:[%s165 + $0xc8] sm:$0xff]
      %v197 = vld [vmem:[%s165 + $0xd0] sm:$0xff]
      %v198 = vld [vmem:[%s165 + $0xd8] sm:$0xff]
      %v199 = vld [vmem:[%s165 + $0xe0] sm:$0xff]
      %v200 = vld [vmem:[%s165 + $0xe8] sm:$0xff]
      %v201 = vld [vmem:[%s165 + $0xf0] sm:$0xff]
      %v202 = vld [vmem:[%s165 + $0xf8] sm:$0xff]
      %v203 = vld [vmem:[%s165 + $0x100] sm:$0xff]
      %v204 = vld [vmem:[%s165 + $0x108] sm:$0xff]
      %v205 = vld [vmem:[%s165 + $0x110] sm:$0xff]
      %v206 = vld [vmem:[%s165 + $0x118] sm:$0xff]
      %v207 = vld [vmem:[%s165 + $0x120] sm:$0xff]
      %v208 = vld [vmem:[%s165 + $0x128] sm:$0xff]
      %v209 = vld [vmem:[%s165 + $0x130] sm:$0xff]
      %v210 = vld [vmem:[%s165 + $0x138] sm:$0xff]
      %v211 = vld [vmem:[%s165 + $0x140] sm:$0xff]
      %v212 = vld [vmem:[%s165 + $0x148] sm:$0xff]
      %v213 = vld [vmem:[%s165 + $0x150] sm:$0xff]
      %v214 = vld [vmem:[%s165 + $0x158] sm:$0xff]
      %v215 = vld [vmem:[%s165 + $0x160] sm:$0xff]
      %v216 = vld [vmem:[%s165 + $0x168] sm:$0xff]
      %v217 = vld [vmem:[%s165 + $0x170] sm:$0xff]
      %v218 = vld [vmem:[%s165 + $0x178] sm:$0xff]
      %v219 = vld [vmem:[%s165 + $0x180] sm:$0xff]
      %v220 = vld [vmem:[%s165 + $0x188] sm:$0xff]
      %v221 = vld [vmem:[%s165 + $0x190] sm:$0xff]
      %v222 = vld [vmem:[%s165 + $0x198] sm:$0xff]
      %v223 = vld [vmem:[%s165 + $0x1a0] sm:$0xff]
      %v224 = vld [vmem:[%s165 + $0x1a8] sm:$0xff]
      %v225 = vld [vmem:[%s165 + $0x1b0] sm:$0xff]
      %v226 = vld [vmem:[%s165 + $0x1b8] sm:$0xff]
      %v227 = vld [vmem:[%s165 + $0x1c0] sm:$0xff]
      %v228 = vld [vmem:[%s165 + $0x1c8] sm:$0xff]
      %v229 = vld [vmem:[%s165 + $0x1d0] sm:$0xff]
      %v230 = vld [vmem:[%s165 + $0x1d8] sm:$0xff]
      %v231 = vld [vmem:[%s165 + $0x1e0] sm:$0xff]
      %v232 = vld [vmem:[%s165 + $0x1e8] sm:$0xff]
      %v233 = vld [vmem:[%s165 + $0x1f0] sm:$0xff]
      %v234 = vld [vmem:[%s165 + $0x1f8] sm:$0xff]
      %v235 = vld [vmem:[%s165 + $0x200] sm:$0xff]
      %v236 = vld [vmem:[%s165 + $0x208] sm:$0xff]
      %v237 = vld [vmem:[%s165 + $0x210] sm:$0xff]
      %v238 = vld [vmem:[%s165 + $0x218] sm:$0xff]
      %v239 = vld [vmem:[%s165 + $0x220] sm:$0xff]
      %v240 = vld [vmem:[%s165 + $0x228] sm:$0xff]
      %v241 = vld [vmem:[%s165 + $0x230] sm:$0xff]
      %v242 = vld [vmem:[%s165 + $0x238] sm:$0xff]
      %v243 = vld [vmem:[%s165 + $0x240] sm:$0xff]
      %v244 = vld [vmem:[%s165 + $0x248] sm:$0xff]
      %v245 = vld [vmem:[%s165 + $0x250] sm:$0xff]
      %v246 = vld [vmem:[%s165 + $0x258] sm:$0xff]
      %v247 = vld [vmem:[%s165 + $0x260] sm:$0xff]
      %v248 = vld [vmem:[%s165 + $0x268] sm:$0xff]
      %v249 = vld [vmem:[%s165 + $0x270] sm:$0xff]
      %v250 = vld [vmem:[%s165 + $0x278] sm:$0xff]
      %v251 = vld [vmem:[%s165 + $0x280] sm:$0xff]
      %v252 = vld [vmem:[%s165 + $0x288] sm:$0xff]
      %v253 = vld [vmem:[%s165 + $0x290] sm:$0xff]
      %v254 = vld [vmem:[%s165 + $0x298] sm:$0xff]
      %v255 = vld [vmem:[%s165 + $0x2a0] sm:$0xff]
      %v256 = vld [vmem:[%s165 + $0x2a8] sm:$0xff]
      %v257 = vld [vmem:[%s165 + $0x2b0] sm:$0xff]
      %v258 = vld [vmem:[%s165 + $0x2b8] sm:$0xff]
      %v259 = vld [vmem:[%s165 + $0x2c0] sm:$0xff]
      %v260 = vld [vmem:[%s165 + $0x2c8] sm:$0xff]
      %v261 = vld [vmem:[%s165 + $0x2d0] sm:$0xff]
      %v262 = vld [vmem:[%s165 + $0x2d8] sm:$0xff]
      %v263 = vld [vmem:[%s165 + $0x2e0] sm:$0xff]
      %v264 = vld [vmem:[%s165 + $0x2e8] sm:$0xff]
      %v265 = vld [vmem:[%s165 + $0x2f0] sm:$0xff]
      %v266 = vld [vmem:[%s165 + $0x2f8] sm:$0xff]
      %v267 = vld [vmem:[%s165 + $0x300] sm:$0xff]
      %v268 = vld [vmem:[%s165 + $0x308] sm:$0xff]
      %v269 = vld [vmem:[%s165 + $0x310] sm:$0xff]
      %v270 = vld [vmem:[%s165 + $0x318] sm:$0xff]
      %v271 = vld [vmem:[%s165 + $0x320] sm:$0xff]
      %v272 = vld [vmem:[%s165 + $0x328] sm:$0xff]
      %v273 = vld [vmem:[%s165 + $0x330] sm:$0xff]
      %v274 = vld [vmem:[%s165 + $0x338] sm:$0xff]
      %v275 = vld [vmem:[%s165 + $0x340] sm:$0xff]
      %v276 = vld [vmem:[%s165 + $0x348] sm:$0xff]
      %v277 = vld [vmem:[%s165 + $0x350] sm:$0xff]
      %v278 = vld [vmem:[%s165 + $0x358] sm:$0xff]
      %v279 = vld [vmem:[%s165 + $0x360] sm:$0xff]
      %v280 = vld [vmem:[%s165 + $0x368] sm:$0xff]
      %v281 = vld [vmem:[%s165 + $0x370] sm:$0xff]
      %v282 = vld [vmem:[%s165 + $0x378] sm:$0xff]
      %v283 = vld [vmem:[%s165 + $0x380] sm:$0xff]
      %v284 = vld [vmem:[%s165 + $0x388] sm:$0xff]
      %v285 = vld [vmem:[%s165 + $0x390] sm:$0xff]
      %v286 = vld [vmem:[%s165 + $0x398] sm:$0xff]
      %v287 = vld [vmem:[%s165 + $0x3a0] sm:$0xff]
      %v288 = vld [vmem:[%s165 + $0x3a8] sm:$0xff]
      %v289 = vld [vmem:[%s165 + $0x3b0] sm:$0xff]
      %v290 = vld [vmem:[%s165 + $0x3b8] sm:$0xff]
      %v291 = vld [vmem:[%s165 + $0x3c0] sm:$0xff]
      %v292 = vld [vmem:[%s165 + $0x3c8] sm:$0xff]
      %v293 = vld [vmem:[%s165 + $0x3d0] sm:$0xff]
      %v294 = vld [vmem:[%s165 + $0x3d8] sm:$0xff]
      %v295 = vld [vmem:[%s165 + $0x3e0] sm:$0xff]
      %v296 = vld [vmem:[%s165 + $0x3e8] sm:$0xff]
      %v297 = vld [vmem:[%s165 + $0x3f0] sm:$0xff]
      %v298 = vld [vmem:[%s165 + $0x3f8] sm:$0xff]
      %v299 = vld [vmem:[%s165 + $0x400] sm:$0xff]
      %v300 = vld [vmem:[%s165 + $0x408] sm:$0xff]
      %v301 = vld [vmem:[%s165 + $0x410] sm:$0xff]
      %v302 = vld [vmem:[%s165 + $0x418] sm:$0xff]
      %v303 = vld [vmem:[%s165 + $0x420] sm:$0xff]
      %v304 = vld [vmem:[%s165 + $0x428] sm:$0xff]
      %v305 = vld [vmem:[%s165 + $0x430] sm:$0xff]
      %v306 = vld [vmem:[%s165 + $0x438] sm:$0xff]
      %v307 = vld [vmem:[%s165 + $0x440] sm:$0xff]
      %v308 = vld [vmem:[%s165 + $0x448] sm:$0xff]
      %v309 = vld [vmem:[%s165 + $0x450] sm:$0xff]
      %v310 = vld [vmem:[%s165 + $0x458] sm:$0xff]
      %v311 = vld [vmem:[%s165 + $0x460] sm:$0xff]
      %v312 = vld [vmem:[%s165 + $0x468] sm:$0xff]
      %v313 = vld [vmem:[%s165 + $0x470] sm:$0xff]
      %v314 = vld [vmem:[%s165 + $0x478] sm:$0xff]
      %v315 = vld [vmem:[%s165 + $0x480] sm:$0xff]
      %v316 = vld [vmem:[%s165 + $0x488] sm:$0xff]
      %v317 = vld [vmem:[%s165 + $0x490] sm:$0xff]
      %v318 = vld [vmem:[%s165 + $0x498] sm:$0xff]
      %v319 = vld [vmem:[%s165 + $0x4a0] sm:$0xff]
      %v320 = vld [vmem:[%s165 + $0x4a8] sm:$0xff]
      %v321 = vld [vmem:[%s165 + $0x4b0] sm:$0xff]
      %v322 = vld [vmem:[%s165 + $0x4b8] sm:$0xff]
      %v323 = vld [vmem:[%s165 + $0x4c0] sm:$0xff]
      %v324 = vld [vmem:[%s165 + $0x4c8] sm:$0xff]
      %v325 = vld [vmem:[%s165 + $0x4d0] sm:$0xff]
      %v326 = vld [vmem:[%s165 + $0x4d8] sm:$0xff]
      %v327 = vld [vmem:[%s165 + $0x4e0] sm:$0xff]
      %v328 = vld [vmem:[%s165 + $0x4e8] sm:$0xff]
      %v329 = vld [vmem:[%s165 + $0x4f0] sm:$0xff]
      %v330 = vld [vmem:[%s165 + $0x4f8] sm:$0xff]
      %v331 = vld [vmem:[%s165 + $0x500] sm:$0xff]
      %v332 = vld [vmem:[%s165 + $0x508] sm:$0xff]
      %v333 = vld [vmem:[%s165 + $0x510] sm:$0xff]
      %v334 = vld [vmem:[%s165 + $0x518] sm:$0xff]
      %v335 = vld [vmem:[%s165 + $0x520] sm:$0xff]
      %v336 = vld [vmem:[%s165 + $0x528] sm:$0xff]
      %v337 = vld [vmem:[%s165 + $0x530] sm:$0xff]
      %v338 = vld [vmem:[%s165 + $0x538] sm:$0xff]
      %v339 = vld [vmem:[%s165 + $0x540] sm:$0xff]
      %v340 = vld [vmem:[%s165 + $0x548] sm:$0xff]
      %v341 = vld [vmem:[%s165 + $0x550] sm:$0xff]
      %v342 = vld [vmem:[%s165 + $0x558] sm:$0xff]
      %v343 = vld [vmem:[%s165 + $0x560] sm:$0xff]
      %v344 = vld [vmem:[%s165 + $0x568] sm:$0xff]
      %v345 = vld [vmem:[%s165 + $0x570] sm:$0xff]
      %v346 = vld [vmem:[%s165 + $0x578] sm:$0xff]
      %v347 = vld [vmem:[%s165 + $0x580] sm:$0xff]
      %v348 = vld [vmem:[%s165 + $0x588] sm:$0xff]
      %v349 = vld [vmem:[%s165 + $0x590] sm:$0xff]
      %v350 = vld [vmem:[%s165 + $0x598] sm:$0xff]
      %v351 = vld [vmem:[%s165 + $0x5a0] sm:$0xff]
      %v352 = vld [vmem:[%s165 + $0x5a8] sm:$0xff]
      %v353 = vld [vmem:[%s165 + $0x5b0] sm:$0xff]
      %v354 = vld [vmem:[%s165 + $0x5b8] sm:$0xff]
      %v355 = vld [vmem:[%s165 + $0x5c0] sm:$0xff]
      %v356 = vld [vmem:[%s165 + $0x5c8] sm:$0xff]
      %v357 = vld [vmem:[%s165 + $0x5d0] sm:$0xff]
      %v358 = vld [vmem:[%s165 + $0x5d8] sm:$0xff]
      %v359 = vld [vmem:[%s165 + $0x5e0] sm:$0xff]
      %v360 = vld [vmem:[%s165 + $0x5e8] sm:$0xff]
      %v361 = vld [vmem:[%s165 + $0x5f0] sm:$0xff]
      %v362 = vld [vmem:[%s165 + $0x5f8] sm:$0xff]
      %v363 = vld [vmem:[%s165 + $0x600] sm:$0xff]
      %v364 = vld [vmem:[%s165 + $0x608] sm:$0xff]
      %v365 = vld [vmem:[%s165 + $0x610] sm:$0xff]
      %v366 = vld [vmem:[%s165 + $0x618] sm:$0xff]
      %v367 = vld [vmem:[%s165 + $0x620] sm:$0xff]
      %v368 = vld [vmem:[%s165 + $0x628] sm:$0xff]
      %v369 = vld [vmem:[%s165 + $0x630] sm:$0xff]
      %v370 = vld [vmem:[%s165 + $0x638] sm:$0xff]
      %v371 = vld [vmem:[%s165 + $0x640] sm:$0xff]
      %v372 = vld [vmem:[%s165 + $0x648] sm:$0xff]
      %v373 = vld [vmem:[%s165 + $0x650] sm:$0xff]
      %v374 = vld [vmem:[%s165 + $0x658] sm:$0xff]
      %v375 = vld [vmem:[%s165 + $0x660] sm:$0xff]
      %v376 = vld [vmem:[%s165 + $0x668] sm:$0xff]
      %v377 = vld [vmem:[%s165 + $0x670] sm:$0xff]
      %v378 = vld [vmem:[%s165 + $0x678] sm:$0xff]
      %v379 = vld [vmem:[%s165 + $0x680] sm:$0xff]
      %v380 = vld [vmem:[%s165 + $0x688] sm:$0xff]
      %v381 = vld [vmem:[%s165 + $0x690] sm:$0xff]
      %v382 = vld [vmem:[%s165 + $0x698] sm:$0xff]
      %v383 = vld [vmem:[%s165 + $0x6a0] sm:$0xff]
      %v384 = vld [vmem:[%s165 + $0x6a8] sm:$0xff]
      %v385 = vld [vmem:[%s165 + $0x6b0] sm:$0xff]
      %v386 = vld [vmem:[%s165 + $0x6b8] sm:$0xff]
      %v387 = vld [vmem:[%s165 + $0x6c0] sm:$0xff]
      %v388 = vld [vmem:[%s165 + $0x6c8] sm:$0xff]
      %v389 = vld [vmem:[%s165 + $0x6d0] sm:$0xff]
      %v390 = vld [vmem:[%s165 + $0x6d8] sm:$0xff]
      %v391 = vld [vmem:[%s165 + $0x6e0] sm:$0xff]
      %v392 = vld [vmem:[%s165 + $0x6e8] sm:$0xff]
      %v393 = vld [vmem:[%s165 + $0x6f0] sm:$0xff]
      %v394 = vld [vmem:[%s165 + $0x6f8] sm:$0xff]
      %v395 = vld [vmem:[%s165 + $0x700] sm:$0xff]
      %v396 = vld [vmem:[%s165 + $0x708] sm:$0xff]
      %v397 = vld [vmem:[%s165 + $0x710] sm:$0xff]
      %v398 = vld [vmem:[%s165 + $0x718] sm:$0xff]
      %v399 = vld [vmem:[%s165 + $0x720] sm:$0xff]
      %v400 = vld [vmem:[%s165 + $0x728] sm:$0xff]
      %v401 = vld [vmem:[%s165 + $0x730] sm:$0xff]
      %v402 = vld [vmem:[%s165 + $0x738] sm:$0xff]
      %v403 = vld [vmem:[%s165 + $0x740] sm:$0xff]
      %v404 = vld [vmem:[%s165 + $0x748] sm:$0xff]
      %v405 = vld [vmem:[%s165 + $0x750] sm:$0xff]
      %v406 = vld [vmem:[%s165 + $0x758] sm:$0xff]
      %v407 = vld [vmem:[%s165 + $0x760] sm:$0xff]
      %v408 = vld [vmem:[%s165 + $0x768] sm:$0xff]
      %v409 = vld [vmem:[%s165 + $0x770] sm:$0xff]
      %v410 = vld [vmem:[%s165 + $0x778] sm:$0xff]
      %v411 = vld [vmem:[%s165 + $0x780] sm:$0xff]
      %v412 = vld [vmem:[%s165 + $0x788] sm:$0xff]
      %v413 = vld [vmem:[%s165 + $0x790] sm:$0xff]
      %v414 = vld [vmem:[%s165 + $0x798] sm:$0xff]
      %v415 = vld [vmem:[%s165 + $0x7a0] sm:$0xff]
      %v416 = vld [vmem:[%s165 + $0x7a8] sm:$0xff]
      %v417 = vld [vmem:[%s165 + $0x7b0] sm:$0xff]
      %v418 = vld [vmem:[%s165 + $0x7b8] sm:$0xff]
      %v419 = vld [vmem:[%s165 + $0x7c0] sm:$0xff]
      %v420 = vld [vmem:[%s165 + $0x7c8] sm:$0xff]
      %v421 = vld [vmem:[%s165 + $0x7d0] sm:$0xff]
      %v422 = vld [vmem:[%s165 + $0x7d8] sm:$0xff]
      %v423 = vld [vmem:[%s165 + $0x7e0] sm:$0xff]
      %v424 = vld [vmem:[%s165 + $0x7e8] sm:$0xff]
      %v425 = vld [vmem:[%s165 + $0x7f0] sm:$0xff]
      %v426 = vld [vmem:[%s165 + $0x7f8] sm:$0xff]
      %v427 = vld [vmem:[%s165 + $0x800] sm:$0xff]
      %v428 = vld [vmem:[%s165 + $0x808] sm:$0xff]
      %v429 = vld [vmem:[%s165 + $0x810] sm:$0xff]
      %v430 = vld [vmem:[%s165 + $0x818] sm:$0xff]
      %v431 = vld [vmem:[%s165 + $0x820] sm:$0xff]
      %v432 = vld [vmem:[%s165 + $0x828] sm:$0xff]
      %v433 = vld [vmem:[%s165 + $0x830] sm:$0xff]
      %v434 = vld [vmem:[%s165 + $0x838] sm:$0xff]
      %v435 = vld [vmem:[%s165 + $0x840] sm:$0xff]
      %v436 = vld [vmem:[%s165 + $0x848] sm:$0xff]
      %v437 = vld [vmem:[%s165 + $0x850] sm:$0xff]
      %v438 = vld [vmem:[%s165 + $0x858] sm:$0xff]
      %v439 = vld [vmem:[%s165 + $0x860] sm:$0xff]
      %v440 = vld [vmem:[%s165 + $0x868] sm:$0xff]
      %v441 = vld [vmem:[%s165 + $0x870] sm:$0xff]
      %v442 = vld [vmem:[%s165 + $0x878] sm:$0xff]
      %v443 = vld [vmem:[%s165 + $0x880] sm:$0xff]
      %v444 = vld [vmem:[%s165 + $0x888] sm:$0xff]
      %v445 = vld [vmem:[%s165 + $0x890] sm:$0xff]
      %v446 = vld [vmem:[%s165 + $0x898] sm:$0xff]
      %v447 = vld [vmem:[%s165 + $0x8a0] sm:$0xff]
      %v448 = vld [vmem:[%s165 + $0x8a8] sm:$0xff]
      %v449 = vld [vmem:[%s165 + $0x8b0] sm:$0xff]
      %v450 = vld [vmem:[%s165 + $0x8b8] sm:$0xff]
      %v451 = vld [vmem:[%s165 + $0x8c0] sm:$0xff]
      %v452 = vld [vmem:[%s165 + $0x8c8] sm:$0xff]
      %v453 = vld [vmem:[%s165 + $0x8d0] sm:$0xff]
      %v454 = vld [vmem:[%s165 + $0x8d8] sm:$0xff]
      %v455 = vld [vmem:[%s165 + $0x8e0] sm:$0xff]
      %v456 = vld [vmem:[%s165 + $0x8e8] sm:$0xff]
      %v457 = vld [vmem:[%s165 + $0x8f0] sm:$0xff]
      %v458 = vld [vmem:[%s165 + $0x8f8] sm:$0xff]
      %v459 = vld [vmem:[%s165 + $0x900] sm:$0xff]
      %v460 = vld [vmem:[%s165 + $0x908] sm:$0xff]
      %v461 = vld [vmem:[%s165 + $0x910] sm:$0xff]
      %v462 = vld [vmem:[%s165 + $0x918] sm:$0xff]
      %v463 = vld [vmem:[%s165 + $0x920] sm:$0xff]
      %v464 = vld [vmem:[%s165 + $0x928] sm:$0xff]
      %v465 = vld [vmem:[%s165 + $0x930] sm:$0xff]
      %v466 = vld [vmem:[%s165 + $0x938] sm:$0xff]
      %v467 = vld [vmem:[%s165 + $0x940] sm:$0xff]
      %v468 = vld [vmem:[%s165 + $0x948] sm:$0xff]
      %v469 = vld [vmem:[%s165 + $0x950] sm:$0xff]
      %v470 = vld [vmem:[%s165 + $0x958] sm:$0xff]
      %v471 = vld [vmem:[%s165 + $0x960] sm:$0xff]
      %v472 = vld [vmem:[%s165 + $0x968] sm:$0xff]
      %v473 = vld [vmem:[%s165 + $0x970] sm:$0xff]
      %v474 = vld [vmem:[%s165 + $0x978] sm:$0xff]
      %v475 = vld [vmem:[%s165 + $0x980] sm:$0xff]
      %v476 = vld [vmem:[%s165 + $0x988] sm:$0xff]
      %v477 = vld [vmem:[%s165 + $0x990] sm:$0xff]
      %v478 = vld [vmem:[%s165 + $0x998] sm:$0xff]
      %v479 = vld [vmem:[%s165 + $0x9a0] sm:$0xff]
      %v480 = vld [vmem:[%s165 + $0x9a8] sm:$0xff]
      %v481 = vld [vmem:[%s165 + $0x9b0] sm:$0xff]
      %v482 = vld [vmem:[%s165 + $0x9b8] sm:$0xff]
      %v483 = vld [vmem:[%s165 + $0x9c0] sm:$0xff]
      %v484 = vld [vmem:[%s165 + $0x9c8] sm:$0xff]
      %v485 = vld [vmem:[%s165 + $0x9d0] sm:$0xff]
      %v486 = vld [vmem:[%s165 + $0x9d8] sm:$0xff]
      %v487 = vld [vmem:[%s165 + $0x9e0] sm:$0xff]
      %v488 = vld [vmem:[%s165 + $0x9e8] sm:$0xff]
      %v489 = vld [vmem:[%s165 + $0x9f0] sm:$0xff]
      %v490 = vld [vmem:[%s165 + $0x9f8] sm:$0xff]
      %v491 = vld [vmem:[%s165 + $0xa00] sm:$0xff]
      %v492 = vld [vmem:[%s165 + $0xa08] sm:$0xff]
      %v493 = vld [vmem:[%s165 + $0xa10] sm:$0xff]
      %v494 = vld [vmem:[%s165 + $0xa18] sm:$0xff]
      %v495 = vld [vmem:[%s165 + $0xa20] sm:$0xff]
      %v496 = vld [vmem:[%s165 + $0xa28] sm:$0xff]
      %v497 = vld [vmem:[%s165 + $0xa30] sm:$0xff]
      %v498 = vld [vmem:[%s165 + $0xa38] sm:$0xff]
      %v499 = vld [vmem:[%s165 + $0xa40] sm:$0xff]
      %v500 = vld [vmem:[%s165 + $0xa48] sm:$0xff]
      %v501 = vld [vmem:[%s165 + $0xa50] sm:$0xff]
      %v502 = vld [vmem:[%s165 + $0xa58] sm:$0xff]
      %v503 = vld [vmem:[%s165 + $0xa60] sm:$0xff]
      %v504 = vld [vmem:[%s165 + $0xa68] sm:$0xff]
      %v505 = vld [vmem:[%s165 + $0xa70] sm:$0xff]
      %v506 = vld [vmem:[%s165 + $0xa78] sm:$0xff]
      %v507 = vld [vmem:[%s165 + $0xa80] sm:$0xff]
      %v508 = vld [vmem:[%s165 + $0xa88] sm:$0xff]
      %v509 = vld [vmem:[%s165 + $0xa90] sm:$0xff]
      %v510 = vld [vmem:[%s165 + $0xa98] sm:$0xff]
      %v511 = vld [vmem:[%s165 + $0xaa0] sm:$0xff]
      %v512 = vld [vmem:[%s165 + $0xaa8] sm:$0xff]
      %v513 = vld [vmem:[%s165 + $0xab0] sm:$0xff]
      %v514 = vld [vmem:[%s165 + $0xab8] sm:$0xff]
      %v515 = vld [vmem:[%s165 + $0xac0] sm:$0xff]
      %v516 = vld [vmem:[%s165 + $0xac8] sm:$0xff]
      %v517 = vld [vmem:[%s165 + $0xad0] sm:$0xff]
      %v518 = vld [vmem:[%s165 + $0xad8] sm:$0xff]
      %v519 = vld [vmem:[%s165 + $0xae0] sm:$0xff]
      %v520 = vld [vmem:[%s165 + $0xae8] sm:$0xff]
      %v521 = vld [vmem:[%s165 + $0xaf0] sm:$0xff]
      %v522 = vld [vmem:[%s165 + $0xaf8] sm:$0xff]
      %v523 = vld [vmem:[%s165 + $0xb00] sm:$0xff]
      %v524 = vld [vmem:[%s165 + $0xb08] sm:$0xff]
      %v525 = vld [vmem:[%s165 + $0xb10] sm:$0xff]
      %v526 = vld [vmem:[%s165 + $0xb18] sm:$0xff]
      %v527 = vld [vmem:[%s165 + $0xb20] sm:$0xff]
      %v528 = vld [vmem:[%s165 + $0xb28] sm:$0xff]
      %v529 = vld [vmem:[%s165 + $0xb30] sm:$0xff]
      %v530 = vld [vmem:[%s165 + $0xb38] sm:$0xff]
      %v531 = vld [vmem:[%s165 + $0xb40] sm:$0xff]
      %v532 = vld [vmem:[%s165 + $0xb48] sm:$0xff]
      %v533 = vld [vmem:[%s165 + $0xb50] sm:$0xff]
      %v534 = vld [vmem:[%s165 + $0xb58] sm:$0xff]
      %v535 = vld [vmem:[%s165 + $0xb60] sm:$0xff]
      %v536 = vld [vmem:[%s165 + $0xb68] sm:$0xff]
      %v537 = vld [vmem:[%s165 + $0xb70] sm:$0xff]
      %v538 = vld [vmem:[%s165 + $0xb78] sm:$0xff]
      %v539 = vld [vmem:[%s165 + $0xb80] sm:$0xff]
      %v540 = vld [vmem:[%s165 + $0xb88] sm:$0xff]
      %v541 = vld [vmem:[%s165 + $0xb90] sm:$0xff]
      %v542 = vld [vmem:[%s165 + $0xb98] sm:$0xff]
      %v543 = vld [vmem:[%s165 + $0xba0] sm:$0xff]
      %v544 = vld [vmem:[%s165 + $0xba8] sm:$0xff]
      %v545 = vld [vmem:[%s165 + $0xbb0] sm:$0xff]
      %v546 = vld [vmem:[%s165 + $0xbb8] sm:$0xff]
      %v547 = vld [vmem:[%s165 + $0xbc0] sm:$0xff]
      %v548 = vld [vmem:[%s165 + $0xbc8] sm:$0xff]
      %v549 = vld [vmem:[%s165 + $0xbd0] sm:$0xff]
      %v550 = vld [vmem:[%s165 + $0xbd8] sm:$0xff]
      %v551 = vld [vmem:[%s165 + $0xbe0] sm:$0xff]
      %v552 = vld [vmem:[%s165 + $0xbe8] sm:$0xff]
      %v553 = vld [vmem:[%s165 + $0xbf0] sm:$0xff]
      %v554 = vld [vmem:[%s165 + $0xbf8] sm:$0xff]
      %v555 = vld [vmem:[%s1] sm:$0xff]
      %v556 = vld [vmem:[%s1 + $0x8] sm:$0xff]
      %v557 = vld [vmem:[%s1 + $0x10] sm:$0xff]
      %v558 = vld [vmem:[%s1 + $0x18] sm:$0xff]
      %v559 = vld [vmem:[%s1 + $0x20] sm:$0xff]
      %v560 = vld [vmem:[%s1 + $0x28] sm:$0xff]
      %v561 = vld [vmem:[%s1 + $0x30] sm:$0xff]
      %v562 = vld [vmem:[%s1 + $0x38] sm:$0xff]
      %v563 = vld [vmem:[%s1 + $0x40] sm:$0xff]
      %v564 = vld [vmem:[%s1 + $0x48] sm:$0xff]
      %v565 = vld [vmem:[%s1 + $0x50] sm:$0xff]
      %v566 = vld [vmem:[%s1 + $0x58] sm:$0xff]
      %v567 = vld [vmem:[%s1 + $0x60] sm:$0xff]
      %v568 = vld [vmem:[%s1 + $0x68] sm:$0xff]
      %v569 = vld [vmem:[%s1 + $0x70] sm:$0xff]
      %v570 = vld [vmem:[%s1 + $0x78] sm:$0xff]
      %v571 = vld [vmem:[%s1 + $0x80] sm:$0xff]
      %v572 = vld [vmem:[%s1 + $0x88] sm:$0xff]
      %v573 = vld [vmem:[%s1 + $0x90] sm:$0xff]
      %v574 = vld [vmem:[%s1 + $0x98] sm:$0xff]
      %v575 = vld [vmem:[%s1 + $0xa0] sm:$0xff]
      %v576 = vld [vmem:[%s1 + $0xa8] sm:$0xff]
      %v577 = vld [vmem:[%s1 + $0xb0] sm:$0xff]
      %v578 = vld [vmem:[%s1 + $0xb8] sm:$0xff]
      %v579 = vld [vmem:[%s1 + $0xc0] sm:$0xff]
      %v580 = vld [vmem:[%s1 + $0xc8] sm:$0xff]
      %v581 = vld [vmem:[%s1 + $0xd0] sm:$0xff]
      %v582 = vld [vmem:[%s1 + $0xd8] sm:$0xff]
      %v583 = vld [vmem:[%s1 + $0xe0] sm:$0xff]
      %v584 = vld [vmem:[%s1 + $0xe8] sm:$0xff]
      %v585 = vld [vmem:[%s1 + $0xf0] sm:$0xff]
      %v586 = vld [vmem:[%s1 + $0xf8] sm:$0xff]
      %v587 = vld [vmem:[%s1 + $0x100] sm:$0xff]
      %v588 = vld [vmem:[%s1 + $0x108] sm:$0xff]
      %v589 = vld [vmem:[%s1 + $0x110] sm:$0xff]
      %v590 = vld [vmem:[%s1 + $0x118] sm:$0xff]
      %vm591 = vcmask 261120
      %v593 = vsel %vm591, %v173, 0
      %v596 = vsel %vm591, %v176, 0
      %v599 = vsel %vm591, %v179, 0
      %v602 = vsel %vm591, %v182, 0
      %v605 = vsel %vm591, %v185, 0
      %v608 = vsel %vm591, %v188, 0
      %v611 = vsel %vm591, %v191, 0
      %v614 = vsel %vm591, %v194, 0
      %v617 = vsel %vm591, %v197, 0
      %v620 = vsel %vm591, %v200, 0
      %v623 = vsel %vm591, %v203, 0
      %v626 = vsel %vm591, %v206, 0
      %v629 = vsel %vm591, %v209, 0
      %v632 = vsel %vm591, %v212, 0
      %v635 = vsel %vm591, %v215, 0
      %v638 = vsel %vm591, %v218, 0
      %v641 = vsel %vm591, %v221, 0
      %v644 = vsel %vm591, %v224, 0
      %v647 = vsel %vm591, %v227, 0
      %v650 = vsel %vm591, %v230, 0
      %v653 = vsel %vm591, %v233, 0
      %v656 = vsel %vm591, %v236, 0
      %v659 = vsel %vm591, %v239, 0
      %v662 = vsel %vm591, %v242, 0
      %v665 = vsel %vm591, %v245, 0
      %v668 = vsel %vm591, %v248, 0
      %v671 = vsel %vm591, %v251, 0
      %v674 = vsel %vm591, %v254, 0
      %v677 = vsel %vm591, %v257, 0
      %v680 = vsel %vm591, %v260, 0
      %v683 = vsel %vm591, %v263, 0
      %v686 = vsel %vm591, %v266, 0
      %v689 = vsel %vm591, %v269, 0
      %v692 = vsel %vm591, %v272, 0
      %v695 = vsel %vm591, %v275, 0
      %v698 = vsel %vm591, %v278, 0
      %v701 = vsel %vm591, %v281, 0
      %v704 = vsel %vm591, %v284, 0
      %v707 = vsel %vm591, %v287, 0
      %v710 = vsel %vm591, %v290, 0
      %v713 = vsel %vm591, %v293, 0
      %v716 = vsel %vm591, %v296, 0
      %v719 = vsel %vm591, %v299, 0
      %v722 = vsel %vm591, %v302, 0
      %v725 = vsel %vm591, %v305, 0
      %v728 = vsel %vm591, %v308, 0
      %v731 = vsel %vm591, %v311, 0
      %v734 = vsel %vm591, %v314, 0
      %v737 = vsel %vm591, %v317, 0
      %v740 = vsel %vm591, %v320, 0
      %v743 = vsel %vm591, %v323, 0
      %v746 = vsel %vm591, %v326, 0
      %v749 = vsel %vm591, %v329, 0
      %v752 = vsel %vm591, %v332, 0
      %v755 = vsel %vm591, %v335, 0
      %v758 = vsel %vm591, %v338, 0
      %v761 = vsel %vm591, %v341, 0
      %v764 = vsel %vm591, %v344, 0
      %v767 = vsel %vm591, %v347, 0
      %v770 = vsel %vm591, %v350, 0
      %v773 = vsel %vm591, %v353, 0
      %v776 = vsel %vm591, %v356, 0
      %v779 = vsel %vm591, %v359, 0
      %v782 = vsel %vm591, %v362, 0
      %v785 = vsel %vm591, %v365, 0
      %v788 = vsel %vm591, %v368, 0
      %v791 = vsel %vm591, %v371, 0
      %v794 = vsel %vm591, %v374, 0
      %v797 = vsel %vm591, %v377, 0
      %v800 = vsel %vm591, %v380, 0
      %v803 = vsel %vm591, %v383, 0
      %v806 = vsel %vm591, %v386, 0
      %v809 = vsel %vm591, %v389, 0
      %v812 = vsel %vm591, %v392, 0
      %v815 = vsel %vm591, %v395, 0
      %v818 = vsel %vm591, %v398, 0
      %v821 = vsel %vm591, %v401, 0
      %v824 = vsel %vm591, %v404, 0
      %v827 = vsel %vm591, %v407, 0
      %v830 = vsel %vm591, %v410, 0
      %v833 = vsel %vm591, %v413, 0
      %v836 = vsel %vm591, %v416, 0
      %v839 = vsel %vm591, %v419, 0
      %v842 = vsel %vm591, %v422, 0
      %v845 = vsel %vm591, %v425, 0
      %v848 = vsel %vm591, %v428, 0
      %v851 = vsel %vm591, %v431, 0
      %v854 = vsel %vm591, %v434, 0
      %v857 = vsel %vm591, %v437, 0
      %v860 = vsel %vm591, %v440, 0
      %v863 = vsel %vm591, %v443, 0
      %v866 = vsel %vm591, %v446, 0
      %v869 = vsel %vm591, %v449, 0
      %v872 = vsel %vm591, %v452, 0
      %v875 = vsel %vm591, %v455, 0
      %v878 = vsel %vm591, %v458, 0
      %v881 = vsel %vm591, %v461, 0
      %v884 = vsel %vm591, %v464, 0
      %v887 = vsel %vm591, %v467, 0
      %v890 = vsel %vm591, %v470, 0
      %v893 = vsel %vm591, %v473, 0
      %v896 = vsel %vm591, %v476, 0
      %v899 = vsel %vm591, %v479, 0
      %v902 = vsel %vm591, %v482, 0
      %v905 = vsel %vm591, %v485, 0
      %v908 = vsel %vm591, %v488, 0
      %v911 = vsel %vm591, %v491, 0
      %v914 = vsel %vm591, %v494, 0
      %v917 = vsel %vm591, %v497, 0
      %v920 = vsel %vm591, %v500, 0
      %v923 = vsel %vm591, %v503, 0
      %v926 = vsel %vm591, %v506, 0
      %v929 = vsel %vm591, %v509, 0
      %v932 = vsel %vm591, %v512, 0
      %v935 = vsel %vm591, %v515, 0
      %v938 = vsel %vm591, %v518, 0
      %v941 = vsel %vm591, %v521, 0
      %v944 = vsel %vm591, %v524, 0
      %v947 = vsel %vm591, %v527, 0
      %v950 = vsel %vm591, %v530, 0
      %v953 = vsel %vm591, %v533, 0
      %v956 = vsel %vm591, %v536, 0
      %v959 = vsel %vm591, %v539, 0
      %v962 = vsel %vm591, %v542, 0
      %v965 = vsel %vm591, %v545, 0
      %v968 = vsel %vm591, %v548, 0
      %v971 = vsel %vm591, %v551, 0
      %v974 = vsel %vm591, %v554, 0
      %976 = vmatprep.subr.mxu0 0.0
      %977 = vmatpush1.msra.mxu0 %v555
      %978 = vmatprep.subr.mxu0 0.0
      %979 = vmatpush1.msra.mxu0 %v556
      %980 = vmatprep.subr.mxu0 0.0
      %981 = vmatpush1.msra.mxu0 %v557
      %982 = vmatprep.subr.mxu0 0.0
      %983 = vmatpush1.msra.mxu0 %v558
      %984 = vmatprep.subr.mxu0 0.0
      %985 = vmatpush1.msra.mxu0 %v559
      %986 = vmatprep.subr.mxu0 0.0
      %987 = vmatpush1.msra.mxu0 %v560
      %988 = vmatprep.subr.mxu0 0.0
      %989 = vmatpush1.msra.mxu0 %v561
      %990 = vmatprep.subr.mxu0 0.0
      %991 = vmatpush1.msra.mxu0 %v562
      %992 = vmatprep.subr.mxu0 0.0
      %993 = vmatpush1.msra.mxu0 %v563
      %994 = vmatprep.subr.mxu0 0.0
      %995 = vmatpush1.msra.mxu0 %v564
      %996 = vmatprep.subr.mxu0 0.0
      %997 = vmatpush1.msra.mxu0 %v565
      %998 = vmatprep.subr.mxu0 0.0
      %999 = vmatpush1.msra.mxu0 %v566
      %1000 = vmatprep.subr.mxu0 0.0
      %1001 = vmatpush1.msra.mxu0 %v567
      %1002 = vmatprep.subr.mxu0 0.0
      %1003 = vmatpush1.msra.mxu0 %v568
      %1004 = vmatprep.subr.mxu0 0.0
      %1005 = vmatpush1.msra.mxu0 %v569
      %1006 = vmatprep.subr.mxu0 0.0
      %1007 = vmatpush1.msra.mxu0 %v570
      %1008 = vmatprep.subr.mxu0 0.0
      %1009 = vmatpush1.msra.mxu0 %v571
      %1010 = vmatprep.subr.mxu0 0.0
      %1011 = vmatpush1.msra.mxu0 %v572
      %1012 = vmatprep.subr.mxu0 0.0
      %1013 = vmatpush1.msra.mxu0 %v573
      %1014 = vmatprep.subr.mxu0 0.0
      %1015 = vmatpush1.msra.mxu0 %v574
      %1016 = vmatprep.subr.mxu0 0.0
      %1017 = vmatpush1.msra.mxu0 %v575
      %1018 = vmatprep.subr.mxu0 0.0
      %1019 = vmatpush1.msra.mxu0 %v576
      %1020 = vmatprep.subr.mxu0 0.0
      %1021 = vmatpush1.msra.mxu0 %v577
      %1022 = vmatprep.subr.mxu0 0.0
      %1023 = vmatpush1.msra.mxu0 %v578
      %1024 = vmatprep.subr.mxu0 0.0
      %1025 = vmatpush1.msra.mxu0 %v579
      %1026 = vmatprep.subr.mxu0 0.0
      %1027 = vmatpush1.msra.mxu0 %v580
      %1028 = vmatprep.subr.mxu0 0.0
      %1029 = vmatpush1.msra.mxu0 %v581
      %1030 = vmatprep.subr.mxu0 0.0
      %1031 = vmatpush1.msra.mxu0 %v582
      %1032 = vmatprep.subr.mxu0 0.0
      %1033 = vmatpush1.msra.mxu0 %v583
      %1034 = vmatprep.subr.mxu0 0.0
      %1035 = vmatpush1.msra.mxu0 %v584
      %1036 = vmatprep.subr.mxu0 0.0
      %1037 = vmatpush1.msra.mxu0 %v585
      %1038 = vmatprep.subr.mxu0 0.0
      %1039 = vmatpush1.msra.mxu0 %v586
      %1040 = vmatprep.mubr.f32.mxu0 %v172
      %1041 = vmatmul.mubr.f32.gmra.mrb[0].mxu0 %v171
      %v1042 = vpop.f32.mrb[0].mxu0
      %v1043 = vadd.f32 0.0, %v1042
      %v1044 = vpop.f32.mrb[0].mxu0
      %1045 = vmatprep.mubr.f32.mxu0 %v175
      %1046 = vmatmul.mubr.f32.gmra.mrb[0].mxu0 %v174
      %v1047 = vpop.f32.mrb[0].mxu0
      %v1048 = vadd.f32 0.0, %v1047
      %v1049 = vpop.f32.mrb[0].mxu0
      %1050 = vmatprep.mubr.f32.mxu0 %v178
      %1051 = vmatmul.mubr.f32.gmra.mrb[0].mxu0 %v177
      %v1052 = vpop.f32.mrb[0].mxu0
      %v1053 = vadd.f32 0.0, %v1052
      %v1054 = vpop.f32.mrb[0].mxu0
      %1055 = vmatprep.mubr.f32.mxu0 %v181
      %1056 = vmatmul.mubr.f32.gmra.mrb[0].mxu0 %v180
      %v1057 = vpop.f32.mrb[0].mxu0
      %v1058 = vadd.f32 0.0, %v1057
      %v1059 = vpop.f32.mrb[0].mxu0
      %1060 = vmatprep.mubr.f32.mxu0 %v184
      %1061 = vmatmul.mubr.f32.gmra.mrb[0].mxu0 %v183
      %v1062 = vpop.f32.mrb[0].mxu0
      %v1063 = vadd.f32 0.0, %v1062
      %v1064 = vpop.f32.mrb[0].mxu0
      %1065 = vmatprep.mubr.f32.mxu0 %v187
      %1066 = vmatmul.mubr.f32.gmra.mrb[0].mxu0 %v186
      %v1067 = vpop.f32.mrb[0].mxu0
      %v1068 = vadd.f32 0.0, %v1067
      %v1069 = vpop.f32.mrb[0].mxu0
      %1070 = vmatprep.mubr.f32.mxu0 %v190
      %1071 = vmatmul.mubr.f32.gmra.mrb[0].mxu0 %v189
      %v1072 = vpop.f32.mrb[0].mxu0
      %v1073 = vadd.f32 0.0, %v1072
      %v1074 = vpop.f32.mrb[0].mxu0
      %1075 = vmatprep.mubr.f32.mxu0 %v193
      %1076 = vmatmul.mubr.f32.gmra.mrb[0].mxu0 %v192
      %v1077 = vpop.f32.mrb[0].mxu0
      %v1078 = vadd.f32 0.0, %v1077
      %v1079 = vpop.f32.mrb[0].mxu0
      %1080 = vmatprep.mubr.f32.mxu0 %v196
      %1081 = vmatmul.mubr.f32.gmra.mrb[0].mxu0 %v195
      %v1082 = vpop.f32.mrb[0].mxu0
      %v1083 = vadd.f32 0.0, %v1082
      %v1084 = vpop.f32.mrb[0].mxu0
      %1085 = vmatprep.mubr.f32.mxu0 %v199
      %1086 = vmatmul.mubr.f32.gmra.mrb[0].mxu0 %v198
      %v1087 = vpop.f32.mrb[0].mxu0
      %v1088 = vadd.f32 0.0, %v1087
      %v1089 = vpop.f32.mrb[0].mxu0
      %1090 = vmatprep.mubr.f32.mxu0 %v202
      %1091 = vmatmul.mubr.f32.gmra.mrb[0].mxu0 %v201
      %v1092 = vpop.f32.mrb[0].mxu0
      %v1093 = vadd.f32 0.0, %v1092
      %v1094 = vpop.f32.mrb[0].mxu0
      %1095 = vmatprep.mubr.f32.mxu0 %v205
      %1096 = vmatmul.mubr.f32.gmra.mrb[0].mxu0 %v204
      %v1097 = vpop.f32.mrb[0].mxu0
      %v1098 = vadd.f32 0.0, %v1097
      %v1099 = vpop.f32.mrb[0].mxu0
      %1100 = vmatprep.mubr.f32.mxu0 %v208
      %1101 = vmatmul.mubr.f32.gmra.mrb[0].mxu0 %v207
      %v1102 = vpop.f32.mrb[0].mxu0
      %v1103 = vadd.f32 0.0, %v1102
      %v1104 = vpop.f32.mrb[0].mxu0
      %1105 = vmatprep.mubr.f32.mxu0 %v211
      %1106 = vmatmul.mubr.f32.gmra.mrb[0].mxu0 %v210
      %v1107 = vpop.f32.mrb[0].mxu0
      %v1108 = vadd.f32 0.0, %v1107
      %v1109 = vpop.f32.mrb[0].mxu0
      %1110 = vmatprep.mubr.f32.mxu0 %v214
      %1111 = vmatmul.mubr.f32.gmra.mrb[0].mxu0 %v213
      %v1112 = vpop.f32.mrb[0].mxu0
      %v1113 = vadd.f32 0.0, %v1112
      %v1114 = vpop.f32.mrb[0].mxu0
      %1115 = vmatprep.mubr.f32.mxu0 %v217
      %1116 = vmatmul.mubr.f32.gmra.mrb[0].mxu0 %v216
      %v1117 = vpop.f32.mrb[0].mxu0
      %v1118 = vadd.f32 0.0, %v1117
      %v1119 = vpop.f32.mrb[0].mxu0
      %1120 = vmatprep.mubr.f32.mxu0 %v220
      %1121 = vmatmul.mubr.f32.gmra.mrb[0].mxu0 %v219
      %v1122 = vpop.f32.mrb[0].mxu0
      %v1123 = vadd.f32 0.0, %v1122
      %v1124 = vpop.f32.mrb[0].mxu0
      %1125 = vmatprep.mubr.f32.mxu0 %v223
      %1126 = vmatmul.mubr.f32.gmra.mrb[0].mxu0 %v222
      %v1127 = vpop.f32.mrb[0].mxu0
      %v1128 = vadd.f32 0.0, %v1127
      %v1129 = vpop.f32.mrb[0].mxu0
      %1130 = vmatprep.mubr.f32.mxu0 %v226
      %1131 = vmatmul.mubr.f32.gmra.mrb[0].mxu0 %v225
      %v1132 = vpop.f32.mrb[0].mxu0
      %v1133 = vadd.f32 0.0, %v1132
      %v1134 = vpop.f32.mrb[0].mxu0
      %1135 = vmatprep.mubr.f32.mxu0 %v229
      %1136 = vmatmul.mubr.f32.gmra.mrb[0].mxu0 %v228
      %v1137 = vpop.f32.mrb[0].mxu0
      %v1138 = vadd.f32 0.0, %v1137
      %v1139 = vpop.f32.mrb[0].mxu0
      %1140 = vmatprep.mubr.f32.mxu0 %v232
      %1141 = vmatmul.mubr.f32.gmra.mrb[0].mxu0 %v231
      %v1142 = vpop.f32.mrb[0].mxu0
      %v1143 = vadd.f32 0.0, %v1142
      %v1144 = vpop.f32.mrb[0].mxu0
      %1145 = vmatprep.mubr.f32.mxu0 %v235
      %1146 = vmatmul.mubr.f32.gmra.mrb[0].mxu0 %v234
      %v1147 = vpop.f32.mrb[0].mxu0
      %v1148 = vadd.f32 0.0, %v1147
      %v1149 = vpop.f32.mrb[0].mxu0
      %1150 = vmatprep.mubr.f32.mxu0 %v238
      %1151 = vmatmul.mubr.f32.gmra.mrb[0].mxu0 %v237
      %v1152 = vpop.f32.mrb[0].mxu0
      %v1153 = vadd.f32 0.0, %v1152
      %v1154 = vpop.f32.mrb[0].mxu0
      %1155 = vmatprep.mubr.f32.mxu0 %v241
      %1156 = vmatmul.mubr.f32.gmra.mrb[0].mxu0 %v240
      %v1157 = vpop.f32.mrb[0].mxu0
      %v1158 = vadd.f32 0.0, %v1157
      %v1159 = vpop.f32.mrb[0].mxu0
      %1160 = vmatprep.mubr.f32.mxu0 %v244
      %1161 = vmatmul.mubr.f32.gmra.mrb[0].mxu0 %v243
      %v1162 = vpop.f32.mrb[0].mxu0
      %v1163 = vadd.f32 0.0, %v1162
      %v1164 = vpop.f32.mrb[0].mxu0
      %1165 = vmatprep.mubr.f32.mxu0 %v247
      %1166 = vmatmul.mubr.f32.gmra.mrb[0].mxu0 %v246
      %v1167 = vpop.f32.mrb[0].mxu0
      %v1168 = vadd.f32 0.0, %v1167
      %v1169 = vpop.f32.mrb[0].mxu0
      %1170 = vmatprep.mubr.f32.mxu0 %v250
      %1171 = vmatmul.mubr.f32.gmra.mrb[0].mxu0 %v249
      %v1172 = vpop.f32.mrb[0].mxu0
      %v1173 = vadd.f32 0.0, %v1172
      %v1174 = vpop.f32.mrb[0].mxu0
      %1175 = vmatprep.mubr.f32.mxu0 %v253
      %1176 = vmatmul.mubr.f32.gmra.mrb[0].mxu0 %v252
      %v1177 = vpop.f32.mrb[0].mxu0
      %v1178 = vadd.f32 0.0, %v1177
      %v1179 = vpop.f32.mrb[0].mxu0
      %1180 = vmatprep.mubr.f32.mxu0 %v256
      %1181 = vmatmul.mubr.f32.gmra.mrb[0].mxu0 %v255
      %v1182 = vpop.f32.mrb[0].mxu0
      %v1183 = vadd.f32 0.0, %v1182
      %v1184 = vpop.f32.mrb[0].mxu0
      %1185 = vmatprep.mubr.f32.mxu0 %v259
      %1186 = vmatmul.mubr.f32.gmra.mrb[0].mxu0 %v258
      %v1187 = vpop.f32.mrb[0].mxu0
      %v1188 = vadd.f32 0.0, %v1187
      %v1189 = vpop.f32.mrb[0].mxu0
      %1190 = vmatprep.mubr.f32.mxu0 %v262
      %1191 = vmatmul.mubr.f32.gmra.mrb[0].mxu0 %v261
      %v1192 = vpop.f32.mrb[0].mxu0
      %v1193 = vadd.f32 0.0, %v1192
      %v1194 = vpop.f32.mrb[0].mxu0
      %1195 = vmatprep.mubr.f32.mxu0 %v265
      %1196 = vmatmul.mubr.f32.gmra.mrb[0].mxu0 %v264
      %v1197 = vpop.f32.mrb[0].mxu0
      %v1198 = vadd.f32 0.0, %v1197
      %v1199 = vpop.f32.mrb[0].mxu0
      %1200 = vmatprep.mubr.f32.mxu0 %v268
      %1201 = vmatmul.mubr.f32.gmra.mrb[0].mxu0 %v267
      %v1202 = vpop.f32.mrb[0].mxu0
      %v1203 = vadd.f32 0.0, %v1202
      %v1204 = vpop.f32.mrb[0].mxu0
      %1205 = vmatprep.mubr.f32.mxu0 %v271
      %1206 = vmatmul.mubr.f32.gmra.mrb[0].mxu0 %v270
      %v1207 = vpop.f32.mrb[0].mxu0
      %v1208 = vadd.f32 0.0, %v1207
      %v1209 = vpop.f32.mrb[0].mxu0
      %1210 = vmatprep.mubr.f32.mxu0 %v274
      %1211 = vmatmul.mubr.f32.gmra.mrb[0].mxu0 %v273
      %v1212 = vpop.f32.mrb[0].mxu0
      %v1213 = vadd.f32 0.0, %v1212
      %v1214 = vpop.f32.mrb[0].mxu0
      %1215 = vmatprep.mubr.f32.mxu0 %v277
      %1216 = vmatmul.mubr.f32.gmra.mrb[0].mxu0 %v276
      %v1217 = vpop.f32.mrb[0].mxu0
      %v1218 = vadd.f32 0.0, %v1217
      %v1219 = vpop.f32.mrb[0].mxu0
      %1220 = vmatprep.mubr.f32.mxu0 %v280
      %1221 = vmatmul.mubr.f32.gmra.mrb[0].mxu0 %v279
      %v1222 = vpop.f32.mrb[0].mxu0
      %v1223 = vadd.f32 0.0, %v1222
      %v1224 = vpop.f32.mrb[0].mxu0
      %1225 = vmatprep.mubr.f32.mxu0 %v283
      %1226 = vmatmul.mubr.f32.gmra.mrb[0].mxu0 %v282
      %v1227 = vpop.f32.mrb[0].mxu0
      %v1228 = vadd.f32 0.0, %v1227
      %v1229 = vpop.f32.mrb[0].mxu0
      %1230 = vmatprep.mubr.f32.mxu0 %v286
      %1231 = vmatmul.mubr.f32.gmra.mrb[0].mxu0 %v285
      %v1232 = vpop.f32.mrb[0].mxu0
      %v1233 = vadd.f32 0.0, %v1232
      %v1234 = vpop.f32.mrb[0].mxu0
      %1235 = vmatprep.mubr.f32.mxu0 %v289
      %1236 = vmatmul.mubr.f32.gmra.mrb[0].mxu0 %v288
      %v1237 = vpop.f32.mrb[0].mxu0
      %v1238 = vadd.f32 0.0, %v1237
      %v1239 = vpop.f32.mrb[0].mxu0
      %1240 = vmatprep.mubr.f32.mxu0 %v292
      %1241 = vmatmul.mubr.f32.gmra.mrb[0].mxu0 %v291
      %v1242 = vpop.f32.mrb[0].mxu0
      %v1243 = vadd.f32 0.0, %v1242
      %v1244 = vpop.f32.mrb[0].mxu0
      %1245 = vmatprep.mubr.f32.mxu0 %v295
      %1246 = vmatmul.mubr.f32.gmra.mrb[0].mxu0 %v294
      %v1247 = vpop.f32.mrb[0].mxu0
      %v1248 = vadd.f32 0.0, %v1247
      %v1249 = vpop.f32.mrb[0].mxu0
      %1250 = vmatprep.mubr.f32.mxu0 %v298
      %1251 = vmatmul.mubr.f32.gmra.mrb[0].mxu0 %v297
      %v1252 = vpop.f32.mrb[0].mxu0
      %v1253 = vadd.f32 0.0, %v1252
      %v1254 = vpop.f32.mrb[0].mxu0
      %1255 = vmatprep.mubr.f32.mxu0 %v301
      %1256 = vmatmul.mubr.f32.gmra.mrb[0].mxu0 %v300
      %v1257 = vpop.f32.mrb[0].mxu0
      %v1258 = vadd.f32 0.0, %v1257
      %v1259 = vpop.f32.mrb[0].mxu0
      %1260 = vmatprep.mubr.f32.mxu0 %v304
      %1261 = vmatmul.mubr.f32.gmra.mrb[0].mxu0 %v303
      %v1262 = vpop.f32.mrb[0].mxu0
      %v1263 = vadd.f32 0.0, %v1262
      %v1264 = vpop.f32.mrb[0].mxu0
      %1265 = vmatprep.mubr.f32.mxu0 %v307
      %1266 = vmatmul.mubr.f32.gmra.mrb[0].mxu0 %v306
      %v1267 = vpop.f32.mrb[0].mxu0
      %v1268 = vadd.f32 0.0, %v1267
      %v1269 = vpop.f32.mrb[0].mxu0
      %1270 = vmatprep.mubr.f32.mxu0 %v310
      %1271 = vmatmul.mubr.f32.gmra.mrb[0].mxu0 %v309
      %v1272 = vpop.f32.mrb[0].mxu0
      %v1273 = vadd.f32 0.0, %v1272
      %v1274 = vpop.f32.mrb[0].mxu0
      %1275 = vmatprep.mubr.f32.mxu0 %v313
      %1276 = vmatmul.mubr.f32.gmra.mrb[0].mxu0 %v312
      %v1277 = vpop.f32.mrb[0].mxu0
      %v1278 = vadd.f32 0.0, %v1277
      %v1279 = vpop.f32.mrb[0].mxu0
      %1280 = vmatprep.mubr.f32.mxu0 %v316
      %1281 = vmatmul.mubr.f32.gmra.mrb[0].mxu0 %v315
      %v1282 = vpop.f32.mrb[0].mxu0
      %v1283 = vadd.f32 0.0, %v1282
      %v1284 = vpop.f32.mrb[0].mxu0
      %1285 = vmatprep.mubr.f32.mxu0 %v319
      %1286 = vmatmul.mubr.f32.gmra.mrb[0].mxu0 %v318
      %v1287 = vpop.f32.mrb[0].mxu0
      %v1288 = vadd.f32 0.0, %v1287
      %v1289 = vpop.f32.mrb[0].mxu0
      %1290 = vmatprep.mubr.f32.mxu0 %v322
      %1291 = vmatmul.mubr.f32.gmra.mrb[0].mxu0 %v321
      %v1292 = vpop.f32.mrb[0].mxu0
      %v1293 = vadd.f32 0.0, %v1292
      %v1294 = vpop.f32.mrb[0].mxu0
      %1295 = vmatprep.mubr.f32.mxu0 %v325
      %1296 = vmatmul.mubr.f32.gmra.mrb[0].mxu0 %v324
      %v1297 = vpop.f32.mrb[0].mxu0
      %v1298 = vadd.f32 0.0, %v1297
      %v1299 = vpop.f32.mrb[0].mxu0
      %1300 = vmatprep.mubr.f32.mxu0 %v328
      %1301 = vmatmul.mubr.f32.gmra.mrb[0].mxu0 %v327
      %v1302 = vpop.f32.mrb[0].mxu0
      %v1303 = vadd.f32 0.0, %v1302
      %v1304 = vpop.f32.mrb[0].mxu0
      %1305 = vmatprep.mubr.f32.mxu0 %v331
      %1306 = vmatmul.mubr.f32.gmra.mrb[0].mxu0 %v330
      %v1307 = vpop.f32.mrb[0].mxu0
      %v1308 = vadd.f32 0.0, %v1307
      %v1309 = vpop.f32.mrb[0].mxu0
      %1310 = vmatprep.mubr.f32.mxu0 %v334
      %1311 = vmatmul.mubr.f32.gmra.mrb[0].mxu0 %v333
      %v1312 = vpop.f32.mrb[0].mxu0
      %v1313 = vadd.f32 0.0, %v1312
      %v1314 = vpop.f32.mrb[0].mxu0
      %1315 = vmatprep.mubr.f32.mxu0 %v337
      %1316 = vmatmul.mubr.f32.gmra.mrb[0].mxu0 %v336
      %v1317 = vpop.f32.mrb[0].mxu0
      %v1318 = vadd.f32 0.0, %v1317
      %v1319 = vpop.f32.mrb[0].mxu0
      %1320 = vmatprep.mubr.f32.mxu0 %v340
      %1321 = vmatmul.mubr.f32.gmra.mrb[0].mxu0 %v339
      %v1322 = vpop.f32.mrb[0].mxu0
      %v1323 = vadd.f32 0.0, %v1322
      %v1324 = vpop.f32.mrb[0].mxu0
      %1325 = vmatprep.mubr.f32.mxu0 %v343
      %1326 = vmatmul.mubr.f32.gmra.mrb[0].mxu0 %v342
      %v1327 = vpop.f32.mrb[0].mxu0
      %v1328 = vadd.f32 0.0, %v1327
      %v1329 = vpop.f32.mrb[0].mxu0
      %1330 = vmatprep.mubr.f32.mxu0 %v346
      %1331 = vmatmul.mubr.f32.gmra.mrb[0].mxu0 %v345
      %v1332 = vpop.f32.mrb[0].mxu0
      %v1333 = vadd.f32 0.0, %v1332
      %v1334 = vpop.f32.mrb[0].mxu0
      %1335 = vmatprep.mubr.f32.mxu0 %v349
      %1336 = vmatmul.mubr.f32.gmra.mrb[0].mxu0 %v348
      %v1337 = vpop.f32.mrb[0].mxu0
      %v1338 = vadd.f32 0.0, %v1337
      %v1339 = vpop.f32.mrb[0].mxu0
      %1340 = vmatprep.mubr.f32.mxu0 %v352
      %1341 = vmatmul.mubr.f32.gmra.mrb[0].mxu0 %v351
      %v1342 = vpop.f32.mrb[0].mxu0
      %v1343 = vadd.f32 0.0, %v1342
      %v1344 = vpop.f32.mrb[0].mxu0
      %1345 = vmatprep.mubr.f32.mxu0 %v355
      %1346 = vmatmul.mubr.f32.gmra.mrb[0].mxu0 %v354
      %v1347 = vpop.f32.mrb[0].mxu0
      %v1348 = vadd.f32 0.0, %v1347
      %v1349 = vpop.f32.mrb[0].mxu0
      %1350 = vmatprep.mubr.f32.mxu0 %v358
      %1351 = vmatmul.mubr.f32.gmra.mrb[0].mxu0 %v357
      %v1352 = vpop.f32.mrb[0].mxu0
      %v1353 = vadd.f32 0.0, %v1352
      %v1354 = vpop.f32.mrb[0].mxu0
      %1355 = vmatprep.mubr.f32.mxu0 %v361
      %1356 = vmatmul.mubr.f32.gmra.mrb[0].mxu0 %v360
      %v1357 = vpop.f32.mrb[0].mxu0
      %v1358 = vadd.f32 0.0, %v1357
      %v1359 = vpop.f32.mrb[0].mxu0
      %1360 = vmatprep.mubr.f32.mxu0 %v364
      %1361 = vmatmul.mubr.f32.gmra.mrb[0].mxu0 %v363
      %v1362 = vpop.f32.mrb[0].mxu0
      %v1363 = vadd.f32 0.0, %v1362
      %v1364 = vpop.f32.mrb[0].mxu0
      %1365 = vmatprep.mubr.f32.mxu0 %v367
      %1366 = vmatmul.mubr.f32.gmra.mrb[0].mxu0 %v366
      %v1367 = vpop.f32.mrb[0].mxu0
      %v1368 = vadd.f32 0.0, %v1367
      %v1369 = vpop.f32.mrb[0].mxu0
      %1370 = vmatprep.mubr.f32.mxu0 %v370
      %1371 = vmatmul.mubr.f32.gmra.mrb[0].mxu0 %v369
      %v1372 = vpop.f32.mrb[0].mxu0
      %v1373 = vadd.f32 0.0, %v1372
      %v1374 = vpop.f32.mrb[0].mxu0
      %1375 = vmatprep.mubr.f32.mxu0 %v373
      %1376 = vmatmul.mubr.f32.gmra.mrb[0].mxu0 %v372
      %v1377 = vpop.f32.mrb[0].mxu0
      %v1378 = vadd.f32 0.0, %v1377
      %v1379 = vpop.f32.mrb[0].mxu0
      %1380 = vmatprep.mubr.f32.mxu0 %v376
      %1381 = vmatmul.mubr.f32.gmra.mrb[0].mxu0 %v375
      %v1382 = vpop.f32.mrb[0].mxu0
      %v1383 = vadd.f32 0.0, %v1382
      %v1384 = vpop.f32.mrb[0].mxu0
      %1385 = vmatprep.mubr.f32.mxu0 %v379
      %1386 = vmatmul.mubr.f32.gmra.mrb[0].mxu0 %v378
      %v1387 = vpop.f32.mrb[0].mxu0
      %v1388 = vadd.f32 0.0, %v1387
      %v1389 = vpop.f32.mrb[0].mxu0
      %1390 = vmatprep.mubr.f32.mxu0 %v382
      %1391 = vmatmul.mubr.f32.gmra.mrb[0].mxu0 %v381
      %v1392 = vpop.f32.mrb[0].mxu0
      %v1393 = vadd.f32 0.0, %v1392
      %v1394 = vpop.f32.mrb[0].mxu0
      %1395 = vmatprep.mubr.f32.mxu0 %v385
      %1396 = vmatmul.mubr.f32.gmra.mrb[0].mxu0 %v384
      %v1397 = vpop.f32.mrb[0].mxu0
      %v1398 = vadd.f32 0.0, %v1397
      %v1399 = vpop.f32.mrb[0].mxu0
      %1400 = vmatprep.mubr.f32.mxu0 %v388
      %1401 = vmatmul.mubr.f32.gmra.mrb[0].mxu0 %v387
      %v1402 = vpop.f32.mrb[0].mxu0
      %v1403 = vadd.f32 0.0, %v1402
      %v1404 = vpop.f32.mrb[0].mxu0
      %1405 = vmatprep.mubr.f32.mxu0 %v391
      %1406 = vmatmul.mubr.f32.gmra.mrb[0].mxu0 %v390
      %v1407 = vpop.f32.mrb[0].mxu0
      %v1408 = vadd.f32 0.0, %v1407
      %v1409 = vpop.f32.mrb[0].mxu0
      %1410 = vmatprep.mubr.f32.mxu0 %v394
      %1411 = vmatmul.mubr.f32.gmra.mrb[0].mxu0 %v393
      %v1412 = vpop.f32.mrb[0].mxu0
      %v1413 = vadd.f32 0.0, %v1412
      %v1414 = vpop.f32.mrb[0].mxu0
      %1415 = vmatprep.mubr.f32.mxu0 %v397
      %1416 = vmatmul.mubr.f32.gmra.mrb[0].mxu0 %v396
      %v1417 = vpop.f32.mrb[0].mxu0
      %v1418 = vadd.f32 0.0, %v1417
      %v1419 = vpop.f32.mrb[0].mxu0
      %1420 = vmatprep.mubr.f32.mxu0 %v400
      %1421 = vmatmul.mubr.f32.gmra.mrb[0].mxu0 %v399
      %v1422 = vpop.f32.mrb[0].mxu0
      %v1423 = vadd.f32 0.0, %v1422
      %v1424 = vpop.f32.mrb[0].mxu0
      %1425 = vmatprep.mubr.f32.mxu0 %v403
      %1426 = vmatmul.mubr.f32.gmra.mrb[0].mxu0 %v402
      %v1427 = vpop.f32.mrb[0].mxu0
      %v1428 = vadd.f32 0.0, %v1427
      %v1429 = vpop.f32.mrb[0].mxu0
      %1430 = vmatprep.mubr.f32.mxu0 %v406
      %1431 = vmatmul.mubr.f32.gmra.mrb[0].mxu0 %v405
      %v1432 = vpop.f32.mrb[0].mxu0
      %v1433 = vadd.f32 0.0, %v1432
      %v1434 = vpop.f32.mrb[0].mxu0
      %1435 = vmatprep.mubr.f32.mxu0 %v409
      %1436 = vmatmul.mubr.f32.gmra.mrb[0].mxu0 %v408
      %v1437 = vpop.f32.mrb[0].mxu0
      %v1438 = vadd.f32 0.0, %v1437
      %v1439 = vpop.f32.mrb[0].mxu0
      %1440 = vmatprep.mubr.f32.mxu0 %v412
      %1441 = vmatmul.mubr.f32.gmra.mrb[0].mxu0 %v411
      %v1442 = vpop.f32.mrb[0].mxu0
      %v1443 = vadd.f32 0.0, %v1442
      %v1444 = vpop.f32.mrb[0].mxu0
      %1445 = vmatprep.mubr.f32.mxu0 %v415
      %1446 = vmatmul.mubr.f32.gmra.mrb[0].mxu0 %v414
      %v1447 = vpop.f32.mrb[0].mxu0
      %v1448 = vadd.f32 0.0, %v1447
      %v1449 = vpop.f32.mrb[0].mxu0
      %1450 = vmatprep.mubr.f32.mxu0 %v418
      %1451 = vmatmul.mubr.f32.gmra.mrb[0].mxu0 %v417
      %v1452 = vpop.f32.mrb[0].mxu0
      %v1453 = vadd.f32 0.0, %v1452
      %v1454 = vpop.f32.mrb[0].mxu0
      %1455 = vmatprep.mubr.f32.mxu0 %v421
      %1456 = vmatmul.mubr.f32.gmra.mrb[0].mxu0 %v420
      %v1457 = vpop.f32.mrb[0].mxu0
      %v1458 = vadd.f32 0.0, %v1457
      %v1459 = vpop.f32.mrb[0].mxu0
      %1460 = vmatprep.mubr.f32.mxu0 %v424
      %1461 = vmatmul.mubr.f32.gmra.mrb[0].mxu0 %v423
      %v1462 = vpop.f32.mrb[0].mxu0
      %v1463 = vadd.f32 0.0, %v1462
      %v1464 = vpop.f32.mrb[0].mxu0
      %1465 = vmatprep.mubr.f32.mxu0 %v427
      %1466 = vmatmul.mubr.f32.gmra.mrb[0].mxu0 %v426
      %v1467 = vpop.f32.mrb[0].mxu0
      %v1468 = vadd.f32 0.0, %v1467
      %v1469 = vpop.f32.mrb[0].mxu0
      %1470 = vmatprep.mubr.f32.mxu0 %v430
      %1471 = vmatmul.mubr.f32.gmra.mrb[0].mxu0 %v429
      %v1472 = vpop.f32.mrb[0].mxu0
      %v1473 = vadd.f32 0.0, %v1472
      %v1474 = vpop.f32.mrb[0].mxu0
      %1475 = vmatprep.mubr.f32.mxu0 %v433
      %1476 = vmatmul.mubr.f32.gmra.mrb[0].mxu0 %v432
      %v1477 = vpop.f32.mrb[0].mxu0
      %v1478 = vadd.f32 0.0, %v1477
      %v1479 = vpop.f32.mrb[0].mxu0
      %1480 = vmatprep.mubr.f32.mxu0 %v436
      %1481 = vmatmul.mubr.f32.gmra.mrb[0].mxu0 %v435
      %v1482 = vpop.f32.mrb[0].mxu0
      %v1483 = vadd.f32 0.0, %v1482
      %v1484 = vpop.f32.mrb[0].mxu0
      %1485 = vmatprep.mubr.f32.mxu0 %v439
      %1486 = vmatmul.mubr.f32.gmra.mrb[0].mxu0 %v438
      %v1487 = vpop.f32.mrb[0].mxu0
      %v1488 = vadd.f32 0.0, %v1487
      %v1489 = vpop.f32.mrb[0].mxu0
      %1490 = vmatprep.mubr.f32.mxu0 %v442
      %1491 = vmatmul.mubr.f32.gmra.mrb[0].mxu0 %v441
      %v1492 = vpop.f32.mrb[0].mxu0
      %v1493 = vadd.f32 0.0, %v1492
      %v1494 = vpop.f32.mrb[0].mxu0
      %1495 = vmatprep.mubr.f32.mxu0 %v445
      %1496 = vmatmul.mubr.f32.gmra.mrb[0].mxu0 %v444
      %v1497 = vpop.f32.mrb[0].mxu0
      %v1498 = vadd.f32 0.0, %v1497
      %v1499 = vpop.f32.mrb[0].mxu0
      %1500 = vmatprep.mubr.f32.mxu0 %v448
      %1501 = vmatmul.mubr.f32.gmra.mrb[0].mxu0 %v447
      %v1502 = vpop.f32.mrb[0].mxu0
      %v1503 = vadd.f32 0.0, %v1502
      %v1504 = vpop.f32.mrb[0].mxu0
      %1505 = vmatprep.mubr.f32.mxu0 %v451
      %1506 = vmatmul.mubr.f32.gmra.mrb[0].mxu0 %v450
      %v1507 = vpop.f32.mrb[0].mxu0
      %v1508 = vadd.f32 0.0, %v1507
      %v1509 = vpop.f32.mrb[0].mxu0
      %1510 = vmatprep.mubr.f32.mxu0 %v454
      %1511 = vmatmul.mubr.f32.gmra.mrb[0].mxu0 %v453
      %v1512 = vpop.f32.mrb[0].mxu0
      %v1513 = vadd.f32 0.0, %v1512
      %v1514 = vpop.f32.mrb[0].mxu0
      %1515 = vmatprep.mubr.f32.mxu0 %v457
      %1516 = vmatmul.mubr.f32.gmra.mrb[0].mxu0 %v456
      %v1517 = vpop.f32.mrb[0].mxu0
      %v1518 = vadd.f32 0.0, %v1517
      %v1519 = vpop.f32.mrb[0].mxu0
      %1520 = vmatprep.mubr.f32.mxu0 %v460
      %1521 = vmatmul.mubr.f32.gmra.mrb[0].mxu0 %v459
      %v1522 = vpop.f32.mrb[0].mxu0
      %v1523 = vadd.f32 0.0, %v1522
      %v1524 = vpop.f32.mrb[0].mxu0
      %1525 = vmatprep.mubr.f32.mxu0 %v463
      %1526 = vmatmul.mubr.f32.gmra.mrb[0].mxu0 %v462
      %v1527 = vpop.f32.mrb[0].mxu0
      %v1528 = vadd.f32 0.0, %v1527
      %v1529 = vpop.f32.mrb[0].mxu0
      %1530 = vmatprep.mubr.f32.mxu0 %v466
      %1531 = vmatmul.mubr.f32.gmra.mrb[0].mxu0 %v465
      %v1532 = vpop.f32.mrb[0].mxu0
      %v1533 = vadd.f32 0.0, %v1532
      %v1534 = vpop.f32.mrb[0].mxu0
      %1535 = vmatprep.mubr.f32.mxu0 %v469
      %1536 = vmatmul.mubr.f32.gmra.mrb[0].mxu0 %v468
      %v1537 = vpop.f32.mrb[0].mxu0
      %v1538 = vadd.f32 0.0, %v1537
      %v1539 = vpop.f32.mrb[0].mxu0
      %1540 = vmatprep.mubr.f32.mxu0 %v472
      %1541 = vmatmul.mubr.f32.gmra.mrb[0].mxu0 %v471
      %v1542 = vpop.f32.mrb[0].mxu0
      %v1543 = vadd.f32 0.0, %v1542
      %v1544 = vpop.f32.mrb[0].mxu0
      %1545 = vmatprep.mubr.f32.mxu0 %v475
      %1546 = vmatmul.mubr.f32.gmra.mrb[0].mxu0 %v474
      %v1547 = vpop.f32.mrb[0].mxu0
      %v1548 = vadd.f32 0.0, %v1547
      %v1549 = vpop.f32.mrb[0].mxu0
      %1550 = vmatprep.mubr.f32.mxu0 %v478
      %1551 = vmatmul.mubr.f32.gmra.mrb[0].mxu0 %v477
      %v1552 = vpop.f32.mrb[0].mxu0
      %v1553 = vadd.f32 0.0, %v1552
      %v1554 = vpop.f32.mrb[0].mxu0
      %1555 = vmatprep.mubr.f32.mxu0 %v481
      %1556 = vmatmul.mubr.f32.gmra.mrb[0].mxu0 %v480
      %v1557 = vpop.f32.mrb[0].mxu0
      %v1558 = vadd.f32 0.0, %v1557
      %v1559 = vpop.f32.mrb[0].mxu0
      %1560 = vmatprep.mubr.f32.mxu0 %v484
      %1561 = vmatmul.mubr.f32.gmra.mrb[0].mxu0 %v483
      %v1562 = vpop.f32.mrb[0].mxu0
      %v1563 = vadd.f32 0.0, %v1562
      %v1564 = vpop.f32.mrb[0].mxu0
      %1565 = vmatprep.mubr.f32.mxu0 %v487
      %1566 = vmatmul.mubr.f32.gmra.mrb[0].mxu0 %v486
      %v1567 = vpop.f32.mrb[0].mxu0
      %v1568 = vadd.f32 0.0, %v1567
      %v1569 = vpop.f32.mrb[0].mxu0
      %1570 = vmatprep.mubr.f32.mxu0 %v490
      %1571 = vmatmul.mubr.f32.gmra.mrb[0].mxu0 %v489
      %v1572 = vpop.f32.mrb[0].mxu0
      %v1573 = vadd.f32 0.0, %v1572
      %v1574 = vpop.f32.mrb[0].mxu0
      %1575 = vmatprep.mubr.f32.mxu0 %v493
      %1576 = vmatmul.mubr.f32.gmra.mrb[0].mxu0 %v492
      %v1577 = vpop.f32.mrb[0].mxu0
      %v1578 = vadd.f32 0.0, %v1577
      %v1579 = vpop.f32.mrb[0].mxu0
      %1580 = vmatprep.mubr.f32.mxu0 %v496
      %1581 = vmatmul.mubr.f32.gmra.mrb[0].mxu0 %v495
      %v1582 = vpop.f32.mrb[0].mxu0
      %v1583 = vadd.f32 0.0, %v1582
      %v1584 = vpop.f32.mrb[0].mxu0
      %1585 = vmatprep.mubr.f32.mxu0 %v499
      %1586 = vmatmul.mubr.f32.gmra.mrb[0].mxu0 %v498
      %v1587 = vpop.f32.mrb[0].mxu0
      %v1588 = vadd.f32 0.0, %v1587
      %v1589 = vpop.f32.mrb[0].mxu0
      %1590 = vmatprep.mubr.f32.mxu0 %v502
      %1591 = vmatmul.mubr.f32.gmra.mrb[0].mxu0 %v501
      %v1592 = vpop.f32.mrb[0].mxu0
      %v1593 = vadd.f32 0.0, %v1592
      %v1594 = vpop.f32.mrb[0].mxu0
      %1595 = vmatprep.mubr.f32.mxu0 %v505
      %1596 = vmatmul.mubr.f32.gmra.mrb[0].mxu0 %v504
      %v1597 = vpop.f32.mrb[0].mxu0
      %v1598 = vadd.f32 0.0, %v1597
      %v1599 = vpop.f32.mrb[0].mxu0
      %1600 = vmatprep.mubr.f32.mxu0 %v508
      %1601 = vmatmul.mubr.f32.gmra.mrb[0].mxu0 %v507
      %v1602 = vpop.f32.mrb[0].mxu0
      %v1603 = vadd.f32 0.0, %v1602
      %v1604 = vpop.f32.mrb[0].mxu0
      %1605 = vmatprep.mubr.f32.mxu0 %v511
      %1606 = vmatmul.mubr.f32.gmra.mrb[0].mxu0 %v510
      %v1607 = vpop.f32.mrb[0].mxu0
      %v1608 = vadd.f32 0.0, %v1607
      %v1609 = vpop.f32.mrb[0].mxu0
      %1610 = vmatprep.mubr.f32.mxu0 %v514
      %1611 = vmatmul.mubr.f32.gmra.mrb[0].mxu0 %v513
      %v1612 = vpop.f32.mrb[0].mxu0
      %v1613 = vadd.f32 0.0, %v1612
      %v1614 = vpop.f32.mrb[0].mxu0
      %1615 = vmatprep.mubr.f32.mxu0 %v517
      %1616 = vmatmul.mubr.f32.gmra.mrb[0].mxu0 %v516
      %v1617 = vpop.f32.mrb[0].mxu0
      %v1618 = vadd.f32 0.0, %v1617
      %v1619 = vpop.f32.mrb[0].mxu0
      %1620 = vmatprep.mubr.f32.mxu0 %v520
      %1621 = vmatmul.mubr.f32.gmra.mrb[0].mxu0 %v519
      %v1622 = vpop.f32.mrb[0].mxu0
      %v1623 = vadd.f32 0.0, %v1622
      %v1624 = vpop.f32.mrb[0].mxu0
      %1625 = vmatprep.mubr.f32.mxu0 %v523
      %1626 = vmatmul.mubr.f32.gmra.mrb[0].mxu0 %v522
      %v1627 = vpop.f32.mrb[0].mxu0
      %v1628 = vadd.f32 0.0, %v1627
      %v1629 = vpop.f32.mrb[0].mxu0
      %1630 = vmatprep.mubr.f32.mxu0 %v526
      %1631 = vmatmul.mubr.f32.gmra.mrb[0].mxu0 %v525
      %v1632 = vpop.f32.mrb[0].mxu0
      %v1633 = vadd.f32 0.0, %v1632
      %v1634 = vpop.f32.mrb[0].mxu0
      %1635 = vmatprep.mubr.f32.mxu0 %v529
      %1636 = vmatmul.mubr.f32.gmra.mrb[0].mxu0 %v528
      %v1637 = vpop.f32.mrb[0].mxu0
      %v1638 = vadd.f32 0.0, %v1637
      %v1639 = vpop.f32.mrb[0].mxu0
      %1640 = vmatprep.mubr.f32.mxu0 %v532
      %1641 = vmatmul.mubr.f32.gmra.mrb[0].mxu0 %v531
      %v1642 = vpop.f32.mrb[0].mxu0
      %v1643 = vadd.f32 0.0, %v1642
      %v1644 = vpop.f32.mrb[0].mxu0
      %1645 = vmatprep.mubr.f32.mxu0 %v535
      %1646 = vmatmul.mubr.f32.gmra.mrb[0].mxu0 %v534
      %v1647 = vpop.f32.mrb[0].mxu0
      %v1648 = vadd.f32 0.0, %v1647
      %v1649 = vpop.f32.mrb[0].mxu0
      %1650 = vmatprep.mubr.f32.mxu0 %v538
      %1651 = vmatmul.mubr.f32.gmra.mrb[0].mxu0 %v537
      %v1652 = vpop.f32.mrb[0].mxu0
      %v1653 = vadd.f32 0.0, %v1652
      %v1654 = vpop.f32.mrb[0].mxu0
      %1655 = vmatprep.mubr.f32.mxu0 %v541
      %1656 = vmatmul.mubr.f32.gmra.mrb[0].mxu0 %v540
      %v1657 = vpop.f32.mrb[0].mxu0
      %v1658 = vadd.f32 0.0, %v1657
      %v1659 = vpop.f32.mrb[0].mxu0
      %1660 = vmatprep.mubr.f32.mxu0 %v544
      %1661 = vmatmul.mubr.f32.gmra.mrb[0].mxu0 %v543
      %v1662 = vpop.f32.mrb[0].mxu0
      %v1663 = vadd.f32 0.0, %v1662
      %v1664 = vpop.f32.mrb[0].mxu0
      %1665 = vmatprep.mubr.f32.mxu0 %v547
      %1666 = vmatmul.mubr.f32.gmra.mrb[0].mxu0 %v546
      %v1667 = vpop.f32.mrb[0].mxu0
      %v1668 = vadd.f32 0.0, %v1667
      %v1669 = vpop.f32.mrb[0].mxu0
      %1670 = vmatprep.mubr.f32.mxu0 %v550
      %1671 = vmatmul.mubr.f32.gmra.mrb[0].mxu0 %v549
      %v1672 = vpop.f32.mrb[0].mxu0
      %v1673 = vadd.f32 0.0, %v1672
      %v1674 = vpop.f32.mrb[0].mxu0
      %1675 = vmatprep.mubr.f32.mxu0 %v553
      %1676 = vmatmul.mubr.f32.gmra.mrb[0].mxu0 %v552
      %v1677 = vpop.f32.mrb[0].mxu0
      %v1678 = vadd.f32 0.0, %v1677
      %v1679 = vpop.f32.mrb[0].mxu0
      %1680 = vdwg.mxu0
      %1681 = vmatprep.subr.mxu0 0.0
      %1682 = vmatpush1.msra.mxu0 %v587
      %1683 = vmatprep.subr.mxu0 0.0
      %1684 = vmatpush1.msra.mxu0 %v588
      %1685 = vmatprep.subr.mxu0 0.0
      %1686 = vmatpush1.msra.mxu0 %v589
      %1687 = vmatprep.subr.mxu0 0.0
      %1688 = vmatpush1.msra.mxu0 %v590
      %1689 = vmatprep.subr.mxu0 0.0
      %1690 = vmatpush1.msra.mxu0 0.0
      %1691 = vmatprep.subr.mxu0 0.0
      %1692 = vmatpush1.msra.mxu0 0.0
      %1693 = vmatprep.subr.mxu0 0.0
      %1694 = vmatpush1.msra.mxu0 0.0
      %1695 = vmatprep.subr.mxu0 0.0
      %1696 = vmatpush1.msra.mxu0 0.0
      %1697 = vmatprep.subr.mxu0 0.0
      %1698 = vmatpush1.msra.mxu0 0.0
      %1699 = vmatprep.subr.mxu0 0.0
      %1700 = vmatpush1.msra.mxu0 0.0
      %1701 = vmatprep.subr.mxu0 0.0
      %1702 = vmatpush1.msra.mxu0 0.0
      %1703 = vmatprep.subr.mxu0 0.0
      %1704 = vmatpush1.msra.mxu0 0.0
      %1705 = vmatprep.subr.mxu0 0.0
      %1706 = vmatpush1.msra.mxu0 0.0
      %1707 = vmatprep.subr.mxu0 0.0
      %1708 = vmatpush1.msra.mxu0 0.0
      %1709 = vmatprep.subr.mxu0 0.0
      %1710 = vmatpush1.msra.mxu0 0.0
      %1711 = vmatprep.subr.mxu0 0.0
      %1712 = vmatpush1.msra.mxu0 0.0
      %1713 = vmatprep.subr.mxu0 0.0
      %1714 = vmatpush1.msra.mxu0 0.0
      %1715 = vmatprep.subr.mxu0 0.0
      %1716 = vmatpush1.msra.mxu0 0.0
      %1717 = vmatprep.subr.mxu0 0.0
      %1718 = vmatpush1.msra.mxu0 0.0
      %1719 = vmatprep.subr.mxu0 0.0
      %1720 = vmatpush1.msra.mxu0 0.0
      %1721 = vmatprep.subr.mxu0 0.0
      %1722 = vmatpush1.msra.mxu0 0.0
      %1723 = vmatprep.subr.mxu0 0.0
      %1724 = vmatpush1.msra.mxu0 0.0
      %1725 = vmatprep.subr.mxu0 0.0
      %1726 = vmatpush1.msra.mxu0 0.0
      %1727 = vmatprep.subr.mxu0 0.0
      %1728 = vmatpush1.msra.mxu0 0.0
      %1729 = vmatprep.subr.mxu0 0.0
      %1730 = vmatpush1.msra.mxu0 0.0
      %1731 = vmatprep.subr.mxu0 0.0
      %1732 = vmatpush1.msra.mxu0 0.0
      %1733 = vmatprep.subr.mxu0 0.0
      %1734 = vmatpush1.msra.mxu0 0.0
      %1735 = vmatprep.subr.mxu0 0.0
      %1736 = vmatpush1.msra.mxu0 0.0
      %1737 = vmatprep.subr.mxu0 0.0
      %1738 = vmatpush1.msra.mxu0 0.0
      %1739 = vmatprep.subr.mxu0 0.0
      %1740 = vmatpush1.msra.mxu0 0.0
      %1741 = vmatprep.subr.mxu0 0.0
      %1742 = vmatpush1.msra.mxu0 0.0
      %1743 = vmatprep.subr.mxu0 0.0
      %1744 = vmatpush1.msra.mxu0 0.0
      %1745 = vmatprep.mubr.f32.mxu0 0.0
      %1746 = vmatmul.mubr.f32.gmra.mrb[0].mxu0 %v593
      %v1747 = vpop.f32.mrb[0].mxu0
      %v1748 = vadd.f32 %v1043, %v1747
      %v1749 = vpop.f32.mrb[0].mxu0
      %1750 = vmatprep.mubr.f32.mxu0 0.0
      %1751 = vmatmul.mubr.f32.gmra.mrb[0].mxu0 %v596
      %v1752 = vpop.f32.mrb[0].mxu0
      %v1753 = vadd.f32 %v1048, %v1752
      %v1754 = vpop.f32.mrb[0].mxu0
      %1755 = vmatprep.mubr.f32.mxu0 0.0
      %1756 = vmatmul.mubr.f32.gmra.mrb[0].mxu0 %v599
      %v1757 = vpop.f32.mrb[0].mxu0
      %v1758 = vadd.f32 %v1053, %v1757
      %v1759 = vpop.f32.mrb[0].mxu0
      %1760 = vmatprep.mubr.f32.mxu0 0.0
      %1761 = vmatmul.mubr.f32.gmra.mrb[0].mxu0 %v602
      %v1762 = vpop.f32.mrb[0].mxu0
      %v1763 = vadd.f32 %v1058, %v1762
      %v1764 = vpop.f32.mrb[0].mxu0
      %1765 = vmatprep.mubr.f32.mxu0 0.0
      %1766 = vmatmul.mubr.f32.gmra.mrb[0].mxu0 %v605
      %v1767 = vpop.f32.mrb[0].mxu0
      %v1768 = vadd.f32 %v1063, %v1767
      %v1769 = vpop.f32.mrb[0].mxu0
      %1770 = vmatprep.mubr.f32.mxu0 0.0
      %1771 = vmatmul.mubr.f32.gmra.mrb[0].mxu0 %v608
      %v1772 = vpop.f32.mrb[0].mxu0
      %v1773 = vadd.f32 %v1068, %v1772
      %v1774 = vpop.f32.mrb[0].mxu0
      %1775 = vmatprep.mubr.f32.mxu0 0.0
      %1776 = vmatmul.mubr.f32.gmra.mrb[0].mxu0 %v611
      %v1777 = vpop.f32.mrb[0].mxu0
      %v1778 = vadd.f32 %v1073, %v1777
      %v1779 = vpop.f32.mrb[0].mxu0
      %1780 = vmatprep.mubr.f32.mxu0 0.0
      %1781 = vmatmul.mubr.f32.gmra.mrb[0].mxu0 %v614
      %v1782 = vpop.f32.mrb[0].mxu0
      %v1783 = vadd.f32 %v1078, %v1782
      %v1784 = vpop.f32.mrb[0].mxu0
      %1785 = vmatprep.mubr.f32.mxu0 0.0
      %1786 = vmatmul.mubr.f32.gmra.mrb[0].mxu0 %v617
      %v1787 = vpop.f32.mrb[0].mxu0
      %v1788 = vadd.f32 %v1083, %v1787
      %v1789 = vpop.f32.mrb[0].mxu0
      %1790 = vmatprep.mubr.f32.mxu0 0.0
      %1791 = vmatmul.mubr.f32.gmra.mrb[0].mxu0 %v620
      %v1792 = vpop.f32.mrb[0].mxu0
      %v1793 = vadd.f32 %v1088, %v1792
      %v1794 = vpop.f32.mrb[0].mxu0
      %1795 = vmatprep.mubr.f32.mxu0 0.0
      %1796 = vmatmul.mubr.f32.gmra.mrb[0].mxu0 %v623
      %v1797 = vpop.f32.mrb[0].mxu0
      %v1798 = vadd.f32 %v1093, %v1797
      %v1799 = vpop.f32.mrb[0].mxu0
      %1800 = vmatprep.mubr.f32.mxu0 0.0
      %1801 = vmatmul.mubr.f32.gmra.mrb[0].mxu0 %v626
      %v1802 = vpop.f32.mrb[0].mxu0
      %v1803 = vadd.f32 %v1098, %v1802
      %v1804 = vpop.f32.mrb[0].mxu0
      %1805 = vmatprep.mubr.f32.mxu0 0.0
      %1806 = vmatmul.mubr.f32.gmra.mrb[0].mxu0 %v629
      %v1807 = vpop.f32.mrb[0].mxu0
      %v1808 = vadd.f32 %v1103, %v1807
      %v1809 = vpop.f32.mrb[0].mxu0
      %1810 = vmatprep.mubr.f32.mxu0 0.0
      %1811 = vmatmul.mubr.f32.gmra.mrb[0].mxu0 %v632
      %v1812 = vpop.f32.mrb[0].mxu0
      %v1813 = vadd.f32 %v1108, %v1812
      %v1814 = vpop.f32.mrb[0].mxu0
      %1815 = vmatprep.mubr.f32.mxu0 0.0
      %1816 = vmatmul.mubr.f32.gmra.mrb[0].mxu0 %v635
      %v1817 = vpop.f32.mrb[0].mxu0
      %v1818 = vadd.f32 %v1113, %v1817
      %v1819 = vpop.f32.mrb[0].mxu0
      %1820 = vmatprep.mubr.f32.mxu0 0.0
      %1821 = vmatmul.mubr.f32.gmra.mrb[0].mxu0 %v638
      %v1822 = vpop.f32.mrb[0].mxu0
      %v1823 = vadd.f32 %v1118, %v1822
      %v1824 = vpop.f32.mrb[0].mxu0
      %1825 = vmatprep.mubr.f32.mxu0 0.0
      %1826 = vmatmul.mubr.f32.gmra.mrb[0].mxu0 %v641
      %v1827 = vpop.f32.mrb[0].mxu0
      %v1828 = vadd.f32 %v1123, %v1827
      %v1829 = vpop.f32.mrb[0].mxu0
      %1830 = vmatprep.mubr.f32.mxu0 0.0
      %1831 = vmatmul.mubr.f32.gmra.mrb[0].mxu0 %v644
      %v1832 = vpop.f32.mrb[0].mxu0
      %v1833 = vadd.f32 %v1128, %v1832
      %v1834 = vpop.f32.mrb[0].mxu0
      %1835 = vmatprep.mubr.f32.mxu0 0.0
      %1836 = vmatmul.mubr.f32.gmra.mrb[0].mxu0 %v647
      %v1837 = vpop.f32.mrb[0].mxu0
      %v1838 = vadd.f32 %v1133, %v1837
      %v1839 = vpop.f32.mrb[0].mxu0
      %1840 = vmatprep.mubr.f32.mxu0 0.0
      %1841 = vmatmul.mubr.f32.gmra.mrb[0].mxu0 %v650
      %v1842 = vpop.f32.mrb[0].mxu0
      %v1843 = vadd.f32 %v1138, %v1842
      %v1844 = vpop.f32.mrb[0].mxu0
      %1845 = vmatprep.mubr.f32.mxu0 0.0
      %1846 = vmatmul.mubr.f32.gmra.mrb[0].mxu0 %v653
      %v1847 = vpop.f32.mrb[0].mxu0
      %v1848 = vadd.f32 %v1143, %v1847
      %v1849 = vpop.f32.mrb[0].mxu0
      %1850 = vmatprep.mubr.f32.mxu0 0.0
      %1851 = vmatmul.mubr.f32.gmra.mrb[0].mxu0 %v656
      %v1852 = vpop.f32.mrb[0].mxu0
      %v1853 = vadd.f32 %v1148, %v1852
      %v1854 = vpop.f32.mrb[0].mxu0
      %1855 = vmatprep.mubr.f32.mxu0 0.0
      %1856 = vmatmul.mubr.f32.gmra.mrb[0].mxu0 %v659
      %v1857 = vpop.f32.mrb[0].mxu0
      %v1858 = vadd.f32 %v1153, %v1857
      %v1859 = vpop.f32.mrb[0].mxu0
      %1860 = vmatprep.mubr.f32.mxu0 0.0
      %1861 = vmatmul.mubr.f32.gmra.mrb[0].mxu0 %v662
      %v1862 = vpop.f32.mrb[0].mxu0
      %v1863 = vadd.f32 %v1158, %v1862
      %v1864 = vpop.f32.mrb[0].mxu0
      %1865 = vmatprep.mubr.f32.mxu0 0.0
      %1866 = vmatmul.mubr.f32.gmra.mrb[0].mxu0 %v665
      %v1867 = vpop.f32.mrb[0].mxu0
      %v1868 = vadd.f32 %v1163, %v1867
      %v1869 = vpop.f32.mrb[0].mxu0
      %1870 = vmatprep.mubr.f32.mxu0 0.0
      %1871 = vmatmul.mubr.f32.gmra.mrb[0].mxu0 %v668
      %v1872 = vpop.f32.mrb[0].mxu0
      %v1873 = vadd.f32 %v1168, %v1872
      %v1874 = vpop.f32.mrb[0].mxu0
      %1875 = vmatprep.mubr.f32.mxu0 0.0
      %1876 = vmatmul.mubr.f32.gmra.mrb[0].mxu0 %v671
      %v1877 = vpop.f32.mrb[0].mxu0
      %v1878 = vadd.f32 %v1173, %v1877
      %v1879 = vpop.f32.mrb[0].mxu0
      %1880 = vmatprep.mubr.f32.mxu0 0.0
      %1881 = vmatmul.mubr.f32.gmra.mrb[0].mxu0 %v674
      %v1882 = vpop.f32.mrb[0].mxu0
      %v1883 = vadd.f32 %v1178, %v1882
      %v1884 = vpop.f32.mrb[0].mxu0
      %1885 = vmatprep.mubr.f32.mxu0 0.0
      %1886 = vmatmul.mubr.f32.gmra.mrb[0].mxu0 %v677
      %v1887 = vpop.f32.mrb[0].mxu0
      %v1888 = vadd.f32 %v1183, %v1887
      %v1889 = vpop.f32.mrb[0].mxu0
      %1890 = vmatprep.mubr.f32.mxu0 0.0
      %1891 = vmatmul.mubr.f32.gmra.mrb[0].mxu0 %v680
      %v1892 = vpop.f32.mrb[0].mxu0
      %v1893 = vadd.f32 %v1188, %v1892
      %v1894 = vpop.f32.mrb[0].mxu0
      %1895 = vmatprep.mubr.f32.mxu0 0.0
      %1896 = vmatmul.mubr.f32.gmra.mrb[0].mxu0 %v683
      %v1897 = vpop.f32.mrb[0].mxu0
      %v1898 = vadd.f32 %v1193, %v1897
      %v1899 = vpop.f32.mrb[0].mxu0
      %1900 = vmatprep.mubr.f32.mxu0 0.0
      %1901 = vmatmul.mubr.f32.gmra.mrb[0].mxu0 %v686
      %v1902 = vpop.f32.mrb[0].mxu0
      %v1903 = vadd.f32 %v1198, %v1902
      %v1904 = vpop.f32.mrb[0].mxu0
      %1905 = vmatprep.mubr.f32.mxu0 0.0
      %1906 = vmatmul.mubr.f32.gmra.mrb[0].mxu0 %v689
      %v1907 = vpop.f32.mrb[0].mxu0
      %v1908 = vadd.f32 %v1203, %v1907
      %v1909 = vpop.f32.mrb[0].mxu0
      %1910 = vmatprep.mubr.f32.mxu0 0.0
      %1911 = vmatmul.mubr.f32.gmra.mrb[0].mxu0 %v692
      %v1912 = vpop.f32.mrb[0].mxu0
      %v1913 = vadd.f32 %v1208, %v1912
      %v1914 = vpop.f32.mrb[0].mxu0
      %1915 = vmatprep.mubr.f32.mxu0 0.0
      %1916 = vmatmul.mubr.f32.gmra.mrb[0].mxu0 %v695
      %v1917 = vpop.f32.mrb[0].mxu0
      %v1918 = vadd.f32 %v1213, %v1917
      %v1919 = vpop.f32.mrb[0].mxu0
      %1920 = vmatprep.mubr.f32.mxu0 0.0
      %1921 = vmatmul.mubr.f32.gmra.mrb[0].mxu0 %v698
      %v1922 = vpop.f32.mrb[0].mxu0
      %v1923 = vadd.f32 %v1218, %v1922
      %v1924 = vpop.f32.mrb[0].mxu0
      %1925 = vmatprep.mubr.f32.mxu0 0.0
      %1926 = vmatmul.mubr.f32.gmra.mrb[0].mxu0 %v701
      %v1927 = vpop.f32.mrb[0].mxu0
      %v1928 = vadd.f32 %v1223, %v1927
      %v1929 = vpop.f32.mrb[0].mxu0
      %1930 = vmatprep.mubr.f32.mxu0 0.0
      %1931 = vmatmul.mubr.f32.gmra.mrb[0].mxu0 %v704
      %v1932 = vpop.f32.mrb[0].mxu0
      %v1933 = vadd.f32 %v1228, %v1932
      %v1934 = vpop.f32.mrb[0].mxu0
      %1935 = vmatprep.mubr.f32.mxu0 0.0
      %1936 = vmatmul.mubr.f32.gmra.mrb[0].mxu0 %v707
      %v1937 = vpop.f32.mrb[0].mxu0
      %v1938 = vadd.f32 %v1233, %v1937
      %v1939 = vpop.f32.mrb[0].mxu0
      %1940 = vmatprep.mubr.f32.mxu0 0.0
      %1941 = vmatmul.mubr.f32.gmra.mrb[0].mxu0 %v710
      %v1942 = vpop.f32.mrb[0].mxu0
      %v1943 = vadd.f32 %v1238, %v1942
      %v1944 = vpop.f32.mrb[0].mxu0
      %1945 = vmatprep.mubr.f32.mxu0 0.0
      %1946 = vmatmul.mubr.f32.gmra.mrb[0].mxu0 %v713
      %v1947 = vpop.f32.mrb[0].mxu0
      %v1948 = vadd.f32 %v1243, %v1947
      %v1949 = vpop.f32.mrb[0].mxu0
      %1950 = vmatprep.mubr.f32.mxu0 0.0
      %1951 = vmatmul.mubr.f32.gmra.mrb[0].mxu0 %v716
      %v1952 = vpop.f32.mrb[0].mxu0
      %v1953 = vadd.f32 %v1248, %v1952
      %v1954 = vpop.f32.mrb[0].mxu0
      %1955 = vmatprep.mubr.f32.mxu0 0.0
      %1956 = vmatmul.mubr.f32.gmra.mrb[0].mxu0 %v719
      %v1957 = vpop.f32.mrb[0].mxu0
      %v1958 = vadd.f32 %v1253, %v1957
      %v1959 = vpop.f32.mrb[0].mxu0
      %1960 = vmatprep.mubr.f32.mxu0 0.0
      %1961 = vmatmul.mubr.f32.gmra.mrb[0].mxu0 %v722
      %v1962 = vpop.f32.mrb[0].mxu0
      %v1963 = vadd.f32 %v1258, %v1962
      %v1964 = vpop.f32.mrb[0].mxu0
      %1965 = vmatprep.mubr.f32.mxu0 0.0
      %1966 = vmatmul.mubr.f32.gmra.mrb[0].mxu0 %v725
      %v1967 = vpop.f32.mrb[0].mxu0
      %v1968 = vadd.f32 %v1263, %v1967
      %v1969 = vpop.f32.mrb[0].mxu0
      %1970 = vmatprep.mubr.f32.mxu0 0.0
      %1971 = vmatmul.mubr.f32.gmra.mrb[0].mxu0 %v728
      %v1972 = vpop.f32.mrb[0].mxu0
      %v1973 = vadd.f32 %v1268, %v1972
      %v1974 = vpop.f32.mrb[0].mxu0
      %1975 = vmatprep.mubr.f32.mxu0 0.0
      %1976 = vmatmul.mubr.f32.gmra.mrb[0].mxu0 %v731
      %v1977 = vpop.f32.mrb[0].mxu0
      %v1978 = vadd.f32 %v1273, %v1977
      %v1979 = vpop.f32.mrb[0].mxu0
      %1980 = vmatprep.mubr.f32.mxu0 0.0
      %1981 = vmatmul.mubr.f32.gmra.mrb[0].mxu0 %v734
      %v1982 = vpop.f32.mrb[0].mxu0
      %v1983 = vadd.f32 %v1278, %v1982
      %v1984 = vpop.f32.mrb[0].mxu0
      %1985 = vmatprep.mubr.f32.mxu0 0.0
      %1986 = vmatmul.mubr.f32.gmra.mrb[0].mxu0 %v737
      %v1987 = vpop.f32.mrb[0].mxu0
      %v1988 = vadd.f32 %v1283, %v1987
      %v1989 = vpop.f32.mrb[0].mxu0
      %1990 = vmatprep.mubr.f32.mxu0 0.0
      %1991 = vmatmul.mubr.f32.gmra.mrb[0].mxu0 %v740
      %v1992 = vpop.f32.mrb[0].mxu0
      %v1993 = vadd.f32 %v1288, %v1992
      %v1994 = vpop.f32.mrb[0].mxu0
      %1995 = vmatprep.mubr.f32.mxu0 0.0
      %1996 = vmatmul.mubr.f32.gmra.mrb[0].mxu0 %v743
      %v1997 = vpop.f32.mrb[0].mxu0
      %v1998 = vadd.f32 %v1293, %v1997
      %v1999 = vpop.f32.mrb[0].mxu0
      %2000 = vmatprep.mubr.f32.mxu0 0.0
      %2001 = vmatmul.mubr.f32.gmra.mrb[0].mxu0 %v746
      %v2002 = vpop.f32.mrb[0].mxu0
      %v2003 = vadd.f32 %v1298, %v2002
      %v2004 = vpop.f32.mrb[0].mxu0
      %2005 = vmatprep.mubr.f32.mxu0 0.0
      %2006 = vmatmul.mubr.f32.gmra.mrb[0].mxu0 %v749
      %v2007 = vpop.f32.mrb[0].mxu0
      %v2008 = vadd.f32 %v1303, %v2007
      %v2009 = vpop.f32.mrb[0].mxu0
      %2010 = vmatprep.mubr.f32.mxu0 0.0
      %2011 = vmatmul.mubr.f32.gmra.mrb[0].mxu0 %v752
      %v2012 = vpop.f32.mrb[0].mxu0
      %v2013 = vadd.f32 %v1308, %v2012
      %v2014 = vpop.f32.mrb[0].mxu0
      %2015 = vmatprep.mubr.f32.mxu0 0.0
      %2016 = vmatmul.mubr.f32.gmra.mrb[0].mxu0 %v755
      %v2017 = vpop.f32.mrb[0].mxu0
      %v2018 = vadd.f32 %v1313, %v2017
      %v2019 = vpop.f32.mrb[0].mxu0
      %2020 = vmatprep.mubr.f32.mxu0 0.0
      %2021 = vmatmul.mubr.f32.gmra.mrb[0].mxu0 %v758
      %v2022 = vpop.f32.mrb[0].mxu0
      %v2023 = vadd.f32 %v1318, %v2022
      %v2024 = vpop.f32.mrb[0].mxu0
      %2025 = vmatprep.mubr.f32.mxu0 0.0
      %2026 = vmatmul.mubr.f32.gmra.mrb[0].mxu0 %v761
      %v2027 = vpop.f32.mrb[0].mxu0
      %v2028 = vadd.f32 %v1323, %v2027
      %v2029 = vpop.f32.mrb[0].mxu0
      %2030 = vmatprep.mubr.f32.mxu0 0.0
      %2031 = vmatmul.mubr.f32.gmra.mrb[0].mxu0 %v764
      %v2032 = vpop.f32.mrb[0].mxu0
      %v2033 = vadd.f32 %v1328, %v2032
      %v2034 = vpop.f32.mrb[0].mxu0
      %2035 = vmatprep.mubr.f32.mxu0 0.0
      %2036 = vmatmul.mubr.f32.gmra.mrb[0].mxu0 %v767
      %v2037 = vpop.f32.mrb[0].mxu0
      %v2038 = vadd.f32 %v1333, %v2037
      %v2039 = vpop.f32.mrb[0].mxu0
      %2040 = vmatprep.mubr.f32.mxu0 0.0
      %2041 = vmatmul.mubr.f32.gmra.mrb[0].mxu0 %v770
      %v2042 = vpop.f32.mrb[0].mxu0
      %v2043 = vadd.f32 %v1338, %v2042
      %v2044 = vpop.f32.mrb[0].mxu0
      %2045 = vmatprep.mubr.f32.mxu0 0.0
      %2046 = vmatmul.mubr.f32.gmra.mrb[0].mxu0 %v773
      %v2047 = vpop.f32.mrb[0].mxu0
      %v2048 = vadd.f32 %v1343, %v2047
      %v2049 = vpop.f32.mrb[0].mxu0
      %2050 = vmatprep.mubr.f32.mxu0 0.0
      %2051 = vmatmul.mubr.f32.gmra.mrb[0].mxu0 %v776
      %v2052 = vpop.f32.mrb[0].mxu0
      %v2053 = vadd.f32 %v1348, %v2052
      %v2054 = vpop.f32.mrb[0].mxu0
      %2055 = vmatprep.mubr.f32.mxu0 0.0
      %2056 = vmatmul.mubr.f32.gmra.mrb[0].mxu0 %v779
      %v2057 = vpop.f32.mrb[0].mxu0
      %v2058 = vadd.f32 %v1353, %v2057
      %v2059 = vpop.f32.mrb[0].mxu0
      %2060 = vmatprep.mubr.f32.mxu0 0.0
      %2061 = vmatmul.mubr.f32.gmra.mrb[0].mxu0 %v782
      %v2062 = vpop.f32.mrb[0].mxu0
      %v2063 = vadd.f32 %v1358, %v2062
      %v2064 = vpop.f32.mrb[0].mxu0
      %2065 = vmatprep.mubr.f32.mxu0 0.0
      %2066 = vmatmul.mubr.f32.gmra.mrb[0].mxu0 %v785
      %v2067 = vpop.f32.mrb[0].mxu0
      %v2068 = vadd.f32 %v1363, %v2067
      %v2069 = vpop.f32.mrb[0].mxu0
      %2070 = vmatprep.mubr.f32.mxu0 0.0
      %2071 = vmatmul.mubr.f32.gmra.mrb[0].mxu0 %v788
      %v2072 = vpop.f32.mrb[0].mxu0
      %v2073 = vadd.f32 %v1368, %v2072
      %v2074 = vpop.f32.mrb[0].mxu0
      %2075 = vmatprep.mubr.f32.mxu0 0.0
      %2076 = vmatmul.mubr.f32.gmra.mrb[0].mxu0 %v791
      %v2077 = vpop.f32.mrb[0].mxu0
      %v2078 = vadd.f32 %v1373, %v2077
      %v2079 = vpop.f32.mrb[0].mxu0
      %2080 = vmatprep.mubr.f32.mxu0 0.0
      %2081 = vmatmul.mubr.f32.gmra.mrb[0].mxu0 %v794
      %v2082 = vpop.f32.mrb[0].mxu0
      %v2083 = vadd.f32 %v1378, %v2082
      %v2084 = vpop.f32.mrb[0].mxu0
      %2085 = vmatprep.mubr.f32.mxu0 0.0
      %2086 = vmatmul.mubr.f32.gmra.mrb[0].mxu0 %v797
      %v2087 = vpop.f32.mrb[0].mxu0
      %v2088 = vadd.f32 %v1383, %v2087
      %v2089 = vpop.f32.mrb[0].mxu0
      %2090 = vmatprep.mubr.f32.mxu0 0.0
      %2091 = vmatmul.mubr.f32.gmra.mrb[0].mxu0 %v800
      %v2092 = vpop.f32.mrb[0].mxu0
      %v2093 = vadd.f32 %v1388, %v2092
      %v2094 = vpop.f32.mrb[0].mxu0
      %2095 = vmatprep.mubr.f32.mxu0 0.0
      %2096 = vmatmul.mubr.f32.gmra.mrb[0].mxu0 %v803
      %v2097 = vpop.f32.mrb[0].mxu0
      %v2098 = vadd.f32 %v1393, %v2097
      %v2099 = vpop.f32.mrb[0].mxu0
      %2100 = vmatprep.mubr.f32.mxu0 0.0
      %2101 = vmatmul.mubr.f32.gmra.mrb[0].mxu0 %v806
      %v2102 = vpop.f32.mrb[0].mxu0
      %v2103 = vadd.f32 %v1398, %v2102
      %v2104 = vpop.f32.mrb[0].mxu0
      %2105 = vmatprep.mubr.f32.mxu0 0.0
      %2106 = vmatmul.mubr.f32.gmra.mrb[0].mxu0 %v809
      %v2107 = vpop.f32.mrb[0].mxu0
      %v2108 = vadd.f32 %v1403, %v2107
      %v2109 = vpop.f32.mrb[0].mxu0
      %2110 = vmatprep.mubr.f32.mxu0 0.0
      %2111 = vmatmul.mubr.f32.gmra.mrb[0].mxu0 %v812
      %v2112 = vpop.f32.mrb[0].mxu0
      %v2113 = vadd.f32 %v1408, %v2112
      %v2114 = vpop.f32.mrb[0].mxu0
      %2115 = vmatprep.mubr.f32.mxu0 0.0
      %2116 = vmatmul.mubr.f32.gmra.mrb[0].mxu0 %v815
      %v2117 = vpop.f32.mrb[0].mxu0
      %v2118 = vadd.f32 %v1413, %v2117
      %v2119 = vpop.f32.mrb[0].mxu0
      %2120 = vmatprep.mubr.f32.mxu0 0.0
      %2121 = vmatmul.mubr.f32.gmra.mrb[0].mxu0 %v818
      %v2122 = vpop.f32.mrb[0].mxu0
      %v2123 = vadd.f32 %v1418, %v2122
      %v2124 = vpop.f32.mrb[0].mxu0
      %2125 = vmatprep.mubr.f32.mxu0 0.0
      %2126 = vmatmul.mubr.f32.gmra.mrb[0].mxu0 %v821
      %v2127 = vpop.f32.mrb[0].mxu0
      %v2128 = vadd.f32 %v1423, %v2127
      %v2129 = vpop.f32.mrb[0].mxu0
      %2130 = vmatprep.mubr.f32.mxu0 0.0
      %2131 = vmatmul.mubr.f32.gmra.mrb[0].mxu0 %v824
      %v2132 = vpop.f32.mrb[0].mxu0
      %v2133 = vadd.f32 %v1428, %v2132
      %v2134 = vpop.f32.mrb[0].mxu0
      %2135 = vmatprep.mubr.f32.mxu0 0.0
      %2136 = vmatmul.mubr.f32.gmra.mrb[0].mxu0 %v827
      %v2137 = vpop.f32.mrb[0].mxu0
      %v2138 = vadd.f32 %v1433, %v2137
      %v2139 = vpop.f32.mrb[0].mxu0
      %2140 = vmatprep.mubr.f32.mxu0 0.0
      %2141 = vmatmul.mubr.f32.gmra.mrb[0].mxu0 %v830
      %v2142 = vpop.f32.mrb[0].mxu0
      %v2143 = vadd.f32 %v1438, %v2142
      %v2144 = vpop.f32.mrb[0].mxu0
      %2145 = vmatprep.mubr.f32.mxu0 0.0
      %2146 = vmatmul.mubr.f32.gmra.mrb[0].mxu0 %v833
      %v2147 = vpop.f32.mrb[0].mxu0
      %v2148 = vadd.f32 %v1443, %v2147
      %v2149 = vpop.f32.mrb[0].mxu0
      %2150 = vmatprep.mubr.f32.mxu0 0.0
      %2151 = vmatmul.mubr.f32.gmra.mrb[0].mxu0 %v836
      %v2152 = vpop.f32.mrb[0].mxu0
      %v2153 = vadd.f32 %v1448, %v2152
      %v2154 = vpop.f32.mrb[0].mxu0
      %2155 = vmatprep.mubr.f32.mxu0 0.0
      %2156 = vmatmul.mubr.f32.gmra.mrb[0].mxu0 %v839
      %v2157 = vpop.f32.mrb[0].mxu0
      %v2158 = vadd.f32 %v1453, %v2157
      %v2159 = vpop.f32.mrb[0].mxu0
      %2160 = vmatprep.mubr.f32.mxu0 0.0
      %2161 = vmatmul.mubr.f32.gmra.mrb[0].mxu0 %v842
      %v2162 = vpop.f32.mrb[0].mxu0
      %v2163 = vadd.f32 %v1458, %v2162
      %v2164 = vpop.f32.mrb[0].mxu0
      %2165 = vmatprep.mubr.f32.mxu0 0.0
      %2166 = vmatmul.mubr.f32.gmra.mrb[0].mxu0 %v845
      %v2167 = vpop.f32.mrb[0].mxu0
      %v2168 = vadd.f32 %v1463, %v2167
      %v2169 = vpop.f32.mrb[0].mxu0
      %2170 = vmatprep.mubr.f32.mxu0 0.0
      %2171 = vmatmul.mubr.f32.gmra.mrb[0].mxu0 %v848
      %v2172 = vpop.f32.mrb[0].mxu0
      %v2173 = vadd.f32 %v1468, %v2172
      %v2174 = vpop.f32.mrb[0].mxu0
      %2175 = vmatprep.mubr.f32.mxu0 0.0
      %2176 = vmatmul.mubr.f32.gmra.mrb[0].mxu0 %v851
      %v2177 = vpop.f32.mrb[0].mxu0
      %v2178 = vadd.f32 %v1473, %v2177
      %v2179 = vpop.f32.mrb[0].mxu0
      %2180 = vmatprep.mubr.f32.mxu0 0.0
      %2181 = vmatmul.mubr.f32.gmra.mrb[0].mxu0 %v854
      %v2182 = vpop.f32.mrb[0].mxu0
      %v2183 = vadd.f32 %v1478, %v2182
      %v2184 = vpop.f32.mrb[0].mxu0
      %2185 = vmatprep.mubr.f32.mxu0 0.0
      %2186 = vmatmul.mubr.f32.gmra.mrb[0].mxu0 %v857
      %v2187 = vpop.f32.mrb[0].mxu0
      %v2188 = vadd.f32 %v1483, %v2187
      %v2189 = vpop.f32.mrb[0].mxu0
      %2190 = vmatprep.mubr.f32.mxu0 0.0
      %2191 = vmatmul.mubr.f32.gmra.mrb[0].mxu0 %v860
      %v2192 = vpop.f32.mrb[0].mxu0
      %v2193 = vadd.f32 %v1488, %v2192
      %v2194 = vpop.f32.mrb[0].mxu0
      %2195 = vmatprep.mubr.f32.mxu0 0.0
      %2196 = vmatmul.mubr.f32.gmra.mrb[0].mxu0 %v863
      %v2197 = vpop.f32.mrb[0].mxu0
      %v2198 = vadd.f32 %v1493, %v2197
      %v2199 = vpop.f32.mrb[0].mxu0
      %2200 = vmatprep.mubr.f32.mxu0 0.0
      %2201 = vmatmul.mubr.f32.gmra.mrb[0].mxu0 %v866
      %v2202 = vpop.f32.mrb[0].mxu0
      %v2203 = vadd.f32 %v1498, %v2202
      %v2204 = vpop.f32.mrb[0].mxu0
      %2205 = vmatprep.mubr.f32.mxu0 0.0
      %2206 = vmatmul.mubr.f32.gmra.mrb[0].mxu0 %v869
      %v2207 = vpop.f32.mrb[0].mxu0
      %v2208 = vadd.f32 %v1503, %v2207
      %v2209 = vpop.f32.mrb[0].mxu0
      %2210 = vmatprep.mubr.f32.mxu0 0.0
      %2211 = vmatmul.mubr.f32.gmra.mrb[0].mxu0 %v872
      %v2212 = vpop.f32.mrb[0].mxu0
      %v2213 = vadd.f32 %v1508, %v2212
      %v2214 = vpop.f32.mrb[0].mxu0
      %2215 = vmatprep.mubr.f32.mxu0 0.0
      %2216 = vmatmul.mubr.f32.gmra.mrb[0].mxu0 %v875
      %v2217 = vpop.f32.mrb[0].mxu0
      %v2218 = vadd.f32 %v1513, %v2217
      %v2219 = vpop.f32.mrb[0].mxu0
      %2220 = vmatprep.mubr.f32.mxu0 0.0
      %2221 = vmatmul.mubr.f32.gmra.mrb[0].mxu0 %v878
      %v2222 = vpop.f32.mrb[0].mxu0
      %v2223 = vadd.f32 %v1518, %v2222
      %v2224 = vpop.f32.mrb[0].mxu0
      %2225 = vmatprep.mubr.f32.mxu0 0.0
      %2226 = vmatmul.mubr.f32.gmra.mrb[0].mxu0 %v881
      %v2227 = vpop.f32.mrb[0].mxu0
      %v2228 = vadd.f32 %v1523, %v2227
      %v2229 = vpop.f32.mrb[0].mxu0
      %2230 = vmatprep.mubr.f32.mxu0 0.0
      %2231 = vmatmul.mubr.f32.gmra.mrb[0].mxu0 %v884
      %v2232 = vpop.f32.mrb[0].mxu0
      %v2233 = vadd.f32 %v1528, %v2232
      %v2234 = vpop.f32.mrb[0].mxu0
      %2235 = vmatprep.mubr.f32.mxu0 0.0
      %2236 = vmatmul.mubr.f32.gmra.mrb[0].mxu0 %v887
      %v2237 = vpop.f32.mrb[0].mxu0
      %v2238 = vadd.f32 %v1533, %v2237
      %v2239 = vpop.f32.mrb[0].mxu0
      %2240 = vmatprep.mubr.f32.mxu0 0.0
      %2241 = vmatmul.mubr.f32.gmra.mrb[0].mxu0 %v890
      %v2242 = vpop.f32.mrb[0].mxu0
      %v2243 = vadd.f32 %v1538, %v2242
      %v2244 = vpop.f32.mrb[0].mxu0
      %2245 = vmatprep.mubr.f32.mxu0 0.0
      %2246 = vmatmul.mubr.f32.gmra.mrb[0].mxu0 %v893
      %v2247 = vpop.f32.mrb[0].mxu0
      %v2248 = vadd.f32 %v1543, %v2247
      %v2249 = vpop.f32.mrb[0].mxu0
      %2250 = vmatprep.mubr.f32.mxu0 0.0
      %2251 = vmatmul.mubr.f32.gmra.mrb[0].mxu0 %v896
      %v2252 = vpop.f32.mrb[0].mxu0
      %v2253 = vadd.f32 %v1548, %v2252
      %v2254 = vpop.f32.mrb[0].mxu0
      %2255 = vmatprep.mubr.f32.mxu0 0.0
      %2256 = vmatmul.mubr.f32.gmra.mrb[0].mxu0 %v899
      %v2257 = vpop.f32.mrb[0].mxu0
      %v2258 = vadd.f32 %v1553, %v2257
      %v2259 = vpop.f32.mrb[0].mxu0
      %2260 = vmatprep.mubr.f32.mxu0 0.0
      %2261 = vmatmul.mubr.f32.gmra.mrb[0].mxu0 %v902
      %v2262 = vpop.f32.mrb[0].mxu0
      %v2263 = vadd.f32 %v1558, %v2262
      %v2264 = vpop.f32.mrb[0].mxu0
      %2265 = vmatprep.mubr.f32.mxu0 0.0
      %2266 = vmatmul.mubr.f32.gmra.mrb[0].mxu0 %v905
      %v2267 = vpop.f32.mrb[0].mxu0
      %v2268 = vadd.f32 %v1563, %v2267
      %v2269 = vpop.f32.mrb[0].mxu0
      %2270 = vmatprep.mubr.f32.mxu0 0.0
      %2271 = vmatmul.mubr.f32.gmra.mrb[0].mxu0 %v908
      %v2272 = vpop.f32.mrb[0].mxu0
      %v2273 = vadd.f32 %v1568, %v2272
      %v2274 = vpop.f32.mrb[0].mxu0
      %2275 = vmatprep.mubr.f32.mxu0 0.0
      %2276 = vmatmul.mubr.f32.gmra.mrb[0].mxu0 %v911
      %v2277 = vpop.f32.mrb[0].mxu0
      %v2278 = vadd.f32 %v1573, %v2277
      %v2279 = vpop.f32.mrb[0].mxu0
      %2280 = vmatprep.mubr.f32.mxu0 0.0
      %2281 = vmatmul.mubr.f32.gmra.mrb[0].mxu0 %v914
      %v2282 = vpop.f32.mrb[0].mxu0
      %v2283 = vadd.f32 %v1578, %v2282
      %v2284 = vpop.f32.mrb[0].mxu0
      %2285 = vmatprep.mubr.f32.mxu0 0.0
      %2286 = vmatmul.mubr.f32.gmra.mrb[0].mxu0 %v917
      %v2287 = vpop.f32.mrb[0].mxu0
      %v2288 = vadd.f32 %v1583, %v2287
      %v2289 = vpop.f32.mrb[0].mxu0
      %2290 = vmatprep.mubr.f32.mxu0 0.0
      %2291 = vmatmul.mubr.f32.gmra.mrb[0].mxu0 %v920
      %v2292 = vpop.f32.mrb[0].mxu0
      %v2293 = vadd.f32 %v1588, %v2292
      %v2294 = vpop.f32.mrb[0].mxu0
      %2295 = vmatprep.mubr.f32.mxu0 0.0
      %2296 = vmatmul.mubr.f32.gmra.mrb[0].mxu0 %v923
      %v2297 = vpop.f32.mrb[0].mxu0
      %v2298 = vadd.f32 %v1593, %v2297
      %v2299 = vpop.f32.mrb[0].mxu0
      %2300 = vmatprep.mubr.f32.mxu0 0.0
      %2301 = vmatmul.mubr.f32.gmra.mrb[0].mxu0 %v926
      %v2302 = vpop.f32.mrb[0].mxu0
      %v2303 = vadd.f32 %v1598, %v2302
      %v2304 = vpop.f32.mrb[0].mxu0
      %2305 = vmatprep.mubr.f32.mxu0 0.0
      %2306 = vmatmul.mubr.f32.gmra.mrb[0].mxu0 %v929
      %v2307 = vpop.f32.mrb[0].mxu0
      %v2308 = vadd.f32 %v1603, %v2307
      %v2309 = vpop.f32.mrb[0].mxu0
      %2310 = vmatprep.mubr.f32.mxu0 0.0
      %2311 = vmatmul.mubr.f32.gmra.mrb[0].mxu0 %v932
      %v2312 = vpop.f32.mrb[0].mxu0
      %v2313 = vadd.f32 %v1608, %v2312
      %v2314 = vpop.f32.mrb[0].mxu0
      %2315 = vmatprep.mubr.f32.mxu0 0.0
      %2316 = vmatmul.mubr.f32.gmra.mrb[0].mxu0 %v935
      %v2317 = vpop.f32.mrb[0].mxu0
      %v2318 = vadd.f32 %v1613, %v2317
      %v2319 = vpop.f32.mrb[0].mxu0
      %2320 = vmatprep.mubr.f32.mxu0 0.0
      %2321 = vmatmul.mubr.f32.gmra.mrb[0].mxu0 %v938
      %v2322 = vpop.f32.mrb[0].mxu0
      %v2323 = vadd.f32 %v1618, %v2322
      %v2324 = vpop.f32.mrb[0].mxu0
      %2325 = vmatprep.mubr.f32.mxu0 0.0
      %2326 = vmatmul.mubr.f32.gmra.mrb[0].mxu0 %v941
      %v2327 = vpop.f32.mrb[0].mxu0
      %v2328 = vadd.f32 %v1623, %v2327
      %v2329 = vpop.f32.mrb[0].mxu0
      %2330 = vmatprep.mubr.f32.mxu0 0.0
      %2331 = vmatmul.mubr.f32.gmra.mrb[0].mxu0 %v944
      %v2332 = vpop.f32.mrb[0].mxu0
      %v2333 = vadd.f32 %v1628, %v2332
      %v2334 = vpop.f32.mrb[0].mxu0
      %2335 = vmatprep.mubr.f32.mxu0 0.0
      %2336 = vmatmul.mubr.f32.gmra.mrb[0].mxu0 %v947
      %v2337 = vpop.f32.mrb[0].mxu0
      %v2338 = vadd.f32 %v1633, %v2337
      %v2339 = vpop.f32.mrb[0].mxu0
      %2340 = vmatprep.mubr.f32.mxu0 0.0
      %2341 = vmatmul.mubr.f32.gmra.mrb[0].mxu0 %v950
      %v2342 = vpop.f32.mrb[0].mxu0
      %v2343 = vadd.f32 %v1638, %v2342
      %v2344 = vpop.f32.mrb[0].mxu0
      %2345 = vmatprep.mubr.f32.mxu0 0.0
      %2346 = vmatmul.mubr.f32.gmra.mrb[0].mxu0 %v953
      %v2347 = vpop.f32.mrb[0].mxu0
      %v2348 = vadd.f32 %v1643, %v2347
      %v2349 = vpop.f32.mrb[0].mxu0
      %2350 = vmatprep.mubr.f32.mxu0 0.0
      %2351 = vmatmul.mubr.f32.gmra.mrb[0].mxu0 %v956
      %v2352 = vpop.f32.mrb[0].mxu0
      %v2353 = vadd.f32 %v1648, %v2352
      %v2354 = vpop.f32.mrb[0].mxu0
      %2355 = vmatprep.mubr.f32.mxu0 0.0
      %2356 = vmatmul.mubr.f32.gmra.mrb[0].mxu0 %v959
      %v2357 = vpop.f32.mrb[0].mxu0
      %v2358 = vadd.f32 %v1653, %v2357
      %v2359 = vpop.f32.mrb[0].mxu0
      %2360 = vmatprep.mubr.f32.mxu0 0.0
      %2361 = vmatmul.mubr.f32.gmra.mrb[0].mxu0 %v962
      %v2362 = vpop.f32.mrb[0].mxu0
      %v2363 = vadd.f32 %v1658, %v2362
      %v2364 = vpop.f32.mrb[0].mxu0
      %2365 = vmatprep.mubr.f32.mxu0 0.0
      %2366 = vmatmul.mubr.f32.gmra.mrb[0].mxu0 %v965
      %v2367 = vpop.f32.mrb[0].mxu0
      %v2368 = vadd.f32 %v1663, %v2367
      %v2369 = vpop.f32.mrb[0].mxu0
      %2370 = vmatprep.mubr.f32.mxu0 0.0
      %2371 = vmatmul.mubr.f32.gmra.mrb[0].mxu0 %v968
      %v2372 = vpop.f32.mrb[0].mxu0
      %v2373 = vadd.f32 %v1668, %v2372
      %v2374 = vpop.f32.mrb[0].mxu0
      %2375 = vmatprep.mubr.f32.mxu0 0.0
      %2376 = vmatmul.mubr.f32.gmra.mrb[0].mxu0 %v971
      %v2377 = vpop.f32.mrb[0].mxu0
      %v2378 = vadd.f32 %v1673, %v2377
      %v2379 = vpop.f32.mrb[0].mxu0
      %2380 = vmatprep.mubr.f32.mxu0 0.0
      %2381 = vmatmul.mubr.f32.gmra.mrb[0].mxu0 %v974
      %v2382 = vpop.f32.mrb[0].mxu0
      %v2383 = vadd.f32 %v1678, %v2382
      %v2384 = vpop.f32.mrb[0].mxu0
      %2385 = vdwg.mxu0
      %v2386 = vmax.f32 %v1748, %v1908
      %v2387 = vmax.f32 %v1753, %v1913
      %v2388 = vmax.f32 %v1758, %v1918
      %v2389 = vmax.f32 %v1763, %v1923
      %v2390 = vmax.f32 %v1768, %v1928
      %v2391 = vmax.f32 %v1773, %v1933
      %v2392 = vmax.f32 %v1778, %v1938
      %v2393 = vmax.f32 %v1783, %v1943
      %v2394 = vmax.f32 %v1788, %v1948
      %v2395 = vmax.f32 %v1793, %v1953
      %v2396 = vmax.f32 %v1798, %v1958
      %v2397 = vmax.f32 %v1803, %v1963
      %v2398 = vmax.f32 %v1808, %v1968
      %v2399 = vmax.f32 %v1813, %v1973
      %v2400 = vmax.f32 %v1818, %v1978
      %v2401 = vmax.f32 %v1823, %v1983
      %v2402 = vmax.f32 %v1828, %v1988
      %v2403 = vmax.f32 %v1833, %v1993
      %v2404 = vmax.f32 %v1838, %v1998
      %v2405 = vmax.f32 %v1843, %v2003
      %v2406 = vmax.f32 %v1848, %v2008
      %v2407 = vmax.f32 %v1853, %v2013
      %v2408 = vmax.f32 %v1858, %v2018
      %v2409 = vmax.f32 %v1863, %v2023
      %v2410 = vmax.f32 %v1868, %v2028
      %v2411 = vmax.f32 %v1873, %v2033
      %v2412 = vmax.f32 %v1878, %v2038
      %v2413 = vmax.f32 %v1883, %v2043
      %v2414 = vmax.f32 %v1888, %v2048
      %v2415 = vmax.f32 %v1893, %v2053
      %v2416 = vmax.f32 %v1898, %v2058
      %v2417 = vmax.f32 %v1903, %v2063
      %v2418 = vmax.f32 %v2386, %v2068
      %v2419 = vmax.f32 %v2387, %v2073
      %v2420 = vmax.f32 %v2388, %v2078
      %v2421 = vmax.f32 %v2389, %v2083
      %v2422 = vmax.f32 %v2390, %v2088
      %v2423 = vmax.f32 %v2391, %v2093
      %v2424 = vmax.f32 %v2392, %v2098
      %v2425 = vmax.f32 %v2393, %v2103
      %v2426 = vmax.f32 %v2394, %v2108
      %v2427 = vmax.f32 %v2395, %v2113
      %v2428 = vmax.f32 %v2396, %v2118
      %v2429 = vmax.f32 %v2397, %v2123
      %v2430 = vmax.f32 %v2398, %v2128
      %v2431 = vmax.f32 %v2399, %v2133
      %v2432 = vmax.f32 %v2400, %v2138
      %v2433 = vmax.f32 %v2401, %v2143
      %v2434 = vmax.f32 %v2402, %v2148
      %v2435 = vmax.f32 %v2403, %v2153
      %v2436 = vmax.f32 %v2404, %v2158
      %v2437 = vmax.f32 %v2405, %v2163
      %v2438 = vmax.f32 %v2406, %v2168
      %v2439 = vmax.f32 %v2407, %v2173
      %v2440 = vmax.f32 %v2408, %v2178
      %v2441 = vmax.f32 %v2409, %v2183
      %v2442 = vmax.f32 %v2410, %v2188
      %v2443 = vmax.f32 %v2411, %v2193
      %v2444 = vmax.f32 %v2412, %v2198
      %v2445 = vmax.f32 %v2413, %v2203
      %v2446 = vmax.f32 %v2414, %v2208
      %v2447 = vmax.f32 %v2415, %v2213
      %v2448 = vmax.f32 %v2416, %v2218
      %v2449 = vmax.f32 %v2417, %v2223
      %v2450 = vmax.f32 %v2418, %v2228
      %v2451 = vmax.f32 %v2419, %v2233
      %v2452 = vmax.f32 %v2420, %v2238
      %v2453 = vmax.f32 %v2421, %v2243
      %v2454 = vmax.f32 %v2422, %v2248
      %v2455 = vmax.f32 %v2423, %v2253
      %v2456 = vmax.f32 %v2424, %v2258
      %v2457 = vmax.f32 %v2425, %v2263
      %v2458 = vmax.f32 %v2426, %v2268
      %v2459 = vmax.f32 %v2427, %v2273
      %v2460 = vmax.f32 %v2428, %v2278
      %v2461 = vmax.f32 %v2429, %v2283
      %v2462 = vmax.f32 %v2430, %v2288
      %v2463 = vmax.f32 %v2431, %v2293
      %v2464 = vmax.f32 %v2432, %v2298
      %v2465 = vmax.f32 %v2433, %v2303
      %v2466 = vmax.f32 %v2434, %v2308
      %v2467 = vmax.f32 %v2435, %v2313
      %v2468 = vmax.f32 %v2436, %v2318
      %v2469 = vmax.f32 %v2437, %v2323
      %v2470 = vmax.f32 %v2438, %v2328
      %v2471 = vmax.f32 %v2439, %v2333
      %v2472 = vmax.f32 %v2440, %v2338
      %v2473 = vmax.f32 %v2441, %v2343
      %v2474 = vmax.f32 %v2442, %v2348
      %v2475 = vmax.f32 %v2443, %v2353
      %v2476 = vmax.f32 %v2444, %v2358
      %v2477 = vmax.f32 %v2445, %v2363
      %v2478 = vmax.f32 %v2446, %v2368
      %v2479 = vmax.f32 %v2447, %v2373
      %v2480 = vmax.f32 %v2448, %v2378
      %v2481 = vmax.f32 %v2449, %v2383
      %v2482 = vld [vmem:[%s2] sm:$0x1]
      %v2484 = vlaneseq
      %v2485 = vshrl.u32 %v2484, 7
      %v2486 = vsub.s32 0, %v2485
      %v2487 = vrot.slane %v2482, %v2486
      %v2489 = vadd.f32 %v2450, %v2487
      %v2490 = vadd.f32 %v2451, %v2487
      %v2491 = vadd.f32 %v2452, %v2487
      %v2492 = vadd.f32 %v2453, %v2487
      %v2493 = vadd.f32 %v2454, %v2487
      %v2494 = vadd.f32 %v2455, %v2487
      %v2495 = vadd.f32 %v2456, %v2487
      %v2496 = vadd.f32 %v2457, %v2487
      %v2497 = vadd.f32 %v2458, %v2487
      %v2498 = vadd.f32 %v2459, %v2487
      %v2499 = vadd.f32 %v2460, %v2487
      %v2500 = vadd.f32 %v2461, %v2487
      %v2501 = vadd.f32 %v2462, %v2487
      %v2502 = vadd.f32 %v2463, %v2487
      %v2503 = vadd.f32 %v2464, %v2487
      %v2504 = vadd.f32 %v2465, %v2487
      %v2505 = vadd.f32 %v2466, %v2487
      %v2506 = vadd.f32 %v2467, %v2487
      %v2507 = vadd.f32 %v2468, %v2487
      %v2508 = vadd.f32 %v2469, %v2487
      %v2509 = vadd.f32 %v2470, %v2487
      %v2510 = vadd.f32 %v2471, %v2487
      %v2511 = vadd.f32 %v2472, %v2487
      %v2512 = vadd.f32 %v2473, %v2487
      %v2513 = vadd.f32 %v2474, %v2487
      %v2514 = vadd.f32 %v2475, %v2487
      %v2515 = vadd.f32 %v2476, %v2487
      %v2516 = vadd.f32 %v2477, %v2487
      %v2517 = vadd.f32 %v2478, %v2487
      %v2518 = vadd.f32 %v2479, %v2487
      %v2519 = vadd.f32 %v2480, %v2487
      %v2520 = vadd.f32 %v2481, %v2487
      %v2521 = vmax.f32 %v2489, 0.0
      %v2522 = vmax.f32 %v2490, 0.0
      %v2523 = vmax.f32 %v2491, 0.0
      %v2524 = vmax.f32 %v2492, 0.0
      %v2525 = vmax.f32 %v2493, 0.0
      %v2526 = vmax.f32 %v2494, 0.0
      %v2527 = vmax.f32 %v2495, 0.0
      %v2528 = vmax.f32 %v2496, 0.0
      %v2529 = vmax.f32 %v2497, 0.0
      %v2530 = vmax.f32 %v2498, 0.0
      %v2531 = vmax.f32 %v2499, 0.0
      %v2532 = vmax.f32 %v2500, 0.0
      %v2533 = vmax.f32 %v2501, 0.0
      %v2534 = vmax.f32 %v2502, 0.0
      %v2535 = vmax.f32 %v2503, 0.0
      %v2536 = vmax.f32 %v2504, 0.0
      %v2537 = vmax.f32 %v2505, 0.0
      %v2538 = vmax.f32 %v2506, 0.0
      %v2539 = vmax.f32 %v2507, 0.0
      %v2540 = vmax.f32 %v2508, 0.0
      %v2541 = vmax.f32 %v2509, 0.0
      %v2542 = vmax.f32 %v2510, 0.0
      %v2543 = vmax.f32 %v2511, 0.0
      %v2544 = vmax.f32 %v2512, 0.0
      %v2545 = vmax.f32 %v2513, 0.0
      %v2546 = vmax.f32 %v2514, 0.0
      %v2547 = vmax.f32 %v2515, 0.0
      %v2548 = vmax.f32 %v2516, 0.0
      %v2549 = vmax.f32 %v2517, 0.0
      %v2550 = vmax.f32 %v2518, 0.0
      %v2551 = vmax.f32 %v2519, 0.0
      %v2552 = vmax.f32 %v2520, 0.0
      %vm2553 = vcmask 523264
      %2554 = vst.msk [vmem:[%s170] sm:$0xff] %vm2553, %v2521
      %2555 = vst.msk [vmem:[%s170 + $0x8] sm:$0xff] %vm2553, %v2522
      %2556 = vst.msk [vmem:[%s170 + $0x10] sm:$0xff] %vm2553, %v2523
      %2557 = vst.msk [vmem:[%s170 + $0x18] sm:$0xff] %vm2553, %v2524
      %2558 = vst.msk [vmem:[%s170 + $0x20] sm:$0xff] %vm2553, %v2525
      %2559 = vst.msk [vmem:[%s170 + $0x28] sm:$0xff] %vm2553, %v2526
      %2560 = vst.msk [vmem:[%s170 + $0x30] sm:$0xff] %vm2553, %v2527
      %2561 = vst.msk [vmem:[%s170 + $0x38] sm:$0xff] %vm2553, %v2528
      %2562 = vst.msk [vmem:[%s170 + $0x40] sm:$0xff] %vm2553, %v2529
      %2563 = vst.msk [vmem:[%s170 + $0x48] sm:$0xff] %vm2553, %v2530
      %2564 = vst.msk [vmem:[%s170 + $0x50] sm:$0xff] %vm2553, %v2531
      %2565 = vst.msk [vmem:[%s170 + $0x58] sm:$0xff] %vm2553, %v2532
      %2566 = vst.msk [vmem:[%s170 + $0x60] sm:$0xff] %vm2553, %v2533
      %2567 = vst.msk [vmem:[%s170 + $0x68] sm:$0xff] %vm2553, %v2534
      %2568 = vst.msk [vmem:[%s170 + $0x70] sm:$0xff] %vm2553, %v2535
      %2569 = vst.msk [vmem:[%s170 + $0x78] sm:$0xff] %vm2553, %v2536
      %2570 = vst.msk [vmem:[%s170 + $0x80] sm:$0xff] %vm2553, %v2537
      %2571 = vst.msk [vmem:[%s170 + $0x88] sm:$0xff] %vm2553, %v2538
      %2572 = vst.msk [vmem:[%s170 + $0x90] sm:$0xff] %vm2553, %v2539
      %2573 = vst.msk [vmem:[%s170 + $0x98] sm:$0xff] %vm2553, %v2540
      %2574 = vst.msk [vmem:[%s170 + $0xa0] sm:$0xff] %vm2553, %v2541
      %2575 = vst.msk [vmem:[%s170 + $0xa8] sm:$0xff] %vm2553, %v2542
      %2576 = vst.msk [vmem:[%s170 + $0xb0] sm:$0xff] %vm2553, %v2543
      %2577 = vst.msk [vmem:[%s170 + $0xb8] sm:$0xff] %vm2553, %v2544
      %2578 = vst.msk [vmem:[%s170 + $0xc0] sm:$0xff] %vm2553, %v2545
      %2579 = vst.msk [vmem:[%s170 + $0xc8] sm:$0xff] %vm2553, %v2546
      %2580 = vst.msk [vmem:[%s170 + $0xd0] sm:$0xff] %vm2553, %v2547
      %2581 = vst.msk [vmem:[%s170 + $0xd8] sm:$0xff] %vm2553, %v2548
      %2582 = vst.msk [vmem:[%s170 + $0xe0] sm:$0xff] %vm2553, %v2549
      %2583 = vst.msk [vmem:[%s170 + $0xe8] sm:$0xff] %vm2553, %v2550
      %2584 = vst.msk [vmem:[%s170 + $0xf0] sm:$0xff] %vm2553, %v2551
      %2585 = vst.msk [vmem:[%s170 + $0xf8] sm:$0xff] %vm2553, %v2552
      %p2586 = scmp.lt.s32.totalorder %s14, 1
      %s2587 = scalar_select %p2586, %s14, 1
      %s2588 = smul.addr %s2587, 32
      %s2589 = smul.addr %s2588, 8
      %s2590 = scalar_lea.vmem %s3, %s2589
      // Predicated region
      $region33: #{forward.4} parent=31 // pred_check
        %p2591 = pneg %p100
      $region34: #{forward.4} parent=31 // pred_check_branch
        %2593 = sbr.rel (%p2591) target = $region36
      $region35: #{forward.4} parent=31 // pred_region
        _
      $region36: #{forward.4} parent=31 // pred_fallthru
        _
    $region32: #{forward.4} parent=5 // pred_fallthru
      _
    %p2594 = scmp.le.s32.totalorder 2, %s9
    // Predicated region
    $region37: #{forward.4} parent=5 // pred_check
      %p2595 = pneg %p2594
    $region38: #{forward.4} parent=5 // pred_check_branch
      %2597 = sbr.rel (%p2595) target = $region40
    $region39: #{forward.4} parent=5 // pred_region
      %s2598 = ssub.s32 %s9, 2
      // Predicated region
      $region41: #{forward.4} parent=39 // pred_check
        %p2599 = pneg %p106
      $region42: #{forward.4} parent=39 // pred_check_branch
        %2601 = sbr.rel (%p2599) target = $region44
      $region43: #{forward.4} parent=39 // pred_region
        %p2602 = scmp.lt.s32.totalorder %s15, 1
        %s2603 = scalar_select %p2602, %s15, 1
        %s2604 = smul.addr %s2603, 32
        %s2605 = smul.addr %s2604, 8
        %s2606 = scalar_lea.vmem %s3, %s2605
      $region44: #{forward.4} parent=39 // pred_fallthru
        _
    $region40: #{forward.4} parent=5 // pred_fallthru
      _
  $region6: #{forward.4} parent=0 // loop_footer
    %s13 = sadd.s32 1, %s9
  $region7: #{forward.4} parent=0 // loop_footer_branch
    %8 = sbr.rel target = $region3
  $region8: #{forward.4} parent=0 // loop_exit
    _

// kernel: forward.5
$region0: #{forward.5}
  #allocation0 [shape = 'u32[]', space=smem, size = 0x4, offset = 0x4, fixed_abs, tag = 'smem constant byte address 0x4 - core index']
  #allocation1 [shape = 'u32[144,128]{1,0:T(1,128)}', space=vmem, size = 0x12000, scoped, tag = 'internal scratch']
  #allocation2 [shape = 'f32[2,256]{1,0:T(2,128)}', space=vmem, size = 0x800, scoped, tag = 'scratch operand']
  %s0 = inlined_call_operand.vmem [shape: f32[2,16384], index: 0, kind: input, shape index: {}]
  %s1 = inlined_call_operand.vmem [shape: f32[16384,256], index: 1, kind: input, shape index: {}]
  %s2 = inlined_call_operand.vmem [shape: f32[1,256], index: 2, kind: input, shape index: {}]
  %s3 = inlined_call_operand.vmem [shape: f32[256,196], index: 3, kind: input, shape index: {}]
  %s4 = inlined_call_operand.vmem [shape: f32[1,196], index: 4, kind: input, shape index: {}]
  %s5 = inlined_call_operand.hbm [shape: f32[2,196], index: 5, kind: output, shape index: {}]
  %s6 = sld [smem:[#allocation0]]
  $region61: #{forward.5} parent=0
    _
  %s8 = ssub.s32 1, %s6
  %s9 = scalar_select 0, %s8, %s6
  $region1: #{forward.5} parent=0
    #allocation3 [shape = 'u8[2048]{0}', space=vmem, size = 0x800, scoped, tag = 'output window, operand 0, single buffered']
    #allocation4 [shape = 's32[2]{0}', space=sflag, size = 0x8, scoped, tag = 'scoped memory for forward.5']
    %10 = vsyncpa [#allocation4], 0
    loop: start=0, step=1, limit=6
    $region2: #{forward.5} parent=1 // loop_pre_header
      _
    $region3: #{forward.5} parent=1 // loop_header
      %s12 = sphi 0, %s16
      %p13 = scmp.ge.s32.totalorder %s12, 6
      %s22 = sphi 0, %s24
      %s25 = sphi 0, %s22
      %s26 = sphi 0, %s25
      %s42 = sphi 0, %s26
      %s48 = sphi 0, %s50
      %s51 = sphi 0, %s48
      %s52 = sphi 0, %s51
      %s68 = sphi 0, %s52
      %s72 = sphi 0, %s72
      %s74 = sphi 0, %s72
      %s75 = sphi 0, %s74
      %s89 = sphi 0, %s75
      %s93 = sphi 0, %s93
      %s95 = sphi 0, %s93
      %s96 = sphi 0, %s95
      %s110 = sphi 0, %s96
      %s114 = sphi 0, %s114
      %s116 = sphi 0, %s114
      %s117 = sphi 0, %s116
      %s131 = sphi 0, %s117
      %s135 = sphi 0, %s135
      %s137 = sphi 0, %s135
      %s138 = sphi 0, %s137
      %s152 = sphi 0, %s138
    $region4: #{forward.5} parent=1 // loop_header_branch
      %15 = sbr.rel (%p13) target = $region8
    $region5: #{forward.5} parent=1 // loop_body
      %s17 = ssub.s32 %s12, 1
      %s18 = ssub.s32 %s12, 2
      %s19 = sadd.s32 %s12, 1
      %s20 = ssub.s32 %s12, %s19
      %p21 = scmp.eq.s32.totalorder %s20, 0
      %s23 = sadd.s32 %s22, 1
      %s24 = scalar_select %p21, %s22, %s23
      %p27 = pneg %p21
      %p28 = scmp.eq.s32.totalorder %s12, 3
      %p29 = por %p27, %p28
      %p30 = scmp.ne.s32.totalorder %s22, %s25
      %p31 = scmp.eq.s32.totalorder %s12, 0
      %p32 = por %p30, %p31
      %p33 = scmp.ne.s32.totalorder %s22, %s25
      %p34 = scmp.eq.s32.totalorder %s17, 3
      %p35 = por %p33, %p34
      %p36 = scmp.ne.s32.totalorder %s25, %s26
      %p37 = scmp.eq.s32.totalorder %s17, 0
      %p38 = por %p36, %p37
      %p39 = scmp.ne.s32.totalorder %s25, %s26
      %p40 = scmp.eq.s32.totalorder %s18, 3
      %p41 = por %p39, %p40
      %p43 = scmp.ne.s32.totalorder %s26, %s42
      %p44 = scmp.eq.s32.totalorder %s18, 0
      %p45 = por %p43, %p44
      %s46 = ssub.s32 %s12, %s19
      %p47 = scmp.eq.s32.totalorder %s46, 0
      %s49 = sadd.s32 %s48, 1
      %s50 = scalar_select %p47, %s48, %s49
      %p53 = pneg %p47
      %p54 = scmp.eq.s32.totalorder %s12, 3
      %p55 = por %p53, %p54
      %p56 = scmp.ne.s32.totalorder %s48, %s51
      %p57 = scmp.eq.s32.totalorder %s12, 0
      %p58 = por %p56, %p57
      %p59 = scmp.ne.s32.totalorder %s48, %s51
      %p60 = scmp.eq.s32.totalorder %s17, 3
      %p61 = por %p59, %p60
      %p62 = scmp.ne.s32.totalorder %s51, %s52
      %p63 = scmp.eq.s32.totalorder %s17, 0
      %p64 = por %p62, %p63
      %p65 = scmp.ne.s32.totalorder %s51, %s52
      %p66 = scmp.eq.s32.totalorder %s18, 3
      %p67 = por %p65, %p66
      %p69 = scmp.ne.s32.totalorder %s52, %s68
      %p70 = scmp.eq.s32.totalorder %s18, 0
      %p71 = por %p69, %p70
      %s73 = sadd.s32 %s72, 1
      %p76 = scmp.eq.s32.totalorder %s12, 3
      %p77 = scmp.ne.s32.totalorder %s72, %s74
      %p78 = scmp.eq.s32.totalorder %s12, 0
      %p79 = por %p77, %p78
      %p80 = scmp.ne.s32.totalorder %s72, %s74
      %p81 = scmp.eq.s32.totalorder %s17, 3
      %p82 = por %p80, %p81
      %p83 = scmp.ne.s32.totalorder %s74, %s75
      %p84 = scmp.eq.s32.totalorder %s17, 0
      %p85 = por %p83, %p84
      %p86 = scmp.ne.s32.totalorder %s74, %s75
      %p87 = scmp.eq.s32.totalorder %s18, 3
      %p88 = por %p86, %p87
      %p90 = scmp.ne.s32.totalorder %s75, %s89
      %p91 = scmp.eq.s32.totalorder %s18, 0
      %p92 = por %p90, %p91
      %s94 = sadd.s32 %s93, 1
      %p97 = scmp.eq.s32.totalorder %s12, 3
      %p98 = scmp.ne.s32.totalorder %s93, %s95
      %p99 = scmp.eq.s32.totalorder %s12, 0
      %p100 = por %p98, %p99
      %p101 = scmp.ne.s32.totalorder %s93, %s95
      %p102 = scmp.eq.s32.totalorder %s17, 3
      %p103 = por %p101, %p102
      %p104 = scmp.ne.s32.totalorder %s95, %s96
      %p105 = scmp.eq.s32.totalorder %s17, 0
      %p106 = por %p104, %p105
      %p107 = scmp.ne.s32.totalorder %s95, %s96
      %p108 = scmp.eq.s32.totalorder %s18, 3
      %p109 = por %p107, %p108
      %p111 = scmp.ne.s32.totalorder %s96, %s110
      %p112 = scmp.eq.s32.totalorder %s18, 0
      %p113 = por %p111, %p112
      %s115 = sadd.s32 %s114, 1
      %p118 = scmp.eq.s32.totalorder %s12, 3
      %p119 = scmp.ne.s32.totalorder %s114, %s116
      %p120 = scmp.eq.s32.totalorder %s12, 0
      %p121 = por %p119, %p120
      %p122 = scmp.ne.s32.totalorder %s114, %s116
      %p123 = scmp.eq.s32.totalorder %s17, 3
      %p124 = por %p122, %p123
      %p125 = scmp.ne.s32.totalorder %s116, %s117
      %p126 = scmp.eq.s32.totalorder %s17, 0
      %p127 = por %p125, %p126
      %p128 = scmp.ne.s32.totalorder %s116, %s117
      %p129 = scmp.eq.s32.totalorder %s18, 3
      %p130 = por %p128, %p129
      %p132 = scmp.ne.s32.totalorder %s117, %s131
      %p133 = scmp.eq.s32.totalorder %s18, 0
      %p134 = por %p132, %p133
      %s136 = sadd.s32 %s135, 1
      %p139 = scmp.eq.s32.totalorder %s12, 3
      %p140 = scmp.ne.s32.totalorder %s135, %s137
      %p141 = scmp.eq.s32.totalorder %s12, 0
      %p142 = por %p140, %p141
      %p143 = scmp.ne.s32.totalorder %s135, %s137
      %p144 = scmp.eq.s32.totalorder %s17, 3
      %p145 = por %p143, %p144
      %p146 = scmp.ne.s32.totalorder %s137, %s138
      %p147 = scmp.eq.s32.totalorder %s17, 0
      %p148 = por %p146, %p147
      %p149 = scmp.ne.s32.totalorder %s137, %s138
      %p150 = scmp.eq.s32.totalorder %s18, 3
      %p151 = por %p149, %p150
      %p153 = scmp.ne.s32.totalorder %s138, %s152
      %p154 = scmp.eq.s32.totalorder %s18, 0
      %p155 = por %p153, %p154
      %p156 = scmp.le.s32.totalorder 1, %s12
      %p157 = scmp.lt.s32.totalorder %s12, 5
      %p158 = pnand %p156, %p157
      %p159 = pneg %p158
      // Predicated region
      $region9: #{forward.5} parent=5 // pred_check
        _
      $region10: #{forward.5} parent=5 // pred_check_branch
        %161 = sbr.rel (%p158) target = $region12
      $region11: #{forward.5} parent=5 // pred_region
        %s162 = ssub.s32 %s12, 1
        // Predicated region
        $region13: #{forward.5} parent=11 // pred_check
          %p163 = pneg %p85
        $region14: #{forward.5} parent=11 // pred_check_branch
          %165 = sbr.rel (%p163) target = $region16
        $region15: #{forward.5} parent=11 // pred_region
          _
        $region16: #{forward.5} parent=11 // pred_fallthru
          _
        // Predicated region
        $region17: #{forward.5} parent=11 // pred_check
          %p166 = pneg %p106
        $region18: #{forward.5} parent=11 // pred_check_branch
          %168 = sbr.rel (%p166) target = $region20
        $region19: #{forward.5} parent=11 // pred_region
          _
        $region20: #{forward.5} parent=11 // pred_fallthru
          _
        // Predicated region
        $region21: #{forward.5} parent=11 // pred_check
          %p169 = pneg %p127
        $region22: #{forward.5} parent=11 // pred_check_branch
          %171 = sbr.rel (%p169) target = $region24
        $region23: #{forward.5} parent=11 // pred_region
          _
        $region24: #{forward.5} parent=11 // pred_fallthru
          _
      $region12: #{forward.5} parent=5 // pred_fallthru
        _
      %p172 = scmp.lt.s32.totalorder %s12, 4
      // Predicated region
      $region25: #{forward.5} parent=5 // pred_check
        %p173 = pneg %p172
      $region26: #{forward.5} parent=5 // pred_check_branch
        %175 = sbr.rel (%p173) target = $region28
      $region27: #{forward.5} parent=5 // pred_region
        // Predicated region
        $region29: #{forward.5} parent=27 // pred_check
          %p176 = pneg %p32
        $region30: #{forward.5} parent=27 // pred_check_branch
          %178 = sbr.rel (%p176) target = $region32
        $region31: #{forward.5} parent=27 // pred_region
          %s179 = smul.u32 32, %s12
          %p180 = scmp.lt.s32.totalorder %s179, 127
          %s181 = scalar_select %p180, %s179, 127
          %s182 = smul.addr %s181, 2
          %s183 = scalar_lea.vmem %s0, %s182
          %s184 = smul.u32 32, %s12
        $region32: #{forward.5} parent=27 // pred_fallthru
          _
        // Predicated region
        $region33: #{forward.5} parent=27 // pred_check
          %p185 = pneg %p58
        $region34: #{forward.5} parent=27 // pred_check_branch
          %187 = sbr.rel (%p185) target = $region36
        $region35: #{forward.5} parent=27 // pred_region
          %s188 = smul.u32 512, %s12
          %p189 = scmp.lt.s32.totalorder %s188, 2047
          %s190 = scalar_select %p189, %s188, 2047
          %s191 = smul.addr %s190, 2
          %s192 = smul.addr %s191, 8
          %s193 = scalar_lea.vmem %s1, %s192
          %s194 = smul.u32 512, %s12
        $region36: #{forward.5} parent=27 // pred_fallthru
          _
      $region28: #{forward.5} parent=5 // pred_fallthru
        _
      %p195 = scmp.le.s32.totalorder 1, %s12
      %p196 = scmp.lt.s32.totalorder %s12, 5
      %p197 = pnand %p195, %p196
      %p198 = pneg %p197
      // Predicated region
      $region37: #{forward.5} parent=5 // pred_check
        _
      $region38: #{forward.5} parent=5 // pred_check_branch
        %200 = sbr.rel (%p197) target = $region40
      $region39: #{forward.5} parent=5 // pred_region
        %s201 = ssub.s32 %s12, 1
        %s202 = smul.u32 32, %s17
        %p203 = scmp.lt.s32.totalorder %s202, 127
        %s204 = scalar_select %p203, %s202, 127
        %s205 = smul.addr %s204, 2
        %s206 = scalar_lea.vmem %s0, %s205
        %p207 = pneg %p38
        %p208 = pneg %p35
        %s209 = smul.u32 512, %s17
        %p210 = scmp.lt.s32.totalorder %s209, 2047
        %s211 = scalar_select %p210, %s209, 2047
        %s212 = smul.addr %s211, 2
        %s213 = smul.addr %s212, 8
        %s214 = scalar_lea.vmem %s1, %s213
        %p215 = pneg %p64
        %p216 = pneg %p61
        %p217 = pneg %p85
        %p218 = pneg %p82
        %p219 = pneg %p106
        %p220 = pneg %p103
        %p221 = pneg %p127
        %p222 = pneg %p124
        %p223 = pneg %p148
        %p224 = pneg %p145
        %s225 = smul.u32 32, %s17
        %p226 = scmp.lt.s32.totalorder %s225, 127
        %s227 = scalar_select %p226, %s225, 127
        %s228 = smul.addr %s227, 2
        %s229 = scalar_lea.vmem %s0, %s228
        %s230 = smul.u32 32, %s17
        %s231 = smul.u32 512, %s17
        %p232 = scmp.lt.s32.totalorder %s231, 2047
        %s233 = scalar_select %p232, %s231, 2047
        %s234 = smul.addr %s233, 2
        %s235 = smul.addr %s234, 8
        %s236 = scalar_lea.vmem %s1, %s235
        %s237 = smul.u32 512, %s17
        %p238 = scmp.eq.s32.totalorder %s17, 0
        // Predicated region
        $region41: #{forward.5} parent=39 // pred_check
          %p239 = pneg %p238
        $region42: #{forward.5} parent=39 // pred_check_branch
          %241 = sbr.rel (%p239) target = $region44
        $region43: #{forward.5} parent=39 // pred_region
          %242 = vst [vmem:[#allocation2] sm:$0xf] 0.0
        $region44: #{forward.5} parent=39 // pred_fallthru
          _
        %v243 = vld [vmem:[#allocation2] sm:$0xf]
        %v244 = vld [vmem:[%s229] sm:$0xff]
        %v245 = vld [vmem:[%s229 + $0x8] sm:$0xff]
        %v246 = vld [vmem:[%s229 + $0x10] sm:$0xff]
        %v247 = vld [vmem:[%s229 + $0x18] sm:$0xff]
        %v248 = vld [vmem:[%s229 + $0x20] sm:$0xff]
        %v249 = vld [vmem:[%s229 + $0x28] sm:$0xff]
        %v250 = vld [vmem:[%s229 + $0x30] sm:$0xff]
        %v251 = vld [vmem:[%s229 + $0x38] sm:$0xff]
        %v252 = vld [vmem:[%s236] sm:$0xff]
        %v253 = vld [vmem:[%s236 + $0x8] sm:$0xff]
        %v254 = vld [vmem:[%s236 + $0x10] sm:$0xff]
        %v255 = vld [vmem:[%s236 + $0x18] sm:$0xff]
        %v256 = vld [vmem:[%s236 + $0x20] sm:$0xff]
        %v257 = vld [vmem:[%s236 + $0x28] sm:$0xff]
        %v258 = vld [vmem:[%s236 + $0x30] sm:$0xff]
        %v259 = vld [vmem:[%s236 + $0x38] sm:$0xff]
        %v260 = vld [vmem:[%s236 + $0x40] sm:$0xff]
        %v261 = vld [vmem:[%s236 + $0x48] sm:$0xff]
        %v262 = vld [vmem:[%s236 + $0x50] sm:$0xff]
        %v263 = vld [vmem:[%s236 + $0x58] sm:$0xff]
        %v264 = vld [vmem:[%s236 + $0x60] sm:$0xff]
        %v265 = vld [vmem:[%s236 + $0x68] sm:$0xff]
        %v266 = vld [vmem:[%s236 + $0x70] sm:$0xff]
        %v267 = vld [vmem:[%s236 + $0x78] sm:$0xff]
        %v268 = vld [vmem:[%s236 + $0x80] sm:$0xff]
        %v269 = vld [vmem:[%s236 + $0x88] sm:$0xff]
        %v270 = vld [vmem:[%s236 + $0x90] sm:$0xff]
        %v271 = vld [vmem:[%s236 + $0x98] sm:$0xff]
        %v272 = vld [vmem:[%s236 + $0xa0] sm:$0xff]
        %v273 = vld [vmem:[%s236 + $0xa8] sm:$0xff]
        %v274 = vld [vmem:[%s236 + $0xb0] sm:$0xff]
        %v275 = vld [vmem:[%s236 + $0xb8] sm:$0xff]
        %v276 = vld [vmem:[%s236 + $0xc0] sm:$0xff]
        %v277 = vld [vmem:[%s236 + $0xc8] sm:$0xff]
        %v278 = vld [vmem:[%s236 + $0xd0] sm:$0xff]
        %v279 = vld [vmem:[%s236 + $0xd8] sm:$0xff]
        %v280 = vld [vmem:[%s236 + $0xe0] sm:$0xff]
        %v281 = vld [vmem:[%s236 + $0xe8] sm:$0xff]
        %v282 = vld [vmem:[%s236 + $0xf0] sm:$0xff]
        %v283 = vld [vmem:[%s236 + $0xf8] sm:$0xff]
        %v284 = vld [vmem:[%s236 + $0x100] sm:$0xff]
        %v285 = vld [vmem:[%s236 + $0x108] sm:$0xff]
        %v286 = vld [vmem:[%s236 + $0x110] sm:$0xff]
        %v287 = vld [vmem:[%s236 + $0x118] sm:$0xff]
        %v288 = vld [vmem:[%s236 + $0x120] sm:$0xff]
        %v289 = vld [vmem:[%s236 + $0x128] sm:$0xff]
        %v290 = vld [vmem:[%s236 + $0x130] sm:$0xff]
        %v291 = vld [vmem:[%s236 + $0x138] sm:$0xff]
        %v292 = vld [vmem:[%s236 + $0x140] sm:$0xff]
        %v293 = vld [vmem:[%s236 + $0x148] sm:$0xff]
        %v294 = vld [vmem:[%s236 + $0x150] sm:$0xff]
        %v295 = vld [vmem:[%s236 + $0x158] sm:$0xff]
        %v296 = vld [vmem:[%s236 + $0x160] sm:$0xff]
        %v297 = vld [vmem:[%s236 + $0x168] sm:$0xff]
        %v298 = vld [vmem:[%s236 + $0x170] sm:$0xff]
        %v299 = vld [vmem:[%s236 + $0x178] sm:$0xff]
        %v300 = vld [vmem:[%s236 + $0x180] sm:$0xff]
        %v301 = vld [vmem:[%s236 + $0x188] sm:$0xff]
        %v302 = vld [vmem:[%s236 + $0x190] sm:$0xff]
        %v303 = vld [vmem:[%s236 + $0x198] sm:$0xff]
        %v304 = vld [vmem:[%s236 + $0x1a0] sm:$0xff]
        %v305 = vld [vmem:[%s236 + $0x1a8] sm:$0xff]
        %v306 = vld [vmem:[%s236 + $0x1b0] sm:$0xff]
        %v307 = vld [vmem:[%s236 + $0x1b8] sm:$0xff]
        %v308 = vld [vmem:[%s236 + $0x1c0] sm:$0xff]
        %v309 = vld [vmem:[%s236 + $0x1c8] sm:$0xff]
        %v310 = vld [vmem:[%s236 + $0x1d0] sm:$0xff]
        %v311 = vld [vmem:[%s236 + $0x1d8] sm:$0xff]
        %v312 = vld [vmem:[%s236 + $0x1e0] sm:$0xff]
        %v313 = vld [vmem:[%s236 + $0x1e8] sm:$0xff]
        %v314 = vld [vmem:[%s236 + $0x1f0] sm:$0xff]
        %v315 = vld [vmem:[%s236 + $0x1f8] sm:$0xff]
        %v316 = vld [vmem:[%s236 + $0x200] sm:$0xff]
        %v317 = vld [vmem:[%s236 + $0x208] sm:$0xff]
        %v318 = vld [vmem:[%s236 + $0x210] sm:$0xff]
        %v319 = vld [vmem:[%s236 + $0x218] sm:$0xff]
        %v320 = vld [vmem:[%s236 + $0x220] sm:$0xff]
        %v321 = vld [vmem:[%s236 + $0x228] sm:$0xff]
        %v322 = vld [vmem:[%s236 + $0x230] sm:$0xff]
        %v323 = vld [vmem:[%s236 + $0x238] sm:$0xff]
        %v324 = vld [vmem:[%s236 + $0x240] sm:$0xff]
        %v325 = vld [vmem:[%s236 + $0x248] sm:$0xff]
        %v326 = vld [vmem:[%s236 + $0x250] sm:$0xff]
        %v327 = vld [vmem:[%s236 + $0x258] sm:$0xff]
        %v328 = vld [vmem:[%s236 + $0x260] sm:$0xff]
        %v329 = vld [vmem:[%s236 + $0x268] sm:$0xff]
        %v330 = vld [vmem:[%s236 + $0x270] sm:$0xff]
        %v331 = vld [vmem:[%s236 + $0x278] sm:$0xff]
        %v332 = vld [vmem:[%s236 + $0x280] sm:$0xff]
        %v333 = vld [vmem:[%s236 + $0x288] sm:$0xff]
        %v334 = vld [vmem:[%s236 + $0x290] sm:$0xff]
        %v335 = vld [vmem:[%s236 + $0x298] sm:$0xff]
        %v336 = vld [vmem:[%s236 + $0x2a0] sm:$0xff]
        %v337 = vld [vmem:[%s236 + $0x2a8] sm:$0xff]
        %v338 = vld [vmem:[%s236 + $0x2b0] sm:$0xff]
        %v339 = vld [vmem:[%s236 + $0x2b8] sm:$0xff]
        %v340 = vld [vmem:[%s236 + $0x2c0] sm:$0xff]
        %v341 = vld [vmem:[%s236 + $0x2c8] sm:$0xff]
        %v342 = vld [vmem:[%s236 + $0x2d0] sm:$0xff]
        %v343 = vld [vmem:[%s236 + $0x2d8] sm:$0xff]
        %v344 = vld [vmem:[%s236 + $0x2e0] sm:$0xff]
        %v345 = vld [vmem:[%s236 + $0x2e8] sm:$0xff]
        %v346 = vld [vmem:[%s236 + $0x2f0] sm:$0xff]
        %v347 = vld [vmem:[%s236 + $0x2f8] sm:$0xff]
        %v348 = vld [vmem:[%s236 + $0x300] sm:$0xff]
        %v349 = vld [vmem:[%s236 + $0x308] sm:$0xff]
        %v350 = vld [vmem:[%s236 + $0x310] sm:$0xff]
        %v351 = vld [vmem:[%s236 + $0x318] sm:$0xff]
        %v352 = vld [vmem:[%s236 + $0x320] sm:$0xff]
        %v353 = vld [vmem:[%s236 + $0x328] sm:$0xff]
        %v354 = vld [vmem:[%s236 + $0x330] sm:$0xff]
        %v355 = vld [vmem:[%s236 + $0x338] sm:$0xff]
        %v356 = vld [vmem:[%s236 + $0x340] sm:$0xff]
        %v357 = vld [vmem:[%s236 + $0x348] sm:$0xff]
        %v358 = vld [vmem:[%s236 + $0x350] sm:$0xff]
        %v359 = vld [vmem:[%s236 + $0x358] sm:$0xff]
        %v360 = vld [vmem:[%s236 + $0x360] sm:$0xff]
        %v361 = vld [vmem:[%s236 + $0x368] sm:$0xff]
        %v362 = vld [vmem:[%s236 + $0x370] sm:$0xff]
        %v363 = vld [vmem:[%s236 + $0x378] sm:$0xff]
        %v364 = vld [vmem:[%s236 + $0x380] sm:$0xff]
        %v365 = vld [vmem:[%s236 + $0x388] sm:$0xff]
        %v366 = vld [vmem:[%s236 + $0x390] sm:$0xff]
        %v367 = vld [vmem:[%s236 + $0x398] sm:$0xff]
        %v368 = vld [vmem:[%s236 + $0x3a0] sm:$0xff]
        %v369 = vld [vmem:[%s236 + $0x3a8] sm:$0xff]
        %v370 = vld [vmem:[%s236 + $0x3b0] sm:$0xff]
        %v371 = vld [vmem:[%s236 + $0x3b8] sm:$0xff]
        %v372 = vld [vmem:[%s236 + $0x3c0] sm:$0xff]
        %v373 = vld [vmem:[%s236 + $0x3c8] sm:$0xff]
        %v374 = vld [vmem:[%s236 + $0x3d0] sm:$0xff]
        %v375 = vld [vmem:[%s236 + $0x3d8] sm:$0xff]
        %v376 = vld [vmem:[%s236 + $0x3e0] sm:$0xff]
        %v377 = vld [vmem:[%s236 + $0x3e8] sm:$0xff]
        %v378 = vld [vmem:[%s236 + $0x3f0] sm:$0xff]
        %v379 = vld [vmem:[%s236 + $0x3f8] sm:$0xff]
        %v380 = vld [vmem:[%s236 + $0x400] sm:$0xff]
        %v381 = vld [vmem:[%s236 + $0x408] sm:$0xff]
        %v382 = vld [vmem:[%s236 + $0x410] sm:$0xff]
        %v383 = vld [vmem:[%s236 + $0x418] sm:$0xff]
        %v384 = vld [vmem:[%s236 + $0x420] sm:$0xff]
        %v385 = vld [vmem:[%s236 + $0x428] sm:$0xff]
        %v386 = vld [vmem:[%s236 + $0x430] sm:$0xff]
        %v387 = vld [vmem:[%s236 + $0x438] sm:$0xff]
        %v388 = vld [vmem:[%s236 + $0x440] sm:$0xff]
        %v389 = vld [vmem:[%s236 + $0x448] sm:$0xff]
        %v390 = vld [vmem:[%s236 + $0x450] sm:$0xff]
        %v391 = vld [vmem:[%s236 + $0x458] sm:$0xff]
        %v392 = vld [vmem:[%s236 + $0x460] sm:$0xff]
        %v393 = vld [vmem:[%s236 + $0x468] sm:$0xff]
        %v394 = vld [vmem:[%s236 + $0x470] sm:$0xff]
        %v395 = vld [vmem:[%s236 + $0x478] sm:$0xff]
        %v396 = vld [vmem:[%s236 + $0x480] sm:$0xff]
        %v397 = vld [vmem:[%s236 + $0x488] sm:$0xff]
        %v398 = vld [vmem:[%s236 + $0x490] sm:$0xff]
        %v399 = vld [vmem:[%s236 + $0x498] sm:$0xff]
        %v400 = vld [vmem:[%s236 + $0x4a0] sm:$0xff]
        %v401 = vld [vmem:[%s236 + $0x4a8] sm:$0xff]
        %v402 = vld [vmem:[%s236 + $0x4b0] sm:$0xff]
        %v403 = vld [vmem:[%s236 + $0x4b8] sm:$0xff]
        %v404 = vld [vmem:[%s236 + $0x4c0] sm:$0xff]
        %v405 = vld [vmem:[%s236 + $0x4c8] sm:$0xff]
        %v406 = vld [vmem:[%s236 + $0x4d0] sm:$0xff]
        %v407 = vld [vmem:[%s236 + $0x4d8] sm:$0xff]
        %v408 = vld [vmem:[%s236 + $0x4e0] sm:$0xff]
        %v409 = vld [vmem:[%s236 + $0x4e8] sm:$0xff]
        %v410 = vld [vmem:[%s236 + $0x4f0] sm:$0xff]
        %v411 = vld [vmem:[%s236 + $0x4f8] sm:$0xff]
        %v412 = vld [vmem:[%s236 + $0x500] sm:$0xff]
        %v413 = vld [vmem:[%s236 + $0x508] sm:$0xff]
        %v414 = vld [vmem:[%s236 + $0x510] sm:$0xff]
        %v415 = vld [vmem:[%s236 + $0x518] sm:$0xff]
        %v416 = vld [vmem:[%s236 + $0x520] sm:$0xff]
        %v417 = vld [vmem:[%s236 + $0x528] sm:$0xff]
        %v418 = vld [vmem:[%s236 + $0x530] sm:$0xff]
        %v419 = vld [vmem:[%s236 + $0x538] sm:$0xff]
        %v420 = vld [vmem:[%s236 + $0x540] sm:$0xff]
        %v421 = vld [vmem:[%s236 + $0x548] sm:$0xff]
        %v422 = vld [vmem:[%s236 + $0x550] sm:$0xff]
        %v423 = vld [vmem:[%s236 + $0x558] sm:$0xff]
        %v424 = vld [vmem:[%s236 + $0x560] sm:$0xff]
        %v425 = vld [vmem:[%s236 + $0x568] sm:$0xff]
        %v426 = vld [vmem:[%s236 + $0x570] sm:$0xff]
        %v427 = vld [vmem:[%s236 + $0x578] sm:$0xff]
        %v428 = vld [vmem:[%s236 + $0x580] sm:$0xff]
        %v429 = vld [vmem:[%s236 + $0x588] sm:$0xff]
        %v430 = vld [vmem:[%s236 + $0x590] sm:$0xff]
        %v431 = vld [vmem:[%s236 + $0x598] sm:$0xff]
        %v432 = vld [vmem:[%s236 + $0x5a0] sm:$0xff]
        %v433 = vld [vmem:[%s236 + $0x5a8] sm:$0xff]
        %v434 = vld [vmem:[%s236 + $0x5b0] sm:$0xff]
        %v435 = vld [vmem:[%s236 + $0x5b8] sm:$0xff]
        %v436 = vld [vmem:[%s236 + $0x5c0] sm:$0xff]
        %v437 = vld [vmem:[%s236 + $0x5c8] sm:$0xff]
        %v438 = vld [vmem:[%s236 + $0x5d0] sm:$0xff]
        %v439 = vld [vmem:[%s236 + $0x5d8] sm:$0xff]
        %v440 = vld [vmem:[%s236 + $0x5e0] sm:$0xff]
        %v441 = vld [vmem:[%s236 + $0x5e8] sm:$0xff]
        %v442 = vld [vmem:[%s236 + $0x5f0] sm:$0xff]
        %v443 = vld [vmem:[%s236 + $0x5f8] sm:$0xff]
        %v444 = vld [vmem:[%s236 + $0x600] sm:$0xff]
        %v445 = vld [vmem:[%s236 + $0x608] sm:$0xff]
        %v446 = vld [vmem:[%s236 + $0x610] sm:$0xff]
        %v447 = vld [vmem:[%s236 + $0x618] sm:$0xff]
        %v448 = vld [vmem:[%s236 + $0x620] sm:$0xff]
        %v449 = vld [vmem:[%s236 + $0x628] sm:$0xff]
        %v450 = vld [vmem:[%s236 + $0x630] sm:$0xff]
        %v451 = vld [vmem:[%s236 + $0x638] sm:$0xff]
        %v452 = vld [vmem:[%s236 + $0x640] sm:$0xff]
        %v453 = vld [vmem:[%s236 + $0x648] sm:$0xff]
        %v454 = vld [vmem:[%s236 + $0x650] sm:$0xff]
        %v455 = vld [vmem:[%s236 + $0x658] sm:$0xff]
        %v456 = vld [vmem:[%s236 + $0x660] sm:$0xff]
        %v457 = vld [vmem:[%s236 + $0x668] sm:$0xff]
        %v458 = vld [vmem:[%s236 + $0x670] sm:$0xff]
        %v459 = vld [vmem:[%s236 + $0x678] sm:$0xff]
        %v460 = vld [vmem:[%s236 + $0x680] sm:$0xff]
        %v461 = vld [vmem:[%s236 + $0x688] sm:$0xff]
        %v462 = vld [vmem:[%s236 + $0x690] sm:$0xff]
        %v463 = vld [vmem:[%s236 + $0x698] sm:$0xff]
        %v464 = vld [vmem:[%s236 + $0x6a0] sm:$0xff]
        %v465 = vld [vmem:[%s236 + $0x6a8] sm:$0xff]
        %v466 = vld [vmem:[%s236 + $0x6b0] sm:$0xff]
        %v467 = vld [vmem:[%s236 + $0x6b8] sm:$0xff]
        %v468 = vld [vmem:[%s236 + $0x6c0] sm:$0xff]
        %v469 = vld [vmem:[%s236 + $0x6c8] sm:$0xff]
        %v470 = vld [vmem:[%s236 + $0x6d0] sm:$0xff]
        %v471 = vld [vmem:[%s236 + $0x6d8] sm:$0xff]
        %v472 = vld [vmem:[%s236 + $0x6e0] sm:$0xff]
        %v473 = vld [vmem:[%s236 + $0x6e8] sm:$0xff]
        %v474 = vld [vmem:[%s236 + $0x6f0] sm:$0xff]
        %v475 = vld [vmem:[%s236 + $0x6f8] sm:$0xff]
        %v476 = vld [vmem:[%s236 + $0x700] sm:$0xff]
        %v477 = vld [vmem:[%s236 + $0x708] sm:$0xff]
        %v478 = vld [vmem:[%s236 + $0x710] sm:$0xff]
        %v479 = vld [vmem:[%s236 + $0x718] sm:$0xff]
        %v480 = vld [vmem:[%s236 + $0x720] sm:$0xff]
        %v481 = vld [vmem:[%s236 + $0x728] sm:$0xff]
        %v482 = vld [vmem:[%s236 + $0x730] sm:$0xff]
        %v483 = vld [vmem:[%s236 + $0x738] sm:$0xff]
        %v484 = vld [vmem:[%s236 + $0x740] sm:$0xff]
        %v485 = vld [vmem:[%s236 + $0x748] sm:$0xff]
        %v486 = vld [vmem:[%s236 + $0x750] sm:$0xff]
        %v487 = vld [vmem:[%s236 + $0x758] sm:$0xff]
        %v488 = vld [vmem:[%s236 + $0x760] sm:$0xff]
        %v489 = vld [vmem:[%s236 + $0x768] sm:$0xff]
        %v490 = vld [vmem:[%s236 + $0x770] sm:$0xff]
        %v491 = vld [vmem:[%s236 + $0x778] sm:$0xff]
        %v492 = vld [vmem:[%s236 + $0x780] sm:$0xff]
        %v493 = vld [vmem:[%s236 + $0x788] sm:$0xff]
        %v494 = vld [vmem:[%s236 + $0x790] sm:$0xff]
        %v495 = vld [vmem:[%s236 + $0x798] sm:$0xff]
        %v496 = vld [vmem:[%s236 + $0x7a0] sm:$0xff]
        %v497 = vld [vmem:[%s236 + $0x7a8] sm:$0xff]
        %v498 = vld [vmem:[%s236 + $0x7b0] sm:$0xff]
        %v499 = vld [vmem:[%s236 + $0x7b8] sm:$0xff]
        %v500 = vld [vmem:[%s236 + $0x7c0] sm:$0xff]
        %v501 = vld [vmem:[%s236 + $0x7c8] sm:$0xff]
        %v502 = vld [vmem:[%s236 + $0x7d0] sm:$0xff]
        %v503 = vld [vmem:[%s236 + $0x7d8] sm:$0xff]
        %v504 = vld [vmem:[%s236 + $0x7e0] sm:$0xff]
        %v505 = vld [vmem:[%s236 + $0x7e8] sm:$0xff]
        %v506 = vld [vmem:[%s236 + $0x7f0] sm:$0xff]
        %v507 = vld [vmem:[%s236 + $0x7f8] sm:$0xff]
        %v508 = vld [vmem:[%s236 + $0x800] sm:$0xff]
        %v509 = vld [vmem:[%s236 + $0x808] sm:$0xff]
        %v510 = vld [vmem:[%s236 + $0x810] sm:$0xff]
        %v511 = vld [vmem:[%s236 + $0x818] sm:$0xff]
        %v512 = vld [vmem:[%s236 + $0x820] sm:$0xff]
        %v513 = vld [vmem:[%s236 + $0x828] sm:$0xff]
        %v514 = vld [vmem:[%s236 + $0x830] sm:$0xff]
        %v515 = vld [vmem:[%s236 + $0x838] sm:$0xff]
        %v516 = vld [vmem:[%s236 + $0x840] sm:$0xff]
        %v517 = vld [vmem:[%s236 + $0x848] sm:$0xff]
        %v518 = vld [vmem:[%s236 + $0x850] sm:$0xff]
        %v519 = vld [vmem:[%s236 + $0x858] sm:$0xff]
        %v520 = vld [vmem:[%s236 + $0x860] sm:$0xff]
        %v521 = vld [vmem:[%s236 + $0x868] sm:$0xff]
        %v522 = vld [vmem:[%s236 + $0x870] sm:$0xff]
        %v523 = vld [vmem:[%s236 + $0x878] sm:$0xff]
        %v524 = vld [vmem:[%s236 + $0x880] sm:$0xff]
        %v525 = vld [vmem:[%s236 + $0x888] sm:$0xff]
        %v526 = vld [vmem:[%s236 + $0x890] sm:$0xff]
        %v527 = vld [vmem:[%s236 + $0x898] sm:$0xff]
        %v528 = vld [vmem:[%s236 + $0x8a0] sm:$0xff]
        %v529 = vld [vmem:[%s236 + $0x8a8] sm:$0xff]
        %v530 = vld [vmem:[%s236 + $0x8b0] sm:$0xff]
        %v531 = vld [vmem:[%s236 + $0x8b8] sm:$0xff]
        %v532 = vld [vmem:[%s236 + $0x8c0] sm:$0xff]
        %v533 = vld [vmem:[%s236 + $0x8c8] sm:$0xff]
        %v534 = vld [vmem:[%s236 + $0x8d0] sm:$0xff]
        %v535 = vld [vmem:[%s236 + $0x8d8] sm:$0xff]
        %v536 = vld [vmem:[%s236 + $0x8e0] sm:$0xff]
        %v537 = vld [vmem:[%s236 + $0x8e8] sm:$0xff]
        %v538 = vld [vmem:[%s236 + $0x8f0] sm:$0xff]
        %v539 = vld [vmem:[%s236 + $0x8f8] sm:$0xff]
        %v540 = vld [vmem:[%s236 + $0x900] sm:$0xff]
        %v541 = vld [vmem:[%s236 + $0x908] sm:$0xff]
        %v542 = vld [vmem:[%s236 + $0x910] sm:$0xff]
        %v543 = vld [vmem:[%s236 + $0x918] sm:$0xff]
        %v544 = vld [vmem:[%s236 + $0x920] sm:$0xff]
        %v545 = vld [vmem:[%s236 + $0x928] sm:$0xff]
        %v546 = vld [vmem:[%s236 + $0x930] sm:$0xff]
        %v547 = vld [vmem:[%s236 + $0x938] sm:$0xff]
        %v548 = vld [vmem:[%s236 + $0x940] sm:$0xff]
        %v549 = vld [vmem:[%s236 + $0x948] sm:$0xff]
        %v550 = vld [vmem:[%s236 + $0x950] sm:$0xff]
        %v551 = vld [vmem:[%s236 + $0x958] sm:$0xff]
        %v552 = vld [vmem:[%s236 + $0x960] sm:$0xff]
        %v553 = vld [vmem:[%s236 + $0x968] sm:$0xff]
        %v554 = vld [vmem:[%s236 + $0x970] sm:$0xff]
        %v555 = vld [vmem:[%s236 + $0x978] sm:$0xff]
        %v556 = vld [vmem:[%s236 + $0x980] sm:$0xff]
        %v557 = vld [vmem:[%s236 + $0x988] sm:$0xff]
        %v558 = vld [vmem:[%s236 + $0x990] sm:$0xff]
        %v559 = vld [vmem:[%s236 + $0x998] sm:$0xff]
        %v560 = vld [vmem:[%s236 + $0x9a0] sm:$0xff]
        %v561 = vld [vmem:[%s236 + $0x9a8] sm:$0xff]
        %v562 = vld [vmem:[%s236 + $0x9b0] sm:$0xff]
        %v563 = vld [vmem:[%s236 + $0x9b8] sm:$0xff]
        %v564 = vld [vmem:[%s236 + $0x9c0] sm:$0xff]
        %v565 = vld [vmem:[%s236 + $0x9c8] sm:$0xff]
        %v566 = vld [vmem:[%s236 + $0x9d0] sm:$0xff]
        %v567 = vld [vmem:[%s236 + $0x9d8] sm:$0xff]
        %v568 = vld [vmem:[%s236 + $0x9e0] sm:$0xff]
        %v569 = vld [vmem:[%s236 + $0x9e8] sm:$0xff]
        %v570 = vld [vmem:[%s236 + $0x9f0] sm:$0xff]
        %v571 = vld [vmem:[%s236 + $0x9f8] sm:$0xff]
        %v572 = vld [vmem:[%s236 + $0xa00] sm:$0xff]
        %v573 = vld [vmem:[%s236 + $0xa08] sm:$0xff]
        %v574 = vld [vmem:[%s236 + $0xa10] sm:$0xff]
        %v575 = vld [vmem:[%s236 + $0xa18] sm:$0xff]
        %v576 = vld [vmem:[%s236 + $0xa20] sm:$0xff]
        %v577 = vld [vmem:[%s236 + $0xa28] sm:$0xff]
        %v578 = vld [vmem:[%s236 + $0xa30] sm:$0xff]
        %v579 = vld [vmem:[%s236 + $0xa38] sm:$0xff]
        %v580 = vld [vmem:[%s236 + $0xa40] sm:$0xff]
        %v581 = vld [vmem:[%s236 + $0xa48] sm:$0xff]
        %v582 = vld [vmem:[%s236 + $0xa50] sm:$0xff]
        %v583 = vld [vmem:[%s236 + $0xa58] sm:$0xff]
        %v584 = vld [vmem:[%s236 + $0xa60] sm:$0xff]
        %v585 = vld [vmem:[%s236 + $0xa68] sm:$0xff]
        %v586 = vld [vmem:[%s236 + $0xa70] sm:$0xff]
        %v587 = vld [vmem:[%s236 + $0xa78] sm:$0xff]
        %v588 = vld [vmem:[%s236 + $0xa80] sm:$0xff]
        %v589 = vld [vmem:[%s236 + $0xa88] sm:$0xff]
        %v590 = vld [vmem:[%s236 + $0xa90] sm:$0xff]
        %v591 = vld [vmem:[%s236 + $0xa98] sm:$0xff]
        %v592 = vld [vmem:[%s236 + $0xaa0] sm:$0xff]
        %v593 = vld [vmem:[%s236 + $0xaa8] sm:$0xff]
        %v594 = vld [vmem:[%s236 + $0xab0] sm:$0xff]
        %v595 = vld [vmem:[%s236 + $0xab8] sm:$0xff]
        %v596 = vld [vmem:[%s236 + $0xac0] sm:$0xff]
        %v597 = vld [vmem:[%s236 + $0xac8] sm:$0xff]
        %v598 = vld [vmem:[%s236 + $0xad0] sm:$0xff]
        %v599 = vld [vmem:[%s236 + $0xad8] sm:$0xff]
        %v600 = vld [vmem:[%s236 + $0xae0] sm:$0xff]
        %v601 = vld [vmem:[%s236 + $0xae8] sm:$0xff]
        %v602 = vld [vmem:[%s236 + $0xaf0] sm:$0xff]
        %v603 = vld [vmem:[%s236 + $0xaf8] sm:$0xff]
        %v604 = vld [vmem:[%s236 + $0xb00] sm:$0xff]
        %v605 = vld [vmem:[%s236 + $0xb08] sm:$0xff]
        %v606 = vld [vmem:[%s236 + $0xb10] sm:$0xff]
        %v607 = vld [vmem:[%s236 + $0xb18] sm:$0xff]
        %v608 = vld [vmem:[%s236 + $0xb20] sm:$0xff]
        %v609 = vld [vmem:[%s236 + $0xb28] sm:$0xff]
        %v610 = vld [vmem:[%s236 + $0xb30] sm:$0xff]
        %v611 = vld [vmem:[%s236 + $0xb38] sm:$0xff]
        %v612 = vld [vmem:[%s236 + $0xb40] sm:$0xff]
        %v613 = vld [vmem:[%s236 + $0xb48] sm:$0xff]
        %v614 = vld [vmem:[%s236 + $0xb50] sm:$0xff]
        %v615 = vld [vmem:[%s236 + $0xb58] sm:$0xff]
        %v616 = vld [vmem:[%s236 + $0xb60] sm:$0xff]
        %v617 = vld [vmem:[%s236 + $0xb68] sm:$0xff]
        %v618 = vld [vmem:[%s236 + $0xb70] sm:$0xff]
        %v619 = vld [vmem:[%s236 + $0xb78] sm:$0xff]
        %v620 = vld [vmem:[%s236 + $0xb80] sm:$0xff]
        %v621 = vld [vmem:[%s236 + $0xb88] sm:$0xff]
        %v622 = vld [vmem:[%s236 + $0xb90] sm:$0xff]
        %v623 = vld [vmem:[%s236 + $0xb98] sm:$0xff]
        %v624 = vld [vmem:[%s236 + $0xba0] sm:$0xff]
        %v625 = vld [vmem:[%s236 + $0xba8] sm:$0xff]
        %v626 = vld [vmem:[%s236 + $0xbb0] sm:$0xff]
        %v627 = vld [vmem:[%s236 + $0xbb8] sm:$0xff]
        %v628 = vld [vmem:[%s236 + $0xbc0] sm:$0xff]
        %v629 = vld [vmem:[%s236 + $0xbc8] sm:$0xff]
        %v630 = vld [vmem:[%s236 + $0xbd0] sm:$0xff]
        %v631 = vld [vmem:[%s236 + $0xbd8] sm:$0xff]
        %v632 = vld [vmem:[%s236 + $0xbe0] sm:$0xff]
        %v633 = vld [vmem:[%s236 + $0xbe8] sm:$0xff]
        %v634 = vld [vmem:[%s236 + $0xbf0] sm:$0xff]
        %v635 = vld [vmem:[%s236 + $0xbf8] sm:$0xff]
        %v636 = vld [vmem:[%s236 + $0xc00] sm:$0xff]
        %v637 = vld [vmem:[%s236 + $0xc08] sm:$0xff]
        %v638 = vld [vmem:[%s236 + $0xc10] sm:$0xff]
        %v639 = vld [vmem:[%s236 + $0xc18] sm:$0xff]
        %v640 = vld [vmem:[%s236 + $0xc20] sm:$0xff]
        %v641 = vld [vmem:[%s236 + $0xc28] sm:$0xff]
        %v642 = vld [vmem:[%s236 + $0xc30] sm:$0xff]
        %v643 = vld [vmem:[%s236 + $0xc38] sm:$0xff]
        %v644 = vld [vmem:[%s236 + $0xc40] sm:$0xff]
        %v645 = vld [vmem:[%s236 + $0xc48] sm:$0xff]
        %v646 = vld [vmem:[%s236 + $0xc50] sm:$0xff]
        %v647 = vld [vmem:[%s236 + $0xc58] sm:$0xff]
        %v648 = vld [vmem:[%s236 + $0xc60] sm:$0xff]
        %v649 = vld [vmem:[%s236 + $0xc68] sm:$0xff]
        %v650 = vld [vmem:[%s236 + $0xc70] sm:$0xff]
        %v651 = vld [vmem:[%s236 + $0xc78] sm:$0xff]
        %v652 = vld [vmem:[%s236 + $0xc80] sm:$0xff]
        %v653 = vld [vmem:[%s236 + $0xc88] sm:$0xff]
        %v654 = vld [vmem:[%s236 + $0xc90] sm:$0xff]
        %v655 = vld [vmem:[%s236 + $0xc98] sm:$0xff]
        %v656 = vld [vmem:[%s236 + $0xca0] sm:$0xff]
        %v657 = vld [vmem:[%s236 + $0xca8] sm:$0xff]
        %v658 = vld [vmem:[%s236 + $0xcb0] sm:$0xff]
        %v659 = vld [vmem:[%s236 + $0xcb8] sm:$0xff]
        %v660 = vld [vmem:[%s236 + $0xcc0] sm:$0xff]
        %v661 = vld [vmem:[%s236 + $0xcc8] sm:$0xff]
        %v662 = vld [vmem:[%s236 + $0xcd0] sm:$0xff]
        %v663 = vld [vmem:[%s236 + $0xcd8] sm:$0xff]
        %v664 = vld [vmem:[%s236 + $0xce0] sm:$0xff]
        %v665 = vld [vmem:[%s236 + $0xce8] sm:$0xff]
        %v666 = vld [vmem:[%s236 + $0xcf0] sm:$0xff]
        %v667 = vld [vmem:[%s236 + $0xcf8] sm:$0xff]
        %v668 = vld [vmem:[%s236 + $0xd00] sm:$0xff]
        %v669 = vld [vmem:[%s236 + $0xd08] sm:$0xff]
        %v670 = vld [vmem:[%s236 + $0xd10] sm:$0xff]
        %v671 = vld [vmem:[%s236 + $0xd18] sm:$0xff]
        %v672 = vld [vmem:[%s236 + $0xd20] sm:$0xff]
        %v673 = vld [vmem:[%s236 + $0xd28] sm:$0xff]
        %v674 = vld [vmem:[%s236 + $0xd30] sm:$0xff]
        %v675 = vld [vmem:[%s236 + $0xd38] sm:$0xff]
        %v676 = vld [vmem:[%s236 + $0xd40] sm:$0xff]
        %v677 = vld [vmem:[%s236 + $0xd48] sm:$0xff]
        %v678 = vld [vmem:[%s236 + $0xd50] sm:$0xff]
        %v679 = vld [vmem:[%s236 + $0xd58] sm:$0xff]
        %v680 = vld [vmem:[%s236 + $0xd60] sm:$0xff]
        %v681 = vld [vmem:[%s236 + $0xd68] sm:$0xff]
        %v682 = vld [vmem:[%s236 + $0xd70] sm:$0xff]
        %v683 = vld [vmem:[%s236 + $0xd78] sm:$0xff]
        %v684 = vld [vmem:[%s236 + $0xd80] sm:$0xff]
        %v685 = vld [vmem:[%s236 + $0xd88] sm:$0xff]
        %v686 = vld [vmem:[%s236 + $0xd90] sm:$0xff]
        %v687 = vld [vmem:[%s236 + $0xd98] sm:$0xff]
        %v688 = vld [vmem:[%s236 + $0xda0] sm:$0xff]
        %v689 = vld [vmem:[%s236 + $0xda8] sm:$0xff]
        %v690 = vld [vmem:[%s236 + $0xdb0] sm:$0xff]
        %v691 = vld [vmem:[%s236 + $0xdb8] sm:$0xff]
        %v692 = vld [vmem:[%s236 + $0xdc0] sm:$0xff]
        %v693 = vld [vmem:[%s236 + $0xdc8] sm:$0xff]
        %v694 = vld [vmem:[%s236 + $0xdd0] sm:$0xff]
        %v695 = vld [vmem:[%s236 + $0xdd8] sm:$0xff]
        %v696 = vld [vmem:[%s236 + $0xde0] sm:$0xff]
        %v697 = vld [vmem:[%s236 + $0xde8] sm:$0xff]
        %v698 = vld [vmem:[%s236 + $0xdf0] sm:$0xff]
        %v699 = vld [vmem:[%s236 + $0xdf8] sm:$0xff]
        %v700 = vld [vmem:[%s236 + $0xe00] sm:$0xff]
        %v701 = vld [vmem:[%s236 + $0xe08] sm:$0xff]
        %v702 = vld [vmem:[%s236 + $0xe10] sm:$0xff]
        %v703 = vld [vmem:[%s236 + $0xe18] sm:$0xff]
        %v704 = vld [vmem:[%s236 + $0xe20] sm:$0xff]
        %v705 = vld [vmem:[%s236 + $0xe28] sm:$0xff]
        %v706 = vld [vmem:[%s236 + $0xe30] sm:$0xff]
        %v707 = vld [vmem:[%s236 + $0xe38] sm:$0xff]
        %v708 = vld [vmem:[%s236 + $0xe40] sm:$0xff]
        %v709 = vld [vmem:[%s236 + $0xe48] sm:$0xff]
        %v710 = vld [vmem:[%s236 + $0xe50] sm:$0xff]
        %v711 = vld [vmem:[%s236 + $0xe58] sm:$0xff]
        %v712 = vld [vmem:[%s236 + $0xe60] sm:$0xff]
        %v713 = vld [vmem:[%s236 + $0xe68] sm:$0xff]
        %v714 = vld [vmem:[%s236 + $0xe70] sm:$0xff]
        %v715 = vld [vmem:[%s236 + $0xe78] sm:$0xff]
        %v716 = vld [vmem:[%s236 + $0xe80] sm:$0xff]
        %v717 = vld [vmem:[%s236 + $0xe88] sm:$0xff]
        %v718 = vld [vmem:[%s236 + $0xe90] sm:$0xff]
        %v719 = vld [vmem:[%s236 + $0xe98] sm:$0xff]
        %v720 = vld [vmem:[%s236 + $0xea0] sm:$0xff]
        %v721 = vld [vmem:[%s236 + $0xea8] sm:$0xff]
        %v722 = vld [vmem:[%s236 + $0xeb0] sm:$0xff]
        %v723 = vld [vmem:[%s236 + $0xeb8] sm:$0xff]
        %v724 = vld [vmem:[%s236 + $0xec0] sm:$0xff]
        %v725 = vld [vmem:[%s236 + $0xec8] sm:$0xff]
        %v726 = vld [vmem:[%s236 + $0xed0] sm:$0xff]
        %v727 = vld [vmem:[%s236 + $0xed8] sm:$0xff]
        %v728 = vld [vmem:[%s236 + $0xee0] sm:$0xff]
        %v729 = vld [vmem:[%s236 + $0xee8] sm:$0xff]
        %v730 = vld [vmem:[%s236 + $0xef0] sm:$0xff]
        %v731 = vld [vmem:[%s236 + $0xef8] sm:$0xff]
        %v732 = vld [vmem:[%s236 + $0xf00] sm:$0xff]
        %v733 = vld [vmem:[%s236 + $0xf08] sm:$0xff]
        %v734 = vld [vmem:[%s236 + $0xf10] sm:$0xff]
        %v735 = vld [vmem:[%s236 + $0xf18] sm:$0xff]
        %v736 = vld [vmem:[%s236 + $0xf20] sm:$0xff]
        %v737 = vld [vmem:[%s236 + $0xf28] sm:$0xff]
        %v738 = vld [vmem:[%s236 + $0xf30] sm:$0xff]
        %v739 = vld [vmem:[%s236 + $0xf38] sm:$0xff]
        %v740 = vld [vmem:[%s236 + $0xf40] sm:$0xff]
        %v741 = vld [vmem:[%s236 + $0xf48] sm:$0xff]
        %v742 = vld [vmem:[%s236 + $0xf50] sm:$0xff]
        %v743 = vld [vmem:[%s236 + $0xf58] sm:$0xff]
        %v744 = vld [vmem:[%s236 + $0xf60] sm:$0xff]
        %v745 = vld [vmem:[%s236 + $0xf68] sm:$0xff]
        %v746 = vld [vmem:[%s236 + $0xf70] sm:$0xff]
        %v747 = vld [vmem:[%s236 + $0xf78] sm:$0xff]
        %v748 = vld [vmem:[%s236 + $0xf80] sm:$0xff]
        %v749 = vld [vmem:[%s236 + $0xf88] sm:$0xff]
        %v750 = vld [vmem:[%s236 + $0xf90] sm:$0xff]
        %v751 = vld [vmem:[%s236 + $0xf98] sm:$0xff]
        %v752 = vld [vmem:[%s236 + $0xfa0] sm:$0xff]
        %v753 = vld [vmem:[%s236 + $0xfa8] sm:$0xff]
        %v754 = vld [vmem:[%s236 + $0xfb0] sm:$0xff]
        %v755 = vld [vmem:[%s236 + $0xfb8] sm:$0xff]
        %v756 = vld [vmem:[%s236 + $0xfc0] sm:$0xff]
        %v757 = vld [vmem:[%s236 + $0xfc8] sm:$0xff]
        %v758 = vld [vmem:[%s236 + $0xfd0] sm:$0xff]
        %v759 = vld [vmem:[%s236 + $0xfd8] sm:$0xff]
        %v760 = vld [vmem:[%s236 + $0xfe0] sm:$0xff]
        %v761 = vld [vmem:[%s236 + $0xfe8] sm:$0xff]
        %v762 = vld [vmem:[%s236 + $0xff0] sm:$0xff]
        %v763 = vld [vmem:[%s236 + $0xff8] sm:$0xff]
        %v764 = vld [vmem:[%s236 + $0x1000] sm:$0xff]
        %v765 = vld [vmem:[%s236 + $0x1008] sm:$0xff]
        %v766 = vld [vmem:[%s236 + $0x1010] sm:$0xff]
        %v767 = vld [vmem:[%s236 + $0x1018] sm:$0xff]
        %v768 = vld [vmem:[%s236 + $0x1020] sm:$0xff]
        %v769 = vld [vmem:[%s236 + $0x1028] sm:$0xff]
        %v770 = vld [vmem:[%s236 + $0x1030] sm:$0xff]
        %v771 = vld [vmem:[%s236 + $0x1038] sm:$0xff]
        %v772 = vld [vmem:[%s236 + $0x1040] sm:$0xff]
        %v773 = vld [vmem:[%s236 + $0x1048] sm:$0xff]
        %v774 = vld [vmem:[%s236 + $0x1050] sm:$0xff]
        %v775 = vld [vmem:[%s236 + $0x1058] sm:$0xff]
        %v776 = vld [vmem:[%s236 + $0x1060] sm:$0xff]
        %v777 = vld [vmem:[%s236 + $0x1068] sm:$0xff]
        %v778 = vld [vmem:[%s236 + $0x1070] sm:$0xff]
        %v779 = vld [vmem:[%s236 + $0x1078] sm:$0xff]
        %v780 = vld [vmem:[%s236 + $0x1080] sm:$0xff]
        %v781 = vld [vmem:[%s236 + $0x1088] sm:$0xff]
        %v782 = vld [vmem:[%s236 + $0x1090] sm:$0xff]
        %v783 = vld [vmem:[%s236 + $0x1098] sm:$0xff]
        %v784 = vld [vmem:[%s236 + $0x10a0] sm:$0xff]
        %v785 = vld [vmem:[%s236 + $0x10a8] sm:$0xff]
        %v786 = vld [vmem:[%s236 + $0x10b0] sm:$0xff]
        %v787 = vld [vmem:[%s236 + $0x10b8] sm:$0xff]
        %v788 = vld [vmem:[%s236 + $0x10c0] sm:$0xff]
        %v789 = vld [vmem:[%s236 + $0x10c8] sm:$0xff]
        %v790 = vld [vmem:[%s236 + $0x10d0] sm:$0xff]
        %v791 = vld [vmem:[%s236 + $0x10d8] sm:$0xff]
        %v792 = vld [vmem:[%s236 + $0x10e0] sm:$0xff]
        %v793 = vld [vmem:[%s236 + $0x10e8] sm:$0xff]
        %v794 = vld [vmem:[%s236 + $0x10f0] sm:$0xff]
        %v795 = vld [vmem:[%s236 + $0x10f8] sm:$0xff]
        %v796 = vld [vmem:[%s236 + $0x1100] sm:$0xff]
        %v797 = vld [vmem:[%s236 + $0x1108] sm:$0xff]
        %v798 = vld [vmem:[%s236 + $0x1110] sm:$0xff]
        %v799 = vld [vmem:[%s236 + $0x1118] sm:$0xff]
        %v800 = vld [vmem:[%s236 + $0x1120] sm:$0xff]
        %v801 = vld [vmem:[%s236 + $0x1128] sm:$0xff]
        %v802 = vld [vmem:[%s236 + $0x1130] sm:$0xff]
        %v803 = vld [vmem:[%s236 + $0x1138] sm:$0xff]
        %v804 = vld [vmem:[%s236 + $0x1140] sm:$0xff]
        %v805 = vld [vmem:[%s236 + $0x1148] sm:$0xff]
        %v806 = vld [vmem:[%s236 + $0x1150] sm:$0xff]
        %v807 = vld [vmem:[%s236 + $0x1158] sm:$0xff]
        %v808 = vld [vmem:[%s236 + $0x1160] sm:$0xff]
        %v809 = vld [vmem:[%s236 + $0x1168] sm:$0xff]
        %v810 = vld [vmem:[%s236 + $0x1170] sm:$0xff]
        %v811 = vld [vmem:[%s236 + $0x1178] sm:$0xff]
        %v812 = vld [vmem:[%s236 + $0x1180] sm:$0xff]
        %v813 = vld [vmem:[%s236 + $0x1188] sm:$0xff]
        %v814 = vld [vmem:[%s236 + $0x1190] sm:$0xff]
        %v815 = vld [vmem:[%s236 + $0x1198] sm:$0xff]
        %v816 = vld [vmem:[%s236 + $0x11a0] sm:$0xff]
        %v817 = vld [vmem:[%s236 + $0x11a8] sm:$0xff]
        %v818 = vld [vmem:[%s236 + $0x11b0] sm:$0xff]
        %v819 = vld [vmem:[%s236 + $0x11b8] sm:$0xff]
        %v820 = vld [vmem:[%s236 + $0x11c0] sm:$0xff]
        %v821 = vld [vmem:[%s236 + $0x11c8] sm:$0xff]
        %v822 = vld [vmem:[%s236 + $0x11d0] sm:$0xff]
        %v823 = vld [vmem:[%s236 + $0x11d8] sm:$0xff]
        %v824 = vld [vmem:[%s236 + $0x11e0] sm:$0xff]
        %v825 = vld [vmem:[%s236 + $0x11e8] sm:$0xff]
        %v826 = vld [vmem:[%s236 + $0x11f0] sm:$0xff]
        %v827 = vld [vmem:[%s236 + $0x11f8] sm:$0xff]
        %v828 = vld [vmem:[%s236 + $0x1200] sm:$0xff]
        %v829 = vld [vmem:[%s236 + $0x1208] sm:$0xff]
        %v830 = vld [vmem:[%s236 + $0x1210] sm:$0xff]
        %v831 = vld [vmem:[%s236 + $0x1218] sm:$0xff]
        %v832 = vld [vmem:[%s236 + $0x1220] sm:$0xff]
        %v833 = vld [vmem:[%s236 + $0x1228] sm:$0xff]
        %v834 = vld [vmem:[%s236 + $0x1230] sm:$0xff]
        %v835 = vld [vmem:[%s236 + $0x1238] sm:$0xff]
        %v836 = vld [vmem:[%s236 + $0x1240] sm:$0xff]
        %v837 = vld [vmem:[%s236 + $0x1248] sm:$0xff]
        %v838 = vld [vmem:[%s236 + $0x1250] sm:$0xff]
        %v839 = vld [vmem:[%s236 + $0x1258] sm:$0xff]
        %v840 = vld [vmem:[%s236 + $0x1260] sm:$0xff]
        %v841 = vld [vmem:[%s236 + $0x1268] sm:$0xff]
        %v842 = vld [vmem:[%s236 + $0x1270] sm:$0xff]
        %v843 = vld [vmem:[%s236 + $0x1278] sm:$0xff]
        %v844 = vld [vmem:[%s236 + $0x1280] sm:$0xff]
        %v845 = vld [vmem:[%s236 + $0x1288] sm:$0xff]
        %v846 = vld [vmem:[%s236 + $0x1290] sm:$0xff]
        %v847 = vld [vmem:[%s236 + $0x1298] sm:$0xff]
        %v848 = vld [vmem:[%s236 + $0x12a0] sm:$0xff]
        %v849 = vld [vmem:[%s236 + $0x12a8] sm:$0xff]
        %v850 = vld [vmem:[%s236 + $0x12b0] sm:$0xff]
        %v851 = vld [vmem:[%s236 + $0x12b8] sm:$0xff]
        %v852 = vld [vmem:[%s236 + $0x12c0] sm:$0xff]
        %v853 = vld [vmem:[%s236 + $0x12c8] sm:$0xff]
        %v854 = vld [vmem:[%s236 + $0x12d0] sm:$0xff]
        %v855 = vld [vmem:[%s236 + $0x12d8] sm:$0xff]
        %v856 = vld [vmem:[%s236 + $0x12e0] sm:$0xff]
        %v857 = vld [vmem:[%s236 + $0x12e8] sm:$0xff]
        %v858 = vld [vmem:[%s236 + $0x12f0] sm:$0xff]
        %v859 = vld [vmem:[%s236 + $0x12f8] sm:$0xff]
        %v860 = vld [vmem:[%s236 + $0x1300] sm:$0xff]
        %v861 = vld [vmem:[%s236 + $0x1308] sm:$0xff]
        %v862 = vld [vmem:[%s236 + $0x1310] sm:$0xff]
        %v863 = vld [vmem:[%s236 + $0x1318] sm:$0xff]
        %v864 = vld [vmem:[%s236 + $0x1320] sm:$0xff]
        %v865 = vld [vmem:[%s236 + $0x1328] sm:$0xff]
        %v866 = vld [vmem:[%s236 + $0x1330] sm:$0xff]
        %v867 = vld [vmem:[%s236 + $0x1338] sm:$0xff]
        %v868 = vld [vmem:[%s236 + $0x1340] sm:$0xff]
        %v869 = vld [vmem:[%s236 + $0x1348] sm:$0xff]
        %v870 = vld [vmem:[%s236 + $0x1350] sm:$0xff]
        %v871 = vld [vmem:[%s236 + $0x1358] sm:$0xff]
        %v872 = vld [vmem:[%s236 + $0x1360] sm:$0xff]
        %v873 = vld [vmem:[%s236 + $0x1368] sm:$0xff]
        %v874 = vld [vmem:[%s236 + $0x1370] sm:$0xff]
        %v875 = vld [vmem:[%s236 + $0x1378] sm:$0xff]
        %v876 = vld [vmem:[%s236 + $0x1380] sm:$0xff]
        %v877 = vld [vmem:[%s236 + $0x1388] sm:$0xff]
        %v878 = vld [vmem:[%s236 + $0x1390] sm:$0xff]
        %v879 = vld [vmem:[%s236 + $0x1398] sm:$0xff]
        %v880 = vld [vmem:[%s236 + $0x13a0] sm:$0xff]
        %v881 = vld [vmem:[%s236 + $0x13a8] sm:$0xff]
        %v882 = vld [vmem:[%s236 + $0x13b0] sm:$0xff]
        %v883 = vld [vmem:[%s236 + $0x13b8] sm:$0xff]
        %v884 = vld [vmem:[%s236 + $0x13c0] sm:$0xff]
        %v885 = vld [vmem:[%s236 + $0x13c8] sm:$0xff]
        %v886 = vld [vmem:[%s236 + $0x13d0] sm:$0xff]
        %v887 = vld [vmem:[%s236 + $0x13d8] sm:$0xff]
        %v888 = vld [vmem:[%s236 + $0x13e0] sm:$0xff]
        %v889 = vld [vmem:[%s236 + $0x13e8] sm:$0xff]
        %v890 = vld [vmem:[%s236 + $0x13f0] sm:$0xff]
        %v891 = vld [vmem:[%s236 + $0x13f8] sm:$0xff]
        %v892 = vld [vmem:[%s236 + $0x1400] sm:$0xff]
        %v893 = vld [vmem:[%s236 + $0x1408] sm:$0xff]
        %v894 = vld [vmem:[%s236 + $0x1410] sm:$0xff]
        %v895 = vld [vmem:[%s236 + $0x1418] sm:$0xff]
        %v896 = vld [vmem:[%s236 + $0x1420] sm:$0xff]
        %v897 = vld [vmem:[%s236 + $0x1428] sm:$0xff]
        %v898 = vld [vmem:[%s236 + $0x1430] sm:$0xff]
        %v899 = vld [vmem:[%s236 + $0x1438] sm:$0xff]
        %v900 = vld [vmem:[%s236 + $0x1440] sm:$0xff]
        %v901 = vld [vmem:[%s236 + $0x1448] sm:$0xff]
        %v902 = vld [vmem:[%s236 + $0x1450] sm:$0xff]
        %v903 = vld [vmem:[%s236 + $0x1458] sm:$0xff]
        %v904 = vld [vmem:[%s236 + $0x1460] sm:$0xff]
        %v905 = vld [vmem:[%s236 + $0x1468] sm:$0xff]
        %v906 = vld [vmem:[%s236 + $0x1470] sm:$0xff]
        %v907 = vld [vmem:[%s236 + $0x1478] sm:$0xff]
        %v908 = vld [vmem:[%s236 + $0x1480] sm:$0xff]
        %v909 = vld [vmem:[%s236 + $0x1488] sm:$0xff]
        %v910 = vld [vmem:[%s236 + $0x1490] sm:$0xff]
        %v911 = vld [vmem:[%s236 + $0x1498] sm:$0xff]
        %v912 = vld [vmem:[%s236 + $0x14a0] sm:$0xff]
        %v913 = vld [vmem:[%s236 + $0x14a8] sm:$0xff]
        %v914 = vld [vmem:[%s236 + $0x14b0] sm:$0xff]
        %v915 = vld [vmem:[%s236 + $0x14b8] sm:$0xff]
        %v916 = vld [vmem:[%s236 + $0x14c0] sm:$0xff]
        %v917 = vld [vmem:[%s236 + $0x14c8] sm:$0xff]
        %v918 = vld [vmem:[%s236 + $0x14d0] sm:$0xff]
        %v919 = vld [vmem:[%s236 + $0x14d8] sm:$0xff]
        %v920 = vld [vmem:[%s236 + $0x14e0] sm:$0xff]
        %v921 = vld [vmem:[%s236 + $0x14e8] sm:$0xff]
        %v922 = vld [vmem:[%s236 + $0x14f0] sm:$0xff]
        %v923 = vld [vmem:[%s236 + $0x14f8] sm:$0xff]
        %v924 = vld [vmem:[%s236 + $0x1500] sm:$0xff]
        %v925 = vld [vmem:[%s236 + $0x1508] sm:$0xff]
        %v926 = vld [vmem:[%s236 + $0x1510] sm:$0xff]
        %v927 = vld [vmem:[%s236 + $0x1518] sm:$0xff]
        %v928 = vld [vmem:[%s236 + $0x1520] sm:$0xff]
        %v929 = vld [vmem:[%s236 + $0x1528] sm:$0xff]
        %v930 = vld [vmem:[%s236 + $0x1530] sm:$0xff]
        %v931 = vld [vmem:[%s236 + $0x1538] sm:$0xff]
        %v932 = vld [vmem:[%s236 + $0x1540] sm:$0xff]
        %v933 = vld [vmem:[%s236 + $0x1548] sm:$0xff]
        %v934 = vld [vmem:[%s236 + $0x1550] sm:$0xff]
        %v935 = vld [vmem:[%s236 + $0x1558] sm:$0xff]
        %v936 = vld [vmem:[%s236 + $0x1560] sm:$0xff]
        %v937 = vld [vmem:[%s236 + $0x1568] sm:$0xff]
        %v938 = vld [vmem:[%s236 + $0x1570] sm:$0xff]
        %v939 = vld [vmem:[%s236 + $0x1578] sm:$0xff]
        %v940 = vld [vmem:[%s236 + $0x1580] sm:$0xff]
        %v941 = vld [vmem:[%s236 + $0x1588] sm:$0xff]
        %v942 = vld [vmem:[%s236 + $0x1590] sm:$0xff]
        %v943 = vld [vmem:[%s236 + $0x1598] sm:$0xff]
        %v944 = vld [vmem:[%s236 + $0x15a0] sm:$0xff]
        %v945 = vld [vmem:[%s236 + $0x15a8] sm:$0xff]
        %v946 = vld [vmem:[%s236 + $0x15b0] sm:$0xff]
        %v947 = vld [vmem:[%s236 + $0x15b8] sm:$0xff]
        %v948 = vld [vmem:[%s236 + $0x15c0] sm:$0xff]
        %v949 = vld [vmem:[%s236 + $0x15c8] sm:$0xff]
        %v950 = vld [vmem:[%s236 + $0x15d0] sm:$0xff]
        %v951 = vld [vmem:[%s236 + $0x15d8] sm:$0xff]
        %v952 = vld [vmem:[%s236 + $0x15e0] sm:$0xff]
        %v953 = vld [vmem:[%s236 + $0x15e8] sm:$0xff]
        %v954 = vld [vmem:[%s236 + $0x15f0] sm:$0xff]
        %v955 = vld [vmem:[%s236 + $0x15f8] sm:$0xff]
        %v956 = vld [vmem:[%s236 + $0x1600] sm:$0xff]
        %v957 = vld [vmem:[%s236 + $0x1608] sm:$0xff]
        %v958 = vld [vmem:[%s236 + $0x1610] sm:$0xff]
        %v959 = vld [vmem:[%s236 + $0x1618] sm:$0xff]
        %v960 = vld [vmem:[%s236 + $0x1620] sm:$0xff]
        %v961 = vld [vmem:[%s236 + $0x1628] sm:$0xff]
        %v962 = vld [vmem:[%s236 + $0x1630] sm:$0xff]
        %v963 = vld [vmem:[%s236 + $0x1638] sm:$0xff]
        %v964 = vld [vmem:[%s236 + $0x1640] sm:$0xff]
        %v965 = vld [vmem:[%s236 + $0x1648] sm:$0xff]
        %v966 = vld [vmem:[%s236 + $0x1650] sm:$0xff]
        %v967 = vld [vmem:[%s236 + $0x1658] sm:$0xff]
        %v968 = vld [vmem:[%s236 + $0x1660] sm:$0xff]
        %v969 = vld [vmem:[%s236 + $0x1668] sm:$0xff]
        %v970 = vld [vmem:[%s236 + $0x1670] sm:$0xff]
        %v971 = vld [vmem:[%s236 + $0x1678] sm:$0xff]
        %v972 = vld [vmem:[%s236 + $0x1680] sm:$0xff]
        %v973 = vld [vmem:[%s236 + $0x1688] sm:$0xff]
        %v974 = vld [vmem:[%s236 + $0x1690] sm:$0xff]
        %v975 = vld [vmem:[%s236 + $0x1698] sm:$0xff]
        %v976 = vld [vmem:[%s236 + $0x16a0] sm:$0xff]
        %v977 = vld [vmem:[%s236 + $0x16a8] sm:$0xff]
        %v978 = vld [vmem:[%s236 + $0x16b0] sm:$0xff]
        %v979 = vld [vmem:[%s236 + $0x16b8] sm:$0xff]
        %v980 = vld [vmem:[%s236 + $0x16c0] sm:$0xff]
        %v981 = vld [vmem:[%s236 + $0x16c8] sm:$0xff]
        %v982 = vld [vmem:[%s236 + $0x16d0] sm:$0xff]
        %v983 = vld [vmem:[%s236 + $0x16d8] sm:$0xff]
        %v984 = vld [vmem:[%s236 + $0x16e0] sm:$0xff]
        %v985 = vld [vmem:[%s236 + $0x16e8] sm:$0xff]
        %v986 = vld [vmem:[%s236 + $0x16f0] sm:$0xff]
        %v987 = vld [vmem:[%s236 + $0x16f8] sm:$0xff]
        %v988 = vld [vmem:[%s236 + $0x1700] sm:$0xff]
        %v989 = vld [vmem:[%s236 + $0x1708] sm:$0xff]
        %v990 = vld [vmem:[%s236 + $0x1710] sm:$0xff]
        %v991 = vld [vmem:[%s236 + $0x1718] sm:$0xff]
        %v992 = vld [vmem:[%s236 + $0x1720] sm:$0xff]
        %v993 = vld [vmem:[%s236 + $0x1728] sm:$0xff]
        %v994 = vld [vmem:[%s236 + $0x1730] sm:$0xff]
        %v995 = vld [vmem:[%s236 + $0x1738] sm:$0xff]
        %v996 = vld [vmem:[%s236 + $0x1740] sm:$0xff]
        %v997 = vld [vmem:[%s236 + $0x1748] sm:$0xff]
        %v998 = vld [vmem:[%s236 + $0x1750] sm:$0xff]
        %v999 = vld [vmem:[%s236 + $0x1758] sm:$0xff]
        %v1000 = vld [vmem:[%s236 + $0x1760] sm:$0xff]
        %v1001 = vld [vmem:[%s236 + $0x1768] sm:$0xff]
        %v1002 = vld [vmem:[%s236 + $0x1770] sm:$0xff]
        %v1003 = vld [vmem:[%s236 + $0x1778] sm:$0xff]
        %v1004 = vld [vmem:[%s236 + $0x1780] sm:$0xff]
        %v1005 = vld [vmem:[%s236 + $0x1788] sm:$0xff]
        %v1006 = vld [vmem:[%s236 + $0x1790] sm:$0xff]
        %v1007 = vld [vmem:[%s236 + $0x1798] sm:$0xff]
        %v1008 = vld [vmem:[%s236 + $0x17a0] sm:$0xff]
        %v1009 = vld [vmem:[%s236 + $0x17a8] sm:$0xff]
        %v1010 = vld [vmem:[%s236 + $0x17b0] sm:$0xff]
        %v1011 = vld [vmem:[%s236 + $0x17b8] sm:$0xff]
        %v1012 = vld [vmem:[%s236 + $0x17c0] sm:$0xff]
        %v1013 = vld [vmem:[%s236 + $0x17c8] sm:$0xff]
        %v1014 = vld [vmem:[%s236 + $0x17d0] sm:$0xff]
        %v1015 = vld [vmem:[%s236 + $0x17d8] sm:$0xff]
        %v1016 = vld [vmem:[%s236 + $0x17e0] sm:$0xff]
        %v1017 = vld [vmem:[%s236 + $0x17e8] sm:$0xff]
        %v1018 = vld [vmem:[%s236 + $0x17f0] sm:$0xff]
        %v1019 = vld [vmem:[%s236 + $0x17f8] sm:$0xff]
        %v1020 = vld [vmem:[%s236 + $0x1800] sm:$0xff]
        %v1021 = vld [vmem:[%s236 + $0x1808] sm:$0xff]
        %v1022 = vld [vmem:[%s236 + $0x1810] sm:$0xff]
        %v1023 = vld [vmem:[%s236 + $0x1818] sm:$0xff]
        %v1024 = vld [vmem:[%s236 + $0x1820] sm:$0xff]
        %v1025 = vld [vmem:[%s236 + $0x1828] sm:$0xff]
        %v1026 = vld [vmem:[%s236 + $0x1830] sm:$0xff]
        %v1027 = vld [vmem:[%s236 + $0x1838] sm:$0xff]
        %v1028 = vld [vmem:[%s236 + $0x1840] sm:$0xff]
        %v1029 = vld [vmem:[%s236 + $0x1848] sm:$0xff]
        %v1030 = vld [vmem:[%s236 + $0x1850] sm:$0xff]
        %v1031 = vld [vmem:[%s236 + $0x1858] sm:$0xff]
        %v1032 = vld [vmem:[%s236 + $0x1860] sm:$0xff]
        %v1033 = vld [vmem:[%s236 + $0x1868] sm:$0xff]
        %v1034 = vld [vmem:[%s236 + $0x1870] sm:$0xff]
        %v1035 = vld [vmem:[%s236 + $0x1878] sm:$0xff]
        %v1036 = vld [vmem:[%s236 + $0x1880] sm:$0xff]
        %v1037 = vld [vmem:[%s236 + $0x1888] sm:$0xff]
        %v1038 = vld [vmem:[%s236 + $0x1890] sm:$0xff]
        %v1039 = vld [vmem:[%s236 + $0x1898] sm:$0xff]
        %v1040 = vld [vmem:[%s236 + $0x18a0] sm:$0xff]
        %v1041 = vld [vmem:[%s236 + $0x18a8] sm:$0xff]
        %v1042 = vld [vmem:[%s236 + $0x18b0] sm:$0xff]
        %v1043 = vld [vmem:[%s236 + $0x18b8] sm:$0xff]
        %v1044 = vld [vmem:[%s236 + $0x18c0] sm:$0xff]
        %v1045 = vld [vmem:[%s236 + $0x18c8] sm:$0xff]
        %v1046 = vld [vmem:[%s236 + $0x18d0] sm:$0xff]
        %v1047 = vld [vmem:[%s236 + $0x18d8] sm:$0xff]
        %v1048 = vld [vmem:[%s236 + $0x18e0] sm:$0xff]
        %v1049 = vld [vmem:[%s236 + $0x18e8] sm:$0xff]
        %v1050 = vld [vmem:[%s236 + $0x18f0] sm:$0xff]
        %v1051 = vld [vmem:[%s236 + $0x18f8] sm:$0xff]
        %v1052 = vld [vmem:[%s236 + $0x1900] sm:$0xff]
        %v1053 = vld [vmem:[%s236 + $0x1908] sm:$0xff]
        %v1054 = vld [vmem:[%s236 + $0x1910] sm:$0xff]
        %v1055 = vld [vmem:[%s236 + $0x1918] sm:$0xff]
        %v1056 = vld [vmem:[%s236 + $0x1920] sm:$0xff]
        %v1057 = vld [vmem:[%s236 + $0x1928] sm:$0xff]
        %v1058 = vld [vmem:[%s236 + $0x1930] sm:$0xff]
        %v1059 = vld [vmem:[%s236 + $0x1938] sm:$0xff]
        %v1060 = vld [vmem:[%s236 + $0x1940] sm:$0xff]
        %v1061 = vld [vmem:[%s236 + $0x1948] sm:$0xff]
        %v1062 = vld [vmem:[%s236 + $0x1950] sm:$0xff]
        %v1063 = vld [vmem:[%s236 + $0x1958] sm:$0xff]
        %v1064 = vld [vmem:[%s236 + $0x1960] sm:$0xff]
        %v1065 = vld [vmem:[%s236 + $0x1968] sm:$0xff]
        %v1066 = vld [vmem:[%s236 + $0x1970] sm:$0xff]
        %v1067 = vld [vmem:[%s236 + $0x1978] sm:$0xff]
        %v1068 = vld [vmem:[%s236 + $0x1980] sm:$0xff]
        %v1069 = vld [vmem:[%s236 + $0x1988] sm:$0xff]
        %v1070 = vld [vmem:[%s236 + $0x1990] sm:$0xff]
        %v1071 = vld [vmem:[%s236 + $0x1998] sm:$0xff]
        %v1072 = vld [vmem:[%s236 + $0x19a0] sm:$0xff]
        %v1073 = vld [vmem:[%s236 + $0x19a8] sm:$0xff]
        %v1074 = vld [vmem:[%s236 + $0x19b0] sm:$0xff]
        %v1075 = vld [vmem:[%s236 + $0x19b8] sm:$0xff]
        %v1076 = vld [vmem:[%s236 + $0x19c0] sm:$0xff]
        %v1077 = vld [vmem:[%s236 + $0x19c8] sm:$0xff]
        %v1078 = vld [vmem:[%s236 + $0x19d0] sm:$0xff]
        %v1079 = vld [vmem:[%s236 + $0x19d8] sm:$0xff]
        %v1080 = vld [vmem:[%s236 + $0x19e0] sm:$0xff]
        %v1081 = vld [vmem:[%s236 + $0x19e8] sm:$0xff]
        %v1082 = vld [vmem:[%s236 + $0x19f0] sm:$0xff]
        %v1083 = vld [vmem:[%s236 + $0x19f8] sm:$0xff]
        %v1084 = vld [vmem:[%s236 + $0x1a00] sm:$0xff]
        %v1085 = vld [vmem:[%s236 + $0x1a08] sm:$0xff]
        %v1086 = vld [vmem:[%s236 + $0x1a10] sm:$0xff]
        %v1087 = vld [vmem:[%s236 + $0x1a18] sm:$0xff]
        %v1088 = vld [vmem:[%s236 + $0x1a20] sm:$0xff]
        %v1089 = vld [vmem:[%s236 + $0x1a28] sm:$0xff]
        %v1090 = vld [vmem:[%s236 + $0x1a30] sm:$0xff]
        %v1091 = vld [vmem:[%s236 + $0x1a38] sm:$0xff]
        %v1092 = vld [vmem:[%s236 + $0x1a40] sm:$0xff]
        %v1093 = vld [vmem:[%s236 + $0x1a48] sm:$0xff]
        %v1094 = vld [vmem:[%s236 + $0x1a50] sm:$0xff]
        %v1095 = vld [vmem:[%s236 + $0x1a58] sm:$0xff]
        %v1096 = vld [vmem:[%s236 + $0x1a60] sm:$0xff]
        %v1097 = vld [vmem:[%s236 + $0x1a68] sm:$0xff]
        %v1098 = vld [vmem:[%s236 + $0x1a70] sm:$0xff]
        %v1099 = vld [vmem:[%s236 + $0x1a78] sm:$0xff]
        %v1100 = vld [vmem:[%s236 + $0x1a80] sm:$0xff]
        %v1101 = vld [vmem:[%s236 + $0x1a88] sm:$0xff]
        %v1102 = vld [vmem:[%s236 + $0x1a90] sm:$0xff]
        %v1103 = vld [vmem:[%s236 + $0x1a98] sm:$0xff]
        %v1104 = vld [vmem:[%s236 + $0x1aa0] sm:$0xff]
        %v1105 = vld [vmem:[%s236 + $0x1aa8] sm:$0xff]
        %v1106 = vld [vmem:[%s236 + $0x1ab0] sm:$0xff]
        %v1107 = vld [vmem:[%s236 + $0x1ab8] sm:$0xff]
        %v1108 = vld [vmem:[%s236 + $0x1ac0] sm:$0xff]
        %v1109 = vld [vmem:[%s236 + $0x1ac8] sm:$0xff]
        %v1110 = vld [vmem:[%s236 + $0x1ad0] sm:$0xff]
        %v1111 = vld [vmem:[%s236 + $0x1ad8] sm:$0xff]
        %v1112 = vld [vmem:[%s236 + $0x1ae0] sm:$0xff]
        %v1113 = vld [vmem:[%s236 + $0x1ae8] sm:$0xff]
        %v1114 = vld [vmem:[%s236 + $0x1af0] sm:$0xff]
        %v1115 = vld [vmem:[%s236 + $0x1af8] sm:$0xff]
        %v1116 = vld [vmem:[%s236 + $0x1b00] sm:$0xff]
        %v1117 = vld [vmem:[%s236 + $0x1b08] sm:$0xff]
        %v1118 = vld [vmem:[%s236 + $0x1b10] sm:$0xff]
        %v1119 = vld [vmem:[%s236 + $0x1b18] sm:$0xff]
        %v1120 = vld [vmem:[%s236 + $0x1b20] sm:$0xff]
        %v1121 = vld [vmem:[%s236 + $0x1b28] sm:$0xff]
        %v1122 = vld [vmem:[%s236 + $0x1b30] sm:$0xff]
        %v1123 = vld [vmem:[%s236 + $0x1b38] sm:$0xff]
        %v1124 = vld [vmem:[%s236 + $0x1b40] sm:$0xff]
        %v1125 = vld [vmem:[%s236 + $0x1b48] sm:$0xff]
        %v1126 = vld [vmem:[%s236 + $0x1b50] sm:$0xff]
        %v1127 = vld [vmem:[%s236 + $0x1b58] sm:$0xff]
        %v1128 = vld [vmem:[%s236 + $0x1b60] sm:$0xff]
        %v1129 = vld [vmem:[%s236 + $0x1b68] sm:$0xff]
        %v1130 = vld [vmem:[%s236 + $0x1b70] sm:$0xff]
        %v1131 = vld [vmem:[%s236 + $0x1b78] sm:$0xff]
        %v1132 = vld [vmem:[%s236 + $0x1b80] sm:$0xff]
        %v1133 = vld [vmem:[%s236 + $0x1b88] sm:$0xff]
        %v1134 = vld [vmem:[%s236 + $0x1b90] sm:$0xff]
        %v1135 = vld [vmem:[%s236 + $0x1b98] sm:$0xff]
        %v1136 = vld [vmem:[%s236 + $0x1ba0] sm:$0xff]
        %v1137 = vld [vmem:[%s236 + $0x1ba8] sm:$0xff]
        %v1138 = vld [vmem:[%s236 + $0x1bb0] sm:$0xff]
        %v1139 = vld [vmem:[%s236 + $0x1bb8] sm:$0xff]
        %v1140 = vld [vmem:[%s236 + $0x1bc0] sm:$0xff]
        %v1141 = vld [vmem:[%s236 + $0x1bc8] sm:$0xff]
        %v1142 = vld [vmem:[%s236 + $0x1bd0] sm:$0xff]
        %v1143 = vld [vmem:[%s236 + $0x1bd8] sm:$0xff]
        %v1144 = vld [vmem:[%s236 + $0x1be0] sm:$0xff]
        %v1145 = vld [vmem:[%s236 + $0x1be8] sm:$0xff]
        %v1146 = vld [vmem:[%s236 + $0x1bf0] sm:$0xff]
        %v1147 = vld [vmem:[%s236 + $0x1bf8] sm:$0xff]
        %v1148 = vld [vmem:[%s236 + $0x1c00] sm:$0xff]
        %v1149 = vld [vmem:[%s236 + $0x1c08] sm:$0xff]
        %v1150 = vld [vmem:[%s236 + $0x1c10] sm:$0xff]
        %v1151 = vld [vmem:[%s236 + $0x1c18] sm:$0xff]
        %v1152 = vld [vmem:[%s236 + $0x1c20] sm:$0xff]
        %v1153 = vld [vmem:[%s236 + $0x1c28] sm:$0xff]
        %v1154 = vld [vmem:[%s236 + $0x1c30] sm:$0xff]
        %v1155 = vld [vmem:[%s236 + $0x1c38] sm:$0xff]
        %v1156 = vld [vmem:[%s236 + $0x1c40] sm:$0xff]
        %v1157 = vld [vmem:[%s236 + $0x1c48] sm:$0xff]
        %v1158 = vld [vmem:[%s236 + $0x1c50] sm:$0xff]
        %v1159 = vld [vmem:[%s236 + $0x1c58] sm:$0xff]
        %v1160 = vld [vmem:[%s236 + $0x1c60] sm:$0xff]
        %v1161 = vld [vmem:[%s236 + $0x1c68] sm:$0xff]
        %v1162 = vld [vmem:[%s236 + $0x1c70] sm:$0xff]
        %v1163 = vld [vmem:[%s236 + $0x1c78] sm:$0xff]
        %v1164 = vld [vmem:[%s236 + $0x1c80] sm:$0xff]
        %v1165 = vld [vmem:[%s236 + $0x1c88] sm:$0xff]
        %v1166 = vld [vmem:[%s236 + $0x1c90] sm:$0xff]
        %v1167 = vld [vmem:[%s236 + $0x1c98] sm:$0xff]
        %v1168 = vld [vmem:[%s236 + $0x1ca0] sm:$0xff]
        %v1169 = vld [vmem:[%s236 + $0x1ca8] sm:$0xff]
        %v1170 = vld [vmem:[%s236 + $0x1cb0] sm:$0xff]
        %v1171 = vld [vmem:[%s236 + $0x1cb8] sm:$0xff]
        %v1172 = vld [vmem:[%s236 + $0x1cc0] sm:$0xff]
        %v1173 = vld [vmem:[%s236 + $0x1cc8] sm:$0xff]
        %v1174 = vld [vmem:[%s236 + $0x1cd0] sm:$0xff]
        %v1175 = vld [vmem:[%s236 + $0x1cd8] sm:$0xff]
        %v1176 = vld [vmem:[%s236 + $0x1ce0] sm:$0xff]
        %v1177 = vld [vmem:[%s236 + $0x1ce8] sm:$0xff]
        %v1178 = vld [vmem:[%s236 + $0x1cf0] sm:$0xff]
        %v1179 = vld [vmem:[%s236 + $0x1cf8] sm:$0xff]
        %v1180 = vld [vmem:[%s236 + $0x1d00] sm:$0xff]
        %v1181 = vld [vmem:[%s236 + $0x1d08] sm:$0xff]
        %v1182 = vld [vmem:[%s236 + $0x1d10] sm:$0xff]
        %v1183 = vld [vmem:[%s236 + $0x1d18] sm:$0xff]
        %v1184 = vld [vmem:[%s236 + $0x1d20] sm:$0xff]
        %v1185 = vld [vmem:[%s236 + $0x1d28] sm:$0xff]
        %v1186 = vld [vmem:[%s236 + $0x1d30] sm:$0xff]
        %v1187 = vld [vmem:[%s236 + $0x1d38] sm:$0xff]
        %v1188 = vld [vmem:[%s236 + $0x1d40] sm:$0xff]
        %v1189 = vld [vmem:[%s236 + $0x1d48] sm:$0xff]
        %v1190 = vld [vmem:[%s236 + $0x1d50] sm:$0xff]
        %v1191 = vld [vmem:[%s236 + $0x1d58] sm:$0xff]
        %v1192 = vld [vmem:[%s236 + $0x1d60] sm:$0xff]
        %v1193 = vld [vmem:[%s236 + $0x1d68] sm:$0xff]
        %v1194 = vld [vmem:[%s236 + $0x1d70] sm:$0xff]
        %v1195 = vld [vmem:[%s236 + $0x1d78] sm:$0xff]
        %v1196 = vld [vmem:[%s236 + $0x1d80] sm:$0xff]
        %v1197 = vld [vmem:[%s236 + $0x1d88] sm:$0xff]
        %v1198 = vld [vmem:[%s236 + $0x1d90] sm:$0xff]
        %v1199 = vld [vmem:[%s236 + $0x1d98] sm:$0xff]
        %v1200 = vld [vmem:[%s236 + $0x1da0] sm:$0xff]
        %v1201 = vld [vmem:[%s236 + $0x1da8] sm:$0xff]
        %v1202 = vld [vmem:[%s236 + $0x1db0] sm:$0xff]
        %v1203 = vld [vmem:[%s236 + $0x1db8] sm:$0xff]
        %v1204 = vld [vmem:[%s236 + $0x1dc0] sm:$0xff]
        %v1205 = vld [vmem:[%s236 + $0x1dc8] sm:$0xff]
        %v1206 = vld [vmem:[%s236 + $0x1dd0] sm:$0xff]
        %v1207 = vld [vmem:[%s236 + $0x1dd8] sm:$0xff]
        %v1208 = vld [vmem:[%s236 + $0x1de0] sm:$0xff]
        %v1209 = vld [vmem:[%s236 + $0x1de8] sm:$0xff]
        %v1210 = vld [vmem:[%s236 + $0x1df0] sm:$0xff]
        %v1211 = vld [vmem:[%s236 + $0x1df8] sm:$0xff]
        %v1212 = vld [vmem:[%s236 + $0x1e00] sm:$0xff]
        %v1213 = vld [vmem:[%s236 + $0x1e08] sm:$0xff]
        %v1214 = vld [vmem:[%s236 + $0x1e10] sm:$0xff]
        %v1215 = vld [vmem:[%s236 + $0x1e18] sm:$0xff]
        %v1216 = vld [vmem:[%s236 + $0x1e20] sm:$0xff]
        %v1217 = vld [vmem:[%s236 + $0x1e28] sm:$0xff]
        %v1218 = vld [vmem:[%s236 + $0x1e30] sm:$0xff]
        %v1219 = vld [vmem:[%s236 + $0x1e38] sm:$0xff]
        %v1220 = vld [vmem:[%s236 + $0x1e40] sm:$0xff]
        %v1221 = vld [vmem:[%s236 + $0x1e48] sm:$0xff]
        %v1222 = vld [vmem:[%s236 + $0x1e50] sm:$0xff]
        %v1223 = vld [vmem:[%s236 + $0x1e58] sm:$0xff]
        %v1224 = vld [vmem:[%s236 + $0x1e60] sm:$0xff]
        %v1225 = vld [vmem:[%s236 + $0x1e68] sm:$0xff]
        %v1226 = vld [vmem:[%s236 + $0x1e70] sm:$0xff]
        %v1227 = vld [vmem:[%s236 + $0x1e78] sm:$0xff]
        %v1228 = vld [vmem:[%s236 + $0x1e80] sm:$0xff]
        %v1229 = vld [vmem:[%s236 + $0x1e88] sm:$0xff]
        %v1230 = vld [vmem:[%s236 + $0x1e90] sm:$0xff]
        %v1231 = vld [vmem:[%s236 + $0x1e98] sm:$0xff]
        %v1232 = vld [vmem:[%s236 + $0x1ea0] sm:$0xff]
        %v1233 = vld [vmem:[%s236 + $0x1ea8] sm:$0xff]
        %v1234 = vld [vmem:[%s236 + $0x1eb0] sm:$0xff]
        %v1235 = vld [vmem:[%s236 + $0x1eb8] sm:$0xff]
        %v1236 = vld [vmem:[%s236 + $0x1ec0] sm:$0xff]
        %v1237 = vld [vmem:[%s236 + $0x1ec8] sm:$0xff]
        %v1238 = vld [vmem:[%s236 + $0x1ed0] sm:$0xff]
        %v1239 = vld [vmem:[%s236 + $0x1ed8] sm:$0xff]
        %v1240 = vld [vmem:[%s236 + $0x1ee0] sm:$0xff]
        %v1241 = vld [vmem:[%s236 + $0x1ee8] sm:$0xff]
        %v1242 = vld [vmem:[%s236 + $0x1ef0] sm:$0xff]
        %v1243 = vld [vmem:[%s236 + $0x1ef8] sm:$0xff]
        %v1244 = vld [vmem:[%s236 + $0x1f00] sm:$0xff]
        %v1245 = vld [vmem:[%s236 + $0x1f08] sm:$0xff]
        %v1246 = vld [vmem:[%s236 + $0x1f10] sm:$0xff]
        %v1247 = vld [vmem:[%s236 + $0x1f18] sm:$0xff]
        %v1248 = vld [vmem:[%s236 + $0x1f20] sm:$0xff]
        %v1249 = vld [vmem:[%s236 + $0x1f28] sm:$0xff]
        %v1250 = vld [vmem:[%s236 + $0x1f30] sm:$0xff]
        %v1251 = vld [vmem:[%s236 + $0x1f38] sm:$0xff]
        %v1252 = vld [vmem:[%s236 + $0x1f40] sm:$0xff]
        %v1253 = vld [vmem:[%s236 + $0x1f48] sm:$0xff]
        %v1254 = vld [vmem:[%s236 + $0x1f50] sm:$0xff]
        %v1255 = vld [vmem:[%s236 + $0x1f58] sm:$0xff]
        %v1256 = vld [vmem:[%s236 + $0x1f60] sm:$0xff]
        %v1257 = vld [vmem:[%s236 + $0x1f68] sm:$0xff]
        %v1258 = vld [vmem:[%s236 + $0x1f70] sm:$0xff]
        %v1259 = vld [vmem:[%s236 + $0x1f78] sm:$0xff]
        %v1260 = vld [vmem:[%s236 + $0x1f80] sm:$0xff]
        %v1261 = vld [vmem:[%s236 + $0x1f88] sm:$0xff]
        %v1262 = vld [vmem:[%s236 + $0x1f90] sm:$0xff]
        %v1263 = vld [vmem:[%s236 + $0x1f98] sm:$0xff]
        %v1264 = vld [vmem:[%s236 + $0x1fa0] sm:$0xff]
        %v1265 = vld [vmem:[%s236 + $0x1fa8] sm:$0xff]
        %v1266 = vld [vmem:[%s236 + $0x1fb0] sm:$0xff]
        %v1267 = vld [vmem:[%s236 + $0x1fb8] sm:$0xff]
        %v1268 = vld [vmem:[%s236 + $0x1fc0] sm:$0xff]
        %v1269 = vld [vmem:[%s236 + $0x1fc8] sm:$0xff]
        %v1270 = vld [vmem:[%s236 + $0x1fd0] sm:$0xff]
        %v1271 = vld [vmem:[%s236 + $0x1fd8] sm:$0xff]
        %v1272 = vld [vmem:[%s236 + $0x1fe0] sm:$0xff]
        %v1273 = vld [vmem:[%s236 + $0x1fe8] sm:$0xff]
        %v1274 = vld [vmem:[%s236 + $0x1ff0] sm:$0xff]
        %v1275 = vld [vmem:[%s236 + $0x1ff8] sm:$0xff]
        %v1284 = vcombine.high %v244, %v244
        %v1286 = vunpack.c.l.s4 1983009808
        %v1287 = vunpack.c.0.s8 %v1286
        %v1288 = vlaneseq
        %v1289 = vshrl.u32 %v1288, 7
        %v1290 = vsub.s32 %v1287, %v1289
        %v1291 = vrot.slane %v244, %v1290
        %v1293 = vunpack.c.l.s4 1983009808
        %v1294 = vunpack.c.0.s8 %v1293
        %v1295 = vlaneseq
        %v1296 = vshrl.u32 %v1295, 7
        %v1297 = vsub.s32 %v1294, %v1296
        %v1298 = vrot.slane %v1284, %v1297
        %v1299 = vcombine.high %v1291, %v1291
        %v1300 = vcombine.high %v1298, %v1298
        %v1301 = vcombine.high %v245, %v245
        %v1303 = vunpack.c.l.s4 1983009808
        %v1304 = vunpack.c.0.s8 %v1303
        %v1305 = vlaneseq
        %v1306 = vshrl.u32 %v1305, 7
        %v1307 = vsub.s32 %v1304, %v1306
        %v1308 = vrot.slane %v245, %v1307
        %v1310 = vunpack.c.l.s4 1983009808
        %v1311 = vunpack.c.0.s8 %v1310
        %v1312 = vlaneseq
        %v1313 = vshrl.u32 %v1312, 7
        %v1314 = vsub.s32 %v1311, %v1313
        %v1315 = vrot.slane %v1301, %v1314
        %v1316 = vcombine.high %v1308, %v1308
        %v1317 = vcombine.high %v1315, %v1315
        %v1318 = vcombine.high %v246, %v246
        %v1320 = vunpack.c.l.s4 1983009808
        %v1321 = vunpack.c.0.s8 %v1320
        %v1322 = vlaneseq
        %v1323 = vshrl.u32 %v1322, 7
        %v1324 = vsub.s32 %v1321, %v1323
        %v1325 = vrot.slane %v246, %v1324
        %v1327 = vunpack.c.l.s4 1983009808
        %v1328 = vunpack.c.0.s8 %v1327
        %v1329 = vlaneseq
        %v1330 = vshrl.u32 %v1329, 7
        %v1331 = vsub.s32 %v1328, %v1330
        %v1332 = vrot.slane %v1318, %v1331
        %v1333 = vcombine.high %v1325, %v1325
        %v1334 = vcombine.high %v1332, %v1332
        %v1335 = vcombine.high %v247, %v247
        %v1337 = vunpack.c.l.s4 1983009808
        %v1338 = vunpack.c.0.s8 %v1337
        %v1339 = vlaneseq
        %v1340 = vshrl.u32 %v1339, 7
        %v1341 = vsub.s32 %v1338, %v1340
        %v1342 = vrot.slane %v247, %v1341
        %v1344 = vunpack.c.l.s4 1983009808
        %v1345 = vunpack.c.0.s8 %v1344
        %v1346 = vlaneseq
        %v1347 = vshrl.u32 %v1346, 7
        %v1348 = vsub.s32 %v1345, %v1347
        %v1349 = vrot.slane %v1335, %v1348
        %v1350 = vcombine.high %v1342, %v1342
        %v1351 = vcombine.high %v1349, %v1349
        %v1352 = vcombine.high %v248, %v248
        %v1354 = vunpack.c.l.s4 1983009808
        %v1355 = vunpack.c.0.s8 %v1354
        %v1356 = vlaneseq
        %v1357 = vshrl.u32 %v1356, 7
        %v1358 = vsub.s32 %v1355, %v1357
        %v1359 = vrot.slane %v248, %v1358
        %v1361 = vunpack.c.l.s4 1983009808
        %v1362 = vunpack.c.0.s8 %v1361
        %v1363 = vlaneseq
        %v1364 = vshrl.u32 %v1363, 7
        %v1365 = vsub.s32 %v1362, %v1364
        %v1366 = vrot.slane %v1352, %v1365
        %v1367 = vcombine.high %v1359, %v1359
        %v1368 = vcombine.high %v1366, %v1366
        %v1369 = vcombine.high %v249, %v249
        %v1371 = vunpack.c.l.s4 1983009808
        %v1372 = vunpack.c.0.s8 %v1371
        %v1373 = vlaneseq
        %v1374 = vshrl.u32 %v1373, 7
        %v1375 = vsub.s32 %v1372, %v1374
        %v1376 = vrot.slane %v249, %v1375
        %v1378 = vunpack.c.l.s4 1983009808
        %v1379 = vunpack.c.0.s8 %v1378
        %v1380 = vlaneseq
        %v1381 = vshrl.u32 %v1380, 7
        %v1382 = vsub.s32 %v1379, %v1381
        %v1383 = vrot.slane %v1369, %v1382
        %v1384 = vcombine.high %v1376, %v1376
        %v1385 = vcombine.high %v1383, %v1383
        %v1386 = vcombine.high %v250, %v250
        %v1388 = vunpack.c.l.s4 1983009808
        %v1389 = vunpack.c.0.s8 %v1388
        %v1390 = vlaneseq
        %v1391 = vshrl.u32 %v1390, 7
        %v1392 = vsub.s32 %v1389, %v1391
        %v1393 = vrot.slane %v250, %v1392
        %v1395 = vunpack.c.l.s4 1983009808
        %v1396 = vunpack.c.0.s8 %v1395
        %v1397 = vlaneseq
        %v1398 = vshrl.u32 %v1397, 7
        %v1399 = vsub.s32 %v1396, %v1398
        %v1400 = vrot.slane %v1386, %v1399
        %v1401 = vcombine.high %v1393, %v1393
        %v1402 = vcombine.high %v1400, %v1400
        %v1403 = vcombine.high %v251, %v251
        %v1405 = vunpack.c.l.s4 1983009808
        %v1406 = vunpack.c.0.s8 %v1405
        %v1407 = vlaneseq
        %v1408 = vshrl.u32 %v1407, 7
        %v1409 = vsub.s32 %v1406, %v1408
        %v1410 = vrot.slane %v251, %v1409
        %v1412 = vunpack.c.l.s4 1983009808
        %v1413 = vunpack.c.0.s8 %v1412
        %v1414 = vlaneseq
        %v1415 = vshrl.u32 %v1414, 7
        %v1416 = vsub.s32 %v1413, %v1415
        %v1417 = vrot.slane %v1403, %v1416
        %v1418 = vcombine.high %v1410, %v1410
        %v1419 = vcombine.high %v1417, %v1417
        %1452 = vmatprep.subr.mxu0 %v253
        %1453 = vmatpush1.msra.mxu0 %v252
        %1454 = vmatprep.subr.mxu0 %v255
        %1455 = vmatpush1.msra.mxu0 %v254
        %1456 = vmatprep.subr.mxu0 %v257
        %1457 = vmatpush1.msra.mxu0 %v256
        %1458 = vmatprep.subr.mxu0 %v259
        %1459 = vmatpush1.msra.mxu0 %v258
        %1460 = vmatprep.subr.mxu0 %v261
        %1461 = vmatpush1.msra.mxu0 %v260
        %1462 = vmatprep.subr.mxu0 %v263
        %1463 = vmatpush1.msra.mxu0 %v262
        %1464 = vmatprep.subr.mxu0 %v265
        %1465 = vmatpush1.msra.mxu0 %v264
        %1466 = vmatprep.subr.mxu0 %v267
        %1467 = vmatpush1.msra.mxu0 %v266
        %1468 = vmatprep.subr.mxu0 %v269
        %1469 = vmatpush1.msra.mxu0 %v268
        %1470 = vmatprep.subr.mxu0 %v271
        %1471 = vmatpush1.msra.mxu0 %v270
        %1472 = vmatprep.subr.mxu0 %v273
        %1473 = vmatpush1.msra.mxu0 %v272
        %1474 = vmatprep.subr.mxu0 %v275
        %1475 = vmatpush1.msra.mxu0 %v274
        %1476 = vmatprep.subr.mxu0 %v277
        %1477 = vmatpush1.msra.mxu0 %v276
        %1478 = vmatprep.subr.mxu0 %v279
        %1479 = vmatpush1.msra.mxu0 %v278
        %1480 = vmatprep.subr.mxu0 %v281
        %1481 = vmatpush1.msra.mxu0 %v280
        %1482 = vmatprep.subr.mxu0 %v283
        %1483 = vmatpush1.msra.mxu0 %v282
        %1484 = vmatprep.subr.mxu0 %v285
        %1485 = vmatpush1.msra.mxu0 %v284
        %1486 = vmatprep.subr.mxu0 %v287
        %1487 = vmatpush1.msra.mxu0 %v286
        %1488 = vmatprep.subr.mxu0 %v289
        %1489 = vmatpush1.msra.mxu0 %v288
        %1490 = vmatprep.subr.mxu0 %v291
        %1491 = vmatpush1.msra.mxu0 %v290
        %1492 = vmatprep.subr.mxu0 %v293
        %1493 = vmatpush1.msra.mxu0 %v292
        %1494 = vmatprep.subr.mxu0 %v295
        %1495 = vmatpush1.msra.mxu0 %v294
        %1496 = vmatprep.subr.mxu0 %v297
        %1497 = vmatpush1.msra.mxu0 %v296
        %1498 = vmatprep.subr.mxu0 %v299
        %1499 = vmatpush1.msra.mxu0 %v298
        %1500 = vmatprep.subr.mxu0 %v301
        %1501 = vmatpush1.msra.mxu0 %v300
        %1502 = vmatprep.subr.mxu0 %v303
        %1503 = vmatpush1.msra.mxu0 %v302
        %1504 = vmatprep.subr.mxu0 %v305
        %1505 = vmatpush1.msra.mxu0 %v304
        %1506 = vmatprep.subr.mxu0 %v307
        %1507 = vmatpush1.msra.mxu0 %v306
        %1508 = vmatprep.subr.mxu0 %v309
        %1509 = vmatpush1.msra.mxu0 %v308
        %1510 = vmatprep.subr.mxu0 %v311
        %1511 = vmatpush1.msra.mxu0 %v310
        %1512 = vmatprep.subr.mxu0 %v313
        %1513 = vmatpush1.msra.mxu0 %v312
        %1514 = vmatprep.subr.mxu0 %v315
        %1515 = vmatpush1.msra.mxu0 %v314
        %1516 = vmatprep.mubr.f32.mxu0 %v1299
        %1517 = vmatmul.mubr.f32.gmra.mrb[0].mxu0 %v1291
        %v1518 = vpop.f32.mrb[0].mxu0
        %v1519 = vadd.f32 0.0, %v1518
        %v1520 = vpop.f32.mrb[0].mxu0
        %v1521 = vadd.f32 0.0, %v1520
        %1522 = vdwg.mxu0
        %1523 = vmatprep.subr.mxu0 %v317
        %1524 = vmatpush1.msra.mxu0 %v316
        %1525 = vmatprep.subr.mxu0 %v319
        %1526 = vmatpush1.msra.mxu0 %v318
        %1527 = vmatprep.subr.mxu0 %v321
        %1528 = vmatpush1.msra.mxu0 %v320
        %1529 = vmatprep.subr.mxu0 %v323
        %1530 = vmatpush1.msra.mxu0 %v322
        %1531 = vmatprep.subr.mxu0 %v325
        %1532 = vmatpush1.msra.mxu0 %v324
        %1533 = vmatprep.subr.mxu0 %v327
        %1534 = vmatpush1.msra.mxu0 %v326
        %1535 = vmatprep.subr.mxu0 %v329
        %1536 = vmatpush1.msra.mxu0 %v328
        %1537 = vmatprep.subr.mxu0 %v331
        %1538 = vmatpush1.msra.mxu0 %v330
        %1539 = vmatprep.subr.mxu0 %v333
        %1540 = vmatpush1.msra.mxu0 %v332
        %1541 = vmatprep.subr.mxu0 %v335
        %1542 = vmatpush1.msra.mxu0 %v334
        %1543 = vmatprep.subr.mxu0 %v337
        %1544 = vmatpush1.msra.mxu0 %v336
        %1545 = vmatprep.subr.mxu0 %v339
        %1546 = vmatpush1.msra.mxu0 %v338
        %1547 = vmatprep.subr.mxu0 %v341
        %1548 = vmatpush1.msra.mxu0 %v340
        %1549 = vmatprep.subr.mxu0 %v343
        %1550 = vmatpush1.msra.mxu0 %v342
        %1551 = vmatprep.subr.mxu0 %v345
        %1552 = vmatpush1.msra.mxu0 %v344
        %1553 = vmatprep.subr.mxu0 %v347
        %1554 = vmatpush1.msra.mxu0 %v346
        %1555 = vmatprep.subr.mxu0 %v349
        %1556 = vmatpush1.msra.mxu0 %v348
        %1557 = vmatprep.subr.mxu0 %v351
        %1558 = vmatpush1.msra.mxu0 %v350
        %1559 = vmatprep.subr.mxu0 %v353
        %1560 = vmatpush1.msra.mxu0 %v352
        %1561 = vmatprep.subr.mxu0 %v355
        %1562 = vmatpush1.msra.mxu0 %v354
        %1563 = vmatprep.subr.mxu0 %v357
        %1564 = vmatpush1.msra.mxu0 %v356
        %1565 = vmatprep.subr.mxu0 %v359
        %1566 = vmatpush1.msra.mxu0 %v358
        %1567 = vmatprep.subr.mxu0 %v361
        %1568 = vmatpush1.msra.mxu0 %v360
        %1569 = vmatprep.subr.mxu0 %v363
        %1570 = vmatpush1.msra.mxu0 %v362
        %1571 = vmatprep.subr.mxu0 %v365
        %1572 = vmatpush1.msra.mxu0 %v364
        %1573 = vmatprep.subr.mxu0 %v367
        %1574 = vmatpush1.msra.mxu0 %v366
        %1575 = vmatprep.subr.mxu0 %v369
        %1576 = vmatpush1.msra.mxu0 %v368
        %1577 = vmatprep.subr.mxu0 %v371
        %1578 = vmatpush1.msra.mxu0 %v370
        %1579 = vmatprep.subr.mxu0 %v373
        %1580 = vmatpush1.msra.mxu0 %v372
        %1581 = vmatprep.subr.mxu0 %v375
        %1582 = vmatpush1.msra.mxu0 %v374
        %1583 = vmatprep.subr.mxu0 %v377
        %1584 = vmatpush1.msra.mxu0 %v376
        %1585 = vmatprep.subr.mxu0 %v379
        %1586 = vmatpush1.msra.mxu0 %v378
        %1587 = vmatprep.mubr.f32.mxu0 %v1300
        %1588 = vmatmul.mubr.f32.gmra.mrb[0].mxu0 %v1298
        %v1589 = vpop.f32.mrb[0].mxu0
        %v1590 = vadd.f32 %v1519, %v1589
        %v1591 = vpop.f32.mrb[0].mxu0
        %v1592 = vadd.f32 %v1521, %v1591
        %1593 = vdwg.mxu0
        %1594 = vmatprep.subr.mxu0 %v381
        %1595 = vmatpush1.msra.mxu0 %v380
        %1596 = vmatprep.subr.mxu0 %v383
        %1597 = vmatpush1.msra.mxu0 %v382
        %1598 = vmatprep.subr.mxu0 %v385
        %1599 = vmatpush1.msra.mxu0 %v384
        %1600 = vmatprep.subr.mxu0 %v387
        %1601 = vmatpush1.msra.mxu0 %v386
        %1602 = vmatprep.subr.mxu0 %v389
        %1603 = vmatpush1.msra.mxu0 %v388
        %1604 = vmatprep.subr.mxu0 %v391
        %1605 = vmatpush1.msra.mxu0 %v390
        %1606 = vmatprep.subr.mxu0 %v393
        %1607 = vmatpush1.msra.mxu0 %v392
        %1608 = vmatprep.subr.mxu0 %v395
        %1609 = vmatpush1.msra.mxu0 %v394
        %1610 = vmatprep.subr.mxu0 %v397
        %1611 = vmatpush1.msra.mxu0 %v396
        %1612 = vmatprep.subr.mxu0 %v399
        %1613 = vmatpush1.msra.mxu0 %v398
        %1614 = vmatprep.subr.mxu0 %v401
        %1615 = vmatpush1.msra.mxu0 %v400
        %1616 = vmatprep.subr.mxu0 %v403
        %1617 = vmatpush1.msra.mxu0 %v402
        %1618 = vmatprep.subr.mxu0 %v405
        %1619 = vmatpush1.msra.mxu0 %v404
        %1620 = vmatprep.subr.mxu0 %v407
        %1621 = vmatpush1.msra.mxu0 %v406
        %1622 = vmatprep.subr.mxu0 %v409
        %1623 = vmatpush1.msra.mxu0 %v408
        %1624 = vmatprep.subr.mxu0 %v411
        %1625 = vmatpush1.msra.mxu0 %v410
        %1626 = vmatprep.subr.mxu0 %v413
        %1627 = vmatpush1.msra.mxu0 %v412
        %1628 = vmatprep.subr.mxu0 %v415
        %1629 = vmatpush1.msra.mxu0 %v414
        %1630 = vmatprep.subr.mxu0 %v417
        %1631 = vmatpush1.msra.mxu0 %v416
        %1632 = vmatprep.subr.mxu0 %v419
        %1633 = vmatpush1.msra.mxu0 %v418
        %1634 = vmatprep.subr.mxu0 %v421
        %1635 = vmatpush1.msra.mxu0 %v420
        %1636 = vmatprep.subr.mxu0 %v423
        %1637 = vmatpush1.msra.mxu0 %v422
        %1638 = vmatprep.subr.mxu0 %v425
        %1639 = vmatpush1.msra.mxu0 %v424
        %1640 = vmatprep.subr.mxu0 %v427
        %1641 = vmatpush1.msra.mxu0 %v426
        %1642 = vmatprep.subr.mxu0 %v429
        %1643 = vmatpush1.msra.mxu0 %v428
        %1644 = vmatprep.subr.mxu0 %v431
        %1645 = vmatpush1.msra.mxu0 %v430
        %1646 = vmatprep.subr.mxu0 %v433
        %1647 = vmatpush1.msra.mxu0 %v432
        %1648 = vmatprep.subr.mxu0 %v435
        %1649 = vmatpush1.msra.mxu0 %v434
        %1650 = vmatprep.subr.mxu0 %v437
        %1651 = vmatpush1.msra.mxu0 %v436
        %1652 = vmatprep.subr.mxu0 %v439
        %1653 = vmatpush1.msra.mxu0 %v438
        %1654 = vmatprep.subr.mxu0 %v441
        %1655 = vmatpush1.msra.mxu0 %v440
        %1656 = vmatprep.subr.mxu0 %v443
        %1657 = vmatpush1.msra.mxu0 %v442
        %1658 = vmatprep.mubr.f32.mxu0 %v1316
        %1659 = vmatmul.mubr.f32.gmra.mrb[0].mxu0 %v1308
        %v1660 = vpop.f32.mrb[0].mxu0
        %v1661 = vadd.f32 %v1590, %v1660
        %v1662 = vpop.f32.mrb[0].mxu0
        %v1663 = vadd.f32 %v1592, %v1662
        %1664 = vdwg.mxu0
        %1665 = vmatprep.subr.mxu0 %v445
        %1666 = vmatpush1.msra.mxu0 %v444
        %1667 = vmatprep.subr.mxu0 %v447
        %1668 = vmatpush1.msra.mxu0 %v446
        %1669 = vmatprep.subr.mxu0 %v449
        %1670 = vmatpush1.msra.mxu0 %v448
        %1671 = vmatprep.subr.mxu0 %v451
        %1672 = vmatpush1.msra.mxu0 %v450
        %1673 = vmatprep.subr.mxu0 %v453
        %1674 = vmatpush1.msra.mxu0 %v452
        %1675 = vmatprep.subr.mxu0 %v455
        %1676 = vmatpush1.msra.mxu0 %v454
        %1677 = vmatprep.subr.mxu0 %v457
        %1678 = vmatpush1.msra.mxu0 %v456
        %1679 = vmatprep.subr.mxu0 %v459
        %1680 = vmatpush1.msra.mxu0 %v458
        %1681 = vmatprep.subr.mxu0 %v461
        %1682 = vmatpush1.msra.mxu0 %v460
        %1683 = vmatprep.subr.mxu0 %v463
        %1684 = vmatpush1.msra.mxu0 %v462
        %1685 = vmatprep.subr.mxu0 %v465
        %1686 = vmatpush1.msra.mxu0 %v464
        %1687 = vmatprep.subr.mxu0 %v467
        %1688 = vmatpush1.msra.mxu0 %v466
        %1689 = vmatprep.subr.mxu0 %v469
        %1690 = vmatpush1.msra.mxu0 %v468
        %1691 = vmatprep.subr.mxu0 %v471
        %1692 = vmatpush1.msra.mxu0 %v470
        %1693 = vmatprep.subr.mxu0 %v473
        %1694 = vmatpush1.msra.mxu0 %v472
        %1695 = vmatprep.subr.mxu0 %v475
        %1696 = vmatpush1.msra.mxu0 %v474
        %1697 = vmatprep.subr.mxu0 %v477
        %1698 = vmatpush1.msra.mxu0 %v476
        %1699 = vmatprep.subr.mxu0 %v479
        %1700 = vmatpush1.msra.mxu0 %v478
        %1701 = vmatprep.subr.mxu0 %v481
        %1702 = vmatpush1.msra.mxu0 %v480
        %1703 = vmatprep.subr.mxu0 %v483
        %1704 = vmatpush1.msra.mxu0 %v482
        %1705 = vmatprep.subr.mxu0 %v485
        %1706 = vmatpush1.msra.mxu0 %v484
        %1707 = vmatprep.subr.mxu0 %v487
        %1708 = vmatpush1.msra.mxu0 %v486
        %1709 = vmatprep.subr.mxu0 %v489
        %1710 = vmatpush1.msra.mxu0 %v488
        %1711 = vmatprep.subr.mxu0 %v491
        %1712 = vmatpush1.msra.mxu0 %v490
        %1713 = vmatprep.subr.mxu0 %v493
        %1714 = vmatpush1.msra.mxu0 %v492
        %1715 = vmatprep.subr.mxu0 %v495
        %1716 = vmatpush1.msra.mxu0 %v494
        %1717 = vmatprep.subr.mxu0 %v497
        %1718 = vmatpush1.msra.mxu0 %v496
        %1719 = vmatprep.subr.mxu0 %v499
        %1720 = vmatpush1.msra.mxu0 %v498
        %1721 = vmatprep.subr.mxu0 %v501
        %1722 = vmatpush1.msra.mxu0 %v500
        %1723 = vmatprep.subr.mxu0 %v503
        %1724 = vmatpush1.msra.mxu0 %v502
        %1725 = vmatprep.subr.mxu0 %v505
        %1726 = vmatpush1.msra.mxu0 %v504
        %1727 = vmatprep.subr.mxu0 %v507
        %1728 = vmatpush1.msra.mxu0 %v506
        %1729 = vmatprep.mubr.f32.mxu0 %v1317
        %1730 = vmatmul.mubr.f32.gmra.mrb[0].mxu0 %v1315
        %v1731 = vpop.f32.mrb[0].mxu0
        %v1732 = vadd.f32 %v1661, %v1731
        %v1733 = vpop.f32.mrb[0].mxu0
        %v1734 = vadd.f32 %v1663, %v1733
        %1735 = vdwg.mxu0
        %1736 = vmatprep.subr.mxu0 %v509
        %1737 = vmatpush1.msra.mxu0 %v508
        %1738 = vmatprep.subr.mxu0 %v511
        %1739 = vmatpush1.msra.mxu0 %v510
        %1740 = vmatprep.subr.mxu0 %v513
        %1741 = vmatpush1.msra.mxu0 %v512
        %1742 = vmatprep.subr.mxu0 %v515
        %1743 = vmatpush1.msra.mxu0 %v514
        %1744 = vmatprep.subr.mxu0 %v517
        %1745 = vmatpush1.msra.mxu0 %v516
        %1746 = vmatprep.subr.mxu0 %v519
        %1747 = vmatpush1.msra.mxu0 %v518
        %1748 = vmatprep.subr.mxu0 %v521
        %1749 = vmatpush1.msra.mxu0 %v520
        %1750 = vmatprep.subr.mxu0 %v523
        %1751 = vmatpush1.msra.mxu0 %v522
        %1752 = vmatprep.subr.mxu0 %v525
        %1753 = vmatpush1.msra.mxu0 %v524
        %1754 = vmatprep.subr.mxu0 %v527
        %1755 = vmatpush1.msra.mxu0 %v526
        %1756 = vmatprep.subr.mxu0 %v529
        %1757 = vmatpush1.msra.mxu0 %v528
        %1758 = vmatprep.subr.mxu0 %v531
        %1759 = vmatpush1.msra.mxu0 %v530
        %1760 = vmatprep.subr.mxu0 %v533
        %1761 = vmatpush1.msra.mxu0 %v532
        %1762 = vmatprep.subr.mxu0 %v535
        %1763 = vmatpush1.msra.mxu0 %v534
        %1764 = vmatprep.subr.mxu0 %v537
        %1765 = vmatpush1.msra.mxu0 %v536
        %1766 = vmatprep.subr.mxu0 %v539
        %1767 = vmatpush1.msra.mxu0 %v538
        %1768 = vmatprep.subr.mxu0 %v541
        %1769 = vmatpush1.msra.mxu0 %v540
        %1770 = vmatprep.subr.mxu0 %v543
        %1771 = vmatpush1.msra.mxu0 %v542
        %1772 = vmatprep.subr.mxu0 %v545
        %1773 = vmatpush1.msra.mxu0 %v544
        %1774 = vmatprep.subr.mxu0 %v547
        %1775 = vmatpush1.msra.mxu0 %v546
        %1776 = vmatprep.subr.mxu0 %v549
        %1777 = vmatpush1.msra.mxu0 %v548
        %1778 = vmatprep.subr.mxu0 %v551
        %1779 = vmatpush1.msra.mxu0 %v550
        %1780 = vmatprep.subr.mxu0 %v553
        %1781 = vmatpush1.msra.mxu0 %v552
        %1782 = vmatprep.subr.mxu0 %v555
        %1783 = vmatpush1.msra.mxu0 %v554
        %1784 = vmatprep.subr.mxu0 %v557
        %1785 = vmatpush1.msra.mxu0 %v556
        %1786 = vmatprep.subr.mxu0 %v559
        %1787 = vmatpush1.msra.mxu0 %v558
        %1788 = vmatprep.subr.mxu0 %v561
        %1789 = vmatpush1.msra.mxu0 %v560
        %1790 = vmatprep.subr.mxu0 %v563
        %1791 = vmatpush1.msra.mxu0 %v562
        %1792 = vmatprep.subr.mxu0 %v565
        %1793 = vmatpush1.msra.mxu0 %v564
        %1794 = vmatprep.subr.mxu0 %v567
        %1795 = vmatpush1.msra.mxu0 %v566
        %1796 = vmatprep.subr.mxu0 %v569
        %1797 = vmatpush1.msra.mxu0 %v568
        %1798 = vmatprep.subr.mxu0 %v571
        %1799 = vmatpush1.msra.mxu0 %v570
        %1800 = vmatprep.mubr.f32.mxu0 %v1333
        %1801 = vmatmul.mubr.f32.gmra.mrb[0].mxu0 %v1325
        %v1802 = vpop.f32.mrb[0].mxu0
        %v1803 = vadd.f32 %v1732, %v1802
        %v1804 = vpop.f32.mrb[0].mxu0
        %v1805 = vadd.f32 %v1734, %v1804
        %1806 = vdwg.mxu0
        %1807 = vmatprep.subr.mxu0 %v573
        %1808 = vmatpush1.msra.mxu0 %v572
        %1809 = vmatprep.subr.mxu0 %v575
        %1810 = vmatpush1.msra.mxu0 %v574
        %1811 = vmatprep.subr.mxu0 %v577
        %1812 = vmatpush1.msra.mxu0 %v576
        %1813 = vmatprep.subr.mxu0 %v579
        %1814 = vmatpush1.msra.mxu0 %v578
        %1815 = vmatprep.subr.mxu0 %v581
        %1816 = vmatpush1.msra.mxu0 %v580
        %1817 = vmatprep.subr.mxu0 %v583
        %1818 = vmatpush1.msra.mxu0 %v582
        %1819 = vmatprep.subr.mxu0 %v585
        %1820 = vmatpush1.msra.mxu0 %v584
        %1821 = vmatprep.subr.mxu0 %v587
        %1822 = vmatpush1.msra.mxu0 %v586
        %1823 = vmatprep.subr.mxu0 %v589
        %1824 = vmatpush1.msra.mxu0 %v588
        %1825 = vmatprep.subr.mxu0 %v591
        %1826 = vmatpush1.msra.mxu0 %v590
        %1827 = vmatprep.subr.mxu0 %v593
        %1828 = vmatpush1.msra.mxu0 %v592
        %1829 = vmatprep.subr.mxu0 %v595
        %1830 = vmatpush1.msra.mxu0 %v594
        %1831 = vmatprep.subr.mxu0 %v597
        %1832 = vmatpush1.msra.mxu0 %v596
        %1833 = vmatprep.subr.mxu0 %v599
        %1834 = vmatpush1.msra.mxu0 %v598
        %1835 = vmatprep.subr.mxu0 %v601
        %1836 = vmatpush1.msra.mxu0 %v600
        %1837 = vmatprep.subr.mxu0 %v603
        %1838 = vmatpush1.msra.mxu0 %v602
        %1839 = vmatprep.subr.mxu0 %v605
        %1840 = vmatpush1.msra.mxu0 %v604
        %1841 = vmatprep.subr.mxu0 %v607
        %1842 = vmatpush1.msra.mxu0 %v606
        %1843 = vmatprep.subr.mxu0 %v609
        %1844 = vmatpush1.msra.mxu0 %v608
        %1845 = vmatprep.subr.mxu0 %v611
        %1846 = vmatpush1.msra.mxu0 %v610
        %1847 = vmatprep.subr.mxu0 %v613
        %1848 = vmatpush1.msra.mxu0 %v612
        %1849 = vmatprep.subr.mxu0 %v615
        %1850 = vmatpush1.msra.mxu0 %v614
        %1851 = vmatprep.subr.mxu0 %v617
        %1852 = vmatpush1.msra.mxu0 %v616
        %1853 = vmatprep.subr.mxu0 %v619
        %1854 = vmatpush1.msra.mxu0 %v618
        %1855 = vmatprep.subr.mxu0 %v621
        %1856 = vmatpush1.msra.mxu0 %v620
        %1857 = vmatprep.subr.mxu0 %v623
        %1858 = vmatpush1.msra.mxu0 %v622
        %1859 = vmatprep.subr.mxu0 %v625
        %1860 = vmatpush1.msra.mxu0 %v624
        %1861 = vmatprep.subr.mxu0 %v627
        %1862 = vmatpush1.msra.mxu0 %v626
        %1863 = vmatprep.subr.mxu0 %v629
        %1864 = vmatpush1.msra.mxu0 %v628
        %1865 = vmatprep.subr.mxu0 %v631
        %1866 = vmatpush1.msra.mxu0 %v630
        %1867 = vmatprep.subr.mxu0 %v633
        %1868 = vmatpush1.msra.mxu0 %v632
        %1869 = vmatprep.subr.mxu0 %v635
        %1870 = vmatpush1.msra.mxu0 %v634
        %1871 = vmatprep.mubr.f32.mxu0 %v1334
        %1872 = vmatmul.mubr.f32.gmra.mrb[0].mxu0 %v1332
        %v1873 = vpop.f32.mrb[0].mxu0
        %v1874 = vadd.f32 %v1803, %v1873
        %v1875 = vpop.f32.mrb[0].mxu0
        %v1876 = vadd.f32 %v1805, %v1875
        %1877 = vdwg.mxu0
        %1878 = vmatprep.subr.mxu0 %v637
        %1879 = vmatpush1.msra.mxu0 %v636
        %1880 = vmatprep.subr.mxu0 %v639
        %1881 = vmatpush1.msra.mxu0 %v638
        %1882 = vmatprep.subr.mxu0 %v641
        %1883 = vmatpush1.msra.mxu0 %v640
        %1884 = vmatprep.subr.mxu0 %v643
        %1885 = vmatpush1.msra.mxu0 %v642
        %1886 = vmatprep.subr.mxu0 %v645
        %1887 = vmatpush1.msra.mxu0 %v644
        %1888 = vmatprep.subr.mxu0 %v647
        %1889 = vmatpush1.msra.mxu0 %v646
        %1890 = vmatprep.subr.mxu0 %v649
        %1891 = vmatpush1.msra.mxu0 %v648
        %1892 = vmatprep.subr.mxu0 %v651
        %1893 = vmatpush1.msra.mxu0 %v650
        %1894 = vmatprep.subr.mxu0 %v653
        %1895 = vmatpush1.msra.mxu0 %v652
        %1896 = vmatprep.subr.mxu0 %v655
        %1897 = vmatpush1.msra.mxu0 %v654
        %1898 = vmatprep.subr.mxu0 %v657
        %1899 = vmatpush1.msra.mxu0 %v656
        %1900 = vmatprep.subr.mxu0 %v659
        %1901 = vmatpush1.msra.mxu0 %v658
        %1902 = vmatprep.subr.mxu0 %v661
        %1903 = vmatpush1.msra.mxu0 %v660
        %1904 = vmatprep.subr.mxu0 %v663
        %1905 = vmatpush1.msra.mxu0 %v662
        %1906 = vmatprep.subr.mxu0 %v665
        %1907 = vmatpush1.msra.mxu0 %v664
        %1908 = vmatprep.subr.mxu0 %v667
        %1909 = vmatpush1.msra.mxu0 %v666
        %1910 = vmatprep.subr.mxu0 %v669
        %1911 = vmatpush1.msra.mxu0 %v668
        %1912 = vmatprep.subr.mxu0 %v671
        %1913 = vmatpush1.msra.mxu0 %v670
        %1914 = vmatprep.subr.mxu0 %v673
        %1915 = vmatpush1.msra.mxu0 %v672
        %1916 = vmatprep.subr.mxu0 %v675
        %1917 = vmatpush1.msra.mxu0 %v674
        %1918 = vmatprep.subr.mxu0 %v677
        %1919 = vmatpush1.msra.mxu0 %v676
        %1920 = vmatprep.subr.mxu0 %v679
        %1921 = vmatpush1.msra.mxu0 %v678
        %1922 = vmatprep.subr.mxu0 %v681
        %1923 = vmatpush1.msra.mxu0 %v680
        %1924 = vmatprep.subr.mxu0 %v683
        %1925 = vmatpush1.msra.mxu0 %v682
        %1926 = vmatprep.subr.mxu0 %v685
        %1927 = vmatpush1.msra.mxu0 %v684
        %1928 = vmatprep.subr.mxu0 %v687
        %1929 = vmatpush1.msra.mxu0 %v686
        %1930 = vmatprep.subr.mxu0 %v689
        %1931 = vmatpush1.msra.mxu0 %v688
        %1932 = vmatprep.subr.mxu0 %v691
        %1933 = vmatpush1.msra.mxu0 %v690
        %1934 = vmatprep.subr.mxu0 %v693
        %1935 = vmatpush1.msra.mxu0 %v692
        %1936 = vmatprep.subr.mxu0 %v695
        %1937 = vmatpush1.msra.mxu0 %v694
        %1938 = vmatprep.subr.mxu0 %v697
        %1939 = vmatpush1.msra.mxu0 %v696
        %1940 = vmatprep.subr.mxu0 %v699
        %1941 = vmatpush1.msra.mxu0 %v698
        %1942 = vmatprep.mubr.f32.mxu0 %v1350
        %1943 = vmatmul.mubr.f32.gmra.mrb[0].mxu0 %v1342
        %v1944 = vpop.f32.mrb[0].mxu0
        %v1945 = vadd.f32 %v1874, %v1944
        %v1946 = vpop.f32.mrb[0].mxu0
        %v1947 = vadd.f32 %v1876, %v1946
        %1948 = vdwg.mxu0
        %1949 = vmatprep.subr.mxu0 %v701
        %1950 = vmatpush1.msra.mxu0 %v700
        %1951 = vmatprep.subr.mxu0 %v703
        %1952 = vmatpush1.msra.mxu0 %v702
        %1953 = vmatprep.subr.mxu0 %v705
        %1954 = vmatpush1.msra.mxu0 %v704
        %1955 = vmatprep.subr.mxu0 %v707
        %1956 = vmatpush1.msra.mxu0 %v706
        %1957 = vmatprep.subr.mxu0 %v709
        %1958 = vmatpush1.msra.mxu0 %v708
        %1959 = vmatprep.subr.mxu0 %v711
        %1960 = vmatpush1.msra.mxu0 %v710
        %1961 = vmatprep.subr.mxu0 %v713
        %1962 = vmatpush1.msra.mxu0 %v712
        %1963 = vmatprep.subr.mxu0 %v715
        %1964 = vmatpush1.msra.mxu0 %v714
        %1965 = vmatprep.subr.mxu0 %v717
        %1966 = vmatpush1.msra.mxu0 %v716
        %1967 = vmatprep.subr.mxu0 %v719
        %1968 = vmatpush1.msra.mxu0 %v718
        %1969 = vmatprep.subr.mxu0 %v721
        %1970 = vmatpush1.msra.mxu0 %v720
        %1971 = vmatprep.subr.mxu0 %v723
        %1972 = vmatpush1.msra.mxu0 %v722
        %1973 = vmatprep.subr.mxu0 %v725
        %1974 = vmatpush1.msra.mxu0 %v724
        %1975 = vmatprep.subr.mxu0 %v727
        %1976 = vmatpush1.msra.mxu0 %v726
        %1977 = vmatprep.subr.mxu0 %v729
        %1978 = vmatpush1.msra.mxu0 %v728
        %1979 = vmatprep.subr.mxu0 %v731
        %1980 = vmatpush1.msra.mxu0 %v730
        %1981 = vmatprep.subr.mxu0 %v733
        %1982 = vmatpush1.msra.mxu0 %v732
        %1983 = vmatprep.subr.mxu0 %v735
        %1984 = vmatpush1.msra.mxu0 %v734
        %1985 = vmatprep.subr.mxu0 %v737
        %1986 = vmatpush1.msra.mxu0 %v736
        %1987 = vmatprep.subr.mxu0 %v739
        %1988 = vmatpush1.msra.mxu0 %v738
        %1989 = vmatprep.subr.mxu0 %v741
        %1990 = vmatpush1.msra.mxu0 %v740
        %1991 = vmatprep.subr.mxu0 %v743
        %1992 = vmatpush1.msra.mxu0 %v742
        %1993 = vmatprep.subr.mxu0 %v745
        %1994 = vmatpush1.msra.mxu0 %v744
        %1995 = vmatprep.subr.mxu0 %v747
        %1996 = vmatpush1.msra.mxu0 %v746
        %1997 = vmatprep.subr.mxu0 %v749
        %1998 = vmatpush1.msra.mxu0 %v748
        %1999 = vmatprep.subr.mxu0 %v751
        %2000 = vmatpush1.msra.mxu0 %v750
        %2001 = vmatprep.subr.mxu0 %v753
        %2002 = vmatpush1.msra.mxu0 %v752
        %2003 = vmatprep.subr.mxu0 %v755
        %2004 = vmatpush1.msra.mxu0 %v754
        %2005 = vmatprep.subr.mxu0 %v757
        %2006 = vmatpush1.msra.mxu0 %v756
        %2007 = vmatprep.subr.mxu0 %v759
        %2008 = vmatpush1.msra.mxu0 %v758
        %2009 = vmatprep.subr.mxu0 %v761
        %2010 = vmatpush1.msra.mxu0 %v760
        %2011 = vmatprep.subr.mxu0 %v763
        %2012 = vmatpush1.msra.mxu0 %v762
        %2013 = vmatprep.mubr.f32.mxu0 %v1351
        %2014 = vmatmul.mubr.f32.gmra.mrb[0].mxu0 %v1349
        %v2015 = vpop.f32.mrb[0].mxu0
        %v2016 = vadd.f32 %v1945, %v2015
        %v2017 = vpop.f32.mrb[0].mxu0
        %v2018 = vadd.f32 %v1947, %v2017
        %2019 = vdwg.mxu0
        %2020 = vmatprep.subr.mxu0 %v765
        %2021 = vmatpush1.msra.mxu0 %v764
        %2022 = vmatprep.subr.mxu0 %v767
        %2023 = vmatpush1.msra.mxu0 %v766
        %2024 = vmatprep.subr.mxu0 %v769
        %2025 = vmatpush1.msra.mxu0 %v768
        %2026 = vmatprep.subr.mxu0 %v771
        %2027 = vmatpush1.msra.mxu0 %v770
        %2028 = vmatprep.subr.mxu0 %v773
        %2029 = vmatpush1.msra.mxu0 %v772
        %2030 = vmatprep.subr.mxu0 %v775
        %2031 = vmatpush1.msra.mxu0 %v774
        %2032 = vmatprep.subr.mxu0 %v777
        %2033 = vmatpush1.msra.mxu0 %v776
        %2034 = vmatprep.subr.mxu0 %v779
        %2035 = vmatpush1.msra.mxu0 %v778
        %2036 = vmatprep.subr.mxu0 %v781
        %2037 = vmatpush1.msra.mxu0 %v780
        %2038 = vmatprep.subr.mxu0 %v783
        %2039 = vmatpush1.msra.mxu0 %v782
        %2040 = vmatprep.subr.mxu0 %v785
        %2041 = vmatpush1.msra.mxu0 %v784
        %2042 = vmatprep.subr.mxu0 %v787
        %2043 = vmatpush1.msra.mxu0 %v786
        %2044 = vmatprep.subr.mxu0 %v789
        %2045 = vmatpush1.msra.mxu0 %v788
        %2046 = vmatprep.subr.mxu0 %v791
        %2047 = vmatpush1.msra.mxu0 %v790
        %2048 = vmatprep.subr.mxu0 %v793
        %2049 = vmatpush1.msra.mxu0 %v792
        %2050 = vmatprep.subr.mxu0 %v795
        %2051 = vmatpush1.msra.mxu0 %v794
        %2052 = vmatprep.subr.mxu0 %v797
        %2053 = vmatpush1.msra.mxu0 %v796
        %2054 = vmatprep.subr.mxu0 %v799
        %2055 = vmatpush1.msra.mxu0 %v798
        %2056 = vmatprep.subr.mxu0 %v801
        %2057 = vmatpush1.msra.mxu0 %v800
        %2058 = vmatprep.subr.mxu0 %v803
        %2059 = vmatpush1.msra.mxu0 %v802
        %2060 = vmatprep.subr.mxu0 %v805
        %2061 = vmatpush1.msra.mxu0 %v804
        %2062 = vmatprep.subr.mxu0 %v807
        %2063 = vmatpush1.msra.mxu0 %v806
        %2064 = vmatprep.subr.mxu0 %v809
        %2065 = vmatpush1.msra.mxu0 %v808
        %2066 = vmatprep.subr.mxu0 %v811
        %2067 = vmatpush1.msra.mxu0 %v810
        %2068 = vmatprep.subr.mxu0 %v813
        %2069 = vmatpush1.msra.mxu0 %v812
        %2070 = vmatprep.subr.mxu0 %v815
        %2071 = vmatpush1.msra.mxu0 %v814
        %2072 = vmatprep.subr.mxu0 %v817
        %2073 = vmatpush1.msra.mxu0 %v816
        %2074 = vmatprep.subr.mxu0 %v819
        %2075 = vmatpush1.msra.mxu0 %v818
        %2076 = vmatprep.subr.mxu0 %v821
        %2077 = vmatpush1.msra.mxu0 %v820
        %2078 = vmatprep.subr.mxu0 %v823
        %2079 = vmatpush1.msra.mxu0 %v822
        %2080 = vmatprep.subr.mxu0 %v825
        %2081 = vmatpush1.msra.mxu0 %v824
        %2082 = vmatprep.subr.mxu0 %v827
        %2083 = vmatpush1.msra.mxu0 %v826
        %2084 = vmatprep.mubr.f32.mxu0 %v1367
        %2085 = vmatmul.mubr.f32.gmra.mrb[0].mxu0 %v1359
        %v2086 = vpop.f32.mrb[0].mxu0
        %v2087 = vadd.f32 %v2016, %v2086
        %v2088 = vpop.f32.mrb[0].mxu0
        %v2089 = vadd.f32 %v2018, %v2088
        %2090 = vdwg.mxu0
        %2091 = vmatprep.subr.mxu0 %v829
        %2092 = vmatpush1.msra.mxu0 %v828
        %2093 = vmatprep.subr.mxu0 %v831
        %2094 = vmatpush1.msra.mxu0 %v830
        %2095 = vmatprep.subr.mxu0 %v833
        %2096 = vmatpush1.msra.mxu0 %v832
        %2097 = vmatprep.subr.mxu0 %v835
        %2098 = vmatpush1.msra.mxu0 %v834
        %2099 = vmatprep.subr.mxu0 %v837
        %2100 = vmatpush1.msra.mxu0 %v836
        %2101 = vmatprep.subr.mxu0 %v839
        %2102 = vmatpush1.msra.mxu0 %v838
        %2103 = vmatprep.subr.mxu0 %v841
        %2104 = vmatpush1.msra.mxu0 %v840
        %2105 = vmatprep.subr.mxu0 %v843
        %2106 = vmatpush1.msra.mxu0 %v842
        %2107 = vmatprep.subr.mxu0 %v845
        %2108 = vmatpush1.msra.mxu0 %v844
        %2109 = vmatprep.subr.mxu0 %v847
        %2110 = vmatpush1.msra.mxu0 %v846
        %2111 = vmatprep.subr.mxu0 %v849
        %2112 = vmatpush1.msra.mxu0 %v848
        %2113 = vmatprep.subr.mxu0 %v851
        %2114 = vmatpush1.msra.mxu0 %v850
        %2115 = vmatprep.subr.mxu0 %v853
        %2116 = vmatpush1.msra.mxu0 %v852
        %2117 = vmatprep.subr.mxu0 %v855
        %2118 = vmatpush1.msra.mxu0 %v854
        %2119 = vmatprep.subr.mxu0 %v857
        %2120 = vmatpush1.msra.mxu0 %v856
        %2121 = vmatprep.subr.mxu0 %v859
        %2122 = vmatpush1.msra.mxu0 %v858
        %2123 = vmatprep.subr.mxu0 %v861
        %2124 = vmatpush1.msra.mxu0 %v860
        %2125 = vmatprep.subr.mxu0 %v863
        %2126 = vmatpush1.msra.mxu0 %v862
        %2127 = vmatprep.subr.mxu0 %v865
        %2128 = vmatpush1.msra.mxu0 %v864
        %2129 = vmatprep.subr.mxu0 %v867
        %2130 = vmatpush1.msra.mxu0 %v866
        %2131 = vmatprep.subr.mxu0 %v869
        %2132 = vmatpush1.msra.mxu0 %v868
        %2133 = vmatprep.subr.mxu0 %v871
        %2134 = vmatpush1.msra.mxu0 %v870
        %2135 = vmatprep.subr.mxu0 %v873
        %2136 = vmatpush1.msra.mxu0 %v872
        %2137 = vmatprep.subr.mxu0 %v875
        %2138 = vmatpush1.msra.mxu0 %v874
        %2139 = vmatprep.subr.mxu0 %v877
        %2140 = vmatpush1.msra.mxu0 %v876
        %2141 = vmatprep.subr.mxu0 %v879
        %2142 = vmatpush1.msra.mxu0 %v878
        %2143 = vmatprep.subr.mxu0 %v881
        %2144 = vmatpush1.msra.mxu0 %v880
        %2145 = vmatprep.subr.mxu0 %v883
        %2146 = vmatpush1.msra.mxu0 %v882
        %2147 = vmatprep.subr.mxu0 %v885
        %2148 = vmatpush1.msra.mxu0 %v884
        %2149 = vmatprep.subr.mxu0 %v887
        %2150 = vmatpush1.msra.mxu0 %v886
        %2151 = vmatprep.subr.mxu0 %v889
        %2152 = vmatpush1.msra.mxu0 %v888
        %2153 = vmatprep.subr.mxu0 %v891
        %2154 = vmatpush1.msra.mxu0 %v890
        %2155 = vmatprep.mubr.f32.mxu0 %v1368
        %2156 = vmatmul.mubr.f32.gmra.mrb[0].mxu0 %v1366
        %v2157 = vpop.f32.mrb[0].mxu0
        %v2158 = vadd.f32 %v2087, %v2157
        %v2159 = vpop.f32.mrb[0].mxu0
        %v2160 = vadd.f32 %v2089, %v2159
        %2161 = vdwg.mxu0
        %2162 = vmatprep.subr.mxu0 %v893
        %2163 = vmatpush1.msra.mxu0 %v892
        %2164 = vmatprep.subr.mxu0 %v895
        %2165 = vmatpush1.msra.mxu0 %v894
        %2166 = vmatprep.subr.mxu0 %v897
        %2167 = vmatpush1.msra.mxu0 %v896
        %2168 = vmatprep.subr.mxu0 %v899
        %2169 = vmatpush1.msra.mxu0 %v898
        %2170 = vmatprep.subr.mxu0 %v901
        %2171 = vmatpush1.msra.mxu0 %v900
        %2172 = vmatprep.subr.mxu0 %v903
        %2173 = vmatpush1.msra.mxu0 %v902
        %2174 = vmatprep.subr.mxu0 %v905
        %2175 = vmatpush1.msra.mxu0 %v904
        %2176 = vmatprep.subr.mxu0 %v907
        %2177 = vmatpush1.msra.mxu0 %v906
        %2178 = vmatprep.subr.mxu0 %v909
        %2179 = vmatpush1.msra.mxu0 %v908
        %2180 = vmatprep.subr.mxu0 %v911
        %2181 = vmatpush1.msra.mxu0 %v910
        %2182 = vmatprep.subr.mxu0 %v913
        %2183 = vmatpush1.msra.mxu0 %v912
        %2184 = vmatprep.subr.mxu0 %v915
        %2185 = vmatpush1.msra.mxu0 %v914
        %2186 = vmatprep.subr.mxu0 %v917
        %2187 = vmatpush1.msra.mxu0 %v916
        %2188 = vmatprep.subr.mxu0 %v919
        %2189 = vmatpush1.msra.mxu0 %v918
        %2190 = vmatprep.subr.mxu0 %v921
        %2191 = vmatpush1.msra.mxu0 %v920
        %2192 = vmatprep.subr.mxu0 %v923
        %2193 = vmatpush1.msra.mxu0 %v922
        %2194 = vmatprep.subr.mxu0 %v925
        %2195 = vmatpush1.msra.mxu0 %v924
        %2196 = vmatprep.subr.mxu0 %v927
        %2197 = vmatpush1.msra.mxu0 %v926
        %2198 = vmatprep.subr.mxu0 %v929
        %2199 = vmatpush1.msra.mxu0 %v928
        %2200 = vmatprep.subr.mxu0 %v931
        %2201 = vmatpush1.msra.mxu0 %v930
        %2202 = vmatprep.subr.mxu0 %v933
        %2203 = vmatpush1.msra.mxu0 %v932
        %2204 = vmatprep.subr.mxu0 %v935
        %2205 = vmatpush1.msra.mxu0 %v934
        %2206 = vmatprep.subr.mxu0 %v937
        %2207 = vmatpush1.msra.mxu0 %v936
        %2208 = vmatprep.subr.mxu0 %v939
        %2209 = vmatpush1.msra.mxu0 %v938
        %2210 = vmatprep.subr.mxu0 %v941
        %2211 = vmatpush1.msra.mxu0 %v940
        %2212 = vmatprep.subr.mxu0 %v943
        %2213 = vmatpush1.msra.mxu0 %v942
        %2214 = vmatprep.subr.mxu0 %v945
        %2215 = vmatpush1.msra.mxu0 %v944
        %2216 = vmatprep.subr.mxu0 %v947
        %2217 = vmatpush1.msra.mxu0 %v946
        %2218 = vmatprep.subr.mxu0 %v949
        %2219 = vmatpush1.msra.mxu0 %v948
        %2220 = vmatprep.subr.mxu0 %v951
        %2221 = vmatpush1.msra.mxu0 %v950
        %2222 = vmatprep.subr.mxu0 %v953
        %2223 = vmatpush1.msra.mxu0 %v952
        %2224 = vmatprep.subr.mxu0 %v955
        %2225 = vmatpush1.msra.mxu0 %v954
        %2226 = vmatprep.mubr.f32.mxu0 %v1384
        %2227 = vmatmul.mubr.f32.gmra.mrb[0].mxu0 %v1376
        %v2228 = vpop.f32.mrb[0].mxu0
        %v2229 = vadd.f32 %v2158, %v2228
        %v2230 = vpop.f32.mrb[0].mxu0
        %v2231 = vadd.f32 %v2160, %v2230
        %2232 = vdwg.mxu0
        %2233 = vmatprep.subr.mxu0 %v957
        %2234 = vmatpush1.msra.mxu0 %v956
        %2235 = vmatprep.subr.mxu0 %v959
        %2236 = vmatpush1.msra.mxu0 %v958
        %2237 = vmatprep.subr.mxu0 %v961
        %2238 = vmatpush1.msra.mxu0 %v960
        %2239 = vmatprep.subr.mxu0 %v963
        %2240 = vmatpush1.msra.mxu0 %v962
        %2241 = vmatprep.subr.mxu0 %v965
        %2242 = vmatpush1.msra.mxu0 %v964
        %2243 = vmatprep.subr.mxu0 %v967
        %2244 = vmatpush1.msra.mxu0 %v966
        %2245 = vmatprep.subr.mxu0 %v969
        %2246 = vmatpush1.msra.mxu0 %v968
        %2247 = vmatprep.subr.mxu0 %v971
        %2248 = vmatpush1.msra.mxu0 %v970
        %2249 = vmatprep.subr.mxu0 %v973
        %2250 = vmatpush1.msra.mxu0 %v972
        %2251 = vmatprep.subr.mxu0 %v975
        %2252 = vmatpush1.msra.mxu0 %v974
        %2253 = vmatprep.subr.mxu0 %v977
        %2254 = vmatpush1.msra.mxu0 %v976
        %2255 = vmatprep.subr.mxu0 %v979
        %2256 = vmatpush1.msra.mxu0 %v978
        %2257 = vmatprep.subr.mxu0 %v981
        %2258 = vmatpush1.msra.mxu0 %v980
        %2259 = vmatprep.subr.mxu0 %v983
        %2260 = vmatpush1.msra.mxu0 %v982
        %2261 = vmatprep.subr.mxu0 %v985
        %2262 = vmatpush1.msra.mxu0 %v984
        %2263 = vmatprep.subr.mxu0 %v987
        %2264 = vmatpush1.msra.mxu0 %v986
        %2265 = vmatprep.subr.mxu0 %v989
        %2266 = vmatpush1.msra.mxu0 %v988
        %2267 = vmatprep.subr.mxu0 %v991
        %2268 = vmatpush1.msra.mxu0 %v990
        %2269 = vmatprep.subr.mxu0 %v993
        %2270 = vmatpush1.msra.mxu0 %v992
        %2271 = vmatprep.subr.mxu0 %v995
        %2272 = vmatpush1.msra.mxu0 %v994
        %2273 = vmatprep.subr.mxu0 %v997
        %2274 = vmatpush1.msra.mxu0 %v996
        %2275 = vmatprep.subr.mxu0 %v999
        %2276 = vmatpush1.msra.mxu0 %v998
        %2277 = vmatprep.subr.mxu0 %v1001
        %2278 = vmatpush1.msra.mxu0 %v1000
        %2279 = vmatprep.subr.mxu0 %v1003
        %2280 = vmatpush1.msra.mxu0 %v1002
        %2281 = vmatprep.subr.mxu0 %v1005
        %2282 = vmatpush1.msra.mxu0 %v1004
        %2283 = vmatprep.subr.mxu0 %v1007
        %2284 = vmatpush1.msra.mxu0 %v1006
        %2285 = vmatprep.subr.mxu0 %v1009
        %2286 = vmatpush1.msra.mxu0 %v1008
        %2287 = vmatprep.subr.mxu0 %v1011
        %2288 = vmatpush1.msra.mxu0 %v1010
        %2289 = vmatprep.subr.mxu0 %v1013
        %2290 = vmatpush1.msra.mxu0 %v1012
        %2291 = vmatprep.subr.mxu0 %v1015
        %2292 = vmatpush1.msra.mxu0 %v1014
        %2293 = vmatprep.subr.mxu0 %v1017
        %2294 = vmatpush1.msra.mxu0 %v1016
        %2295 = vmatprep.subr.mxu0 %v1019
        %2296 = vmatpush1.msra.mxu0 %v1018
        %2297 = vmatprep.mubr.f32.mxu0 %v1385
        %2298 = vmatmul.mubr.f32.gmra.mrb[0].mxu0 %v1383
        %v2299 = vpop.f32.mrb[0].mxu0
        %v2300 = vadd.f32 %v2229, %v2299
        %v2301 = vpop.f32.mrb[0].mxu0
        %v2302 = vadd.f32 %v2231, %v2301
        %2303 = vdwg.mxu0
        %2304 = vmatprep.subr.mxu0 %v1021
        %2305 = vmatpush1.msra.mxu0 %v1020
        %2306 = vmatprep.subr.mxu0 %v1023
        %2307 = vmatpush1.msra.mxu0 %v1022
        %2308 = vmatprep.subr.mxu0 %v1025
        %2309 = vmatpush1.msra.mxu0 %v1024
        %2310 = vmatprep.subr.mxu0 %v1027
        %2311 = vmatpush1.msra.mxu0 %v1026
        %2312 = vmatprep.subr.mxu0 %v1029
        %2313 = vmatpush1.msra.mxu0 %v1028
        %2314 = vmatprep.subr.mxu0 %v1031
        %2315 = vmatpush1.msra.mxu0 %v1030
        %2316 = vmatprep.subr.mxu0 %v1033
        %2317 = vmatpush1.msra.mxu0 %v1032
        %2318 = vmatprep.subr.mxu0 %v1035
        %2319 = vmatpush1.msra.mxu0 %v1034
        %2320 = vmatprep.subr.mxu0 %v1037
        %2321 = vmatpush1.msra.mxu0 %v1036
        %2322 = vmatprep.subr.mxu0 %v1039
        %2323 = vmatpush1.msra.mxu0 %v1038
        %2324 = vmatprep.subr.mxu0 %v1041
        %2325 = vmatpush1.msra.mxu0 %v1040
        %2326 = vmatprep.subr.mxu0 %v1043
        %2327 = vmatpush1.msra.mxu0 %v1042
        %2328 = vmatprep.subr.mxu0 %v1045
        %2329 = vmatpush1.msra.mxu0 %v1044
        %2330 = vmatprep.subr.mxu0 %v1047
        %2331 = vmatpush1.msra.mxu0 %v1046
        %2332 = vmatprep.subr.mxu0 %v1049
        %2333 = vmatpush1.msra.mxu0 %v1048
        %2334 = vmatprep.subr.mxu0 %v1051
        %2335 = vmatpush1.msra.mxu0 %v1050
        %2336 = vmatprep.subr.mxu0 %v1053
        %2337 = vmatpush1.msra.mxu0 %v1052
        %2338 = vmatprep.subr.mxu0 %v1055
        %2339 = vmatpush1.msra.mxu0 %v1054
        %2340 = vmatprep.subr.mxu0 %v1057
        %2341 = vmatpush1.msra.mxu0 %v1056
        %2342 = vmatprep.subr.mxu0 %v1059
        %2343 = vmatpush1.msra.mxu0 %v1058
        %2344 = vmatprep.subr.mxu0 %v1061
        %2345 = vmatpush1.msra.mxu0 %v1060
        %2346 = vmatprep.subr.mxu0 %v1063
        %2347 = vmatpush1.msra.mxu0 %v1062
        %2348 = vmatprep.subr.mxu0 %v1065
        %2349 = vmatpush1.msra.mxu0 %v1064
        %2350 = vmatprep.subr.mxu0 %v1067
        %2351 = vmatpush1.msra.mxu0 %v1066
        %2352 = vmatprep.subr.mxu0 %v1069
        %2353 = vmatpush1.msra.mxu0 %v1068
        %2354 = vmatprep.subr.mxu0 %v1071
        %2355 = vmatpush1.msra.mxu0 %v1070
        %2356 = vmatprep.subr.mxu0 %v1073
        %2357 = vmatpush1.msra.mxu0 %v1072
        %2358 = vmatprep.subr.mxu0 %v1075
        %2359 = vmatpush1.msra.mxu0 %v1074
        %2360 = vmatprep.subr.mxu0 %v1077
        %2361 = vmatpush1.msra.mxu0 %v1076
        %2362 = vmatprep.subr.mxu0 %v1079
        %2363 = vmatpush1.msra.mxu0 %v1078
        %2364 = vmatprep.subr.mxu0 %v1081
        %2365 = vmatpush1.msra.mxu0 %v1080
        %2366 = vmatprep.subr.mxu0 %v1083
        %2367 = vmatpush1.msra.mxu0 %v1082
        %2368 = vmatprep.mubr.f32.mxu0 %v1401
        %2369 = vmatmul.mubr.f32.gmra.mrb[0].mxu0 %v1393
        %v2370 = vpop.f32.mrb[0].mxu0
        %v2371 = vadd.f32 %v2300, %v2370
        %v2372 = vpop.f32.mrb[0].mxu0
        %v2373 = vadd.f32 %v2302, %v2372
        %2374 = vdwg.mxu0
        %2375 = vmatprep.subr.mxu0 %v1085
        %2376 = vmatpush1.msra.mxu0 %v1084
        %2377 = vmatprep.subr.mxu0 %v1087
        %2378 = vmatpush1.msra.mxu0 %v1086
        %2379 = vmatprep.subr.mxu0 %v1089
        %2380 = vmatpush1.msra.mxu0 %v1088
        %2381 = vmatprep.subr.mxu0 %v1091
        %2382 = vmatpush1.msra.mxu0 %v1090
        %2383 = vmatprep.subr.mxu0 %v1093
        %2384 = vmatpush1.msra.mxu0 %v1092
        %2385 = vmatprep.subr.mxu0 %v1095
        %2386 = vmatpush1.msra.mxu0 %v1094
        %2387 = vmatprep.subr.mxu0 %v1097
        %2388 = vmatpush1.msra.mxu0 %v1096
        %2389 = vmatprep.subr.mxu0 %v1099
        %2390 = vmatpush1.msra.mxu0 %v1098
        %2391 = vmatprep.subr.mxu0 %v1101
        %2392 = vmatpush1.msra.mxu0 %v1100
        %2393 = vmatprep.subr.mxu0 %v1103
        %2394 = vmatpush1.msra.mxu0 %v1102
        %2395 = vmatprep.subr.mxu0 %v1105
        %2396 = vmatpush1.msra.mxu0 %v1104
        %2397 = vmatprep.subr.mxu0 %v1107
        %2398 = vmatpush1.msra.mxu0 %v1106
        %2399 = vmatprep.subr.mxu0 %v1109
        %2400 = vmatpush1.msra.mxu0 %v1108
        %2401 = vmatprep.subr.mxu0 %v1111
        %2402 = vmatpush1.msra.mxu0 %v1110
        %2403 = vmatprep.subr.mxu0 %v1113
        %2404 = vmatpush1.msra.mxu0 %v1112
        %2405 = vmatprep.subr.mxu0 %v1115
        %2406 = vmatpush1.msra.mxu0 %v1114
        %2407 = vmatprep.subr.mxu0 %v1117
        %2408 = vmatpush1.msra.mxu0 %v1116
        %2409 = vmatprep.subr.mxu0 %v1119
        %2410 = vmatpush1.msra.mxu0 %v1118
        %2411 = vmatprep.subr.mxu0 %v1121
        %2412 = vmatpush1.msra.mxu0 %v1120
        %2413 = vmatprep.subr.mxu0 %v1123
        %2414 = vmatpush1.msra.mxu0 %v1122
        %2415 = vmatprep.subr.mxu0 %v1125
        %2416 = vmatpush1.msra.mxu0 %v1124
        %2417 = vmatprep.subr.mxu0 %v1127
        %2418 = vmatpush1.msra.mxu0 %v1126
        %2419 = vmatprep.subr.mxu0 %v1129
        %2420 = vmatpush1.msra.mxu0 %v1128
        %2421 = vmatprep.subr.mxu0 %v1131
        %2422 = vmatpush1.msra.mxu0 %v1130
        %2423 = vmatprep.subr.mxu0 %v1133
        %2424 = vmatpush1.msra.mxu0 %v1132
        %2425 = vmatprep.subr.mxu0 %v1135
        %2426 = vmatpush1.msra.mxu0 %v1134
        %2427 = vmatprep.subr.mxu0 %v1137
        %2428 = vmatpush1.msra.mxu0 %v1136
        %2429 = vmatprep.subr.mxu0 %v1139
        %2430 = vmatpush1.msra.mxu0 %v1138
        %2431 = vmatprep.subr.mxu0 %v1141
        %2432 = vmatpush1.msra.mxu0 %v1140
        %2433 = vmatprep.subr.mxu0 %v1143
        %2434 = vmatpush1.msra.mxu0 %v1142
        %2435 = vmatprep.subr.mxu0 %v1145
        %2436 = vmatpush1.msra.mxu0 %v1144
        %2437 = vmatprep.subr.mxu0 %v1147
        %2438 = vmatpush1.msra.mxu0 %v1146
        %2439 = vmatprep.mubr.f32.mxu0 %v1402
        %2440 = vmatmul.mubr.f32.gmra.mrb[0].mxu0 %v1400
        %v2441 = vpop.f32.mrb[0].mxu0
        %v2442 = vadd.f32 %v2371, %v2441
        %v2443 = vpop.f32.mrb[0].mxu0
        %v2444 = vadd.f32 %v2373, %v2443
        %2445 = vdwg.mxu0
        %2446 = vmatprep.subr.mxu0 %v1149
        %2447 = vmatpush1.msra.mxu0 %v1148
        %2448 = vmatprep.subr.mxu0 %v1151
        %2449 = vmatpush1.msra.mxu0 %v1150
        %2450 = vmatprep.subr.mxu0 %v1153
        %2451 = vmatpush1.msra.mxu0 %v1152
        %2452 = vmatprep.subr.mxu0 %v1155
        %2453 = vmatpush1.msra.mxu0 %v1154
        %2454 = vmatprep.subr.mxu0 %v1157
        %2455 = vmatpush1.msra.mxu0 %v1156
        %2456 = vmatprep.subr.mxu0 %v1159
        %2457 = vmatpush1.msra.mxu0 %v1158
        %2458 = vmatprep.subr.mxu0 %v1161
        %2459 = vmatpush1.msra.mxu0 %v1160
        %2460 = vmatprep.subr.mxu0 %v1163
        %2461 = vmatpush1.msra.mxu0 %v1162
        %2462 = vmatprep.subr.mxu0 %v1165
        %2463 = vmatpush1.msra.mxu0 %v1164
        %2464 = vmatprep.subr.mxu0 %v1167
        %2465 = vmatpush1.msra.mxu0 %v1166
        %2466 = vmatprep.subr.mxu0 %v1169
        %2467 = vmatpush1.msra.mxu0 %v1168
        %2468 = vmatprep.subr.mxu0 %v1171
        %2469 = vmatpush1.msra.mxu0 %v1170
        %2470 = vmatprep.subr.mxu0 %v1173
        %2471 = vmatpush1.msra.mxu0 %v1172
        %2472 = vmatprep.subr.mxu0 %v1175
        %2473 = vmatpush1.msra.mxu0 %v1174
        %2474 = vmatprep.subr.mxu0 %v1177
        %2475 = vmatpush1.msra.mxu0 %v1176
        %2476 = vmatprep.subr.mxu0 %v1179
        %2477 = vmatpush1.msra.mxu0 %v1178
        %2478 = vmatprep.subr.mxu0 %v1181
        %2479 = vmatpush1.msra.mxu0 %v1180
        %2480 = vmatprep.subr.mxu0 %v1183
        %2481 = vmatpush1.msra.mxu0 %v1182
        %2482 = vmatprep.subr.mxu0 %v1185
        %2483 = vmatpush1.msra.mxu0 %v1184
        %2484 = vmatprep.subr.mxu0 %v1187
        %2485 = vmatpush1.msra.mxu0 %v1186
        %2486 = vmatprep.subr.mxu0 %v1189
        %2487 = vmatpush1.msra.mxu0 %v1188
        %2488 = vmatprep.subr.mxu0 %v1191
        %2489 = vmatpush1.msra.mxu0 %v1190
        %2490 = vmatprep.subr.mxu0 %v1193
        %2491 = vmatpush1.msra.mxu0 %v1192
        %2492 = vmatprep.subr.mxu0 %v1195
        %2493 = vmatpush1.msra.mxu0 %v1194
        %2494 = vmatprep.subr.mxu0 %v1197
        %2495 = vmatpush1.msra.mxu0 %v1196
        %2496 = vmatprep.subr.mxu0 %v1199
        %2497 = vmatpush1.msra.mxu0 %v1198
        %2498 = vmatprep.subr.mxu0 %v1201
        %2499 = vmatpush1.msra.mxu0 %v1200
        %2500 = vmatprep.subr.mxu0 %v1203
        %2501 = vmatpush1.msra.mxu0 %v1202
        %2502 = vmatprep.subr.mxu0 %v1205
        %2503 = vmatpush1.msra.mxu0 %v1204
        %2504 = vmatprep.subr.mxu0 %v1207
        %2505 = vmatpush1.msra.mxu0 %v1206
        %2506 = vmatprep.subr.mxu0 %v1209
        %2507 = vmatpush1.msra.mxu0 %v1208
        %2508 = vmatprep.subr.mxu0 %v1211
        %2509 = vmatpush1.msra.mxu0 %v1210
        %2510 = vmatprep.mubr.f32.mxu0 %v1418
        %2511 = vmatmul.mubr.f32.gmra.mrb[0].mxu0 %v1410
        %v2512 = vpop.f32.mrb[0].mxu0
        %v2513 = vadd.f32 %v2442, %v2512
        %v2514 = vpop.f32.mrb[0].mxu0
        %v2515 = vadd.f32 %v2444, %v2514
        %2516 = vdwg.mxu0
        %2517 = vmatprep.subr.mxu0 %v1213
        %2518 = vmatpush1.msra.mxu0 %v1212
        %2519 = vmatprep.subr.mxu0 %v1215
        %2520 = vmatpush1.msra.mxu0 %v1214
        %2521 = vmatprep.subr.mxu0 %v1217
        %2522 = vmatpush1.msra.mxu0 %v1216
        %2523 = vmatprep.subr.mxu0 %v1219
        %2524 = vmatpush1.msra.mxu0 %v1218
        %2525 = vmatprep.subr.mxu0 %v1221
        %2526 = vmatpush1.msra.mxu0 %v1220
        %2527 = vmatprep.subr.mxu0 %v1223
        %2528 = vmatpush1.msra.mxu0 %v1222
        %2529 = vmatprep.subr.mxu0 %v1225
        %2530 = vmatpush1.msra.mxu0 %v1224
        %2531 = vmatprep.subr.mxu0 %v1227
        %2532 = vmatpush1.msra.mxu0 %v1226
        %2533 = vmatprep.subr.mxu0 %v1229
        %2534 = vmatpush1.msra.mxu0 %v1228
        %2535 = vmatprep.subr.mxu0 %v1231
        %2536 = vmatpush1.msra.mxu0 %v1230
        %2537 = vmatprep.subr.mxu0 %v1233
        %2538 = vmatpush1.msra.mxu0 %v1232
        %2539 = vmatprep.subr.mxu0 %v1235
        %2540 = vmatpush1.msra.mxu0 %v1234
        %2541 = vmatprep.subr.mxu0 %v1237
        %2542 = vmatpush1.msra.mxu0 %v1236
        %2543 = vmatprep.subr.mxu0 %v1239
        %2544 = vmatpush1.msra.mxu0 %v1238
        %2545 = vmatprep.subr.mxu0 %v1241
        %2546 = vmatpush1.msra.mxu0 %v1240
        %2547 = vmatprep.subr.mxu0 %v1243
        %2548 = vmatpush1.msra.mxu0 %v1242
        %2549 = vmatprep.subr.mxu0 %v1245
        %2550 = vmatpush1.msra.mxu0 %v1244
        %2551 = vmatprep.subr.mxu0 %v1247
        %2552 = vmatpush1.msra.mxu0 %v1246
        %2553 = vmatprep.subr.mxu0 %v1249
        %2554 = vmatpush1.msra.mxu0 %v1248
        %2555 = vmatprep.subr.mxu0 %v1251
        %2556 = vmatpush1.msra.mxu0 %v1250
        %2557 = vmatprep.subr.mxu0 %v1253
        %2558 = vmatpush1.msra.mxu0 %v1252
        %2559 = vmatprep.subr.mxu0 %v1255
        %2560 = vmatpush1.msra.mxu0 %v1254
        %2561 = vmatprep.subr.mxu0 %v1257
        %2562 = vmatpush1.msra.mxu0 %v1256
        %2563 = vmatprep.subr.mxu0 %v1259
        %2564 = vmatpush1.msra.mxu0 %v1258
        %2565 = vmatprep.subr.mxu0 %v1261
        %2566 = vmatpush1.msra.mxu0 %v1260
        %2567 = vmatprep.subr.mxu0 %v1263
        %2568 = vmatpush1.msra.mxu0 %v1262
        %2569 = vmatprep.subr.mxu0 %v1265
        %2570 = vmatpush1.msra.mxu0 %v1264
        %2571 = vmatprep.subr.mxu0 %v1267
        %2572 = vmatpush1.msra.mxu0 %v1266
        %2573 = vmatprep.subr.mxu0 %v1269
        %2574 = vmatpush1.msra.mxu0 %v1268
        %2575 = vmatprep.subr.mxu0 %v1271
        %2576 = vmatpush1.msra.mxu0 %v1270
        %2577 = vmatprep.subr.mxu0 %v1273
        %2578 = vmatpush1.msra.mxu0 %v1272
        %2579 = vmatprep.subr.mxu0 %v1275
        %2580 = vmatpush1.msra.mxu0 %v1274
        %2581 = vmatprep.mubr.f32.mxu0 %v1419
        %2582 = vmatmul.mubr.f32.gmra.mrb[0].mxu0 %v1417
        %v2583 = vpop.f32.mrb[0].mxu0
        %v2584 = vadd.f32 %v2513, %v2583
        %v2585 = vpop.f32.mrb[0].mxu0
        %v2586 = vadd.f32 %v2515, %v2585
        %2587 = vdwg.mxu0
        %v2590 = vcombine.low %v2584, %v2586
        %v2592 = vunpack.c.l.s4 1983009808
        %v2593 = vunpack.c.0.s8 %v2592
        %v2594 = vlaneseq
        %v2595 = vshrl.u32 %v2594, 7
        %v2596 = vsub.s32 %v2593, %v2595
        %v2597 = vrot.slane %v2590, %v2596
        %v2599 = vadd.f32 %v243, %v2597
        %2600 = vst [vmem:[#allocation2] sm:$0xf] %v2599
        %p2601 = scmp.eq.s32.totalorder %s17, 3
        // Predicated region
        $region45: #{forward.5} parent=39 // pred_check
          %p2602 = pneg %p2601
        $region46: #{forward.5} parent=39 // pred_check_branch
          %2604 = sbr.rel (%p2602) target = $region48
        $region47: #{forward.5} parent=39 // pred_region
          %v2605 = vld [vmem:[#allocation2] sm:$0xf]
          %v2606 = vld [vmem:[%s2] sm:$0x3]
          %v2608 = vlaneseq
          %v2609 = vshrl.u32 %v2608, 7
          %v2610 = vsub.s32 0, %v2609
          %v2611 = vrot.slane %v2606, %v2610
          %v2612 = vlaneseq
          %v2613 = vshrl.u32 %v2612, 7
          %v2614 = vsub.s32 1, %v2613
          %v2615 = vrot.slane %v2606, %v2614
          %v2616 = vcombine.low %v2611, %v2615
          %v2618 = vunpack.c.l.s4 1983009808
          %v2619 = vunpack.c.0.s8 %v2618
          %v2620 = vlaneseq
          %v2621 = vshrl.u32 %v2620, 7
          %v2622 = vsub.s32 %v2619, %v2621
          %v2623 = vrot.slane %v2616, %v2622
          %v2625 = vadd.f32 %v2605, %v2623
          %v2626 = vmax.f32 %v2625, 0.0
          %v2627 = vld [vmem:[%s3] sm:$0xff]
          %v2628 = vld [vmem:[%s3 + $0x8] sm:$0xff]
          %v2629 = vld [vmem:[%s3 + $0x10] sm:$0xff]
          %v2630 = vld [vmem:[%s3 + $0x18] sm:$0xff]
          %v2631 = vld [vmem:[%s3 + $0x20] sm:$0xff]
          %v2632 = vld [vmem:[%s3 + $0x28] sm:$0xff]
          %v2633 = vld [vmem:[%s3 + $0x30] sm:$0xff]
          %v2634 = vld [vmem:[%s3 + $0x38] sm:$0xff]
          %v2635 = vld [vmem:[%s3 + $0x40] sm:$0xff]
          %v2636 = vld [vmem:[%s3 + $0x48] sm:$0xff]
          %v2637 = vld [vmem:[%s3 + $0x50] sm:$0xff]
          %v2638 = vld [vmem:[%s3 + $0x58] sm:$0xff]
          %v2639 = vld [vmem:[%s3 + $0x60] sm:$0xff]
          %v2640 = vld [vmem:[%s3 + $0x68] sm:$0xff]
          %v2641 = vld [vmem:[%s3 + $0x70] sm:$0xff]
          %v2642 = vld [vmem:[%s3 + $0x78] sm:$0xff]
          %v2643 = vld [vmem:[%s3 + $0x80] sm:$0xff]
          %v2644 = vld [vmem:[%s3 + $0x88] sm:$0xff]
          %v2645 = vld [vmem:[%s3 + $0x90] sm:$0xff]
          %v2646 = vld [vmem:[%s3 + $0x98] sm:$0xff]
          %v2647 = vld [vmem:[%s3 + $0xa0] sm:$0xff]
          %v2648 = vld [vmem:[%s3 + $0xa8] sm:$0xff]
          %v2649 = vld [vmem:[%s3 + $0xb0] sm:$0xff]
          %v2650 = vld [vmem:[%s3 + $0xb8] sm:$0xff]
          %v2651 = vld [vmem:[%s3 + $0xc0] sm:$0xff]
          %v2652 = vld [vmem:[%s3 + $0xc8] sm:$0xff]
          %v2653 = vld [vmem:[%s3 + $0xd0] sm:$0xff]
          %v2654 = vld [vmem:[%s3 + $0xd8] sm:$0xff]
          %v2655 = vld [vmem:[%s3 + $0xe0] sm:$0xff]
          %v2656 = vld [vmem:[%s3 + $0xe8] sm:$0xff]
          %v2657 = vld [vmem:[%s3 + $0xf0] sm:$0xff]
          %v2658 = vld [vmem:[%s3 + $0xf8] sm:$0xff]
          %v2659 = vld [vmem:[%s3 + $0x100] sm:$0xff]
          %v2660 = vld [vmem:[%s3 + $0x108] sm:$0xff]
          %v2661 = vld [vmem:[%s3 + $0x110] sm:$0xff]
          %v2662 = vld [vmem:[%s3 + $0x118] sm:$0xff]
          %v2663 = vld [vmem:[%s3 + $0x120] sm:$0xff]
          %v2664 = vld [vmem:[%s3 + $0x128] sm:$0xff]
          %v2665 = vld [vmem:[%s3 + $0x130] sm:$0xff]
          %v2666 = vld [vmem:[%s3 + $0x138] sm:$0xff]
          %v2667 = vld [vmem:[%s3 + $0x140] sm:$0xff]
          %v2668 = vld [vmem:[%s3 + $0x148] sm:$0xff]
          %v2669 = vld [vmem:[%s3 + $0x150] sm:$0xff]
          %v2670 = vld [vmem:[%s3 + $0x158] sm:$0xff]
          %v2671 = vld [vmem:[%s3 + $0x160] sm:$0xff]
          %v2672 = vld [vmem:[%s3 + $0x168] sm:$0xff]
          %v2673 = vld [vmem:[%s3 + $0x170] sm:$0xff]
          %v2674 = vld [vmem:[%s3 + $0x178] sm:$0xff]
          %v2675 = vld [vmem:[%s3 + $0x180] sm:$0xff]
          %v2676 = vld [vmem:[%s3 + $0x188] sm:$0xff]
          %v2677 = vld [vmem:[%s3 + $0x190] sm:$0xff]
          %v2678 = vld [vmem:[%s3 + $0x198] sm:$0xff]
          %v2679 = vld [vmem:[%s3 + $0x1a0] sm:$0xff]
          %v2680 = vld [vmem:[%s3 + $0x1a8] sm:$0xff]
          %v2681 = vld [vmem:[%s3 + $0x1b0] sm:$0xff]
          %v2682 = vld [vmem:[%s3 + $0x1b8] sm:$0xff]
          %v2683 = vld [vmem:[%s3 + $0x1c0] sm:$0xff]
          %v2684 = vld [vmem:[%s3 + $0x1c8] sm:$0xff]
          %v2685 = vld [vmem:[%s3 + $0x1d0] sm:$0xff]
          %v2686 = vld [vmem:[%s3 + $0x1d8] sm:$0xff]
          %v2687 = vld [vmem:[%s3 + $0x1e0] sm:$0xff]
          %v2688 = vld [vmem:[%s3 + $0x1e8] sm:$0xff]
          %v2689 = vld [vmem:[%s3 + $0x1f0] sm:$0xff]
          %v2690 = vld [vmem:[%s3 + $0x1f8] sm:$0xff]
          %v2691 = vld [vmem:[%s4] sm:$0x3]
          %v2693 = vlaneseq
          %v2694 = vshrl.u32 %v2693, 7
          %v2695 = vsub.s32 0, %v2694
          %v2696 = vrot.slane %v2691, %v2695
          %v2697 = vlaneseq
          %v2698 = vshrl.u32 %v2697, 7
          %v2699 = vsub.s32 1, %v2698
          %v2700 = vrot.slane %v2691, %v2699
          %v2705 = vunpack.c.l.s4 1983009808
          %v2706 = vunpack.c.0.s8 %v2705
          %v2707 = vlaneseq
          %v2708 = vshrl.u32 %v2707, 7
          %v2709 = vsub.s32 %v2706, %v2708
          %v2710 = vrot.slane %v2626, %v2709
          %v2711 = vcombine.high %v2710, %v2710
          %2714 = vmatprep.subr.mxu0 %v2628
          %2715 = vmatpush1.msra.mxu0 %v2627
          %2716 = vmatprep.subr.mxu0 %v2630
          %2717 = vmatpush1.msra.mxu0 %v2629
          %2718 = vmatprep.subr.mxu0 %v2632
          %2719 = vmatpush1.msra.mxu0 %v2631
          %2720 = vmatprep.subr.mxu0 %v2634
          %2721 = vmatpush1.msra.mxu0 %v2633
          %2722 = vmatprep.subr.mxu0 %v2636
          %2723 = vmatpush1.msra.mxu0 %v2635
          %2724 = vmatprep.subr.mxu0 %v2638
          %2725 = vmatpush1.msra.mxu0 %v2637
          %2726 = vmatprep.subr.mxu0 %v2640
          %2727 = vmatpush1.msra.mxu0 %v2639
          %2728 = vmatprep.subr.mxu0 %v2642
          %2729 = vmatpush1.msra.mxu0 %v2641
          %2730 = vmatprep.subr.mxu0 %v2644
          %2731 = vmatpush1.msra.mxu0 %v2643
          %2732 = vmatprep.subr.mxu0 %v2646
          %2733 = vmatpush1.msra.mxu0 %v2645
          %2734 = vmatprep.subr.mxu0 %v2648
          %2735 = vmatpush1.msra.mxu0 %v2647
          %2736 = vmatprep.subr.mxu0 %v2650
          %2737 = vmatpush1.msra.mxu0 %v2649
          %2738 = vmatprep.subr.mxu0 %v2652
          %2739 = vmatpush1.msra.mxu0 %v2651
          %2740 = vmatprep.subr.mxu0 %v2654
          %2741 = vmatpush1.msra.mxu0 %v2653
          %2742 = vmatprep.subr.mxu0 %v2656
          %2743 = vmatpush1.msra.mxu0 %v2655
          %2744 = vmatprep.subr.mxu0 %v2658
          %2745 = vmatpush1.msra.mxu0 %v2657
          %2746 = vmatprep.subr.mxu0 %v2660
          %2747 = vmatpush1.msra.mxu0 %v2659
          %2748 = vmatprep.subr.mxu0 %v2662
          %2749 = vmatpush1.msra.mxu0 %v2661
          %2750 = vmatprep.subr.mxu0 %v2664
          %2751 = vmatpush1.msra.mxu0 %v2663
          %2752 = vmatprep.subr.mxu0 %v2666
          %2753 = vmatpush1.msra.mxu0 %v2665
          %2754 = vmatprep.subr.mxu0 %v2668
          %2755 = vmatpush1.msra.mxu0 %v2667
          %2756 = vmatprep.subr.mxu0 %v2670
          %2757 = vmatpush1.msra.mxu0 %v2669
          %2758 = vmatprep.subr.mxu0 %v2672
          %2759 = vmatpush1.msra.mxu0 %v2671
          %2760 = vmatprep.subr.mxu0 %v2674
          %2761 = vmatpush1.msra.mxu0 %v2673
          %2762 = vmatprep.subr.mxu0 %v2676
          %2763 = vmatpush1.msra.mxu0 %v2675
          %2764 = vmatprep.subr.mxu0 %v2678
          %2765 = vmatpush1.msra.mxu0 %v2677
          %2766 = vmatprep.subr.mxu0 %v2680
          %2767 = vmatpush1.msra.mxu0 %v2679
          %2768 = vmatprep.subr.mxu0 %v2682
          %2769 = vmatpush1.msra.mxu0 %v2681
          %2770 = vmatprep.subr.mxu0 %v2684
          %2771 = vmatpush1.msra.mxu0 %v2683
          %2772 = vmatprep.subr.mxu0 %v2686
          %2773 = vmatpush1.msra.mxu0 %v2685
          %2774 = vmatprep.subr.mxu0 %v2688
          %2775 = vmatpush1.msra.mxu0 %v2687
          %2776 = vmatprep.subr.mxu0 %v2690
          %2777 = vmatpush1.msra.mxu0 %v2689
          %2778 = vmatprep.mubr.f32.mxu0 %v2711
          %2779 = vmatmul.mubr.f32.gmra.mrb[0].mxu0 %v2710
          %v2780 = vpop.f32.mrb[0].mxu0
          %v2781 = vadd.f32 %v2696, %v2780
          %v2782 = vpop.f32.mrb[0].mxu0
          %v2783 = vadd.f32 %v2700, %v2782
          %2784 = vdwg.mxu0
          %v2787 = vcombine.low %v2781, %v2783
          %v2789 = vunpack.c.l.s4 1983009808
          %v2790 = vunpack.c.0.s8 %v2789
          %v2791 = vlaneseq
          %v2792 = vshrl.u32 %v2791, 7
          %v2793 = vsub.s32 %v2790, %v2792
          %v2794 = vrot.slane %v2787, %v2793
          %vm2796 = vcmask 1041408
          %vm2797 = vcmask 551938
          %vm2798 = vmor %vm2797, %vm2796
          %2799 = vst.msk [vmem:[#allocation3] sm:$0xf] %vm2798, %v2794
        $region48: #{forward.5} parent=39 // pred_fallthru
          _
        // Predicated region
        $region49: #{forward.5} parent=39 // pred_check
          %p2800 = pneg %p145
        $region50: #{forward.5} parent=39 // pred_check_branch
          %2802 = sbr.rel (%p2800) target = $region52
        $region51: #{forward.5} parent=39 // pred_region
          %s2804 = ssub.s32 64, 64
          %2805 = vsyncadd [#allocation4], %s2804
          %s2807 = sshll.u32 [#allocation3], 4
          %s2808 = int_to_ptr.vmem [resolvable:$true] %s2807
          %2810 = dma.vmem_to_hbm [thread:$0]  %s2808, 64, %s5, [#allocation4]
        $region52: #{forward.5} parent=39 // pred_fallthru
          _
        // Predicated region
        $region53: #{forward.5} parent=39 // pred_check
          %p2811 = pneg %p145
        $region54: #{forward.5} parent=39 // pred_check_branch
          %2813 = sbr.rel (%p2811) target = $region56
        $region55: #{forward.5} parent=39 // pred_region
          %2814 = dma.done [#allocation4], 64
        $region56: #{forward.5} parent=39 // pred_fallthru
          _
      $region40: #{forward.5} parent=5 // pred_fallthru
        _
      %p2815 = scmp.le.s32.totalorder 2, %s12
      // Predicated region
      $region57: #{forward.5} parent=5 // pred_check
        %p2816 = pneg %p2815
      $region58: #{forward.5} parent=5 // pred_check_branch
        %2818 = sbr.rel (%p2816) target = $region60
      $region59: #{forward.5} parent=5 // pred_region
        %s2819 = ssub.s32 %s12, 2
      $region60: #{forward.5} parent=5 // pred_fallthru
        _
    $region6: #{forward.5} parent=1 // loop_footer
      %s16 = sadd.s32 1, %s12
    $region7: #{forward.5} parent=1 // loop_footer_branch
      %11 = sbr.rel target = $region3
    $region8: #{forward.5} parent=1 // loop_exit
      _
    %2820 = vsyncpa [#allocation4], 1
    %s2821 = scalar_lea.sflag [#allocation4], 1
    %2822 = vsyncpa %s2821, 1

</llo_original>
